<compile_context>
chip_gen: v7x
topology: tpu7x:2x2x1
jax: 0.10.0
libtpu: 0.0.40
codegen_flags: <defaults>
</compile_context>

<pallas_src>
import jax
import jax.numpy as jnp
from jax.experimental import pallas as pl
from jax.experimental.pallas import tpu as pltpu

INPUT_DIM = 45
IN_PAD = 64             # input features zero-padded to 64 (half a lane tile)
H1, H2, H3, H4 = 1024, 512, 256, 16
OUT_PAD = 128           # final layer padded to one full lane tile (sliced in wrapper)
EPS = 1e-5
NEG_SLOPE = 0.01


def divernet_kernel(x_ref, w1_ref, bn_ref, b4_ref,        # VMEM inputs (auto-DMA)
                    w2_hbm, w3_hbm, w4_hbm,                # HBM inputs (manual DMA)
                    o_ref,                                 # VMEM output
                    w2_vmem, w3_vmem, w4_vmem, sem):       # scratch
    # Kick off HBM->VMEM weight prefetches immediately; the DMA engine drains them
    # while the MXU runs layers 1..3, so later-layer weights are (mostly) resident
    # by the time each matmul needs them.
    cp2 = pltpu.make_async_copy(w2_hbm, w2_vmem, sem.at[0])
    cp3 = pltpu.make_async_copy(w3_hbm, w3_vmem, sem.at[1])
    cp4 = pltpu.make_async_copy(w4_hbm, w4_vmem, sem.at[2])
    cp2.start()
    cp3.start()
    cp4.start()

    # B is the true (unpadded) batch; zero-padded rows would corrupt BN batch stats.
    inv_b = 1.0 / x_ref.shape[0]

    def bn_lrelu(h, gamma, beta):
        # Training-mode BatchNorm1d (batch stats, biased variance) + LeakyReLU,
        # folded into one scale/shift. Single-pass stats; var clamped at 0 so f32
        # cancellation can never produce a NaN from rsqrt.
        mean = jnp.sum(h, axis=0, keepdims=True) * inv_b
        meansq = jnp.sum(h * h, axis=0, keepdims=True) * inv_b
        var = jnp.maximum(meansq - mean * mean, 0.0)
        scale = gamma * jax.lax.rsqrt(var + EPS)
        shift = beta - mean * scale
        hn = h * scale + shift
        return jnp.where(hn >= 0, hn, NEG_SLOPE * hn)

    # Layer 1: Linear(45->1024). Bias dropped: a per-feature constant added before
    # training-mode BN cancels exactly in the centering (same for b2/b3 below).
    h = jnp.dot(x_ref[...], w1_ref[...], preferred_element_type=jnp.float32)
    h = bn_lrelu(h, bn_ref[0:1, :H1], bn_ref[1:2, :H1])

    # Layer 2: Linear(1024->512) + BN + LeakyReLU.
    cp2.wait()
    h = jnp.dot(h.astype(jnp.bfloat16), w2_vmem[...], preferred_element_type=jnp.float32)
    h = bn_lrelu(h, bn_ref[2:3, :H2], bn_ref[3:4, :H2])

    # Layer 3: Linear(512->256) + BN + LeakyReLU.
    cp3.wait()
    h = jnp.dot(h.astype(jnp.bfloat16), w3_vmem[...], preferred_element_type=jnp.float32)
    h = bn_lrelu(h, bn_ref[4:5, :H3], bn_ref[5:6, :H3])

    # Layer 4: Linear(256->16) padded to 128 lanes; bias kept (no BN after it).
    cp4.wait()
    o_ref[...] = (
        jnp.dot(h.astype(jnp.bfloat16), w4_vmem[...], preferred_element_type=jnp.float32)
        + b4_ref[...]
    ).astype(o_ref.dtype)


def prepare_kernel_params(p):
    """Pack PyTorch-layout f32 params into the kernel's consolidated bf16/f32 arrays."""
    w1p = (
        jnp.zeros((IN_PAD, H1), jnp.float32).at[:INPUT_DIM, :].set(p["w1"])
    ).astype(jnp.bfloat16)
    w2p = p["w2"].astype(jnp.bfloat16)
    w3p = p["w3"].astype(jnp.bfloat16)
    w4p = (
        jnp.zeros((H3, OUT_PAD), jnp.float32).at[:, :H4].set(p["w4"])
    ).astype(jnp.bfloat16)

    # Per-layer (gamma, beta) rows packed into a single (6, 1024) f32 array.
    bn = jnp.zeros((6, H1), jnp.float32)
    bn = bn.at[0, :H1].set(p["g1"][0]).at[1, :H1].set(p["be1"][0])
    bn = bn.at[2, :H2].set(p["g2"][0]).at[3, :H2].set(p["be2"][0])
    bn = bn.at[4, :H3].set(p["g3"][0]).at[5, :H3].set(p["be3"][0])

    b4p = jnp.zeros((1, OUT_PAD), jnp.float32).at[:, :H4].set(p["b4"])
    return dict(w1=w1p, w2=w2p, w3=w3p, w4=w4p, bn=bn, b4=b4p)


def divernet_forward(x, kp):
    """x: (B, 45) float32, kp: packed kernel params. Returns (B, 16) float32."""
    B = x.shape[0]
    xp = jnp.pad(x, ((0, 0), (0, IN_PAD - INPUT_DIM))).astype(jnp.bfloat16)
    args = (xp, kp["w1"], kp["bn"], kp["b4"], kp["w2"], kp["w3"], kp["w4"])

    flops = int(2 * B * (IN_PAD * H1 + H1 * H2 + H2 * H3 + H3 * OUT_PAD))
    bytes_accessed = int(
        sum(a.size * a.dtype.itemsize for a in args) + B * OUT_PAD * 4
    )
    cost = pl.CostEstimate(
        flops=flops, transcendentals=H1 + H2 + H3, bytes_accessed=bytes_accessed
    )

    vmem_spec = pl.BlockSpec(memory_space=pltpu.VMEM)
    hbm_spec = pl.BlockSpec(memory_space=pl.ANY)

    out = pl.pallas_call(
        divernet_kernel,
        out_shape=jax.ShapeDtypeStruct((B, OUT_PAD), jnp.float32),
        in_specs=[vmem_spec, vmem_spec, vmem_spec, vmem_spec,
                  hbm_spec, hbm_spec, hbm_spec],
        out_specs=vmem_spec,
        scratch_shapes=[
            pltpu.VMEM((H1, H2), jnp.bfloat16),        # w2 landing buffer (1 MiB)
            pltpu.VMEM((H2, H3), jnp.bfloat16),        # w3 landing buffer (256 KiB)
            pltpu.VMEM((H3, OUT_PAD), jnp.bfloat16),   # w4 landing buffer (64 KiB)
            pltpu.SemaphoreType.DMA((3,)),
        ],
        compiler_params=pltpu.CompilerParams(vmem_limit_bytes=16 * 1024 * 1024),
        cost_estimate=cost,
    )(*args)
    return out[:, :H4]


def init_params(key):
    """Deterministic PyTorch-style init (Kaiming-uniform-like, PyTorch shapes)."""
    ks = jax.random.split(key, 8)

    def linear(kw, kb, fan_in, fan_out):
        bound = 1.0 / (fan_in ** 0.5)
        w = jax.random.uniform(kw, (fan_in, fan_out), jnp.float32, -bound, bound)
        b = jax.random.uniform(kb, (1, fan_out), jnp.float32, -bound, bound)
        return w, b

    w1, b1 = linear(ks[0], ks[1], INPUT_DIM, H1)
    w2, b2 = linear(ks[2], ks[3], H1, H2)
    w3, b3 = linear(ks[4], ks[5], H2, H3)
    w4, b4 = linear(ks[6], ks[7], H3, H4)

    # BatchNorm affine params at PyTorch defaults (gamma=1, beta=0).
    return dict(
        w1=w1, b1=b1, g1=jnp.ones((1, H1), jnp.float32), be1=jnp.zeros((1, H1), jnp.float32),
        w2=w2, b2=b2, g2=jnp.ones((1, H2), jnp.float32), be2=jnp.zeros((1, H2), jnp.float32),
        w3=w3, b3=b3, g3=jnp.ones((1, H3), jnp.float32), be3=jnp.zeros((1, H3), jnp.float32),
        w4=w4, b4=b4,
    )


def reference_forward(x, p):
    """Pure-JAX reference with PyTorch semantics (biases + two-pass BN), using the
    same deliberate bf16 matmul-input / f32-accumulate precision choice as the kernel."""
    def dot(a, w):
        return jnp.dot(a.astype(jnp.bfloat16), w.astype(jnp.bfloat16),
                       preferred_element_type=jnp.float32)

    def bn_lrelu(h, g, be):
        mean = jnp.mean(h, axis=0, keepdims=True)
        var = jnp.mean((h - mean) ** 2, axis=0, keepdims=True)
        hn = (h - mean) / jnp.sqrt(var + EPS) * g + be
        return jnp.where(hn >= 0, hn, NEG_SLOPE * hn)

    h = bn_lrelu(dot(x, p["w1"]) + p["b1"], p["g1"], p["be1"])
    h = bn_lrelu(dot(h, p["w2"]) + p["b2"], p["g2"], p["be2"])
    h = bn_lrelu(dot(h, p["w3"]) + p["b3"], p["g3"], p["be3"])
    return dot(h, p["w4"]) + p["b4"]


if __name__ == "__main__":
    key = jax.random.PRNGKey(0)
    k_param, k_x = jax.random.split(key)

    # B=256 fills the 256-row MXU on v6e/v7x (>=128 suffices on v5e) and amortizes
    # launch overhead / weight DMA; BN batch stats are computed over the full batch.
    B = 256
    x = jax.random.normal(k_x, (B, INPUT_DIM), jnp.float32)

    params = init_params(k_param)
    kparams = prepare_kernel_params(params)

    out = jax.block_until_ready(divernet_forward(x, kparams))
    ref = reference_forward(x, params)

    assert out.shape == (B, H4)
    max_err = jnp.max(jnp.abs(out - ref))
    assert jnp.allclose(out, ref, atol=2e-2, rtol=2e-2), f"max abs err = {max_err}"
    print("KERNEL_OK")
</pallas_src>

<mosaic_0001>
module attributes {stable_mosaic.version = 11 : i64} {
  func.func @divernet_kernel(%arg0: memref<256x64xbf16, #tpu.memory_space<vmem>>, %arg1: memref<64x1024xbf16, #tpu.memory_space<vmem>>, %arg2: memref<6x1024xf32, #tpu.memory_space<vmem>>, %arg3: memref<1x128xf32, #tpu.memory_space<vmem>>, %arg4: memref<1024x512xbf16, #tpu.memory_space<any>>, %arg5: memref<512x256xbf16, #tpu.memory_space<any>>, %arg6: memref<256x128xbf16, #tpu.memory_space<any>>, %arg7: memref<256x128xf32, #tpu.memory_space<vmem>>, %arg8: memref<1024x512xbf16, #tpu.memory_space<vmem>>, %arg9: memref<512x256xbf16, #tpu.memory_space<vmem>>, %arg10: memref<256x128xbf16, #tpu.memory_space<vmem>>, %arg11: memref<3x!tpu.dma_semaphore, #tpu.memory_space<semaphore_mem>>) attributes {dimension_semantics = [], scalar_prefetch = 0 : i64, scratch_operands = 4 : i64, tpu.core_type = #tpu.core_type<tc>} {
    %c0_i32 = arith.constant 0 : i32
    %0 = tpu.memref_slice %arg11[%c0_i32] : memref<3x!tpu.dma_semaphore, #tpu.memory_space<semaphore_mem>> -> memref<1x!tpu.dma_semaphore, #tpu.memory_space<semaphore_mem>>
    %1 = tpu.memref_squeeze %0 : memref<1x!tpu.dma_semaphore, #tpu.memory_space<semaphore_mem>> -> memref<!tpu.dma_semaphore, #tpu.memory_space<semaphore_mem>>
    tpu.enqueue_dma source(%arg4 : memref<1024x512xbf16, #tpu.memory_space<any>>) target(%arg8 : memref<1024x512xbf16, #tpu.memory_space<vmem>>) target_semaphore(%1 : memref<!tpu.dma_semaphore, #tpu.memory_space<semaphore_mem>>)
    %c1_i32 = arith.constant 1 : i32
    %2 = tpu.memref_slice %arg11[%c1_i32] : memref<3x!tpu.dma_semaphore, #tpu.memory_space<semaphore_mem>> -> memref<1x!tpu.dma_semaphore, #tpu.memory_space<semaphore_mem>>
    %3 = tpu.memref_squeeze %2 : memref<1x!tpu.dma_semaphore, #tpu.memory_space<semaphore_mem>> -> memref<!tpu.dma_semaphore, #tpu.memory_space<semaphore_mem>>
    tpu.enqueue_dma source(%arg5 : memref<512x256xbf16, #tpu.memory_space<any>>) target(%arg9 : memref<512x256xbf16, #tpu.memory_space<vmem>>) target_semaphore(%3 : memref<!tpu.dma_semaphore, #tpu.memory_space<semaphore_mem>>)
    %c2_i32 = arith.constant 2 : i32
    %4 = tpu.memref_slice %arg11[%c2_i32] : memref<3x!tpu.dma_semaphore, #tpu.memory_space<semaphore_mem>> -> memref<1x!tpu.dma_semaphore, #tpu.memory_space<semaphore_mem>>
    %5 = tpu.memref_squeeze %4 : memref<1x!tpu.dma_semaphore, #tpu.memory_space<semaphore_mem>> -> memref<!tpu.dma_semaphore, #tpu.memory_space<semaphore_mem>>
    tpu.enqueue_dma source(%arg6 : memref<256x128xbf16, #tpu.memory_space<any>>) target(%arg10 : memref<256x128xbf16, #tpu.memory_space<vmem>>) target_semaphore(%5 : memref<!tpu.dma_semaphore, #tpu.memory_space<semaphore_mem>>)
    %c0 = arith.constant 0 : index
    %c0_0 = arith.constant 0 : index
    %6 = vector.load %arg0[%c0, %c0_0] : memref<256x64xbf16, #tpu.memory_space<vmem>>, vector<256x64xbf16>
    %c0_1 = arith.constant 0 : index
    %c0_2 = arith.constant 0 : index
    %7 = vector.load %arg1[%c0_1, %c0_2] : memref<64x1024xbf16, #tpu.memory_space<vmem>>, vector<64x1024xbf16>
    %cst = arith.constant dense<0.000000e+00> : vector<256x1024xf32>
    %8 = tpu.matmul %6, %7, %cst {dimension_numbers = #tpu.dot_dimension_numbers<[1], [0], [0], [1], [0, 0, 1, 1], [], []>} : vector<256x64xbf16>, vector<64x1024xbf16>, vector<256x1024xf32> -> vector<256x1024xf32>
    %c0_3 = arith.constant 0 : index
    %c0_4 = arith.constant 0 : index
    %9 = vector.load %arg2[%c0_3, %c0_4] : memref<6x1024xf32, #tpu.memory_space<vmem>>, vector<1x1024xf32>
    %c1 = arith.constant 1 : index
    %c0_5 = arith.constant 0 : index
    %10 = vector.load %arg2[%c1, %c0_5] : memref<6x1024xf32, #tpu.memory_space<vmem>>, vector<1x1024xf32>
    %cst_6 = arith.constant dense<0.000000e+00> : vector<1024xf32>
    %11 = vector.multi_reduction <add>, %8, %cst_6 [0] : vector<256x1024xf32> to vector<1024xf32>
    %12 = vector.shape_cast %11 : vector<1024xf32> to vector<1x1024xf32>
    %cst_7 = arith.constant 3.906250e-03 : f32
    %13 = vector.broadcast %cst_7 : f32 to vector<1x1024xf32>
    %14 = arith.mulf %12, %13 : vector<1x1024xf32>
    %15 = arith.mulf %8, %8 : vector<256x1024xf32>
    %cst_8 = arith.constant dense<0.000000e+00> : vector<1024xf32>
    %16 = vector.multi_reduction <add>, %15, %cst_8 [0] : vector<256x1024xf32> to vector<1024xf32>
    %17 = vector.shape_cast %16 : vector<1024xf32> to vector<1x1024xf32>
    %cst_9 = arith.constant 3.906250e-03 : f32
    %18 = vector.broadcast %cst_9 : f32 to vector<1x1024xf32>
    %19 = arith.mulf %17, %18 : vector<1x1024xf32>
    %20 = arith.mulf %14, %14 : vector<1x1024xf32>
    %21 = arith.subf %19, %20 : vector<1x1024xf32>
    %cst_10 = arith.constant 0.000000e+00 : f32
    %22 = vector.broadcast %cst_10 : f32 to vector<1x1024xf32>
    %23 = arith.maximumf %21, %22 : vector<1x1024xf32>
    %cst_11 = arith.constant 9.99999974E-6 : f32
    %24 = vector.broadcast %cst_11 : f32 to vector<1x1024xf32>
    %25 = arith.addf %23, %24 : vector<1x1024xf32>
    %26 = math.rsqrt %25 : vector<1x1024xf32>
    %27 = arith.mulf %9, %26 : vector<1x1024xf32>
    %28 = arith.mulf %14, %27 : vector<1x1024xf32>
    %29 = arith.subf %10, %28 : vector<1x1024xf32>
    %30 = vector.broadcast %27 : vector<1x1024xf32> to vector<256x1024xf32>
    %31 = arith.mulf %8, %30 : vector<256x1024xf32>
    %32 = vector.broadcast %29 : vector<1x1024xf32> to vector<256x1024xf32>
    %33 = arith.addf %31, %32 : vector<256x1024xf32>
    %cst_12 = arith.constant 0.000000e+00 : f32
    %34 = vector.broadcast %cst_12 : f32 to vector<256x1024xf32>
    %35 = arith.cmpf oge, %33, %34 : vector<256x1024xf32>
    %cst_13 = arith.constant 0.00999999977 : f32
    %36 = vector.broadcast %cst_13 : f32 to vector<256x1024xf32>
    %37 = arith.mulf %36, %33 : vector<256x1024xf32>
    %38 = arith.select %35, %33, %37 : vector<256x1024xi1>, vector<256x1024xf32>
    %c0_i32_14 = arith.constant 0 : i32
    %39 = tpu.memref_slice %arg11[%c0_i32_14] : memref<3x!tpu.dma_semaphore, #tpu.memory_space<semaphore_mem>> -> memref<1x!tpu.dma_semaphore, #tpu.memory_space<semaphore_mem>>
    %40 = tpu.memref_squeeze %39 : memref<1x!tpu.dma_semaphore, #tpu.memory_space<semaphore_mem>> -> memref<!tpu.dma_semaphore, #tpu.memory_space<semaphore_mem>>
    tpu.wait_dma2 semaphore(%40 : memref<!tpu.dma_semaphore, #tpu.memory_space<semaphore_mem>>) src(%arg4 : memref<1024x512xbf16, #tpu.memory_space<any>>) dst(%arg8 : memref<1024x512xbf16, #tpu.memory_space<vmem>>)
    %41 = arith.truncf %38 : vector<256x1024xf32> to vector<256x1024xbf16>
    %c0_15 = arith.constant 0 : index
    %c0_16 = arith.constant 0 : index
    %42 = vector.load %arg8[%c0_15, %c0_16] : memref<1024x512xbf16, #tpu.memory_space<vmem>>, vector<1024x512xbf16>
    %cst_17 = arith.constant dense<0.000000e+00> : vector<256x512xf32>
    %43 = tpu.matmul %41, %42, %cst_17 {dimension_numbers = #tpu.dot_dimension_numbers<[1], [0], [0], [1], [0, 0, 1, 1], [], []>} : vector<256x1024xbf16>, vector<1024x512xbf16>, vector<256x512xf32> -> vector<256x512xf32>
    %c2 = arith.constant 2 : index
    %c0_18 = arith.constant 0 : index
    %44 = vector.load %arg2[%c2, %c0_18] : memref<6x1024xf32, #tpu.memory_space<vmem>>, vector<1x512xf32>
    %c3 = arith.constant 3 : index
    %c0_19 = arith.constant 0 : index
    %45 = vector.load %arg2[%c3, %c0_19] : memref<6x1024xf32, #tpu.memory_space<vmem>>, vector<1x512xf32>
    %cst_20 = arith.constant dense<0.000000e+00> : vector<512xf32>
    %46 = vector.multi_reduction <add>, %43, %cst_20 [0] : vector<256x512xf32> to vector<512xf32>
    %47 = vector.shape_cast %46 : vector<512xf32> to vector<1x512xf32>
    %cst_21 = arith.constant 3.906250e-03 : f32
    %48 = vector.broadcast %cst_21 : f32 to vector<1x512xf32>
    %49 = arith.mulf %47, %48 : vector<1x512xf32>
    %50 = arith.mulf %43, %43 : vector<256x512xf32>
    %cst_22 = arith.constant dense<0.000000e+00> : vector<512xf32>
    %51 = vector.multi_reduction <add>, %50, %cst_22 [0] : vector<256x512xf32> to vector<512xf32>
    %52 = vector.shape_cast %51 : vector<512xf32> to vector<1x512xf32>
    %cst_23 = arith.constant 3.906250e-03 : f32
    %53 = vector.broadcast %cst_23 : f32 to vector<1x512xf32>
    %54 = arith.mulf %52, %53 : vector<1x512xf32>
    %55 = arith.mulf %49, %49 : vector<1x512xf32>
    %56 = arith.subf %54, %55 : vector<1x512xf32>
    %cst_24 = arith.constant 0.000000e+00 : f32
    %57 = vector.broadcast %cst_24 : f32 to vector<1x512xf32>
    %58 = arith.maximumf %56, %57 : vector<1x512xf32>
    %cst_25 = arith.constant 9.99999974E-6 : f32
    %59 = vector.broadcast %cst_25 : f32 to vector<1x512xf32>
    %60 = arith.addf %58, %59 : vector<1x512xf32>
    %61 = math.rsqrt %60 : vector<1x512xf32>
    %62 = arith.mulf %44, %61 : vector<1x512xf32>
    %63 = arith.mulf %49, %62 : vector<1x512xf32>
    %64 = arith.subf %45, %63 : vector<1x512xf32>
    %65 = vector.broadcast %62 : vector<1x512xf32> to vector<256x512xf32>
    %66 = arith.mulf %43, %65 : vector<256x512xf32>
    %67 = vector.broadcast %64 : vector<1x512xf32> to vector<256x512xf32>
    %68 = arith.addf %66, %67 : vector<256x512xf32>
    %cst_26 = arith.constant 0.000000e+00 : f32
    %69 = vector.broadcast %cst_26 : f32 to vector<256x512xf32>
    %70 = arith.cmpf oge, %68, %69 : vector<256x512xf32>
    %cst_27 = arith.constant 0.00999999977 : f32
    %71 = vector.broadcast %cst_27 : f32 to vector<256x512xf32>
    %72 = arith.mulf %71, %68 : vector<256x512xf32>
    %73 = arith.select %70, %68, %72 : vector<256x512xi1>, vector<256x512xf32>
    %c1_i32_28 = arith.constant 1 : i32
    %74 = tpu.memref_slice %arg11[%c1_i32_28] : memref<3x!tpu.dma_semaphore, #tpu.memory_space<semaphore_mem>> -> memref<1x!tpu.dma_semaphore, #tpu.memory_space<semaphore_mem>>
    %75 = tpu.memref_squeeze %74 : memref<1x!tpu.dma_semaphore, #tpu.memory_space<semaphore_mem>> -> memref<!tpu.dma_semaphore, #tpu.memory_space<semaphore_mem>>
    tpu.wait_dma2 semaphore(%75 : memref<!tpu.dma_semaphore, #tpu.memory_space<semaphore_mem>>) src(%arg5 : memref<512x256xbf16, #tpu.memory_space<any>>) dst(%arg9 : memref<512x256xbf16, #tpu.memory_space<vmem>>)
    %76 = arith.truncf %73 : vector<256x512xf32> to vector<256x512xbf16>
    %c0_29 = arith.constant 0 : index
    %c0_30 = arith.constant 0 : index
    %77 = vector.load %arg9[%c0_29, %c0_30] : memref<512x256xbf16, #tpu.memory_space<vmem>>, vector<512x256xbf16>
    %cst_31 = arith.constant dense<0.000000e+00> : vector<256x256xf32>
    %78 = tpu.matmul %76, %77, %cst_31 {dimension_numbers = #tpu.dot_dimension_numbers<[1], [0], [0], [1], [0, 0, 1, 1], [], []>} : vector<256x512xbf16>, vector<512x256xbf16>, vector<256x256xf32> -> vector<256x256xf32>
    %c4 = arith.constant 4 : index
    %c0_32 = arith.constant 0 : index
    %79 = vector.load %arg2[%c4, %c0_32] : memref<6x1024xf32, #tpu.memory_space<vmem>>, vector<1x256xf32>
    %c5 = arith.constant 5 : index
    %c0_33 = arith.constant 0 : index
    %80 = vector.load %arg2[%c5, %c0_33] : memref<6x1024xf32, #tpu.memory_space<vmem>>, vector<1x256xf32>
    %cst_34 = arith.constant dense<0.000000e+00> : vector<256xf32>
    %81 = vector.multi_reduction <add>, %78, %cst_34 [0] : vector<256x256xf32> to vector<256xf32>
    %82 = vector.shape_cast %81 : vector<256xf32> to vector<1x256xf32>
    %cst_35 = arith.constant 3.906250e-03 : f32
    %83 = vector.broadcast %cst_35 : f32 to vector<1x256xf32>
    %84 = arith.mulf %82, %83 : vector<1x256xf32>
    %85 = arith.mulf %78, %78 : vector<256x256xf32>
    %cst_36 = arith.constant dense<0.000000e+00> : vector<256xf32>
    %86 = vector.multi_reduction <add>, %85, %cst_36 [0] : vector<256x256xf32> to vector<256xf32>
    %87 = vector.shape_cast %86 : vector<256xf32> to vector<1x256xf32>
    %cst_37 = arith.constant 3.906250e-03 : f32
    %88 = vector.broadcast %cst_37 : f32 to vector<1x256xf32>
    %89 = arith.mulf %87, %88 : vector<1x256xf32>
    %90 = arith.mulf %84, %84 : vector<1x256xf32>
    %91 = arith.subf %89, %90 : vector<1x256xf32>
    %cst_38 = arith.constant 0.000000e+00 : f32
    %92 = vector.broadcast %cst_38 : f32 to vector<1x256xf32>
    %93 = arith.maximumf %91, %92 : vector<1x256xf32>
    %cst_39 = arith.constant 9.99999974E-6 : f32
    %94 = vector.broadcast %cst_39 : f32 to vector<1x256xf32>
    %95 = arith.addf %93, %94 : vector<1x256xf32>
    %96 = math.rsqrt %95 : vector<1x256xf32>
    %97 = arith.mulf %79, %96 : vector<1x256xf32>
    %98 = arith.mulf %84, %97 : vector<1x256xf32>
    %99 = arith.subf %80, %98 : vector<1x256xf32>
    %100 = vector.broadcast %97 : vector<1x256xf32> to vector<256x256xf32>
    %101 = arith.mulf %78, %100 : vector<256x256xf32>
    %102 = vector.broadcast %99 : vector<1x256xf32> to vector<256x256xf32>
    %103 = arith.addf %101, %102 : vector<256x256xf32>
    %cst_40 = arith.constant 0.000000e+00 : f32
    %104 = vector.broadcast %cst_40 : f32 to vector<256x256xf32>
    %105 = arith.cmpf oge, %103, %104 : vector<256x256xf32>
    %cst_41 = arith.constant 0.00999999977 : f32
    %106 = vector.broadcast %cst_41 : f32 to vector<256x256xf32>
    %107 = arith.mulf %106, %103 : vector<256x256xf32>
    %108 = arith.select %105, %103, %107 : vector<256x256xi1>, vector<256x256xf32>
    %c2_i32_42 = arith.constant 2 : i32
    %109 = tpu.memref_slice %arg11[%c2_i32_42] : memref<3x!tpu.dma_semaphore, #tpu.memory_space<semaphore_mem>> -> memref<1x!tpu.dma_semaphore, #tpu.memory_space<semaphore_mem>>
    %110 = tpu.memref_squeeze %109 : memref<1x!tpu.dma_semaphore, #tpu.memory_space<semaphore_mem>> -> memref<!tpu.dma_semaphore, #tpu.memory_space<semaphore_mem>>
    tpu.wait_dma2 semaphore(%110 : memref<!tpu.dma_semaphore, #tpu.memory_space<semaphore_mem>>) src(%arg6 : memref<256x128xbf16, #tpu.memory_space<any>>) dst(%arg10 : memref<256x128xbf16, #tpu.memory_space<vmem>>)
    %111 = arith.truncf %108 : vector<256x256xf32> to vector<256x256xbf16>
    %c0_43 = arith.constant 0 : index
    %c0_44 = arith.constant 0 : index
    %112 = vector.load %arg10[%c0_43, %c0_44] : memref<256x128xbf16, #tpu.memory_space<vmem>>, vector<256x128xbf16>
    %cst_45 = arith.constant dense<0.000000e+00> : vector<256x128xf32>
    %113 = tpu.matmul %111, %112, %cst_45 {dimension_numbers = #tpu.dot_dimension_numbers<[1], [0], [0], [1], [0, 0, 1, 1], [], []>} : vector<256x256xbf16>, vector<256x128xbf16>, vector<256x128xf32> -> vector<256x128xf32>
    %c0_46 = arith.constant 0 : index
    %c0_47 = arith.constant 0 : index
    %114 = vector.load %arg3[%c0_46, %c0_47] : memref<1x128xf32, #tpu.memory_space<vmem>>, vector<1x128xf32>
    %115 = vector.broadcast %114 : vector<1x128xf32> to vector<256x128xf32>
    %116 = arith.addf %113, %115 : vector<256x128xf32>
    %c0_48 = arith.constant 0 : index
    %c0_49 = arith.constant 0 : index
    %117 = vector.load %arg7[%c0_48, %c0_49] : memref<256x128xf32, #tpu.memory_space<vmem>>, vector<256x128xf32>
    tpu.vector_store %arg7[%c0_48, %c0_49], %116 {strides = array<i32>} : memref<256x128xf32, #tpu.memory_space<vmem>>, vector<256x128xf32>,
    return
  }
}

</mosaic_0001>

<llo_original>
// kernel: tpu_custom_call.1
$region0: #{tpu_custom_call.1}
  #allocation0 [shape = 'u32[]', space=smem, size = 0x4, offset = 0x4, fixed_abs, tag = 'smem constant byte address 0x4 - core index']
  #allocation1 [shape = 'u32[144,128]{1,0:T(1,128)}', space=vmem, size = 0x12000, scoped, tag = 'internal scratch']
  #allocation2 [shape = 'bf16[1024,512]{1,0:T(16,128)(2,1)}', space=vmem, size = 0x100000, scoped, tag = 'scratch operand']
  #allocation3 [shape = 'bf16[512,256]{1,0:T(16,128)(2,1)}', space=vmem, size = 0x40000, scoped, tag = 'scratch operand']
  #allocation4 [shape = 'bf16[256,128]{1,0:T(16,128)(2,1)}', space=vmem, size = 0x10000, scoped, tag = 'scratch operand']
  #allocation5 [shape = 's32[3]{0}', space=sflag, size = 0xc, scoped, tag = 'scratch operand']
  #allocation10 [shape = 's32[]', space=sflag, size = 0x4, offset = 0, fixed_abs, tag = 'sflag constant byte address 0x0 - dummy sync flag']
  #allocation12 [shape = 's32[]', space=sflag, size = 0x4, offset = 0, fixed_abs, tag = 'sflag constant byte address 0x0 - dummy sync flag']
  #allocation14 [shape = 's32[]', space=sflag, size = 0x4, offset = 0, fixed_abs, tag = 'sflag constant byte address 0x0 - dummy sync flag']
  %s0 = inlined_call_operand.vmem [shape: bf16[256,64], index: 0, kind: input, shape index: {}]
  %s1 = inlined_call_operand.hbm [shape: bf16[64,1024], index: 1, kind: input, shape index: {}]
  %s2 = inlined_call_operand.vmem [shape: f32[6,1024], index: 2, kind: input, shape index: {}]
  %s3 = inlined_call_operand.vmem [shape: f32[1,128], index: 3, kind: input, shape index: {}]
  %s4 = inlined_call_operand.hbm [shape: bf16[1024,512], index: 4, kind: input, shape index: {}]
  %s5 = inlined_call_operand.hbm [shape: bf16[512,256], index: 5, kind: input, shape index: {}]
  %s6 = inlined_call_operand.vmem [shape: bf16[256,128], index: 6, kind: input, shape index: {}]
  %s7 = inlined_call_operand.hbm [shape: f32[256,128], index: 7, kind: output, shape index: {}]
  %s8 = sld [smem:[#allocation0]]
  $region64: #{tpu_custom_call.1} parent=0
    _
  %s10 = ssub.s32 1, %s8
  %s11 = scalar_select 0, %s10, %s8
  $region1: #{tpu_custom_call.1} parent=0
    #allocation6 [shape = 'u8[131072]{0}', space=vmem, size = 0x20000, scoped, tag = 'input window, operand 1, single buffered']
    #allocation7 [shape = 's32[1]{0}', space=sflag, size = 0x4, scoped, tag = 'scoped memory for tpu_custom_call.1']
    #allocation8 [shape = 's32[1]{0}', space=sflag, size = 0x4, scoped, tag = 'scoped memory for tpu_custom_call.1']
    #allocation9 [shape = 'u8[131072]{0}', space=vmem, size = 0x20000, scoped, tag = 'output window, operand 0, single buffered']
    #allocation11 [shape = 'u32[9]{0}', space=smem, size = 0x24, scoped, tag = 'DMA stride descriptor']
    #allocation13 [shape = 'u32[9]{0}', space=smem, size = 0x24, scoped, tag = 'DMA stride descriptor']
    %12 = vsyncpa [#allocation7], 0
    %13 = vsyncpa [#allocation8], 0
    // Predicated region
    $region2: #{tpu_custom_call.1} parent=1 // pred_check
      _
    $region3: #{tpu_custom_call.1} parent=1 // pred_check_branch
      %15 = sbr.rel (0) target = $region5
    $region4: #{tpu_custom_call.1} parent=1 // pred_region
      _
    $region5: #{tpu_custom_call.1} parent=1 // pred_fallthru
      _
    // Predicated region
    $region6: #{tpu_custom_call.1} parent=1 // pred_check
      _
    $region7: #{tpu_custom_call.1} parent=1 // pred_check_branch
      %17 = sbr.rel (0) target = $region9
    $region8: #{tpu_custom_call.1} parent=1 // pred_region
      %s19 = ssub.s32 4096, 4096
      %20 = vsyncadd [#allocation7], %s19
      %s21 = sshll.u32 [#allocation6], 4
      %s22 = int_to_ptr.vmem [resolvable:$true] %s21
      %27 = dma.hbm_to_vmem [thread:$0]  %s1, 4096, %s22, [#allocation7], 512, 512, 32
    $region9: #{tpu_custom_call.1} parent=1 // pred_fallthru
      _
    // Predicated region
    $region10: #{tpu_custom_call.1} parent=1 // pred_check
      _
    $region11: #{tpu_custom_call.1} parent=1 // pred_check_branch
      %29 = sbr.rel (0) target = $region13
    $region12: #{tpu_custom_call.1} parent=1 // pred_region
      _
    $region13: #{tpu_custom_call.1} parent=1 // pred_fallthru
      _
    // Predicated region
    $region14: #{tpu_custom_call.1} parent=1 // pred_check
      _
    $region15: #{tpu_custom_call.1} parent=1 // pred_check_branch
      %31 = sbr.rel (0) target = $region17
    $region16: #{tpu_custom_call.1} parent=1 // pred_region
      _
    $region17: #{tpu_custom_call.1} parent=1 // pred_fallthru
      _
    // Predicated region
    $region18: #{tpu_custom_call.1} parent=1 // pred_check
      _
    $region19: #{tpu_custom_call.1} parent=1 // pred_check_branch
      %33 = sbr.rel (0) target = $region21
    $region20: #{tpu_custom_call.1} parent=1 // pred_region
      %34 = dma.done [#allocation7], 4096
    $region21: #{tpu_custom_call.1} parent=1 // pred_fallthru
      _
    %s37 = sshll.u32 1, 14
    %s38 = sxor.u32 4294967295, %s37
    %s40 = sld [smem:[#allocation0]]
    %s41 = sadd.s32 2, %s40
    %s43 = sshll.u32 7, 26
    %s44 = sxor.u32 4294967295, %s43
    %s45 = sand.u32 0, %s44
    %s46 = sshll.u32 %s41, 26
    %s47 = sor.u32 %s45, %s46
    %s48 = sshll.u32 [#allocation2], 4
    %s49 = int_to_ptr.vmem [resolvable:$true] %s48
    %52 = sst [smem:[#allocation11]] 512
    %s53 = scalar_lea.smem [#allocation11], 1
    %54 = sst [smem:[%s53]] 512
    %s55 = scalar_lea.smem [#allocation11], 2
    %56 = sst [smem:[%s55]] 4
    %s57 = scalar_lea.smem [#allocation11], 3
    %58 = sst [smem:[%s57]] 64
    %s59 = scalar_lea.smem [#allocation11], 4
    %60 = sst [smem:[%s59]] 128
    %s61 = scalar_lea.smem [#allocation11], 5
    %62 = sst [smem:[%s61]] 2
    %s63 = scalar_lea.smem [#allocation11], 6
    %64 = sst [smem:[%s63]] 256
    %s65 = scalar_lea.smem [#allocation11], 7
    %66 = sst [smem:[%s65]] 64
    %s67 = scalar_lea.smem [#allocation11], 8
    %68 = sst [smem:[%s67]] 4
    %70 = dma.general %s4, 32768, %s49, [#allocation5], [#allocation10], [#allocation11], %s47, 0
    %s71 = scalar_lea.sflag [#allocation5], 1
    %s73 = sshll.u32 1, 14
    %s74 = sxor.u32 4294967295, %s73
    %s76 = sadd.s32 2, %s40
    %s78 = sshll.u32 7, 26
    %s79 = sxor.u32 4294967295, %s78
    %s80 = sand.u32 0, %s79
    %s81 = sshll.u32 %s76, 26
    %s82 = sor.u32 %s80, %s81
    %s83 = sshll.u32 [#allocation3], 4
    %s84 = int_to_ptr.vmem [resolvable:$true] %s83
    %87 = sst [smem:[#allocation13]] 256
    %s88 = scalar_lea.smem [#allocation13], 1
    %89 = sst [smem:[%s88]] 256
    %s90 = scalar_lea.smem [#allocation13], 2
    %91 = sst [smem:[%s90]] 2
    %s92 = scalar_lea.smem [#allocation13], 3
    %93 = sst [smem:[%s92]] 64
    %s94 = scalar_lea.smem [#allocation13], 4
    %95 = sst [smem:[%s94]] 128
    %s96 = scalar_lea.smem [#allocation13], 5
    %97 = sst [smem:[%s96]] 2
    %s98 = scalar_lea.smem [#allocation13], 6
    %99 = sst [smem:[%s98]] 128
    %s100 = scalar_lea.smem [#allocation13], 7
    %101 = sst [smem:[%s100]] 64
    %s102 = scalar_lea.smem [#allocation13], 8
    %103 = sst [smem:[%s102]] 4
    %105 = dma.general %s5, 8192, %s84, %s71, [#allocation12], [#allocation13], %s82, 0
    %s106 = scalar_lea.sflag [#allocation5], 2
    %p108 = scmp.lt.u32.totalorder 128, 8
    %p109 = pneg %p108
    // Predicated region
    $region22: #{tpu_custom_call.1} parent=1 // pred_check
      _
    $region23: #{tpu_custom_call.1} parent=1 // pred_check_branch
      %111 = sbr.rel (%p108) target = $region25
    $region24: #{tpu_custom_call.1} parent=1 // pred_region
      %s126 = sand.u32 128, 7
      %p127 = scmp.eq.s32.totalorder %s126, 0
      // Predicated region
      $region37: #{tpu_custom_call.1} parent=24 // pred_check
        %p128 = pneg %p127
      $region38: #{tpu_custom_call.1} parent=24 // pred_check_branch
        %130 = sbr.rel (%p128) target = $region40
      $region39: #{tpu_custom_call.1} parent=24 // pred_region
        loop: start=0, step=1, limit=1
        $region41: #{tpu_custom_call.1} parent=39 // loop_pre_header
          _
        $region42: #{tpu_custom_call.1} parent=39 // loop_header
          %s132 = sphi 0, %s136
          %p133 = scmp.ge.s32.totalorder %s132, 1
          %s137 = sphi %s6, %s6
          %s138 = sphi [#allocation4], [#allocation4]
        $region43: #{tpu_custom_call.1} parent=39 // loop_header_branch
          %135 = sbr.rel (%p133) target = $region47
        $region44: #{tpu_custom_call.1} parent=39 // loop_body
          %v139 = vld [vmem:[%s137] sm:$0xff]
          %140 = vst [vmem:[%s138] sm:$0xff] %v139
          %v141 = vld [vmem:[%s137 + $0x8] sm:$0xff]
          %142 = vst [vmem:[%s138 + $0x8] sm:$0xff] %v141
          %v143 = vld [vmem:[%s137 + $0x10] sm:$0xff]
          %144 = vst [vmem:[%s138 + $0x10] sm:$0xff] %v143
          %v145 = vld [vmem:[%s137 + $0x18] sm:$0xff]
          %146 = vst [vmem:[%s138 + $0x18] sm:$0xff] %v145
          %v147 = vld [vmem:[%s137 + $0x20] sm:$0xff]
          %148 = vst [vmem:[%s138 + $0x20] sm:$0xff] %v147
          %v149 = vld [vmem:[%s137 + $0x28] sm:$0xff]
          %150 = vst [vmem:[%s138 + $0x28] sm:$0xff] %v149
          %v151 = vld [vmem:[%s137 + $0x30] sm:$0xff]
          %152 = vst [vmem:[%s138 + $0x30] sm:$0xff] %v151
          %v153 = vld [vmem:[%s137 + $0x38] sm:$0xff]
          %154 = vst [vmem:[%s138 + $0x38] sm:$0xff] %v153
          %v155 = vld [vmem:[%s137 + $0x40] sm:$0xff]
          %156 = vst [vmem:[%s138 + $0x40] sm:$0xff] %v155
          %v157 = vld [vmem:[%s137 + $0x48] sm:$0xff]
          %158 = vst [vmem:[%s138 + $0x48] sm:$0xff] %v157
          %v159 = vld [vmem:[%s137 + $0x50] sm:$0xff]
          %160 = vst [vmem:[%s138 + $0x50] sm:$0xff] %v159
          %v161 = vld [vmem:[%s137 + $0x58] sm:$0xff]
          %162 = vst [vmem:[%s138 + $0x58] sm:$0xff] %v161
          %v163 = vld [vmem:[%s137 + $0x60] sm:$0xff]
          %164 = vst [vmem:[%s138 + $0x60] sm:$0xff] %v163
          %v165 = vld [vmem:[%s137 + $0x68] sm:$0xff]
          %166 = vst [vmem:[%s138 + $0x68] sm:$0xff] %v165
          %v167 = vld [vmem:[%s137 + $0x70] sm:$0xff]
          %168 = vst [vmem:[%s138 + $0x70] sm:$0xff] %v167
          %v169 = vld [vmem:[%s137 + $0x78] sm:$0xff]
          %170 = vst [vmem:[%s138 + $0x78] sm:$0xff] %v169
        $region45: #{tpu_custom_call.1} parent=39 // loop_footer
          %s136 = sadd.s32 1, %s132
        $region46: #{tpu_custom_call.1} parent=39 // loop_footer_branch
          %131 = sbr.rel target = $region42
        $region47: #{tpu_custom_call.1} parent=39 // loop_exit
          _
      $region40: #{tpu_custom_call.1} parent=24 // pred_fallthru
        _
      %p171 = pneg %p127
      // Predicated region
      $region48: #{tpu_custom_call.1} parent=24 // pred_check
        _
      $region49: #{tpu_custom_call.1} parent=24 // pred_check_branch
        %173 = sbr.rel (%p127) target = $region51
      $region50: #{tpu_custom_call.1} parent=24 // pred_region
        %s174 = sand.u32 128, 7
      $region51: #{tpu_custom_call.1} parent=24 // pred_fallthru
        _
    $region25: #{tpu_custom_call.1} parent=1 // pred_fallthru
      _
    // Predicated region
    $region26: #{tpu_custom_call.1} parent=1 // pred_check
      %p112 = pneg %p108
    $region27: #{tpu_custom_call.1} parent=1 // pred_check_branch
      %114 = sbr.rel (%p112) target = $region29
    $region28: #{tpu_custom_call.1} parent=1 // pred_region
      %s115 = sshllo.u32 0, 128
      loop: start=0, step=1, limit=1
      $region30: #{tpu_custom_call.1} parent=28 // loop_pre_header
        _
      $region31: #{tpu_custom_call.1} parent=28 // loop_header
        %s117 = sphi 0, %s121
        %p118 = scmp.ge.s32.totalorder %s117, 1
        %s122 = sphi %s6, %s6
        %s123 = sphi [#allocation4], [#allocation4]
      $region32: #{tpu_custom_call.1} parent=28 // loop_header_branch
        %120 = sbr.rel (%p118) target = $region36
      $region33: #{tpu_custom_call.1} parent=28 // loop_body
        %v124 = vld [vmem:[%s122] sm:%s115]
        %125 = vst [vmem:[%s123] sm:%s115] %v124
      $region34: #{tpu_custom_call.1} parent=28 // loop_footer
        %s121 = sadd.s32 1, %s117
      $region35: #{tpu_custom_call.1} parent=28 // loop_footer_branch
        %116 = sbr.rel target = $region31
      $region36: #{tpu_custom_call.1} parent=28 // loop_exit
        _
    $region29: #{tpu_custom_call.1} parent=1 // pred_fallthru
      _
    // Predicated region
    $region52: #{tpu_custom_call.1} parent=1 // pred_check
      _
    $region53: #{tpu_custom_call.1} parent=1 // pred_check_branch
      %177 = sbr.rel (0) target = $region55
    $region54: #{tpu_custom_call.1} parent=1 // pred_region
      %178 = vsyncadd %s106, 2048
    $region55: #{tpu_custom_call.1} parent=1 // pred_fallthru
      _
    %v179 = vld [vmem:[%s0] sm:$0xf]
    %v180 = vld [vmem:[%s0 + $0x4] sm:$0xf]
    %v181 = vld [vmem:[%s0 + $0x8] sm:$0xf]
    %v182 = vld [vmem:[%s0 + $0xc] sm:$0xf]
    %v183 = vld [vmem:[%s0 + $0x10] sm:$0xf]
    %v184 = vld [vmem:[%s0 + $0x14] sm:$0xf]
    %v185 = vld [vmem:[%s0 + $0x18] sm:$0xf]
    %v186 = vld [vmem:[%s0 + $0x1c] sm:$0xf]
    %v187 = vld [vmem:[%s0 + $0x20] sm:$0xf]
    %v188 = vld [vmem:[%s0 + $0x24] sm:$0xf]
    %v189 = vld [vmem:[%s0 + $0x28] sm:$0xf]
    %v190 = vld [vmem:[%s0 + $0x2c] sm:$0xf]
    %v191 = vld [vmem:[%s0 + $0x30] sm:$0xf]
    %v192 = vld [vmem:[%s0 + $0x34] sm:$0xf]
    %v193 = vld [vmem:[%s0 + $0x38] sm:$0xf]
    %v194 = vld [vmem:[%s0 + $0x3c] sm:$0xf]
    %v195 = vld [vmem:[%s0 + $0x40] sm:$0xf]
    %v196 = vld [vmem:[%s0 + $0x44] sm:$0xf]
    %v197 = vld [vmem:[%s0 + $0x48] sm:$0xf]
    %v198 = vld [vmem:[%s0 + $0x4c] sm:$0xf]
    %v199 = vld [vmem:[%s0 + $0x50] sm:$0xf]
    %v200 = vld [vmem:[%s0 + $0x54] sm:$0xf]
    %v201 = vld [vmem:[%s0 + $0x58] sm:$0xf]
    %v202 = vld [vmem:[%s0 + $0x5c] sm:$0xf]
    %v203 = vld [vmem:[%s0 + $0x60] sm:$0xf]
    %v204 = vld [vmem:[%s0 + $0x64] sm:$0xf]
    %v205 = vld [vmem:[%s0 + $0x68] sm:$0xf]
    %v206 = vld [vmem:[%s0 + $0x6c] sm:$0xf]
    %v207 = vld [vmem:[%s0 + $0x70] sm:$0xf]
    %v208 = vld [vmem:[%s0 + $0x74] sm:$0xf]
    %v209 = vld [vmem:[%s0 + $0x78] sm:$0xf]
    %v210 = vld [vmem:[%s0 + $0x7c] sm:$0xf]
    %v211 = vld [vmem:[#allocation6] sm:$0xff]
    %v212 = vld [vmem:[#allocation6 + $0x8] sm:$0xff]
    %v213 = vld [vmem:[#allocation6 + $0x10] sm:$0xff]
    %v214 = vld [vmem:[#allocation6 + $0x18] sm:$0xff]
    %v215 = vld [vmem:[#allocation6 + $0x20] sm:$0xff]
    %v216 = vld [vmem:[#allocation6 + $0x28] sm:$0xff]
    %v217 = vld [vmem:[#allocation6 + $0x30] sm:$0xff]
    %v218 = vld [vmem:[#allocation6 + $0x38] sm:$0xff]
    %v219 = vld [vmem:[#allocation6 + $0x40] sm:$0xff]
    %v220 = vld [vmem:[#allocation6 + $0x48] sm:$0xff]
    %v221 = vld [vmem:[#allocation6 + $0x50] sm:$0xff]
    %v222 = vld [vmem:[#allocation6 + $0x58] sm:$0xff]
    %v223 = vld [vmem:[#allocation6 + $0x60] sm:$0xff]
    %v224 = vld [vmem:[#allocation6 + $0x68] sm:$0xff]
    %v225 = vld [vmem:[#allocation6 + $0x70] sm:$0xff]
    %v226 = vld [vmem:[#allocation6 + $0x78] sm:$0xff]
    %v227 = vld [vmem:[#allocation6 + $0x80] sm:$0xff]
    %v228 = vld [vmem:[#allocation6 + $0x88] sm:$0xff]
    %v229 = vld [vmem:[#allocation6 + $0x90] sm:$0xff]
    %v230 = vld [vmem:[#allocation6 + $0x98] sm:$0xff]
    %v231 = vld [vmem:[#allocation6 + $0xa0] sm:$0xff]
    %v232 = vld [vmem:[#allocation6 + $0xa8] sm:$0xff]
    %v233 = vld [vmem:[#allocation6 + $0xb0] sm:$0xff]
    %v234 = vld [vmem:[#allocation6 + $0xb8] sm:$0xff]
    %v235 = vld [vmem:[#allocation6 + $0xc0] sm:$0xff]
    %v236 = vld [vmem:[#allocation6 + $0xc8] sm:$0xff]
    %v237 = vld [vmem:[#allocation6 + $0xd0] sm:$0xff]
    %v238 = vld [vmem:[#allocation6 + $0xd8] sm:$0xff]
    %v239 = vld [vmem:[#allocation6 + $0xe0] sm:$0xff]
    %v240 = vld [vmem:[#allocation6 + $0xe8] sm:$0xff]
    %v241 = vld [vmem:[#allocation6 + $0xf0] sm:$0xff]
    %v242 = vld [vmem:[#allocation6 + $0xf8] sm:$0xff]
    %v275 = vunpack.c.l.b16 %v179
    %v276 = vunpack.c.l.b16 %v180
    %v277 = vunpack.c.l.b16 %v181
    %v278 = vunpack.c.l.b16 %v182
    %v279 = vunpack.c.l.b16 %v183
    %v280 = vunpack.c.l.b16 %v184
    %v281 = vunpack.c.l.b16 %v185
    %v282 = vunpack.c.l.b16 %v186
    %v283 = vunpack.c.l.b16 %v187
    %v284 = vunpack.c.l.b16 %v188
    %v285 = vunpack.c.l.b16 %v189
    %v286 = vunpack.c.l.b16 %v190
    %v287 = vunpack.c.l.b16 %v191
    %v288 = vunpack.c.l.b16 %v192
    %v289 = vunpack.c.l.b16 %v193
    %v290 = vunpack.c.l.b16 %v194
    %v291 = vunpack.c.l.b16 %v195
    %v292 = vunpack.c.l.b16 %v196
    %v293 = vunpack.c.l.b16 %v197
    %v294 = vunpack.c.l.b16 %v198
    %v295 = vunpack.c.l.b16 %v199
    %v296 = vunpack.c.l.b16 %v200
    %v297 = vunpack.c.l.b16 %v201
    %v298 = vunpack.c.l.b16 %v202
    %v299 = vunpack.c.l.b16 %v203
    %v300 = vunpack.c.l.b16 %v204
    %v301 = vunpack.c.l.b16 %v205
    %v302 = vunpack.c.l.b16 %v206
    %v303 = vunpack.c.l.b16 %v207
    %v304 = vunpack.c.l.b16 %v208
    %v305 = vunpack.c.l.b16 %v209
    %v306 = vunpack.c.l.b16 %v210
    %v307 = vpack.c.b16 %v276, %v275
    %v308 = vpack.c.b16 %v278, %v277
    %v309 = vpack.c.b16 %v280, %v279
    %v310 = vpack.c.b16 %v282, %v281
    %v311 = vpack.c.b16 %v284, %v283
    %v312 = vpack.c.b16 %v286, %v285
    %v313 = vpack.c.b16 %v288, %v287
    %v314 = vpack.c.b16 %v290, %v289
    %v315 = vpack.c.b16 %v292, %v291
    %v316 = vpack.c.b16 %v294, %v293
    %v317 = vpack.c.b16 %v296, %v295
    %v318 = vpack.c.b16 %v298, %v297
    %v319 = vpack.c.b16 %v300, %v299
    %v320 = vpack.c.b16 %v302, %v301
    %v321 = vpack.c.b16 %v304, %v303
    %v322 = vpack.c.b16 %v306, %v305
    %v355 = vunpack.c.l.b16 %v211
    %v356 = vunpack.c.h.b16 %v211
    %v357 = vunpack.c.l.b16 %v212
    %v358 = vunpack.c.h.b16 %v212
    %v359 = vunpack.c.l.b16 %v213
    %v360 = vunpack.c.h.b16 %v213
    %v361 = vunpack.c.l.b16 %v214
    %v362 = vunpack.c.h.b16 %v214
    %v363 = vunpack.c.l.b16 %v215
    %v364 = vunpack.c.h.b16 %v215
    %v365 = vunpack.c.l.b16 %v216
    %v366 = vunpack.c.h.b16 %v216
    %v367 = vunpack.c.l.b16 %v217
    %v368 = vunpack.c.h.b16 %v217
    %v369 = vunpack.c.l.b16 %v218
    %v370 = vunpack.c.h.b16 %v218
    %v371 = vunpack.c.l.b16 %v219
    %v372 = vunpack.c.h.b16 %v219
    %v373 = vunpack.c.l.b16 %v220
    %v374 = vunpack.c.h.b16 %v220
    %v375 = vunpack.c.l.b16 %v221
    %v376 = vunpack.c.h.b16 %v221
    %v377 = vunpack.c.l.b16 %v222
    %v378 = vunpack.c.h.b16 %v222
    %v379 = vunpack.c.l.b16 %v223
    %v380 = vunpack.c.h.b16 %v223
    %v381 = vunpack.c.l.b16 %v224
    %v382 = vunpack.c.h.b16 %v224
    %v383 = vunpack.c.l.b16 %v225
    %v384 = vunpack.c.h.b16 %v225
    %v385 = vunpack.c.l.b16 %v226
    %v386 = vunpack.c.h.b16 %v226
    %v387 = vunpack.c.l.b16 %v227
    %v388 = vunpack.c.h.b16 %v227
    %v389 = vunpack.c.l.b16 %v228
    %v390 = vunpack.c.h.b16 %v228
    %v391 = vunpack.c.l.b16 %v229
    %v392 = vunpack.c.h.b16 %v229
    %v393 = vunpack.c.l.b16 %v230
    %v394 = vunpack.c.h.b16 %v230
    %v395 = vunpack.c.l.b16 %v231
    %v396 = vunpack.c.h.b16 %v231
    %v397 = vunpack.c.l.b16 %v232
    %v398 = vunpack.c.h.b16 %v232
    %v399 = vunpack.c.l.b16 %v233
    %v400 = vunpack.c.h.b16 %v233
    %v401 = vunpack.c.l.b16 %v234
    %v402 = vunpack.c.h.b16 %v234
    %v403 = vunpack.c.l.b16 %v235
    %v404 = vunpack.c.h.b16 %v235
    %v405 = vunpack.c.l.b16 %v236
    %v406 = vunpack.c.h.b16 %v236
    %v407 = vunpack.c.l.b16 %v237
    %v408 = vunpack.c.h.b16 %v237
    %v409 = vunpack.c.l.b16 %v238
    %v410 = vunpack.c.h.b16 %v238
    %v411 = vunpack.c.l.b16 %v239
    %v412 = vunpack.c.h.b16 %v239
    %v413 = vunpack.c.l.b16 %v240
    %v414 = vunpack.c.h.b16 %v240
    %v415 = vunpack.c.l.b16 %v241
    %v416 = vunpack.c.h.b16 %v241
    %v417 = vunpack.c.l.b16 %v242
    %v418 = vunpack.c.h.b16 %v242
    %v419 = vpack.c.b16 %v363, %v355
    %v420 = vpack.c.b16 %v364, %v356
    %v421 = vpack.c.b16 %v365, %v357
    %v422 = vpack.c.b16 %v366, %v358
    %v423 = vpack.c.b16 %v367, %v359
    %v424 = vpack.c.b16 %v368, %v360
    %v425 = vpack.c.b16 %v369, %v361
    %v426 = vpack.c.b16 %v370, %v362
    %v427 = vpack.c.b16 %v379, %v371
    %v428 = vpack.c.b16 %v380, %v372
    %v429 = vpack.c.b16 %v381, %v373
    %v430 = vpack.c.b16 %v382, %v374
    %v431 = vpack.c.b16 %v383, %v375
    %v432 = vpack.c.b16 %v384, %v376
    %v433 = vpack.c.b16 %v385, %v377
    %v434 = vpack.c.b16 %v386, %v378
    %v435 = vpack.c.b16 %v395, %v387
    %v436 = vpack.c.b16 %v396, %v388
    %v437 = vpack.c.b16 %v397, %v389
    %v438 = vpack.c.b16 %v398, %v390
    %v439 = vpack.c.b16 %v399, %v391
    %v440 = vpack.c.b16 %v400, %v392
    %v441 = vpack.c.b16 %v401, %v393
    %v442 = vpack.c.b16 %v402, %v394
    %v443 = vpack.c.b16 %v411, %v403
    %v444 = vpack.c.b16 %v412, %v404
    %v445 = vpack.c.b16 %v413, %v405
    %v446 = vpack.c.b16 %v414, %v406
    %v447 = vpack.c.b16 %v415, %v407
    %v448 = vpack.c.b16 %v416, %v408
    %v449 = vpack.c.b16 %v417, %v409
    %v450 = vpack.c.b16 %v418, %v410
    %vm483 = vcmask 523264
    %v485 = vsel %vm483, %v307, 0
    %v488 = vsel %vm483, %v308, 0
    %v491 = vsel %vm483, %v309, 0
    %v494 = vsel %vm483, %v310, 0
    %v497 = vsel %vm483, %v311, 0
    %v500 = vsel %vm483, %v312, 0
    %v503 = vsel %vm483, %v313, 0
    %v506 = vsel %vm483, %v314, 0
    %v509 = vsel %vm483, %v315, 0
    %v512 = vsel %vm483, %v316, 0
    %v515 = vsel %vm483, %v317, 0
    %v518 = vsel %vm483, %v318, 0
    %v521 = vsel %vm483, %v319, 0
    %v524 = vsel %vm483, %v320, 0
    %v527 = vsel %vm483, %v321, 0
    %v530 = vsel %vm483, %v322, 0
    %532 = vmatprep.subr.bf16.mxu0 %v420
    %533 = vmatpush1.bf16.msra.mxu0 %v419
    %534 = vmatprep.subr.bf16.mxu0 %v428
    %535 = vmatpush1.bf16.msra.mxu0 %v427
    %536 = vmatprep.subr.bf16.mxu0 %v436
    %537 = vmatpush1.bf16.msra.mxu0 %v435
    %538 = vmatprep.subr.bf16.mxu0 %v444
    %539 = vmatpush1.bf16.msra.mxu0 %v443
    %540 = vmatprep.subr.bf16.mxu0 0
    %541 = vmatpush1.bf16.msra.mxu0 0
    %542 = vmatprep.subr.bf16.mxu0 0
    %543 = vmatpush1.bf16.msra.mxu0 0
    %544 = vmatprep.subr.bf16.mxu0 0
    %545 = vmatpush1.bf16.msra.mxu0 0
    %546 = vmatprep.subr.bf16.mxu0 0
    %547 = vmatpush1.bf16.msra.mxu0 0
    %548 = vmatprep.subr.bf16.mxu0 0
    %549 = vmatpush1.bf16.msra.mxu0 0
    %550 = vmatprep.subr.bf16.mxu0 0
    %551 = vmatpush1.bf16.msra.mxu0 0
    %552 = vmatprep.subr.bf16.mxu0 0
    %553 = vmatpush1.bf16.msra.mxu0 0
    %554 = vmatprep.subr.bf16.mxu0 0
    %555 = vmatpush1.bf16.msra.mxu0 0
    %556 = vmatprep.subr.bf16.mxu0 0
    %557 = vmatpush1.bf16.msra.mxu0 0
    %558 = vmatprep.subr.bf16.mxu0 0
    %559 = vmatpush1.bf16.msra.mxu0 0
    %560 = vmatprep.subr.bf16.mxu0 0
    %561 = vmatpush1.bf16.msra.mxu0 0
    %562 = vmatprep.subr.bf16.mxu0 0
    %563 = vmatpush1.bf16.msra.mxu0 0
    %564 = vmatprep.mubr.bf16.mxu0 0
    %565 = vmatmul.mubr.bf16.gmra.mrb[0].mxu0 %v485
    %v566 = vpop.f32.mrb[0].mxu0
    %v567 = vadd.f32 0.0, %v566
    %v568 = vpop.f32.mrb[0].mxu0
    %v569 = vadd.f32 0.0, %v568
    %v570 = vpop.f32.mrb[0].mxu0
    %v571 = vadd.f32 0.0, %v570
    %v572 = vpop.f32.mrb[0].mxu0
    %v573 = vadd.f32 0.0, %v572
    %574 = vmatprep.mubr.bf16.mxu0 0
    %575 = vmatmul.mubr.bf16.gmra.mrb[0].mxu0 %v488
    %v576 = vpop.f32.mrb[0].mxu0
    %v577 = vadd.f32 0.0, %v576
    %v578 = vpop.f32.mrb[0].mxu0
    %v579 = vadd.f32 0.0, %v578
    %v580 = vpop.f32.mrb[0].mxu0
    %v581 = vadd.f32 0.0, %v580
    %v582 = vpop.f32.mrb[0].mxu0
    %v583 = vadd.f32 0.0, %v582
    %584 = vmatprep.mubr.bf16.mxu0 0
    %585 = vmatmul.mubr.bf16.gmra.mrb[0].mxu0 %v491
    %v586 = vpop.f32.mrb[0].mxu0
    %v587 = vadd.f32 0.0, %v586
    %v588 = vpop.f32.mrb[0].mxu0
    %v589 = vadd.f32 0.0, %v588
    %v590 = vpop.f32.mrb[0].mxu0
    %v591 = vadd.f32 0.0, %v590
    %v592 = vpop.f32.mrb[0].mxu0
    %v593 = vadd.f32 0.0, %v592
    %594 = vmatprep.mubr.bf16.mxu0 0
    %595 = vmatmul.mubr.bf16.gmra.mrb[0].mxu0 %v494
    %v596 = vpop.f32.mrb[0].mxu0
    %v597 = vadd.f32 0.0, %v596
    %v598 = vpop.f32.mrb[0].mxu0
    %v599 = vadd.f32 0.0, %v598
    %v600 = vpop.f32.mrb[0].mxu0
    %v601 = vadd.f32 0.0, %v600
    %v602 = vpop.f32.mrb[0].mxu0
    %v603 = vadd.f32 0.0, %v602
    %604 = vmatprep.mubr.bf16.mxu0 0
    %605 = vmatmul.mubr.bf16.gmra.mrb[0].mxu0 %v497
    %v606 = vpop.f32.mrb[0].mxu0
    %v607 = vadd.f32 0.0, %v606
    %v608 = vpop.f32.mrb[0].mxu0
    %v609 = vadd.f32 0.0, %v608
    %v610 = vpop.f32.mrb[0].mxu0
    %v611 = vadd.f32 0.0, %v610
    %v612 = vpop.f32.mrb[0].mxu0
    %v613 = vadd.f32 0.0, %v612
    %614 = vmatprep.mubr.bf16.mxu0 0
    %615 = vmatmul.mubr.bf16.gmra.mrb[0].mxu0 %v500
    %v616 = vpop.f32.mrb[0].mxu0
    %v617 = vadd.f32 0.0, %v616
    %v618 = vpop.f32.mrb[0].mxu0
    %v619 = vadd.f32 0.0, %v618
    %v620 = vpop.f32.mrb[0].mxu0
    %v621 = vadd.f32 0.0, %v620
    %v622 = vpop.f32.mrb[0].mxu0
    %v623 = vadd.f32 0.0, %v622
    %624 = vmatprep.mubr.bf16.mxu0 0
    %625 = vmatmul.mubr.bf16.gmra.mrb[0].mxu0 %v503
    %v626 = vpop.f32.mrb[0].mxu0
    %v627 = vadd.f32 0.0, %v626
    %v628 = vpop.f32.mrb[0].mxu0
    %v629 = vadd.f32 0.0, %v628
    %v630 = vpop.f32.mrb[0].mxu0
    %v631 = vadd.f32 0.0, %v630
    %v632 = vpop.f32.mrb[0].mxu0
    %v633 = vadd.f32 0.0, %v632
    %634 = vmatprep.mubr.bf16.mxu0 0
    %635 = vmatmul.mubr.bf16.gmra.mrb[0].mxu0 %v506
    %v636 = vpop.f32.mrb[0].mxu0
    %v637 = vadd.f32 0.0, %v636
    %v638 = vpop.f32.mrb[0].mxu0
    %v639 = vadd.f32 0.0, %v638
    %v640 = vpop.f32.mrb[0].mxu0
    %v641 = vadd.f32 0.0, %v640
    %v642 = vpop.f32.mrb[0].mxu0
    %v643 = vadd.f32 0.0, %v642
    %644 = vmatprep.mubr.bf16.mxu0 0
    %645 = vmatmul.mubr.bf16.gmra.mrb[0].mxu0 %v509
    %v646 = vpop.f32.mrb[0].mxu0
    %v647 = vadd.f32 0.0, %v646
    %v648 = vpop.f32.mrb[0].mxu0
    %v649 = vadd.f32 0.0, %v648
    %v650 = vpop.f32.mrb[0].mxu0
    %v651 = vadd.f32 0.0, %v650
    %v652 = vpop.f32.mrb[0].mxu0
    %v653 = vadd.f32 0.0, %v652
    %654 = vmatprep.mubr.bf16.mxu0 0
    %655 = vmatmul.mubr.bf16.gmra.mrb[0].mxu0 %v512
    %v656 = vpop.f32.mrb[0].mxu0
    %v657 = vadd.f32 0.0, %v656
    %v658 = vpop.f32.mrb[0].mxu0
    %v659 = vadd.f32 0.0, %v658
    %v660 = vpop.f32.mrb[0].mxu0
    %v661 = vadd.f32 0.0, %v660
    %v662 = vpop.f32.mrb[0].mxu0
    %v663 = vadd.f32 0.0, %v662
    %664 = vmatprep.mubr.bf16.mxu0 0
    %665 = vmatmul.mubr.bf16.gmra.mrb[0].mxu0 %v515
    %v666 = vpop.f32.mrb[0].mxu0
    %v667 = vadd.f32 0.0, %v666
    %v668 = vpop.f32.mrb[0].mxu0
    %v669 = vadd.f32 0.0, %v668
    %v670 = vpop.f32.mrb[0].mxu0
    %v671 = vadd.f32 0.0, %v670
    %v672 = vpop.f32.mrb[0].mxu0
    %v673 = vadd.f32 0.0, %v672
    %674 = vmatprep.mubr.bf16.mxu0 0
    %675 = vmatmul.mubr.bf16.gmra.mrb[0].mxu0 %v518
    %v676 = vpop.f32.mrb[0].mxu0
    %v677 = vadd.f32 0.0, %v676
    %v678 = vpop.f32.mrb[0].mxu0
    %v679 = vadd.f32 0.0, %v678
    %v680 = vpop.f32.mrb[0].mxu0
    %v681 = vadd.f32 0.0, %v680
    %v682 = vpop.f32.mrb[0].mxu0
    %v683 = vadd.f32 0.0, %v682
    %684 = vmatprep.mubr.bf16.mxu0 0
    %685 = vmatmul.mubr.bf16.gmra.mrb[0].mxu0 %v521
    %v686 = vpop.f32.mrb[0].mxu0
    %v687 = vadd.f32 0.0, %v686
    %v688 = vpop.f32.mrb[0].mxu0
    %v689 = vadd.f32 0.0, %v688
    %v690 = vpop.f32.mrb[0].mxu0
    %v691 = vadd.f32 0.0, %v690
    %v692 = vpop.f32.mrb[0].mxu0
    %v693 = vadd.f32 0.0, %v692
    %694 = vmatprep.mubr.bf16.mxu0 0
    %695 = vmatmul.mubr.bf16.gmra.mrb[0].mxu0 %v524
    %v696 = vpop.f32.mrb[0].mxu0
    %v697 = vadd.f32 0.0, %v696
    %v698 = vpop.f32.mrb[0].mxu0
    %v699 = vadd.f32 0.0, %v698
    %v700 = vpop.f32.mrb[0].mxu0
    %v701 = vadd.f32 0.0, %v700
    %v702 = vpop.f32.mrb[0].mxu0
    %v703 = vadd.f32 0.0, %v702
    %704 = vmatprep.mubr.bf16.mxu0 0
    %705 = vmatmul.mubr.bf16.gmra.mrb[0].mxu0 %v527
    %v706 = vpop.f32.mrb[0].mxu0
    %v707 = vadd.f32 0.0, %v706
    %v708 = vpop.f32.mrb[0].mxu0
    %v709 = vadd.f32 0.0, %v708
    %v710 = vpop.f32.mrb[0].mxu0
    %v711 = vadd.f32 0.0, %v710
    %v712 = vpop.f32.mrb[0].mxu0
    %v713 = vadd.f32 0.0, %v712
    %714 = vmatprep.mubr.bf16.mxu0 0
    %715 = vmatmul.mubr.bf16.gmra.mrb[0].mxu0 %v530
    %v716 = vpop.f32.mrb[0].mxu0
    %v717 = vadd.f32 0.0, %v716
    %v718 = vpop.f32.mrb[0].mxu0
    %v719 = vadd.f32 0.0, %v718
    %v720 = vpop.f32.mrb[0].mxu0
    %v721 = vadd.f32 0.0, %v720
    %v722 = vpop.f32.mrb[0].mxu0
    %v723 = vadd.f32 0.0, %v722
    %724 = vdwg.mxu0
    %725 = vmatprep.subr.bf16.mxu0 %v422
    %726 = vmatpush1.bf16.msra.mxu0 %v421
    %727 = vmatprep.subr.bf16.mxu0 %v430
    %728 = vmatpush1.bf16.msra.mxu0 %v429
    %729 = vmatprep.subr.bf16.mxu0 %v438
    %730 = vmatpush1.bf16.msra.mxu0 %v437
    %731 = vmatprep.subr.bf16.mxu0 %v446
    %732 = vmatpush1.bf16.msra.mxu0 %v445
    %733 = vmatprep.subr.bf16.mxu0 0
    %734 = vmatpush1.bf16.msra.mxu0 0
    %735 = vmatprep.subr.bf16.mxu0 0
    %736 = vmatpush1.bf16.msra.mxu0 0
    %737 = vmatprep.subr.bf16.mxu0 0
    %738 = vmatpush1.bf16.msra.mxu0 0
    %739 = vmatprep.subr.bf16.mxu0 0
    %740 = vmatpush1.bf16.msra.mxu0 0
    %741 = vmatprep.subr.bf16.mxu0 0
    %742 = vmatpush1.bf16.msra.mxu0 0
    %743 = vmatprep.subr.bf16.mxu0 0
    %744 = vmatpush1.bf16.msra.mxu0 0
    %745 = vmatprep.subr.bf16.mxu0 0
    %746 = vmatpush1.bf16.msra.mxu0 0
    %747 = vmatprep.subr.bf16.mxu0 0
    %748 = vmatpush1.bf16.msra.mxu0 0
    %749 = vmatprep.subr.bf16.mxu0 0
    %750 = vmatpush1.bf16.msra.mxu0 0
    %751 = vmatprep.subr.bf16.mxu0 0
    %752 = vmatpush1.bf16.msra.mxu0 0
    %753 = vmatprep.subr.bf16.mxu0 0
    %754 = vmatpush1.bf16.msra.mxu0 0
    %755 = vmatprep.subr.bf16.mxu0 0
    %756 = vmatpush1.bf16.msra.mxu0 0
    %757 = vmatprep.mubr.bf16.mxu0 0
    %758 = vmatmul.mubr.bf16.gmra.mrb[0].mxu0 %v485
    %v759 = vpop.f32.mrb[0].mxu0
    %v760 = vadd.f32 0.0, %v759
    %v761 = vpop.f32.mrb[0].mxu0
    %v762 = vadd.f32 0.0, %v761
    %v763 = vpop.f32.mrb[0].mxu0
    %v764 = vadd.f32 0.0, %v763
    %v765 = vpop.f32.mrb[0].mxu0
    %v766 = vadd.f32 0.0, %v765
    %767 = vmatprep.mubr.bf16.mxu0 0
    %768 = vmatmul.mubr.bf16.gmra.mrb[0].mxu0 %v488
    %v769 = vpop.f32.mrb[0].mxu0
    %v770 = vadd.f32 0.0, %v769
    %v771 = vpop.f32.mrb[0].mxu0
    %v772 = vadd.f32 0.0, %v771
    %v773 = vpop.f32.mrb[0].mxu0
    %v774 = vadd.f32 0.0, %v773
    %v775 = vpop.f32.mrb[0].mxu0
    %v776 = vadd.f32 0.0, %v775
    %777 = vmatprep.mubr.bf16.mxu0 0
    %778 = vmatmul.mubr.bf16.gmra.mrb[0].mxu0 %v491
    %v779 = vpop.f32.mrb[0].mxu0
    %v780 = vadd.f32 0.0, %v779
    %v781 = vpop.f32.mrb[0].mxu0
    %v782 = vadd.f32 0.0, %v781
    %v783 = vpop.f32.mrb[0].mxu0
    %v784 = vadd.f32 0.0, %v783
    %v785 = vpop.f32.mrb[0].mxu0
    %v786 = vadd.f32 0.0, %v785
    %787 = vmatprep.mubr.bf16.mxu0 0
    %788 = vmatmul.mubr.bf16.gmra.mrb[0].mxu0 %v494
    %v789 = vpop.f32.mrb[0].mxu0
    %v790 = vadd.f32 0.0, %v789
    %v791 = vpop.f32.mrb[0].mxu0
    %v792 = vadd.f32 0.0, %v791
    %v793 = vpop.f32.mrb[0].mxu0
    %v794 = vadd.f32 0.0, %v793
    %v795 = vpop.f32.mrb[0].mxu0
    %v796 = vadd.f32 0.0, %v795
    %797 = vmatprep.mubr.bf16.mxu0 0
    %798 = vmatmul.mubr.bf16.gmra.mrb[0].mxu0 %v497
    %v799 = vpop.f32.mrb[0].mxu0
    %v800 = vadd.f32 0.0, %v799
    %v801 = vpop.f32.mrb[0].mxu0
    %v802 = vadd.f32 0.0, %v801
    %v803 = vpop.f32.mrb[0].mxu0
    %v804 = vadd.f32 0.0, %v803
    %v805 = vpop.f32.mrb[0].mxu0
    %v806 = vadd.f32 0.0, %v805
    %807 = vmatprep.mubr.bf16.mxu0 0
    %808 = vmatmul.mubr.bf16.gmra.mrb[0].mxu0 %v500
    %v809 = vpop.f32.mrb[0].mxu0
    %v810 = vadd.f32 0.0, %v809
    %v811 = vpop.f32.mrb[0].mxu0
    %v812 = vadd.f32 0.0, %v811
    %v813 = vpop.f32.mrb[0].mxu0
    %v814 = vadd.f32 0.0, %v813
    %v815 = vpop.f32.mrb[0].mxu0
    %v816 = vadd.f32 0.0, %v815
    %817 = vmatprep.mubr.bf16.mxu0 0
    %818 = vmatmul.mubr.bf16.gmra.mrb[0].mxu0 %v503
    %v819 = vpop.f32.mrb[0].mxu0
    %v820 = vadd.f32 0.0, %v819
    %v821 = vpop.f32.mrb[0].mxu0
    %v822 = vadd.f32 0.0, %v821
    %v823 = vpop.f32.mrb[0].mxu0
    %v824 = vadd.f32 0.0, %v823
    %v825 = vpop.f32.mrb[0].mxu0
    %v826 = vadd.f32 0.0, %v825
    %827 = vmatprep.mubr.bf16.mxu0 0
    %828 = vmatmul.mubr.bf16.gmra.mrb[0].mxu0 %v506
    %v829 = vpop.f32.mrb[0].mxu0
    %v830 = vadd.f32 0.0, %v829
    %v831 = vpop.f32.mrb[0].mxu0
    %v832 = vadd.f32 0.0, %v831
    %v833 = vpop.f32.mrb[0].mxu0
    %v834 = vadd.f32 0.0, %v833
    %v835 = vpop.f32.mrb[0].mxu0
    %v836 = vadd.f32 0.0, %v835
    %837 = vmatprep.mubr.bf16.mxu0 0
    %838 = vmatmul.mubr.bf16.gmra.mrb[0].mxu0 %v509
    %v839 = vpop.f32.mrb[0].mxu0
    %v840 = vadd.f32 0.0, %v839
    %v841 = vpop.f32.mrb[0].mxu0
    %v842 = vadd.f32 0.0, %v841
    %v843 = vpop.f32.mrb[0].mxu0
    %v844 = vadd.f32 0.0, %v843
    %v845 = vpop.f32.mrb[0].mxu0
    %v846 = vadd.f32 0.0, %v845
    %847 = vmatprep.mubr.bf16.mxu0 0
    %848 = vmatmul.mubr.bf16.gmra.mrb[0].mxu0 %v512
    %v849 = vpop.f32.mrb[0].mxu0
    %v850 = vadd.f32 0.0, %v849
    %v851 = vpop.f32.mrb[0].mxu0
    %v852 = vadd.f32 0.0, %v851
    %v853 = vpop.f32.mrb[0].mxu0
    %v854 = vadd.f32 0.0, %v853
    %v855 = vpop.f32.mrb[0].mxu0
    %v856 = vadd.f32 0.0, %v855
    %857 = vmatprep.mubr.bf16.mxu0 0
    %858 = vmatmul.mubr.bf16.gmra.mrb[0].mxu0 %v515
    %v859 = vpop.f32.mrb[0].mxu0
    %v860 = vadd.f32 0.0, %v859
    %v861 = vpop.f32.mrb[0].mxu0
    %v862 = vadd.f32 0.0, %v861
    %v863 = vpop.f32.mrb[0].mxu0
    %v864 = vadd.f32 0.0, %v863
    %v865 = vpop.f32.mrb[0].mxu0
    %v866 = vadd.f32 0.0, %v865
    %867 = vmatprep.mubr.bf16.mxu0 0
    %868 = vmatmul.mubr.bf16.gmra.mrb[0].mxu0 %v518
    %v869 = vpop.f32.mrb[0].mxu0
    %v870 = vadd.f32 0.0, %v869
    %v871 = vpop.f32.mrb[0].mxu0
    %v872 = vadd.f32 0.0, %v871
    %v873 = vpop.f32.mrb[0].mxu0
    %v874 = vadd.f32 0.0, %v873
    %v875 = vpop.f32.mrb[0].mxu0
    %v876 = vadd.f32 0.0, %v875
    %877 = vmatprep.mubr.bf16.mxu0 0
    %878 = vmatmul.mubr.bf16.gmra.mrb[0].mxu0 %v521
    %v879 = vpop.f32.mrb[0].mxu0
    %v880 = vadd.f32 0.0, %v879
    %v881 = vpop.f32.mrb[0].mxu0
    %v882 = vadd.f32 0.0, %v881
    %v883 = vpop.f32.mrb[0].mxu0
    %v884 = vadd.f32 0.0, %v883
    %v885 = vpop.f32.mrb[0].mxu0
    %v886 = vadd.f32 0.0, %v885
    %887 = vmatprep.mubr.bf16.mxu0 0
    %888 = vmatmul.mubr.bf16.gmra.mrb[0].mxu0 %v524
    %v889 = vpop.f32.mrb[0].mxu0
    %v890 = vadd.f32 0.0, %v889
    %v891 = vpop.f32.mrb[0].mxu0
    %v892 = vadd.f32 0.0, %v891
    %v893 = vpop.f32.mrb[0].mxu0
    %v894 = vadd.f32 0.0, %v893
    %v895 = vpop.f32.mrb[0].mxu0
    %v896 = vadd.f32 0.0, %v895
    %897 = vmatprep.mubr.bf16.mxu0 0
    %898 = vmatmul.mubr.bf16.gmra.mrb[0].mxu0 %v527
    %v899 = vpop.f32.mrb[0].mxu0
    %v900 = vadd.f32 0.0, %v899
    %v901 = vpop.f32.mrb[0].mxu0
    %v902 = vadd.f32 0.0, %v901
    %v903 = vpop.f32.mrb[0].mxu0
    %v904 = vadd.f32 0.0, %v903
    %v905 = vpop.f32.mrb[0].mxu0
    %v906 = vadd.f32 0.0, %v905
    %907 = vmatprep.mubr.bf16.mxu0 0
    %908 = vmatmul.mubr.bf16.gmra.mrb[0].mxu0 %v530
    %v909 = vpop.f32.mrb[0].mxu0
    %v910 = vadd.f32 0.0, %v909
    %v911 = vpop.f32.mrb[0].mxu0
    %v912 = vadd.f32 0.0, %v911
    %v913 = vpop.f32.mrb[0].mxu0
    %v914 = vadd.f32 0.0, %v913
    %v915 = vpop.f32.mrb[0].mxu0
    %v916 = vadd.f32 0.0, %v915
    %917 = vdwg.mxu0
    %918 = vmatprep.subr.bf16.mxu0 %v424
    %919 = vmatpush1.bf16.msra.mxu0 %v423
    %920 = vmatprep.subr.bf16.mxu0 %v432
    %921 = vmatpush1.bf16.msra.mxu0 %v431
    %922 = vmatprep.subr.bf16.mxu0 %v440
    %923 = vmatpush1.bf16.msra.mxu0 %v439
    %924 = vmatprep.subr.bf16.mxu0 %v448
    %925 = vmatpush1.bf16.msra.mxu0 %v447
    %926 = vmatprep.subr.bf16.mxu0 0
    %927 = vmatpush1.bf16.msra.mxu0 0
    %928 = vmatprep.subr.bf16.mxu0 0
    %929 = vmatpush1.bf16.msra.mxu0 0
    %930 = vmatprep.subr.bf16.mxu0 0
    %931 = vmatpush1.bf16.msra.mxu0 0
    %932 = vmatprep.subr.bf16.mxu0 0
    %933 = vmatpush1.bf16.msra.mxu0 0
    %934 = vmatprep.subr.bf16.mxu0 0
    %935 = vmatpush1.bf16.msra.mxu0 0
    %936 = vmatprep.subr.bf16.mxu0 0
    %937 = vmatpush1.bf16.msra.mxu0 0
    %938 = vmatprep.subr.bf16.mxu0 0
    %939 = vmatpush1.bf16.msra.mxu0 0
    %940 = vmatprep.subr.bf16.mxu0 0
    %941 = vmatpush1.bf16.msra.mxu0 0
    %942 = vmatprep.subr.bf16.mxu0 0
    %943 = vmatpush1.bf16.msra.mxu0 0
    %944 = vmatprep.subr.bf16.mxu0 0
    %945 = vmatpush1.bf16.msra.mxu0 0
    %946 = vmatprep.subr.bf16.mxu0 0
    %947 = vmatpush1.bf16.msra.mxu0 0
    %948 = vmatprep.subr.bf16.mxu0 0
    %949 = vmatpush1.bf16.msra.mxu0 0
    %950 = vmatprep.mubr.bf16.mxu0 0
    %951 = vmatmul.mubr.bf16.gmra.mrb[0].mxu0 %v485
    %v952 = vpop.f32.mrb[0].mxu0
    %v953 = vadd.f32 0.0, %v952
    %v954 = vpop.f32.mrb[0].mxu0
    %v955 = vadd.f32 0.0, %v954
    %v956 = vpop.f32.mrb[0].mxu0
    %v957 = vadd.f32 0.0, %v956
    %v958 = vpop.f32.mrb[0].mxu0
    %v959 = vadd.f32 0.0, %v958
    %960 = vmatprep.mubr.bf16.mxu0 0
    %961 = vmatmul.mubr.bf16.gmra.mrb[0].mxu0 %v488
    %v962 = vpop.f32.mrb[0].mxu0
    %v963 = vadd.f32 0.0, %v962
    %v964 = vpop.f32.mrb[0].mxu0
    %v965 = vadd.f32 0.0, %v964
    %v966 = vpop.f32.mrb[0].mxu0
    %v967 = vadd.f32 0.0, %v966
    %v968 = vpop.f32.mrb[0].mxu0
    %v969 = vadd.f32 0.0, %v968
    %970 = vmatprep.mubr.bf16.mxu0 0
    %971 = vmatmul.mubr.bf16.gmra.mrb[0].mxu0 %v491
    %v972 = vpop.f32.mrb[0].mxu0
    %v973 = vadd.f32 0.0, %v972
    %v974 = vpop.f32.mrb[0].mxu0
    %v975 = vadd.f32 0.0, %v974
    %v976 = vpop.f32.mrb[0].mxu0
    %v977 = vadd.f32 0.0, %v976
    %v978 = vpop.f32.mrb[0].mxu0
    %v979 = vadd.f32 0.0, %v978
    %980 = vmatprep.mubr.bf16.mxu0 0
    %981 = vmatmul.mubr.bf16.gmra.mrb[0].mxu0 %v494
    %v982 = vpop.f32.mrb[0].mxu0
    %v983 = vadd.f32 0.0, %v982
    %v984 = vpop.f32.mrb[0].mxu0
    %v985 = vadd.f32 0.0, %v984
    %v986 = vpop.f32.mrb[0].mxu0
    %v987 = vadd.f32 0.0, %v986
    %v988 = vpop.f32.mrb[0].mxu0
    %v989 = vadd.f32 0.0, %v988
    %990 = vmatprep.mubr.bf16.mxu0 0
    %991 = vmatmul.mubr.bf16.gmra.mrb[0].mxu0 %v497
    %v992 = vpop.f32.mrb[0].mxu0
    %v993 = vadd.f32 0.0, %v992
    %v994 = vpop.f32.mrb[0].mxu0
    %v995 = vadd.f32 0.0, %v994
    %v996 = vpop.f32.mrb[0].mxu0
    %v997 = vadd.f32 0.0, %v996
    %v998 = vpop.f32.mrb[0].mxu0
    %v999 = vadd.f32 0.0, %v998
    %1000 = vmatprep.mubr.bf16.mxu0 0
    %1001 = vmatmul.mubr.bf16.gmra.mrb[0].mxu0 %v500
    %v1002 = vpop.f32.mrb[0].mxu0
    %v1003 = vadd.f32 0.0, %v1002
    %v1004 = vpop.f32.mrb[0].mxu0
    %v1005 = vadd.f32 0.0, %v1004
    %v1006 = vpop.f32.mrb[0].mxu0
    %v1007 = vadd.f32 0.0, %v1006
    %v1008 = vpop.f32.mrb[0].mxu0
    %v1009 = vadd.f32 0.0, %v1008
    %1010 = vmatprep.mubr.bf16.mxu0 0
    %1011 = vmatmul.mubr.bf16.gmra.mrb[0].mxu0 %v503
    %v1012 = vpop.f32.mrb[0].mxu0
    %v1013 = vadd.f32 0.0, %v1012
    %v1014 = vpop.f32.mrb[0].mxu0
    %v1015 = vadd.f32 0.0, %v1014
    %v1016 = vpop.f32.mrb[0].mxu0
    %v1017 = vadd.f32 0.0, %v1016
    %v1018 = vpop.f32.mrb[0].mxu0
    %v1019 = vadd.f32 0.0, %v1018
    %1020 = vmatprep.mubr.bf16.mxu0 0
    %1021 = vmatmul.mubr.bf16.gmra.mrb[0].mxu0 %v506
    %v1022 = vpop.f32.mrb[0].mxu0
    %v1023 = vadd.f32 0.0, %v1022
    %v1024 = vpop.f32.mrb[0].mxu0
    %v1025 = vadd.f32 0.0, %v1024
    %v1026 = vpop.f32.mrb[0].mxu0
    %v1027 = vadd.f32 0.0, %v1026
    %v1028 = vpop.f32.mrb[0].mxu0
    %v1029 = vadd.f32 0.0, %v1028
    %1030 = vmatprep.mubr.bf16.mxu0 0
    %1031 = vmatmul.mubr.bf16.gmra.mrb[0].mxu0 %v509
    %v1032 = vpop.f32.mrb[0].mxu0
    %v1033 = vadd.f32 0.0, %v1032
    %v1034 = vpop.f32.mrb[0].mxu0
    %v1035 = vadd.f32 0.0, %v1034
    %v1036 = vpop.f32.mrb[0].mxu0
    %v1037 = vadd.f32 0.0, %v1036
    %v1038 = vpop.f32.mrb[0].mxu0
    %v1039 = vadd.f32 0.0, %v1038
    %1040 = vmatprep.mubr.bf16.mxu0 0
    %1041 = vmatmul.mubr.bf16.gmra.mrb[0].mxu0 %v512
    %v1042 = vpop.f32.mrb[0].mxu0
    %v1043 = vadd.f32 0.0, %v1042
    %v1044 = vpop.f32.mrb[0].mxu0
    %v1045 = vadd.f32 0.0, %v1044
    %v1046 = vpop.f32.mrb[0].mxu0
    %v1047 = vadd.f32 0.0, %v1046
    %v1048 = vpop.f32.mrb[0].mxu0
    %v1049 = vadd.f32 0.0, %v1048
    %1050 = vmatprep.mubr.bf16.mxu0 0
    %1051 = vmatmul.mubr.bf16.gmra.mrb[0].mxu0 %v515
    %v1052 = vpop.f32.mrb[0].mxu0
    %v1053 = vadd.f32 0.0, %v1052
    %v1054 = vpop.f32.mrb[0].mxu0
    %v1055 = vadd.f32 0.0, %v1054
    %v1056 = vpop.f32.mrb[0].mxu0
    %v1057 = vadd.f32 0.0, %v1056
    %v1058 = vpop.f32.mrb[0].mxu0
    %v1059 = vadd.f32 0.0, %v1058
    %1060 = vmatprep.mubr.bf16.mxu0 0
    %1061 = vmatmul.mubr.bf16.gmra.mrb[0].mxu0 %v518
    %v1062 = vpop.f32.mrb[0].mxu0
    %v1063 = vadd.f32 0.0, %v1062
    %v1064 = vpop.f32.mrb[0].mxu0
    %v1065 = vadd.f32 0.0, %v1064
    %v1066 = vpop.f32.mrb[0].mxu0
    %v1067 = vadd.f32 0.0, %v1066
    %v1068 = vpop.f32.mrb[0].mxu0
    %v1069 = vadd.f32 0.0, %v1068
    %1070 = vmatprep.mubr.bf16.mxu0 0
    %1071 = vmatmul.mubr.bf16.gmra.mrb[0].mxu0 %v521
    %v1072 = vpop.f32.mrb[0].mxu0
    %v1073 = vadd.f32 0.0, %v1072
    %v1074 = vpop.f32.mrb[0].mxu0
    %v1075 = vadd.f32 0.0, %v1074
    %v1076 = vpop.f32.mrb[0].mxu0
    %v1077 = vadd.f32 0.0, %v1076
    %v1078 = vpop.f32.mrb[0].mxu0
    %v1079 = vadd.f32 0.0, %v1078
    %1080 = vmatprep.mubr.bf16.mxu0 0
    %1081 = vmatmul.mubr.bf16.gmra.mrb[0].mxu0 %v524
    %v1082 = vpop.f32.mrb[0].mxu0
    %v1083 = vadd.f32 0.0, %v1082
    %v1084 = vpop.f32.mrb[0].mxu0
    %v1085 = vadd.f32 0.0, %v1084
    %v1086 = vpop.f32.mrb[0].mxu0
    %v1087 = vadd.f32 0.0, %v1086
    %v1088 = vpop.f32.mrb[0].mxu0
    %v1089 = vadd.f32 0.0, %v1088
    %1090 = vmatprep.mubr.bf16.mxu0 0
    %1091 = vmatmul.mubr.bf16.gmra.mrb[0].mxu0 %v527
    %v1092 = vpop.f32.mrb[0].mxu0
    %v1093 = vadd.f32 0.0, %v1092
    %v1094 = vpop.f32.mrb[0].mxu0
    %v1095 = vadd.f32 0.0, %v1094
    %v1096 = vpop.f32.mrb[0].mxu0
    %v1097 = vadd.f32 0.0, %v1096
    %v1098 = vpop.f32.mrb[0].mxu0
    %v1099 = vadd.f32 0.0, %v1098
    %1100 = vmatprep.mubr.bf16.mxu0 0
    %1101 = vmatmul.mubr.bf16.gmra.mrb[0].mxu0 %v530
    %v1102 = vpop.f32.mrb[0].mxu0
    %v1103 = vadd.f32 0.0, %v1102
    %v1104 = vpop.f32.mrb[0].mxu0
    %v1105 = vadd.f32 0.0, %v1104
    %v1106 = vpop.f32.mrb[0].mxu0
    %v1107 = vadd.f32 0.0, %v1106
    %v1108 = vpop.f32.mrb[0].mxu0
    %v1109 = vadd.f32 0.0, %v1108
    %1110 = vdwg.mxu0
    %1111 = vmatprep.subr.bf16.mxu0 %v426
    %1112 = vmatpush1.bf16.msra.mxu0 %v425
    %1113 = vmatprep.subr.bf16.mxu0 %v434
    %1114 = vmatpush1.bf16.msra.mxu0 %v433
    %1115 = vmatprep.subr.bf16.mxu0 %v442
    %1116 = vmatpush1.bf16.msra.mxu0 %v441
    %1117 = vmatprep.subr.bf16.mxu0 %v450
    %1118 = vmatpush1.bf16.msra.mxu0 %v449
    %1119 = vmatprep.subr.bf16.mxu0 0
    %1120 = vmatpush1.bf16.msra.mxu0 0
    %1121 = vmatprep.subr.bf16.mxu0 0
    %1122 = vmatpush1.bf16.msra.mxu0 0
    %1123 = vmatprep.subr.bf16.mxu0 0
    %1124 = vmatpush1.bf16.msra.mxu0 0
    %1125 = vmatprep.subr.bf16.mxu0 0
    %1126 = vmatpush1.bf16.msra.mxu0 0
    %1127 = vmatprep.subr.bf16.mxu0 0
    %1128 = vmatpush1.bf16.msra.mxu0 0
    %1129 = vmatprep.subr.bf16.mxu0 0
    %1130 = vmatpush1.bf16.msra.mxu0 0
    %1131 = vmatprep.subr.bf16.mxu0 0
    %1132 = vmatpush1.bf16.msra.mxu0 0
    %1133 = vmatprep.subr.bf16.mxu0 0
    %1134 = vmatpush1.bf16.msra.mxu0 0
    %1135 = vmatprep.subr.bf16.mxu0 0
    %1136 = vmatpush1.bf16.msra.mxu0 0
    %1137 = vmatprep.subr.bf16.mxu0 0
    %1138 = vmatpush1.bf16.msra.mxu0 0
    %1139 = vmatprep.subr.bf16.mxu0 0
    %1140 = vmatpush1.bf16.msra.mxu0 0
    %1141 = vmatprep.subr.bf16.mxu0 0
    %1142 = vmatpush1.bf16.msra.mxu0 0
    %1143 = vmatprep.mubr.bf16.mxu0 0
    %1144 = vmatmul.mubr.bf16.gmra.mrb[0].mxu0 %v485
    %v1145 = vpop.f32.mrb[0].mxu0
    %v1146 = vadd.f32 0.0, %v1145
    %v1147 = vpop.f32.mrb[0].mxu0
    %v1148 = vadd.f32 0.0, %v1147
    %v1149 = vpop.f32.mrb[0].mxu0
    %v1150 = vadd.f32 0.0, %v1149
    %v1151 = vpop.f32.mrb[0].mxu0
    %v1152 = vadd.f32 0.0, %v1151
    %1153 = vmatprep.mubr.bf16.mxu0 0
    %1154 = vmatmul.mubr.bf16.gmra.mrb[0].mxu0 %v488
    %v1155 = vpop.f32.mrb[0].mxu0
    %v1156 = vadd.f32 0.0, %v1155
    %v1157 = vpop.f32.mrb[0].mxu0
    %v1158 = vadd.f32 0.0, %v1157
    %v1159 = vpop.f32.mrb[0].mxu0
    %v1160 = vadd.f32 0.0, %v1159
    %v1161 = vpop.f32.mrb[0].mxu0
    %v1162 = vadd.f32 0.0, %v1161
    %1163 = vmatprep.mubr.bf16.mxu0 0
    %1164 = vmatmul.mubr.bf16.gmra.mrb[0].mxu0 %v491
    %v1165 = vpop.f32.mrb[0].mxu0
    %v1166 = vadd.f32 0.0, %v1165
    %v1167 = vpop.f32.mrb[0].mxu0
    %v1168 = vadd.f32 0.0, %v1167
    %v1169 = vpop.f32.mrb[0].mxu0
    %v1170 = vadd.f32 0.0, %v1169
    %v1171 = vpop.f32.mrb[0].mxu0
    %v1172 = vadd.f32 0.0, %v1171
    %1173 = vmatprep.mubr.bf16.mxu0 0
    %1174 = vmatmul.mubr.bf16.gmra.mrb[0].mxu0 %v494
    %v1175 = vpop.f32.mrb[0].mxu0
    %v1176 = vadd.f32 0.0, %v1175
    %v1177 = vpop.f32.mrb[0].mxu0
    %v1178 = vadd.f32 0.0, %v1177
    %v1179 = vpop.f32.mrb[0].mxu0
    %v1180 = vadd.f32 0.0, %v1179
    %v1181 = vpop.f32.mrb[0].mxu0
    %v1182 = vadd.f32 0.0, %v1181
    %1183 = vmatprep.mubr.bf16.mxu0 0
    %1184 = vmatmul.mubr.bf16.gmra.mrb[0].mxu0 %v497
    %v1185 = vpop.f32.mrb[0].mxu0
    %v1186 = vadd.f32 0.0, %v1185
    %v1187 = vpop.f32.mrb[0].mxu0
    %v1188 = vadd.f32 0.0, %v1187
    %v1189 = vpop.f32.mrb[0].mxu0
    %v1190 = vadd.f32 0.0, %v1189
    %v1191 = vpop.f32.mrb[0].mxu0
    %v1192 = vadd.f32 0.0, %v1191
    %1193 = vmatprep.mubr.bf16.mxu0 0
    %1194 = vmatmul.mubr.bf16.gmra.mrb[0].mxu0 %v500
    %v1195 = vpop.f32.mrb[0].mxu0
    %v1196 = vadd.f32 0.0, %v1195
    %v1197 = vpop.f32.mrb[0].mxu0
    %v1198 = vadd.f32 0.0, %v1197
    %v1199 = vpop.f32.mrb[0].mxu0
    %v1200 = vadd.f32 0.0, %v1199
    %v1201 = vpop.f32.mrb[0].mxu0
    %v1202 = vadd.f32 0.0, %v1201
    %1203 = vmatprep.mubr.bf16.mxu0 0
    %1204 = vmatmul.mubr.bf16.gmra.mrb[0].mxu0 %v503
    %v1205 = vpop.f32.mrb[0].mxu0
    %v1206 = vadd.f32 0.0, %v1205
    %v1207 = vpop.f32.mrb[0].mxu0
    %v1208 = vadd.f32 0.0, %v1207
    %v1209 = vpop.f32.mrb[0].mxu0
    %v1210 = vadd.f32 0.0, %v1209
    %v1211 = vpop.f32.mrb[0].mxu0
    %v1212 = vadd.f32 0.0, %v1211
    %1213 = vmatprep.mubr.bf16.mxu0 0
    %1214 = vmatmul.mubr.bf16.gmra.mrb[0].mxu0 %v506
    %v1215 = vpop.f32.mrb[0].mxu0
    %v1216 = vadd.f32 0.0, %v1215
    %v1217 = vpop.f32.mrb[0].mxu0
    %v1218 = vadd.f32 0.0, %v1217
    %v1219 = vpop.f32.mrb[0].mxu0
    %v1220 = vadd.f32 0.0, %v1219
    %v1221 = vpop.f32.mrb[0].mxu0
    %v1222 = vadd.f32 0.0, %v1221
    %1223 = vmatprep.mubr.bf16.mxu0 0
    %1224 = vmatmul.mubr.bf16.gmra.mrb[0].mxu0 %v509
    %v1225 = vpop.f32.mrb[0].mxu0
    %v1226 = vadd.f32 0.0, %v1225
    %v1227 = vpop.f32.mrb[0].mxu0
    %v1228 = vadd.f32 0.0, %v1227
    %v1229 = vpop.f32.mrb[0].mxu0
    %v1230 = vadd.f32 0.0, %v1229
    %v1231 = vpop.f32.mrb[0].mxu0
    %v1232 = vadd.f32 0.0, %v1231
    %1233 = vmatprep.mubr.bf16.mxu0 0
    %1234 = vmatmul.mubr.bf16.gmra.mrb[0].mxu0 %v512
    %v1235 = vpop.f32.mrb[0].mxu0
    %v1236 = vadd.f32 0.0, %v1235
    %v1237 = vpop.f32.mrb[0].mxu0
    %v1238 = vadd.f32 0.0, %v1237
    %v1239 = vpop.f32.mrb[0].mxu0
    %v1240 = vadd.f32 0.0, %v1239
    %v1241 = vpop.f32.mrb[0].mxu0
    %v1242 = vadd.f32 0.0, %v1241
    %1243 = vmatprep.mubr.bf16.mxu0 0
    %1244 = vmatmul.mubr.bf16.gmra.mrb[0].mxu0 %v515
    %v1245 = vpop.f32.mrb[0].mxu0
    %v1246 = vadd.f32 0.0, %v1245
    %v1247 = vpop.f32.mrb[0].mxu0
    %v1248 = vadd.f32 0.0, %v1247
    %v1249 = vpop.f32.mrb[0].mxu0
    %v1250 = vadd.f32 0.0, %v1249
    %v1251 = vpop.f32.mrb[0].mxu0
    %v1252 = vadd.f32 0.0, %v1251
    %1253 = vmatprep.mubr.bf16.mxu0 0
    %1254 = vmatmul.mubr.bf16.gmra.mrb[0].mxu0 %v518
    %v1255 = vpop.f32.mrb[0].mxu0
    %v1256 = vadd.f32 0.0, %v1255
    %v1257 = vpop.f32.mrb[0].mxu0
    %v1258 = vadd.f32 0.0, %v1257
    %v1259 = vpop.f32.mrb[0].mxu0
    %v1260 = vadd.f32 0.0, %v1259
    %v1261 = vpop.f32.mrb[0].mxu0
    %v1262 = vadd.f32 0.0, %v1261
    %1263 = vmatprep.mubr.bf16.mxu0 0
    %1264 = vmatmul.mubr.bf16.gmra.mrb[0].mxu0 %v521
    %v1265 = vpop.f32.mrb[0].mxu0
    %v1266 = vadd.f32 0.0, %v1265
    %v1267 = vpop.f32.mrb[0].mxu0
    %v1268 = vadd.f32 0.0, %v1267
    %v1269 = vpop.f32.mrb[0].mxu0
    %v1270 = vadd.f32 0.0, %v1269
    %v1271 = vpop.f32.mrb[0].mxu0
    %v1272 = vadd.f32 0.0, %v1271
    %1273 = vmatprep.mubr.bf16.mxu0 0
    %1274 = vmatmul.mubr.bf16.gmra.mrb[0].mxu0 %v524
    %v1275 = vpop.f32.mrb[0].mxu0
    %v1276 = vadd.f32 0.0, %v1275
    %v1277 = vpop.f32.mrb[0].mxu0
    %v1278 = vadd.f32 0.0, %v1277
    %v1279 = vpop.f32.mrb[0].mxu0
    %v1280 = vadd.f32 0.0, %v1279
    %v1281 = vpop.f32.mrb[0].mxu0
    %v1282 = vadd.f32 0.0, %v1281
    %1283 = vmatprep.mubr.bf16.mxu0 0
    %1284 = vmatmul.mubr.bf16.gmra.mrb[0].mxu0 %v527
    %v1285 = vpop.f32.mrb[0].mxu0
    %v1286 = vadd.f32 0.0, %v1285
    %v1287 = vpop.f32.mrb[0].mxu0
    %v1288 = vadd.f32 0.0, %v1287
    %v1289 = vpop.f32.mrb[0].mxu0
    %v1290 = vadd.f32 0.0, %v1289
    %v1291 = vpop.f32.mrb[0].mxu0
    %v1292 = vadd.f32 0.0, %v1291
    %1293 = vmatprep.mubr.bf16.mxu0 0
    %1294 = vmatmul.mubr.bf16.gmra.mrb[0].mxu0 %v530
    %v1295 = vpop.f32.mrb[0].mxu0
    %v1296 = vadd.f32 0.0, %v1295
    %v1297 = vpop.f32.mrb[0].mxu0
    %v1298 = vadd.f32 0.0, %v1297
    %v1299 = vpop.f32.mrb[0].mxu0
    %v1300 = vadd.f32 0.0, %v1299
    %v1301 = vpop.f32.mrb[0].mxu0
    %v1302 = vadd.f32 0.0, %v1301
    %1303 = vdwg.mxu0
    %v1304 = vld [vmem:[%s2] ss:$8 sm:$0xf]
    %v1305 = vld [vmem:[%s2] ss:$8 sm:$0xf0]
    %v1306 = vor.u32 %v1304, %v1305
    %s1307 = scalar_lea.vmem %s2, 1
    %v1308 = vld [vmem:[%s1307] ss:$8 sm:$0xf]
    %v1309 = vld [vmem:[%s1307] ss:$8 sm:$0xf0]
    %v1310 = vor.u32 %v1308, %v1309
    %v1311 = vadd.f32 %v567, %v571
    %v1312 = vadd.f32 %v1311, %v577
    %v1313 = vadd.f32 %v1312, %v581
    %v1314 = vadd.f32 %v1313, %v587
    %v1315 = vadd.f32 %v1314, %v591
    %v1316 = vadd.f32 %v1315, %v597
    %v1317 = vadd.f32 %v1316, %v601
    %v1318 = vadd.f32 %v1317, %v607
    %v1319 = vadd.f32 %v1318, %v611
    %v1320 = vadd.f32 %v1319, %v617
    %v1321 = vadd.f32 %v1320, %v621
    %v1322 = vadd.f32 %v1321, %v627
    %v1323 = vadd.f32 %v1322, %v631
    %v1324 = vadd.f32 %v1323, %v637
    %v1325 = vadd.f32 %v1324, %v641
    %v1326 = vadd.f32 %v1325, %v647
    %v1327 = vadd.f32 %v1326, %v651
    %v1328 = vadd.f32 %v1327, %v657
    %v1329 = vadd.f32 %v1328, %v661
    %v1330 = vadd.f32 %v1329, %v667
    %v1331 = vadd.f32 %v1330, %v671
    %v1332 = vadd.f32 %v1331, %v677
    %v1333 = vadd.f32 %v1332, %v681
    %v1334 = vadd.f32 %v1333, %v687
    %v1335 = vadd.f32 %v1334, %v691
    %v1336 = vadd.f32 %v1335, %v697
    %v1337 = vadd.f32 %v1336, %v701
    %v1338 = vadd.f32 %v1337, %v707
    %v1339 = vadd.f32 %v1338, %v711
    %v1340 = vadd.f32 %v1339, %v717
    %v1341 = vadd.f32 %v1340, %v721
    %v1342 = vrot.slane %v1341, 4
    %v1343 = vadd.f32 %v1341, %v1342
    %v1344 = vrot.slane %v1343, 2
    %v1345 = vadd.f32 %v1343, %v1344
    %v1346 = vrot.slane %v1345, 1
    %v1347 = vadd.f32 %v1345, %v1346
    %v1348 = vadd.f32 %v569, %v573
    %v1349 = vadd.f32 %v1348, %v579
    %v1350 = vadd.f32 %v1349, %v583
    %v1351 = vadd.f32 %v1350, %v589
    %v1352 = vadd.f32 %v1351, %v593
    %v1353 = vadd.f32 %v1352, %v599
    %v1354 = vadd.f32 %v1353, %v603
    %v1355 = vadd.f32 %v1354, %v609
    %v1356 = vadd.f32 %v1355, %v613
    %v1357 = vadd.f32 %v1356, %v619
    %v1358 = vadd.f32 %v1357, %v623
    %v1359 = vadd.f32 %v1358, %v629
    %v1360 = vadd.f32 %v1359, %v633
    %v1361 = vadd.f32 %v1360, %v639
    %v1362 = vadd.f32 %v1361, %v643
    %v1363 = vadd.f32 %v1362, %v649
    %v1364 = vadd.f32 %v1363, %v653
    %v1365 = vadd.f32 %v1364, %v659
    %v1366 = vadd.f32 %v1365, %v663
    %v1367 = vadd.f32 %v1366, %v669
    %v1368 = vadd.f32 %v1367, %v673
    %v1369 = vadd.f32 %v1368, %v679
    %v1370 = vadd.f32 %v1369, %v683
    %v1371 = vadd.f32 %v1370, %v689
    %v1372 = vadd.f32 %v1371, %v693
    %v1373 = vadd.f32 %v1372, %v699
    %v1374 = vadd.f32 %v1373, %v703
    %v1375 = vadd.f32 %v1374, %v709
    %v1376 = vadd.f32 %v1375, %v713
    %v1377 = vadd.f32 %v1376, %v719
    %v1378 = vadd.f32 %v1377, %v723
    %v1379 = vrot.slane %v1378, 4
    %v1380 = vadd.f32 %v1378, %v1379
    %v1381 = vrot.slane %v1380, 2
    %v1382 = vadd.f32 %v1380, %v1381
    %v1383 = vrot.slane %v1382, 1
    %v1384 = vadd.f32 %v1382, %v1383
    %v1385 = vadd.f32 %v760, %v764
    %v1386 = vadd.f32 %v1385, %v770
    %v1387 = vadd.f32 %v1386, %v774
    %v1388 = vadd.f32 %v1387, %v780
    %v1389 = vadd.f32 %v1388, %v784
    %v1390 = vadd.f32 %v1389, %v790
    %v1391 = vadd.f32 %v1390, %v794
    %v1392 = vadd.f32 %v1391, %v800
    %v1393 = vadd.f32 %v1392, %v804
    %v1394 = vadd.f32 %v1393, %v810
    %v1395 = vadd.f32 %v1394, %v814
    %v1396 = vadd.f32 %v1395, %v820
    %v1397 = vadd.f32 %v1396, %v824
    %v1398 = vadd.f32 %v1397, %v830
    %v1399 = vadd.f32 %v1398, %v834
    %v1400 = vadd.f32 %v1399, %v840
    %v1401 = vadd.f32 %v1400, %v844
    %v1402 = vadd.f32 %v1401, %v850
    %v1403 = vadd.f32 %v1402, %v854
    %v1404 = vadd.f32 %v1403, %v860
    %v1405 = vadd.f32 %v1404, %v864
    %v1406 = vadd.f32 %v1405, %v870
    %v1407 = vadd.f32 %v1406, %v874
    %v1408 = vadd.f32 %v1407, %v880
    %v1409 = vadd.f32 %v1408, %v884
    %v1410 = vadd.f32 %v1409, %v890
    %v1411 = vadd.f32 %v1410, %v894
    %v1412 = vadd.f32 %v1411, %v900
    %v1413 = vadd.f32 %v1412, %v904
    %v1414 = vadd.f32 %v1413, %v910
    %v1415 = vadd.f32 %v1414, %v914
    %v1416 = vrot.slane %v1415, 4
    %v1417 = vadd.f32 %v1415, %v1416
    %v1418 = vrot.slane %v1417, 2
    %v1419 = vadd.f32 %v1417, %v1418
    %v1420 = vrot.slane %v1419, 1
    %v1421 = vadd.f32 %v1419, %v1420
    %v1422 = vadd.f32 %v762, %v766
    %v1423 = vadd.f32 %v1422, %v772
    %v1424 = vadd.f32 %v1423, %v776
    %v1425 = vadd.f32 %v1424, %v782
    %v1426 = vadd.f32 %v1425, %v786
    %v1427 = vadd.f32 %v1426, %v792
    %v1428 = vadd.f32 %v1427, %v796
    %v1429 = vadd.f32 %v1428, %v802
    %v1430 = vadd.f32 %v1429, %v806
    %v1431 = vadd.f32 %v1430, %v812
    %v1432 = vadd.f32 %v1431, %v816
    %v1433 = vadd.f32 %v1432, %v822
    %v1434 = vadd.f32 %v1433, %v826
    %v1435 = vadd.f32 %v1434, %v832
    %v1436 = vadd.f32 %v1435, %v836
    %v1437 = vadd.f32 %v1436, %v842
    %v1438 = vadd.f32 %v1437, %v846
    %v1439 = vadd.f32 %v1438, %v852
    %v1440 = vadd.f32 %v1439, %v856
    %v1441 = vadd.f32 %v1440, %v862
    %v1442 = vadd.f32 %v1441, %v866
    %v1443 = vadd.f32 %v1442, %v872
    %v1444 = vadd.f32 %v1443, %v876
    %v1445 = vadd.f32 %v1444, %v882
    %v1446 = vadd.f32 %v1445, %v886
    %v1447 = vadd.f32 %v1446, %v892
    %v1448 = vadd.f32 %v1447, %v896
    %v1449 = vadd.f32 %v1448, %v902
    %v1450 = vadd.f32 %v1449, %v906
    %v1451 = vadd.f32 %v1450, %v912
    %v1452 = vadd.f32 %v1451, %v916
    %v1453 = vrot.slane %v1452, 4
    %v1454 = vadd.f32 %v1452, %v1453
    %v1455 = vrot.slane %v1454, 2
    %v1456 = vadd.f32 %v1454, %v1455
    %v1457 = vrot.slane %v1456, 1
    %v1458 = vadd.f32 %v1456, %v1457
    %v1459 = vadd.f32 %v953, %v957
    %v1460 = vadd.f32 %v1459, %v963
    %v1461 = vadd.f32 %v1460, %v967
    %v1462 = vadd.f32 %v1461, %v973
    %v1463 = vadd.f32 %v1462, %v977
    %v1464 = vadd.f32 %v1463, %v983
    %v1465 = vadd.f32 %v1464, %v987
    %v1466 = vadd.f32 %v1465, %v993
    %v1467 = vadd.f32 %v1466, %v997
    %v1468 = vadd.f32 %v1467, %v1003
    %v1469 = vadd.f32 %v1468, %v1007
    %v1470 = vadd.f32 %v1469, %v1013
    %v1471 = vadd.f32 %v1470, %v1017
    %v1472 = vadd.f32 %v1471, %v1023
    %v1473 = vadd.f32 %v1472, %v1027
    %v1474 = vadd.f32 %v1473, %v1033
    %v1475 = vadd.f32 %v1474, %v1037
    %v1476 = vadd.f32 %v1475, %v1043
    %v1477 = vadd.f32 %v1476, %v1047
    %v1478 = vadd.f32 %v1477, %v1053
    %v1479 = vadd.f32 %v1478, %v1057
    %v1480 = vadd.f32 %v1479, %v1063
    %v1481 = vadd.f32 %v1480, %v1067
    %v1482 = vadd.f32 %v1481, %v1073
    %v1483 = vadd.f32 %v1482, %v1077
    %v1484 = vadd.f32 %v1483, %v1083
    %v1485 = vadd.f32 %v1484, %v1087
    %v1486 = vadd.f32 %v1485, %v1093
    %v1487 = vadd.f32 %v1486, %v1097
    %v1488 = vadd.f32 %v1487, %v1103
    %v1489 = vadd.f32 %v1488, %v1107
    %v1490 = vrot.slane %v1489, 4
    %v1491 = vadd.f32 %v1489, %v1490
    %v1492 = vrot.slane %v1491, 2
    %v1493 = vadd.f32 %v1491, %v1492
    %v1494 = vrot.slane %v1493, 1
    %v1495 = vadd.f32 %v1493, %v1494
    %v1496 = vadd.f32 %v955, %v959
    %v1497 = vadd.f32 %v1496, %v965
    %v1498 = vadd.f32 %v1497, %v969
    %v1499 = vadd.f32 %v1498, %v975
    %v1500 = vadd.f32 %v1499, %v979
    %v1501 = vadd.f32 %v1500, %v985
    %v1502 = vadd.f32 %v1501, %v989
    %v1503 = vadd.f32 %v1502, %v995
    %v1504 = vadd.f32 %v1503, %v999
    %v1505 = vadd.f32 %v1504, %v1005
    %v1506 = vadd.f32 %v1505, %v1009
    %v1507 = vadd.f32 %v1506, %v1015
    %v1508 = vadd.f32 %v1507, %v1019
    %v1509 = vadd.f32 %v1508, %v1025
    %v1510 = vadd.f32 %v1509, %v1029
    %v1511 = vadd.f32 %v1510, %v1035
    %v1512 = vadd.f32 %v1511, %v1039
    %v1513 = vadd.f32 %v1512, %v1045
    %v1514 = vadd.f32 %v1513, %v1049
    %v1515 = vadd.f32 %v1514, %v1055
    %v1516 = vadd.f32 %v1515, %v1059
    %v1517 = vadd.f32 %v1516, %v1065
    %v1518 = vadd.f32 %v1517, %v1069
    %v1519 = vadd.f32 %v1518, %v1075
    %v1520 = vadd.f32 %v1519, %v1079
    %v1521 = vadd.f32 %v1520, %v1085
    %v1522 = vadd.f32 %v1521, %v1089
    %v1523 = vadd.f32 %v1522, %v1095
    %v1524 = vadd.f32 %v1523, %v1099
    %v1525 = vadd.f32 %v1524, %v1105
    %v1526 = vadd.f32 %v1525, %v1109
    %v1527 = vrot.slane %v1526, 4
    %v1528 = vadd.f32 %v1526, %v1527
    %v1529 = vrot.slane %v1528, 2
    %v1530 = vadd.f32 %v1528, %v1529
    %v1531 = vrot.slane %v1530, 1
    %v1532 = vadd.f32 %v1530, %v1531
    %v1533 = vadd.f32 %v1146, %v1150
    %v1534 = vadd.f32 %v1533, %v1156
    %v1535 = vadd.f32 %v1534, %v1160
    %v1536 = vadd.f32 %v1535, %v1166
    %v1537 = vadd.f32 %v1536, %v1170
    %v1538 = vadd.f32 %v1537, %v1176
    %v1539 = vadd.f32 %v1538, %v1180
    %v1540 = vadd.f32 %v1539, %v1186
    %v1541 = vadd.f32 %v1540, %v1190
    %v1542 = vadd.f32 %v1541, %v1196
    %v1543 = vadd.f32 %v1542, %v1200
    %v1544 = vadd.f32 %v1543, %v1206
    %v1545 = vadd.f32 %v1544, %v1210
    %v1546 = vadd.f32 %v1545, %v1216
    %v1547 = vadd.f32 %v1546, %v1220
    %v1548 = vadd.f32 %v1547, %v1226
    %v1549 = vadd.f32 %v1548, %v1230
    %v1550 = vadd.f32 %v1549, %v1236
    %v1551 = vadd.f32 %v1550, %v1240
    %v1552 = vadd.f32 %v1551, %v1246
    %v1553 = vadd.f32 %v1552, %v1250
    %v1554 = vadd.f32 %v1553, %v1256
    %v1555 = vadd.f32 %v1554, %v1260
    %v1556 = vadd.f32 %v1555, %v1266
    %v1557 = vadd.f32 %v1556, %v1270
    %v1558 = vadd.f32 %v1557, %v1276
    %v1559 = vadd.f32 %v1558, %v1280
    %v1560 = vadd.f32 %v1559, %v1286
    %v1561 = vadd.f32 %v1560, %v1290
    %v1562 = vadd.f32 %v1561, %v1296
    %v1563 = vadd.f32 %v1562, %v1300
    %v1564 = vrot.slane %v1563, 4
    %v1565 = vadd.f32 %v1563, %v1564
    %v1566 = vrot.slane %v1565, 2
    %v1567 = vadd.f32 %v1565, %v1566
    %v1568 = vrot.slane %v1567, 1
    %v1569 = vadd.f32 %v1567, %v1568
    %v1570 = vadd.f32 %v1148, %v1152
    %v1571 = vadd.f32 %v1570, %v1158
    %v1572 = vadd.f32 %v1571, %v1162
    %v1573 = vadd.f32 %v1572, %v1168
    %v1574 = vadd.f32 %v1573, %v1172
    %v1575 = vadd.f32 %v1574, %v1178
    %v1576 = vadd.f32 %v1575, %v1182
    %v1577 = vadd.f32 %v1576, %v1188
    %v1578 = vadd.f32 %v1577, %v1192
    %v1579 = vadd.f32 %v1578, %v1198
    %v1580 = vadd.f32 %v1579, %v1202
    %v1581 = vadd.f32 %v1580, %v1208
    %v1582 = vadd.f32 %v1581, %v1212
    %v1583 = vadd.f32 %v1582, %v1218
    %v1584 = vadd.f32 %v1583, %v1222
    %v1585 = vadd.f32 %v1584, %v1228
    %v1586 = vadd.f32 %v1585, %v1232
    %v1587 = vadd.f32 %v1586, %v1238
    %v1588 = vadd.f32 %v1587, %v1242
    %v1589 = vadd.f32 %v1588, %v1248
    %v1590 = vadd.f32 %v1589, %v1252
    %v1591 = vadd.f32 %v1590, %v1258
    %v1592 = vadd.f32 %v1591, %v1262
    %v1593 = vadd.f32 %v1592, %v1268
    %v1594 = vadd.f32 %v1593, %v1272
    %v1595 = vadd.f32 %v1594, %v1278
    %v1596 = vadd.f32 %v1595, %v1282
    %v1597 = vadd.f32 %v1596, %v1288
    %v1598 = vadd.f32 %v1597, %v1292
    %v1599 = vadd.f32 %v1598, %v1298
    %v1600 = vadd.f32 %v1599, %v1302
    %v1601 = vrot.slane %v1600, 4
    %v1602 = vadd.f32 %v1600, %v1601
    %v1603 = vrot.slane %v1602, 2
    %v1604 = vadd.f32 %v1602, %v1603
    %v1605 = vrot.slane %v1604, 1
    %v1606 = vadd.f32 %v1604, %v1605
    %v1607 = vmul.f32 %v1347, 0.00390625
    %v1608 = vmul.f32 %v1384, 0.00390625
    %v1609 = vmul.f32 %v1421, 0.00390625
    %v1610 = vmul.f32 %v1458, 0.00390625
    %v1611 = vmul.f32 %v1495, 0.00390625
    %v1612 = vmul.f32 %v1532, 0.00390625
    %v1613 = vmul.f32 %v1569, 0.00390625
    %v1614 = vmul.f32 %v1606, 0.00390625
    %v1615 = vmul.f32 %v567, %v567
    %v1616 = vmul.f32 %v569, %v569
    %v1617 = vmul.f32 %v760, %v760
    %v1618 = vmul.f32 %v762, %v762
    %v1619 = vmul.f32 %v953, %v953
    %v1620 = vmul.f32 %v955, %v955
    %v1621 = vmul.f32 %v1146, %v1146
    %v1622 = vmul.f32 %v1148, %v1148
    %v1623 = vmul.f32 %v571, %v571
    %v1624 = vmul.f32 %v573, %v573
    %v1625 = vmul.f32 %v764, %v764
    %v1626 = vmul.f32 %v766, %v766
    %v1627 = vmul.f32 %v957, %v957
    %v1628 = vmul.f32 %v959, %v959
    %v1629 = vmul.f32 %v1150, %v1150
    %v1630 = vmul.f32 %v1152, %v1152
    %v1631 = vmul.f32 %v577, %v577
    %v1632 = vmul.f32 %v579, %v579
    %v1633 = vmul.f32 %v770, %v770
    %v1634 = vmul.f32 %v772, %v772
    %v1635 = vmul.f32 %v963, %v963
    %v1636 = vmul.f32 %v965, %v965
    %v1637 = vmul.f32 %v1156, %v1156
    %v1638 = vmul.f32 %v1158, %v1158
    %v1639 = vmul.f32 %v581, %v581
    %v1640 = vmul.f32 %v583, %v583
    %v1641 = vmul.f32 %v774, %v774
    %v1642 = vmul.f32 %v776, %v776
    %v1643 = vmul.f32 %v967, %v967
    %v1644 = vmul.f32 %v969, %v969
    %v1645 = vmul.f32 %v1160, %v1160
    %v1646 = vmul.f32 %v1162, %v1162
    %v1647 = vmul.f32 %v587, %v587
    %v1648 = vmul.f32 %v589, %v589
    %v1649 = vmul.f32 %v780, %v780
    %v1650 = vmul.f32 %v782, %v782
    %v1651 = vmul.f32 %v973, %v973
    %v1652 = vmul.f32 %v975, %v975
    %v1653 = vmul.f32 %v1166, %v1166
    %v1654 = vmul.f32 %v1168, %v1168
    %v1655 = vmul.f32 %v591, %v591
    %v1656 = vmul.f32 %v593, %v593
    %v1657 = vmul.f32 %v784, %v784
    %v1658 = vmul.f32 %v786, %v786
    %v1659 = vmul.f32 %v977, %v977
    %v1660 = vmul.f32 %v979, %v979
    %v1661 = vmul.f32 %v1170, %v1170
    %v1662 = vmul.f32 %v1172, %v1172
    %v1663 = vmul.f32 %v597, %v597
    %v1664 = vmul.f32 %v599, %v599
    %v1665 = vmul.f32 %v790, %v790
    %v1666 = vmul.f32 %v792, %v792
    %v1667 = vmul.f32 %v983, %v983
    %v1668 = vmul.f32 %v985, %v985
    %v1669 = vmul.f32 %v1176, %v1176
    %v1670 = vmul.f32 %v1178, %v1178
    %v1671 = vmul.f32 %v601, %v601
    %v1672 = vmul.f32 %v603, %v603
    %v1673 = vmul.f32 %v794, %v794
    %v1674 = vmul.f32 %v796, %v796
    %v1675 = vmul.f32 %v987, %v987
    %v1676 = vmul.f32 %v989, %v989
    %v1677 = vmul.f32 %v1180, %v1180
    %v1678 = vmul.f32 %v1182, %v1182
    %v1679 = vmul.f32 %v607, %v607
    %v1680 = vmul.f32 %v609, %v609
    %v1681 = vmul.f32 %v800, %v800
    %v1682 = vmul.f32 %v802, %v802
    %v1683 = vmul.f32 %v993, %v993
    %v1684 = vmul.f32 %v995, %v995
    %v1685 = vmul.f32 %v1186, %v1186
    %v1686 = vmul.f32 %v1188, %v1188
    %v1687 = vmul.f32 %v611, %v611
    %v1688 = vmul.f32 %v613, %v613
    %v1689 = vmul.f32 %v804, %v804
    %v1690 = vmul.f32 %v806, %v806
    %v1691 = vmul.f32 %v997, %v997
    %v1692 = vmul.f32 %v999, %v999
    %v1693 = vmul.f32 %v1190, %v1190
    %v1694 = vmul.f32 %v1192, %v1192
    %v1695 = vmul.f32 %v617, %v617
    %v1696 = vmul.f32 %v619, %v619
    %v1697 = vmul.f32 %v810, %v810
    %v1698 = vmul.f32 %v812, %v812
    %v1699 = vmul.f32 %v1003, %v1003
    %v1700 = vmul.f32 %v1005, %v1005
    %v1701 = vmul.f32 %v1196, %v1196
    %v1702 = vmul.f32 %v1198, %v1198
    %v1703 = vmul.f32 %v621, %v621
    %v1704 = vmul.f32 %v623, %v623
    %v1705 = vmul.f32 %v814, %v814
    %v1706 = vmul.f32 %v816, %v816
    %v1707 = vmul.f32 %v1007, %v1007
    %v1708 = vmul.f32 %v1009, %v1009
    %v1709 = vmul.f32 %v1200, %v1200
    %v1710 = vmul.f32 %v1202, %v1202
    %v1711 = vmul.f32 %v627, %v627
    %v1712 = vmul.f32 %v629, %v629
    %v1713 = vmul.f32 %v820, %v820
    %v1714 = vmul.f32 %v822, %v822
    %v1715 = vmul.f32 %v1013, %v1013
    %v1716 = vmul.f32 %v1015, %v1015
    %v1717 = vmul.f32 %v1206, %v1206
    %v1718 = vmul.f32 %v1208, %v1208
    %v1719 = vmul.f32 %v631, %v631
    %v1720 = vmul.f32 %v633, %v633
    %v1721 = vmul.f32 %v824, %v824
    %v1722 = vmul.f32 %v826, %v826
    %v1723 = vmul.f32 %v1017, %v1017
    %v1724 = vmul.f32 %v1019, %v1019
    %v1725 = vmul.f32 %v1210, %v1210
    %v1726 = vmul.f32 %v1212, %v1212
    %v1727 = vmul.f32 %v637, %v637
    %v1728 = vmul.f32 %v639, %v639
    %v1729 = vmul.f32 %v830, %v830
    %v1730 = vmul.f32 %v832, %v832
    %v1731 = vmul.f32 %v1023, %v1023
    %v1732 = vmul.f32 %v1025, %v1025
    %v1733 = vmul.f32 %v1216, %v1216
    %v1734 = vmul.f32 %v1218, %v1218
    %v1735 = vmul.f32 %v641, %v641
    %v1736 = vmul.f32 %v643, %v643
    %v1737 = vmul.f32 %v834, %v834
    %v1738 = vmul.f32 %v836, %v836
    %v1739 = vmul.f32 %v1027, %v1027
    %v1740 = vmul.f32 %v1029, %v1029
    %v1741 = vmul.f32 %v1220, %v1220
    %v1742 = vmul.f32 %v1222, %v1222
    %v1743 = vmul.f32 %v647, %v647
    %v1744 = vmul.f32 %v649, %v649
    %v1745 = vmul.f32 %v840, %v840
    %v1746 = vmul.f32 %v842, %v842
    %v1747 = vmul.f32 %v1033, %v1033
    %v1748 = vmul.f32 %v1035, %v1035
    %v1749 = vmul.f32 %v1226, %v1226
    %v1750 = vmul.f32 %v1228, %v1228
    %v1751 = vmul.f32 %v651, %v651
    %v1752 = vmul.f32 %v653, %v653
    %v1753 = vmul.f32 %v844, %v844
    %v1754 = vmul.f32 %v846, %v846
    %v1755 = vmul.f32 %v1037, %v1037
    %v1756 = vmul.f32 %v1039, %v1039
    %v1757 = vmul.f32 %v1230, %v1230
    %v1758 = vmul.f32 %v1232, %v1232
    %v1759 = vmul.f32 %v657, %v657
    %v1760 = vmul.f32 %v659, %v659
    %v1761 = vmul.f32 %v850, %v850
    %v1762 = vmul.f32 %v852, %v852
    %v1763 = vmul.f32 %v1043, %v1043
    %v1764 = vmul.f32 %v1045, %v1045
    %v1765 = vmul.f32 %v1236, %v1236
    %v1766 = vmul.f32 %v1238, %v1238
    %v1767 = vmul.f32 %v661, %v661
    %v1768 = vmul.f32 %v663, %v663
    %v1769 = vmul.f32 %v854, %v854
    %v1770 = vmul.f32 %v856, %v856
    %v1771 = vmul.f32 %v1047, %v1047
    %v1772 = vmul.f32 %v1049, %v1049
    %v1773 = vmul.f32 %v1240, %v1240
    %v1774 = vmul.f32 %v1242, %v1242
    %v1775 = vmul.f32 %v667, %v667
    %v1776 = vmul.f32 %v669, %v669
    %v1777 = vmul.f32 %v860, %v860
    %v1778 = vmul.f32 %v862, %v862
    %v1779 = vmul.f32 %v1053, %v1053
    %v1780 = vmul.f32 %v1055, %v1055
    %v1781 = vmul.f32 %v1246, %v1246
    %v1782 = vmul.f32 %v1248, %v1248
    %v1783 = vmul.f32 %v671, %v671
    %v1784 = vmul.f32 %v673, %v673
    %v1785 = vmul.f32 %v864, %v864
    %v1786 = vmul.f32 %v866, %v866
    %v1787 = vmul.f32 %v1057, %v1057
    %v1788 = vmul.f32 %v1059, %v1059
    %v1789 = vmul.f32 %v1250, %v1250
    %v1790 = vmul.f32 %v1252, %v1252
    %v1791 = vmul.f32 %v677, %v677
    %v1792 = vmul.f32 %v679, %v679
    %v1793 = vmul.f32 %v870, %v870
    %v1794 = vmul.f32 %v872, %v872
    %v1795 = vmul.f32 %v1063, %v1063
    %v1796 = vmul.f32 %v1065, %v1065
    %v1797 = vmul.f32 %v1256, %v1256
    %v1798 = vmul.f32 %v1258, %v1258
    %v1799 = vmul.f32 %v681, %v681
    %v1800 = vmul.f32 %v683, %v683
    %v1801 = vmul.f32 %v874, %v874
    %v1802 = vmul.f32 %v876, %v876
    %v1803 = vmul.f32 %v1067, %v1067
    %v1804 = vmul.f32 %v1069, %v1069
    %v1805 = vmul.f32 %v1260, %v1260
    %v1806 = vmul.f32 %v1262, %v1262
    %v1807 = vmul.f32 %v687, %v687
    %v1808 = vmul.f32 %v689, %v689
    %v1809 = vmul.f32 %v880, %v880
    %v1810 = vmul.f32 %v882, %v882
    %v1811 = vmul.f32 %v1073, %v1073
    %v1812 = vmul.f32 %v1075, %v1075
    %v1813 = vmul.f32 %v1266, %v1266
    %v1814 = vmul.f32 %v1268, %v1268
    %v1815 = vmul.f32 %v691, %v691
    %v1816 = vmul.f32 %v693, %v693
    %v1817 = vmul.f32 %v884, %v884
    %v1818 = vmul.f32 %v886, %v886
    %v1819 = vmul.f32 %v1077, %v1077
    %v1820 = vmul.f32 %v1079, %v1079
    %v1821 = vmul.f32 %v1270, %v1270
    %v1822 = vmul.f32 %v1272, %v1272
    %v1823 = vmul.f32 %v697, %v697
    %v1824 = vmul.f32 %v699, %v699
    %v1825 = vmul.f32 %v890, %v890
    %v1826 = vmul.f32 %v892, %v892
    %v1827 = vmul.f32 %v1083, %v1083
    %v1828 = vmul.f32 %v1085, %v1085
    %v1829 = vmul.f32 %v1276, %v1276
    %v1830 = vmul.f32 %v1278, %v1278
    %v1831 = vmul.f32 %v701, %v701
    %v1832 = vmul.f32 %v703, %v703
    %v1833 = vmul.f32 %v894, %v894
    %v1834 = vmul.f32 %v896, %v896
    %v1835 = vmul.f32 %v1087, %v1087
    %v1836 = vmul.f32 %v1089, %v1089
    %v1837 = vmul.f32 %v1280, %v1280
    %v1838 = vmul.f32 %v1282, %v1282
    %v1839 = vmul.f32 %v707, %v707
    %v1840 = vmul.f32 %v709, %v709
    %v1841 = vmul.f32 %v900, %v900
    %v1842 = vmul.f32 %v902, %v902
    %v1843 = vmul.f32 %v1093, %v1093
    %v1844 = vmul.f32 %v1095, %v1095
    %v1845 = vmul.f32 %v1286, %v1286
    %v1846 = vmul.f32 %v1288, %v1288
    %v1847 = vmul.f32 %v711, %v711
    %v1848 = vmul.f32 %v713, %v713
    %v1849 = vmul.f32 %v904, %v904
    %v1850 = vmul.f32 %v906, %v906
    %v1851 = vmul.f32 %v1097, %v1097
    %v1852 = vmul.f32 %v1099, %v1099
    %v1853 = vmul.f32 %v1290, %v1290
    %v1854 = vmul.f32 %v1292, %v1292
    %v1855 = vmul.f32 %v717, %v717
    %v1856 = vmul.f32 %v719, %v719
    %v1857 = vmul.f32 %v910, %v910
    %v1858 = vmul.f32 %v912, %v912
    %v1859 = vmul.f32 %v1103, %v1103
    %v1860 = vmul.f32 %v1105, %v1105
    %v1861 = vmul.f32 %v1296, %v1296
    %v1862 = vmul.f32 %v1298, %v1298
    %v1863 = vmul.f32 %v721, %v721
    %v1864 = vmul.f32 %v723, %v723
    %v1865 = vmul.f32 %v914, %v914
    %v1866 = vmul.f32 %v916, %v916
    %v1867 = vmul.f32 %v1107, %v1107
    %v1868 = vmul.f32 %v1109, %v1109
    %v1869 = vmul.f32 %v1300, %v1300
    %v1870 = vmul.f32 %v1302, %v1302
    %v1871 = vadd.f32 %v1615, %v1623
    %v1872 = vadd.f32 %v1871, %v1631
    %v1873 = vadd.f32 %v1872, %v1639
    %v1874 = vadd.f32 %v1873, %v1647
    %v1875 = vadd.f32 %v1874, %v1655
    %v1876 = vadd.f32 %v1875, %v1663
    %v1877 = vadd.f32 %v1876, %v1671
    %v1878 = vadd.f32 %v1877, %v1679
    %v1879 = vadd.f32 %v1878, %v1687
    %v1880 = vadd.f32 %v1879, %v1695
    %v1881 = vadd.f32 %v1880, %v1703
    %v1882 = vadd.f32 %v1881, %v1711
    %v1883 = vadd.f32 %v1882, %v1719
    %v1884 = vadd.f32 %v1883, %v1727
    %v1885 = vadd.f32 %v1884, %v1735
    %v1886 = vadd.f32 %v1885, %v1743
    %v1887 = vadd.f32 %v1886, %v1751
    %v1888 = vadd.f32 %v1887, %v1759
    %v1889 = vadd.f32 %v1888, %v1767
    %v1890 = vadd.f32 %v1889, %v1775
    %v1891 = vadd.f32 %v1890, %v1783
    %v1892 = vadd.f32 %v1891, %v1791
    %v1893 = vadd.f32 %v1892, %v1799
    %v1894 = vadd.f32 %v1893, %v1807
    %v1895 = vadd.f32 %v1894, %v1815
    %v1896 = vadd.f32 %v1895, %v1823
    %v1897 = vadd.f32 %v1896, %v1831
    %v1898 = vadd.f32 %v1897, %v1839
    %v1899 = vadd.f32 %v1898, %v1847
    %v1900 = vadd.f32 %v1899, %v1855
    %v1901 = vadd.f32 %v1900, %v1863
    %v1902 = vrot.slane %v1901, 4
    %v1903 = vadd.f32 %v1901, %v1902
    %v1904 = vrot.slane %v1903, 2
    %v1905 = vadd.f32 %v1903, %v1904
    %v1906 = vrot.slane %v1905, 1
    %v1907 = vadd.f32 %v1905, %v1906
    %v1908 = vadd.f32 %v1616, %v1624
    %v1909 = vadd.f32 %v1908, %v1632
    %v1910 = vadd.f32 %v1909, %v1640
    %v1911 = vadd.f32 %v1910, %v1648
    %v1912 = vadd.f32 %v1911, %v1656
    %v1913 = vadd.f32 %v1912, %v1664
    %v1914 = vadd.f32 %v1913, %v1672
    %v1915 = vadd.f32 %v1914, %v1680
    %v1916 = vadd.f32 %v1915, %v1688
    %v1917 = vadd.f32 %v1916, %v1696
    %v1918 = vadd.f32 %v1917, %v1704
    %v1919 = vadd.f32 %v1918, %v1712
    %v1920 = vadd.f32 %v1919, %v1720
    %v1921 = vadd.f32 %v1920, %v1728
    %v1922 = vadd.f32 %v1921, %v1736
    %v1923 = vadd.f32 %v1922, %v1744
    %v1924 = vadd.f32 %v1923, %v1752
    %v1925 = vadd.f32 %v1924, %v1760
    %v1926 = vadd.f32 %v1925, %v1768
    %v1927 = vadd.f32 %v1926, %v1776
    %v1928 = vadd.f32 %v1927, %v1784
    %v1929 = vadd.f32 %v1928, %v1792
    %v1930 = vadd.f32 %v1929, %v1800
    %v1931 = vadd.f32 %v1930, %v1808
    %v1932 = vadd.f32 %v1931, %v1816
    %v1933 = vadd.f32 %v1932, %v1824
    %v1934 = vadd.f32 %v1933, %v1832
    %v1935 = vadd.f32 %v1934, %v1840
    %v1936 = vadd.f32 %v1935, %v1848
    %v1937 = vadd.f32 %v1936, %v1856
    %v1938 = vadd.f32 %v1937, %v1864
    %v1939 = vrot.slane %v1938, 4
    %v1940 = vadd.f32 %v1938, %v1939
    %v1941 = vrot.slane %v1940, 2
    %v1942 = vadd.f32 %v1940, %v1941
    %v1943 = vrot.slane %v1942, 1
    %v1944 = vadd.f32 %v1942, %v1943
    %v1945 = vadd.f32 %v1617, %v1625
    %v1946 = vadd.f32 %v1945, %v1633
    %v1947 = vadd.f32 %v1946, %v1641
    %v1948 = vadd.f32 %v1947, %v1649
    %v1949 = vadd.f32 %v1948, %v1657
    %v1950 = vadd.f32 %v1949, %v1665
    %v1951 = vadd.f32 %v1950, %v1673
    %v1952 = vadd.f32 %v1951, %v1681
    %v1953 = vadd.f32 %v1952, %v1689
    %v1954 = vadd.f32 %v1953, %v1697
    %v1955 = vadd.f32 %v1954, %v1705
    %v1956 = vadd.f32 %v1955, %v1713
    %v1957 = vadd.f32 %v1956, %v1721
    %v1958 = vadd.f32 %v1957, %v1729
    %v1959 = vadd.f32 %v1958, %v1737
    %v1960 = vadd.f32 %v1959, %v1745
    %v1961 = vadd.f32 %v1960, %v1753
    %v1962 = vadd.f32 %v1961, %v1761
    %v1963 = vadd.f32 %v1962, %v1769
    %v1964 = vadd.f32 %v1963, %v1777
    %v1965 = vadd.f32 %v1964, %v1785
    %v1966 = vadd.f32 %v1965, %v1793
    %v1967 = vadd.f32 %v1966, %v1801
    %v1968 = vadd.f32 %v1967, %v1809
    %v1969 = vadd.f32 %v1968, %v1817
    %v1970 = vadd.f32 %v1969, %v1825
    %v1971 = vadd.f32 %v1970, %v1833
    %v1972 = vadd.f32 %v1971, %v1841
    %v1973 = vadd.f32 %v1972, %v1849
    %v1974 = vadd.f32 %v1973, %v1857
    %v1975 = vadd.f32 %v1974, %v1865
    %v1976 = vrot.slane %v1975, 4
    %v1977 = vadd.f32 %v1975, %v1976
    %v1978 = vrot.slane %v1977, 2
    %v1979 = vadd.f32 %v1977, %v1978
    %v1980 = vrot.slane %v1979, 1
    %v1981 = vadd.f32 %v1979, %v1980
    %v1982 = vadd.f32 %v1618, %v1626
    %v1983 = vadd.f32 %v1982, %v1634
    %v1984 = vadd.f32 %v1983, %v1642
    %v1985 = vadd.f32 %v1984, %v1650
    %v1986 = vadd.f32 %v1985, %v1658
    %v1987 = vadd.f32 %v1986, %v1666
    %v1988 = vadd.f32 %v1987, %v1674
    %v1989 = vadd.f32 %v1988, %v1682
    %v1990 = vadd.f32 %v1989, %v1690
    %v1991 = vadd.f32 %v1990, %v1698
    %v1992 = vadd.f32 %v1991, %v1706
    %v1993 = vadd.f32 %v1992, %v1714
    %v1994 = vadd.f32 %v1993, %v1722
    %v1995 = vadd.f32 %v1994, %v1730
    %v1996 = vadd.f32 %v1995, %v1738
    %v1997 = vadd.f32 %v1996, %v1746
    %v1998 = vadd.f32 %v1997, %v1754
    %v1999 = vadd.f32 %v1998, %v1762
    %v2000 = vadd.f32 %v1999, %v1770
    %v2001 = vadd.f32 %v2000, %v1778
    %v2002 = vadd.f32 %v2001, %v1786
    %v2003 = vadd.f32 %v2002, %v1794
    %v2004 = vadd.f32 %v2003, %v1802
    %v2005 = vadd.f32 %v2004, %v1810
    %v2006 = vadd.f32 %v2005, %v1818
    %v2007 = vadd.f32 %v2006, %v1826
    %v2008 = vadd.f32 %v2007, %v1834
    %v2009 = vadd.f32 %v2008, %v1842
    %v2010 = vadd.f32 %v2009, %v1850
    %v2011 = vadd.f32 %v2010, %v1858
    %v2012 = vadd.f32 %v2011, %v1866
    %v2013 = vrot.slane %v2012, 4
    %v2014 = vadd.f32 %v2012, %v2013
    %v2015 = vrot.slane %v2014, 2
    %v2016 = vadd.f32 %v2014, %v2015
    %v2017 = vrot.slane %v2016, 1
    %v2018 = vadd.f32 %v2016, %v2017
    %v2019 = vadd.f32 %v1619, %v1627
    %v2020 = vadd.f32 %v2019, %v1635
    %v2021 = vadd.f32 %v2020, %v1643
    %v2022 = vadd.f32 %v2021, %v1651
    %v2023 = vadd.f32 %v2022, %v1659
    %v2024 = vadd.f32 %v2023, %v1667
    %v2025 = vadd.f32 %v2024, %v1675
    %v2026 = vadd.f32 %v2025, %v1683
    %v2027 = vadd.f32 %v2026, %v1691
    %v2028 = vadd.f32 %v2027, %v1699
    %v2029 = vadd.f32 %v2028, %v1707
    %v2030 = vadd.f32 %v2029, %v1715
    %v2031 = vadd.f32 %v2030, %v1723
    %v2032 = vadd.f32 %v2031, %v1731
    %v2033 = vadd.f32 %v2032, %v1739
    %v2034 = vadd.f32 %v2033, %v1747
    %v2035 = vadd.f32 %v2034, %v1755
    %v2036 = vadd.f32 %v2035, %v1763
    %v2037 = vadd.f32 %v2036, %v1771
    %v2038 = vadd.f32 %v2037, %v1779
    %v2039 = vadd.f32 %v2038, %v1787
    %v2040 = vadd.f32 %v2039, %v1795
    %v2041 = vadd.f32 %v2040, %v1803
    %v2042 = vadd.f32 %v2041, %v1811
    %v2043 = vadd.f32 %v2042, %v1819
    %v2044 = vadd.f32 %v2043, %v1827
    %v2045 = vadd.f32 %v2044, %v1835
    %v2046 = vadd.f32 %v2045, %v1843
    %v2047 = vadd.f32 %v2046, %v1851
    %v2048 = vadd.f32 %v2047, %v1859
    %v2049 = vadd.f32 %v2048, %v1867
    %v2050 = vrot.slane %v2049, 4
    %v2051 = vadd.f32 %v2049, %v2050
    %v2052 = vrot.slane %v2051, 2
    %v2053 = vadd.f32 %v2051, %v2052
    %v2054 = vrot.slane %v2053, 1
    %v2055 = vadd.f32 %v2053, %v2054
    %v2056 = vadd.f32 %v1620, %v1628
    %v2057 = vadd.f32 %v2056, %v1636
    %v2058 = vadd.f32 %v2057, %v1644
    %v2059 = vadd.f32 %v2058, %v1652
    %v2060 = vadd.f32 %v2059, %v1660
    %v2061 = vadd.f32 %v2060, %v1668
    %v2062 = vadd.f32 %v2061, %v1676
    %v2063 = vadd.f32 %v2062, %v1684
    %v2064 = vadd.f32 %v2063, %v1692
    %v2065 = vadd.f32 %v2064, %v1700
    %v2066 = vadd.f32 %v2065, %v1708
    %v2067 = vadd.f32 %v2066, %v1716
    %v2068 = vadd.f32 %v2067, %v1724
    %v2069 = vadd.f32 %v2068, %v1732
    %v2070 = vadd.f32 %v2069, %v1740
    %v2071 = vadd.f32 %v2070, %v1748
    %v2072 = vadd.f32 %v2071, %v1756
    %v2073 = vadd.f32 %v2072, %v1764
    %v2074 = vadd.f32 %v2073, %v1772
    %v2075 = vadd.f32 %v2074, %v1780
    %v2076 = vadd.f32 %v2075, %v1788
    %v2077 = vadd.f32 %v2076, %v1796
    %v2078 = vadd.f32 %v2077, %v1804
    %v2079 = vadd.f32 %v2078, %v1812
    %v2080 = vadd.f32 %v2079, %v1820
    %v2081 = vadd.f32 %v2080, %v1828
    %v2082 = vadd.f32 %v2081, %v1836
    %v2083 = vadd.f32 %v2082, %v1844
    %v2084 = vadd.f32 %v2083, %v1852
    %v2085 = vadd.f32 %v2084, %v1860
    %v2086 = vadd.f32 %v2085, %v1868
    %v2087 = vrot.slane %v2086, 4
    %v2088 = vadd.f32 %v2086, %v2087
    %v2089 = vrot.slane %v2088, 2
    %v2090 = vadd.f32 %v2088, %v2089
    %v2091 = vrot.slane %v2090, 1
    %v2092 = vadd.f32 %v2090, %v2091
    %v2093 = vadd.f32 %v1621, %v1629
    %v2094 = vadd.f32 %v2093, %v1637
    %v2095 = vadd.f32 %v2094, %v1645
    %v2096 = vadd.f32 %v2095, %v1653
    %v2097 = vadd.f32 %v2096, %v1661
    %v2098 = vadd.f32 %v2097, %v1669
    %v2099 = vadd.f32 %v2098, %v1677
    %v2100 = vadd.f32 %v2099, %v1685
    %v2101 = vadd.f32 %v2100, %v1693
    %v2102 = vadd.f32 %v2101, %v1701
    %v2103 = vadd.f32 %v2102, %v1709
    %v2104 = vadd.f32 %v2103, %v1717
    %v2105 = vadd.f32 %v2104, %v1725
    %v2106 = vadd.f32 %v2105, %v1733
    %v2107 = vadd.f32 %v2106, %v1741
    %v2108 = vadd.f32 %v2107, %v1749
    %v2109 = vadd.f32 %v2108, %v1757
    %v2110 = vadd.f32 %v2109, %v1765
    %v2111 = vadd.f32 %v2110, %v1773
    %v2112 = vadd.f32 %v2111, %v1781
    %v2113 = vadd.f32 %v2112, %v1789
    %v2114 = vadd.f32 %v2113, %v1797
    %v2115 = vadd.f32 %v2114, %v1805
    %v2116 = vadd.f32 %v2115, %v1813
    %v2117 = vadd.f32 %v2116, %v1821
    %v2118 = vadd.f32 %v2117, %v1829
    %v2119 = vadd.f32 %v2118, %v1837
    %v2120 = vadd.f32 %v2119, %v1845
    %v2121 = vadd.f32 %v2120, %v1853
    %v2122 = vadd.f32 %v2121, %v1861
    %v2123 = vadd.f32 %v2122, %v1869
    %v2124 = vrot.slane %v2123, 4
    %v2125 = vadd.f32 %v2123, %v2124
    %v2126 = vrot.slane %v2125, 2
    %v2127 = vadd.f32 %v2125, %v2126
    %v2128 = vrot.slane %v2127, 1
    %v2129 = vadd.f32 %v2127, %v2128
    %v2130 = vadd.f32 %v1622, %v1630
    %v2131 = vadd.f32 %v2130, %v1638
    %v2132 = vadd.f32 %v2131, %v1646
    %v2133 = vadd.f32 %v2132, %v1654
    %v2134 = vadd.f32 %v2133, %v1662
    %v2135 = vadd.f32 %v2134, %v1670
    %v2136 = vadd.f32 %v2135, %v1678
    %v2137 = vadd.f32 %v2136, %v1686
    %v2138 = vadd.f32 %v2137, %v1694
    %v2139 = vadd.f32 %v2138, %v1702
    %v2140 = vadd.f32 %v2139, %v1710
    %v2141 = vadd.f32 %v2140, %v1718
    %v2142 = vadd.f32 %v2141, %v1726
    %v2143 = vadd.f32 %v2142, %v1734
    %v2144 = vadd.f32 %v2143, %v1742
    %v2145 = vadd.f32 %v2144, %v1750
    %v2146 = vadd.f32 %v2145, %v1758
    %v2147 = vadd.f32 %v2146, %v1766
    %v2148 = vadd.f32 %v2147, %v1774
    %v2149 = vadd.f32 %v2148, %v1782
    %v2150 = vadd.f32 %v2149, %v1790
    %v2151 = vadd.f32 %v2150, %v1798
    %v2152 = vadd.f32 %v2151, %v1806
    %v2153 = vadd.f32 %v2152, %v1814
    %v2154 = vadd.f32 %v2153, %v1822
    %v2155 = vadd.f32 %v2154, %v1830
    %v2156 = vadd.f32 %v2155, %v1838
    %v2157 = vadd.f32 %v2156, %v1846
    %v2158 = vadd.f32 %v2157, %v1854
    %v2159 = vadd.f32 %v2158, %v1862
    %v2160 = vadd.f32 %v2159, %v1870
    %v2161 = vrot.slane %v2160, 4
    %v2162 = vadd.f32 %v2160, %v2161
    %v2163 = vrot.slane %v2162, 2
    %v2164 = vadd.f32 %v2162, %v2163
    %v2165 = vrot.slane %v2164, 1
    %v2166 = vadd.f32 %v2164, %v2165
    %v2167 = vmul.f32 %v1907, 0.00390625
    %v2168 = vmul.f32 %v1944, 0.00390625
    %v2169 = vmul.f32 %v1981, 0.00390625
    %v2170 = vmul.f32 %v2018, 0.00390625
    %v2171 = vmul.f32 %v2055, 0.00390625
    %v2172 = vmul.f32 %v2092, 0.00390625
    %v2173 = vmul.f32 %v2129, 0.00390625
    %v2174 = vmul.f32 %v2166, 0.00390625
    %v2175 = vmul.f32 %v1607, %v1607
    %v2176 = vmul.f32 %v1608, %v1608
    %v2177 = vmul.f32 %v1609, %v1609
    %v2178 = vmul.f32 %v1610, %v1610
    %v2179 = vmul.f32 %v1611, %v1611
    %v2180 = vmul.f32 %v1612, %v1612
    %v2181 = vmul.f32 %v1613, %v1613
    %v2182 = vmul.f32 %v1614, %v1614
    %v2183 = vsub.f32 %v2167, %v2175
    %v2184 = vsub.f32 %v2168, %v2176
    %v2185 = vsub.f32 %v2169, %v2177
    %v2186 = vsub.f32 %v2170, %v2178
    %v2187 = vsub.f32 %v2171, %v2179
    %v2188 = vsub.f32 %v2172, %v2180
    %v2189 = vsub.f32 %v2173, %v2181
    %v2190 = vsub.f32 %v2174, %v2182
    %v2191 = vmax.f32 %v2183, 0.0
    %v2192 = vmax.f32 %v2184, 0.0
    %v2193 = vmax.f32 %v2185, 0.0
    %v2194 = vmax.f32 %v2186, 0.0
    %v2195 = vmax.f32 %v2187, 0.0
    %v2196 = vmax.f32 %v2188, 0.0
    %v2197 = vmax.f32 %v2189, 0.0
    %v2198 = vmax.f32 %v2190, 0.0
    %v2199 = vadd.f32 %v2191, 1e-05
    %v2200 = vadd.f32 %v2192, 1e-05
    %v2201 = vadd.f32 %v2193, 1e-05
    %v2202 = vadd.f32 %v2194, 1e-05
    %v2203 = vadd.f32 %v2195, 1e-05
    %v2204 = vadd.f32 %v2196, 1e-05
    %v2205 = vadd.f32 %v2197, 1e-05
    %v2206 = vadd.f32 %v2198, 1e-05
    %v2207 = vrsqrt.pop %v2199
    %v2208 = vrsqrt.pop %v2200
    %v2209 = vrsqrt.pop %v2201
    %v2210 = vrsqrt.pop %v2202
    %v2211 = vrsqrt.pop %v2203
    %v2212 = vrsqrt.pop %v2204
    %v2213 = vrsqrt.pop %v2205
    %v2214 = vrsqrt.pop %v2206
    %v2223 = vcombine.low %v2207, %v2208
    %v2224 = vcombine.low %v2209, %v2210
    %v2225 = vcombine.low %v2211, %v2212
    %v2226 = vcombine.low %v2213, %v2214
    %v2228 = vunpack.c.l.s4 1966171168
    %v2229 = vunpack.c.0.s8 %v2228
    %v2230 = vlaneseq
    %v2231 = vshrl.u32 %v2230, 7
    %v2232 = vsub.s32 %v2229, %v2231
    %v2233 = vrot.slane %v2223, %v2232
    %v2235 = vunpack.c.l.s4 1966171168
    %v2236 = vunpack.c.0.s8 %v2235
    %v2237 = vlaneseq
    %v2238 = vshrl.u32 %v2237, 7
    %v2239 = vsub.s32 %v2236, %v2238
    %v2240 = vrot.slane %v2224, %v2239
    %v2242 = vunpack.c.l.s4 1966171168
    %v2243 = vunpack.c.0.s8 %v2242
    %v2244 = vlaneseq
    %v2245 = vshrl.u32 %v2244, 7
    %v2246 = vsub.s32 %v2243, %v2245
    %v2247 = vrot.slane %v2225, %v2246
    %v2249 = vunpack.c.l.s4 1966171168
    %v2250 = vunpack.c.0.s8 %v2249
    %v2251 = vlaneseq
    %v2252 = vshrl.u32 %v2251, 7
    %v2253 = vsub.s32 %v2250, %v2252
    %v2254 = vrot.slane %v2226, %v2253
    %v2255 = vcombine.low %v2233, %v2240
    %v2256 = vcombine.low %v2247, %v2254
    %v2258 = vunpack.c.l.s4 1966171168
    %v2259 = vunpack.c.0.s8 %v2258
    %v2260 = vlaneseq
    %v2261 = vshrl.u32 %v2260, 7
    %v2262 = vsub.s32 %v2259, %v2261
    %v2263 = vrot.slane %v2255, %v2262
    %v2265 = vunpack.c.l.s4 1966171168
    %v2266 = vunpack.c.0.s8 %v2265
    %v2267 = vlaneseq
    %v2268 = vshrl.u32 %v2267, 7
    %v2269 = vsub.s32 %v2266, %v2268
    %v2270 = vrot.slane %v2256, %v2269
    %v2271 = vcombine.low %v2263, %v2270
    %v2273 = vmul.f32 %v1306, %v2271
    %v2275 = vlaneseq
    %v2276 = vshrl.u32 %v2275, 7
    %v2277 = vsub.s32 0, %v2276
    %v2278 = vrot.slane %v2273, %v2277
    %v2279 = vlaneseq
    %v2280 = vshrl.u32 %v2279, 7
    %v2281 = vsub.s32 1, %v2280
    %v2282 = vrot.slane %v2273, %v2281
    %v2283 = vlaneseq
    %v2284 = vshrl.u32 %v2283, 7
    %v2285 = vsub.s32 2, %v2284
    %v2286 = vrot.slane %v2273, %v2285
    %v2287 = vlaneseq
    %v2288 = vshrl.u32 %v2287, 7
    %v2289 = vsub.s32 3, %v2288
    %v2290 = vrot.slane %v2273, %v2289
    %v2291 = vlaneseq
    %v2292 = vshrl.u32 %v2291, 7
    %v2293 = vsub.s32 4, %v2292
    %v2294 = vrot.slane %v2273, %v2293
    %v2295 = vlaneseq
    %v2296 = vshrl.u32 %v2295, 7
    %v2297 = vsub.s32 5, %v2296
    %v2298 = vrot.slane %v2273, %v2297
    %v2299 = vlaneseq
    %v2300 = vshrl.u32 %v2299, 7
    %v2301 = vsub.s32 6, %v2300
    %v2302 = vrot.slane %v2273, %v2301
    %v2303 = vlaneseq
    %v2304 = vshrl.u32 %v2303, 7
    %v2305 = vsub.s32 7, %v2304
    %v2306 = vrot.slane %v2273, %v2305
    %v2315 = vmul.f32 %v1607, %v2278
    %v2316 = vmul.f32 %v1608, %v2282
    %v2317 = vmul.f32 %v1609, %v2286
    %v2318 = vmul.f32 %v1610, %v2290
    %v2319 = vmul.f32 %v1611, %v2294
    %v2320 = vmul.f32 %v1612, %v2298
    %v2321 = vmul.f32 %v1613, %v2302
    %v2322 = vmul.f32 %v1614, %v2306
    %v2331 = vcombine.low %v2315, %v2316
    %v2332 = vcombine.low %v2317, %v2318
    %v2333 = vcombine.low %v2319, %v2320
    %v2334 = vcombine.low %v2321, %v2322
    %v2336 = vunpack.c.l.s4 1966171168
    %v2337 = vunpack.c.0.s8 %v2336
    %v2338 = vlaneseq
    %v2339 = vshrl.u32 %v2338, 7
    %v2340 = vsub.s32 %v2337, %v2339
    %v2341 = vrot.slane %v2331, %v2340
    %v2343 = vunpack.c.l.s4 1966171168
    %v2344 = vunpack.c.0.s8 %v2343
    %v2345 = vlaneseq
    %v2346 = vshrl.u32 %v2345, 7
    %v2347 = vsub.s32 %v2344, %v2346
    %v2348 = vrot.slane %v2332, %v2347
    %v2350 = vunpack.c.l.s4 1966171168
    %v2351 = vunpack.c.0.s8 %v2350
    %v2352 = vlaneseq
    %v2353 = vshrl.u32 %v2352, 7
    %v2354 = vsub.s32 %v2351, %v2353
    %v2355 = vrot.slane %v2333, %v2354
    %v2357 = vunpack.c.l.s4 1966171168
    %v2358 = vunpack.c.0.s8 %v2357
    %v2359 = vlaneseq
    %v2360 = vshrl.u32 %v2359, 7
    %v2361 = vsub.s32 %v2358, %v2360
    %v2362 = vrot.slane %v2334, %v2361
    %v2363 = vcombine.low %v2341, %v2348
    %v2364 = vcombine.low %v2355, %v2362
    %v2366 = vunpack.c.l.s4 1966171168
    %v2367 = vunpack.c.0.s8 %v2366
    %v2368 = vlaneseq
    %v2369 = vshrl.u32 %v2368, 7
    %v2370 = vsub.s32 %v2367, %v2369
    %v2371 = vrot.slane %v2363, %v2370
    %v2373 = vunpack.c.l.s4 1966171168
    %v2374 = vunpack.c.0.s8 %v2373
    %v2375 = vlaneseq
    %v2376 = vshrl.u32 %v2375, 7
    %v2377 = vsub.s32 %v2374, %v2376
    %v2378 = vrot.slane %v2364, %v2377
    %v2379 = vcombine.low %v2371, %v2378
    %v2381 = vsub.f32 %v1310, %v2379
    %v2382 = vmul.f32 %v567, %v2278
    %v2383 = vmul.f32 %v569, %v2282
    %v2384 = vmul.f32 %v760, %v2286
    %v2385 = vmul.f32 %v762, %v2290
    %v2386 = vmul.f32 %v953, %v2294
    %v2387 = vmul.f32 %v955, %v2298
    %v2388 = vmul.f32 %v1146, %v2302
    %v2389 = vmul.f32 %v1148, %v2306
    %v2390 = vmul.f32 %v571, %v2278
    %v2391 = vmul.f32 %v573, %v2282
    %v2392 = vmul.f32 %v764, %v2286
    %v2393 = vmul.f32 %v766, %v2290
    %v2394 = vmul.f32 %v957, %v2294
    %v2395 = vmul.f32 %v959, %v2298
    %v2396 = vmul.f32 %v1150, %v2302
    %v2397 = vmul.f32 %v1152, %v2306
    %v2398 = vmul.f32 %v577, %v2278
    %v2399 = vmul.f32 %v579, %v2282
    %v2400 = vmul.f32 %v770, %v2286
    %v2401 = vmul.f32 %v772, %v2290
    %v2402 = vmul.f32 %v963, %v2294
    %v2403 = vmul.f32 %v965, %v2298
    %v2404 = vmul.f32 %v1156, %v2302
    %v2405 = vmul.f32 %v1158, %v2306
    %v2406 = vmul.f32 %v581, %v2278
    %v2407 = vmul.f32 %v583, %v2282
    %v2408 = vmul.f32 %v774, %v2286
    %v2409 = vmul.f32 %v776, %v2290
    %v2410 = vmul.f32 %v967, %v2294
    %v2411 = vmul.f32 %v969, %v2298
    %v2412 = vmul.f32 %v1160, %v2302
    %v2413 = vmul.f32 %v1162, %v2306
    %v2414 = vmul.f32 %v587, %v2278
    %v2415 = vmul.f32 %v589, %v2282
    %v2416 = vmul.f32 %v780, %v2286
    %v2417 = vmul.f32 %v782, %v2290
    %v2418 = vmul.f32 %v973, %v2294
    %v2419 = vmul.f32 %v975, %v2298
    %v2420 = vmul.f32 %v1166, %v2302
    %v2421 = vmul.f32 %v1168, %v2306
    %v2422 = vmul.f32 %v591, %v2278
    %v2423 = vmul.f32 %v593, %v2282
    %v2424 = vmul.f32 %v784, %v2286
    %v2425 = vmul.f32 %v786, %v2290
    %v2426 = vmul.f32 %v977, %v2294
    %v2427 = vmul.f32 %v979, %v2298
    %v2428 = vmul.f32 %v1170, %v2302
    %v2429 = vmul.f32 %v1172, %v2306
    %v2430 = vmul.f32 %v597, %v2278
    %v2431 = vmul.f32 %v599, %v2282
    %v2432 = vmul.f32 %v790, %v2286
    %v2433 = vmul.f32 %v792, %v2290
    %v2434 = vmul.f32 %v983, %v2294
    %v2435 = vmul.f32 %v985, %v2298
    %v2436 = vmul.f32 %v1176, %v2302
    %v2437 = vmul.f32 %v1178, %v2306
    %v2438 = vmul.f32 %v601, %v2278
    %v2439 = vmul.f32 %v603, %v2282
    %v2440 = vmul.f32 %v794, %v2286
    %v2441 = vmul.f32 %v796, %v2290
    %v2442 = vmul.f32 %v987, %v2294
    %v2443 = vmul.f32 %v989, %v2298
    %v2444 = vmul.f32 %v1180, %v2302
    %v2445 = vmul.f32 %v1182, %v2306
    %v2446 = vmul.f32 %v607, %v2278
    %v2447 = vmul.f32 %v609, %v2282
    %v2448 = vmul.f32 %v800, %v2286
    %v2449 = vmul.f32 %v802, %v2290
    %v2450 = vmul.f32 %v993, %v2294
    %v2451 = vmul.f32 %v995, %v2298
    %v2452 = vmul.f32 %v1186, %v2302
    %v2453 = vmul.f32 %v1188, %v2306
    %v2454 = vmul.f32 %v611, %v2278
    %v2455 = vmul.f32 %v613, %v2282
    %v2456 = vmul.f32 %v804, %v2286
    %v2457 = vmul.f32 %v806, %v2290
    %v2458 = vmul.f32 %v997, %v2294
    %v2459 = vmul.f32 %v999, %v2298
    %v2460 = vmul.f32 %v1190, %v2302
    %v2461 = vmul.f32 %v1192, %v2306
    %v2462 = vmul.f32 %v617, %v2278
    %v2463 = vmul.f32 %v619, %v2282
    %v2464 = vmul.f32 %v810, %v2286
    %v2465 = vmul.f32 %v812, %v2290
    %v2466 = vmul.f32 %v1003, %v2294
    %v2467 = vmul.f32 %v1005, %v2298
    %v2468 = vmul.f32 %v1196, %v2302
    %v2469 = vmul.f32 %v1198, %v2306
    %v2470 = vmul.f32 %v621, %v2278
    %v2471 = vmul.f32 %v623, %v2282
    %v2472 = vmul.f32 %v814, %v2286
    %v2473 = vmul.f32 %v816, %v2290
    %v2474 = vmul.f32 %v1007, %v2294
    %v2475 = vmul.f32 %v1009, %v2298
    %v2476 = vmul.f32 %v1200, %v2302
    %v2477 = vmul.f32 %v1202, %v2306
    %v2478 = vmul.f32 %v627, %v2278
    %v2479 = vmul.f32 %v629, %v2282
    %v2480 = vmul.f32 %v820, %v2286
    %v2481 = vmul.f32 %v822, %v2290
    %v2482 = vmul.f32 %v1013, %v2294
    %v2483 = vmul.f32 %v1015, %v2298
    %v2484 = vmul.f32 %v1206, %v2302
    %v2485 = vmul.f32 %v1208, %v2306
    %v2486 = vmul.f32 %v631, %v2278
    %v2487 = vmul.f32 %v633, %v2282
    %v2488 = vmul.f32 %v824, %v2286
    %v2489 = vmul.f32 %v826, %v2290
    %v2490 = vmul.f32 %v1017, %v2294
    %v2491 = vmul.f32 %v1019, %v2298
    %v2492 = vmul.f32 %v1210, %v2302
    %v2493 = vmul.f32 %v1212, %v2306
    %v2494 = vmul.f32 %v637, %v2278
    %v2495 = vmul.f32 %v639, %v2282
    %v2496 = vmul.f32 %v830, %v2286
    %v2497 = vmul.f32 %v832, %v2290
    %v2498 = vmul.f32 %v1023, %v2294
    %v2499 = vmul.f32 %v1025, %v2298
    %v2500 = vmul.f32 %v1216, %v2302
    %v2501 = vmul.f32 %v1218, %v2306
    %v2502 = vmul.f32 %v641, %v2278
    %v2503 = vmul.f32 %v643, %v2282
    %v2504 = vmul.f32 %v834, %v2286
    %v2505 = vmul.f32 %v836, %v2290
    %v2506 = vmul.f32 %v1027, %v2294
    %v2507 = vmul.f32 %v1029, %v2298
    %v2508 = vmul.f32 %v1220, %v2302
    %v2509 = vmul.f32 %v1222, %v2306
    %v2510 = vmul.f32 %v647, %v2278
    %v2511 = vmul.f32 %v649, %v2282
    %v2512 = vmul.f32 %v840, %v2286
    %v2513 = vmul.f32 %v842, %v2290
    %v2514 = vmul.f32 %v1033, %v2294
    %v2515 = vmul.f32 %v1035, %v2298
    %v2516 = vmul.f32 %v1226, %v2302
    %v2517 = vmul.f32 %v1228, %v2306
    %v2518 = vmul.f32 %v651, %v2278
    %v2519 = vmul.f32 %v653, %v2282
    %v2520 = vmul.f32 %v844, %v2286
    %v2521 = vmul.f32 %v846, %v2290
    %v2522 = vmul.f32 %v1037, %v2294
    %v2523 = vmul.f32 %v1039, %v2298
    %v2524 = vmul.f32 %v1230, %v2302
    %v2525 = vmul.f32 %v1232, %v2306
    %v2526 = vmul.f32 %v657, %v2278
    %v2527 = vmul.f32 %v659, %v2282
    %v2528 = vmul.f32 %v850, %v2286
    %v2529 = vmul.f32 %v852, %v2290
    %v2530 = vmul.f32 %v1043, %v2294
    %v2531 = vmul.f32 %v1045, %v2298
    %v2532 = vmul.f32 %v1236, %v2302
    %v2533 = vmul.f32 %v1238, %v2306
    %v2534 = vmul.f32 %v661, %v2278
    %v2535 = vmul.f32 %v663, %v2282
    %v2536 = vmul.f32 %v854, %v2286
    %v2537 = vmul.f32 %v856, %v2290
    %v2538 = vmul.f32 %v1047, %v2294
    %v2539 = vmul.f32 %v1049, %v2298
    %v2540 = vmul.f32 %v1240, %v2302
    %v2541 = vmul.f32 %v1242, %v2306
    %v2542 = vmul.f32 %v667, %v2278
    %v2543 = vmul.f32 %v669, %v2282
    %v2544 = vmul.f32 %v860, %v2286
    %v2545 = vmul.f32 %v862, %v2290
    %v2546 = vmul.f32 %v1053, %v2294
    %v2547 = vmul.f32 %v1055, %v2298
    %v2548 = vmul.f32 %v1246, %v2302
    %v2549 = vmul.f32 %v1248, %v2306
    %v2550 = vmul.f32 %v671, %v2278
    %v2551 = vmul.f32 %v673, %v2282
    %v2552 = vmul.f32 %v864, %v2286
    %v2553 = vmul.f32 %v866, %v2290
    %v2554 = vmul.f32 %v1057, %v2294
    %v2555 = vmul.f32 %v1059, %v2298
    %v2556 = vmul.f32 %v1250, %v2302
    %v2557 = vmul.f32 %v1252, %v2306
    %v2558 = vmul.f32 %v677, %v2278
    %v2559 = vmul.f32 %v679, %v2282
    %v2560 = vmul.f32 %v870, %v2286
    %v2561 = vmul.f32 %v872, %v2290
    %v2562 = vmul.f32 %v1063, %v2294
    %v2563 = vmul.f32 %v1065, %v2298
    %v2564 = vmul.f32 %v1256, %v2302
    %v2565 = vmul.f32 %v1258, %v2306
    %v2566 = vmul.f32 %v681, %v2278
    %v2567 = vmul.f32 %v683, %v2282
    %v2568 = vmul.f32 %v874, %v2286
    %v2569 = vmul.f32 %v876, %v2290
    %v2570 = vmul.f32 %v1067, %v2294
    %v2571 = vmul.f32 %v1069, %v2298
    %v2572 = vmul.f32 %v1260, %v2302
    %v2573 = vmul.f32 %v1262, %v2306
    %v2574 = vmul.f32 %v687, %v2278
    %v2575 = vmul.f32 %v689, %v2282
    %v2576 = vmul.f32 %v880, %v2286
    %v2577 = vmul.f32 %v882, %v2290
    %v2578 = vmul.f32 %v1073, %v2294
    %v2579 = vmul.f32 %v1075, %v2298
    %v2580 = vmul.f32 %v1266, %v2302
    %v2581 = vmul.f32 %v1268, %v2306
    %v2582 = vmul.f32 %v691, %v2278
    %v2583 = vmul.f32 %v693, %v2282
    %v2584 = vmul.f32 %v884, %v2286
    %v2585 = vmul.f32 %v886, %v2290
    %v2586 = vmul.f32 %v1077, %v2294
    %v2587 = vmul.f32 %v1079, %v2298
    %v2588 = vmul.f32 %v1270, %v2302
    %v2589 = vmul.f32 %v1272, %v2306
    %v2590 = vmul.f32 %v697, %v2278
    %v2591 = vmul.f32 %v699, %v2282
    %v2592 = vmul.f32 %v890, %v2286
    %v2593 = vmul.f32 %v892, %v2290
    %v2594 = vmul.f32 %v1083, %v2294
    %v2595 = vmul.f32 %v1085, %v2298
    %v2596 = vmul.f32 %v1276, %v2302
    %v2597 = vmul.f32 %v1278, %v2306
    %v2598 = vmul.f32 %v701, %v2278
    %v2599 = vmul.f32 %v703, %v2282
    %v2600 = vmul.f32 %v894, %v2286
    %v2601 = vmul.f32 %v896, %v2290
    %v2602 = vmul.f32 %v1087, %v2294
    %v2603 = vmul.f32 %v1089, %v2298
    %v2604 = vmul.f32 %v1280, %v2302
    %v2605 = vmul.f32 %v1282, %v2306
    %v2606 = vmul.f32 %v707, %v2278
    %v2607 = vmul.f32 %v709, %v2282
    %v2608 = vmul.f32 %v900, %v2286
    %v2609 = vmul.f32 %v902, %v2290
    %v2610 = vmul.f32 %v1093, %v2294
    %v2611 = vmul.f32 %v1095, %v2298
    %v2612 = vmul.f32 %v1286, %v2302
    %v2613 = vmul.f32 %v1288, %v2306
    %v2614 = vmul.f32 %v711, %v2278
    %v2615 = vmul.f32 %v713, %v2282
    %v2616 = vmul.f32 %v904, %v2286
    %v2617 = vmul.f32 %v906, %v2290
    %v2618 = vmul.f32 %v1097, %v2294
    %v2619 = vmul.f32 %v1099, %v2298
    %v2620 = vmul.f32 %v1290, %v2302
    %v2621 = vmul.f32 %v1292, %v2306
    %v2622 = vmul.f32 %v717, %v2278
    %v2623 = vmul.f32 %v719, %v2282
    %v2624 = vmul.f32 %v910, %v2286
    %v2625 = vmul.f32 %v912, %v2290
    %v2626 = vmul.f32 %v1103, %v2294
    %v2627 = vmul.f32 %v1105, %v2298
    %v2628 = vmul.f32 %v1296, %v2302
    %v2629 = vmul.f32 %v1298, %v2306
    %v2630 = vmul.f32 %v721, %v2278
    %v2631 = vmul.f32 %v723, %v2282
    %v2632 = vmul.f32 %v914, %v2286
    %v2633 = vmul.f32 %v916, %v2290
    %v2634 = vmul.f32 %v1107, %v2294
    %v2635 = vmul.f32 %v1109, %v2298
    %v2636 = vmul.f32 %v1300, %v2302
    %v2637 = vmul.f32 %v1302, %v2306
    %v2639 = vlaneseq
    %v2640 = vshrl.u32 %v2639, 7
    %v2641 = vsub.s32 0, %v2640
    %v2642 = vrot.slane %v2381, %v2641
    %v2643 = vlaneseq
    %v2644 = vshrl.u32 %v2643, 7
    %v2645 = vsub.s32 1, %v2644
    %v2646 = vrot.slane %v2381, %v2645
    %v2647 = vlaneseq
    %v2648 = vshrl.u32 %v2647, 7
    %v2649 = vsub.s32 2, %v2648
    %v2650 = vrot.slane %v2381, %v2649
    %v2651 = vlaneseq
    %v2652 = vshrl.u32 %v2651, 7
    %v2653 = vsub.s32 3, %v2652
    %v2654 = vrot.slane %v2381, %v2653
    %v2655 = vlaneseq
    %v2656 = vshrl.u32 %v2655, 7
    %v2657 = vsub.s32 4, %v2656
    %v2658 = vrot.slane %v2381, %v2657
    %v2659 = vlaneseq
    %v2660 = vshrl.u32 %v2659, 7
    %v2661 = vsub.s32 5, %v2660
    %v2662 = vrot.slane %v2381, %v2661
    %v2663 = vlaneseq
    %v2664 = vshrl.u32 %v2663, 7
    %v2665 = vsub.s32 6, %v2664
    %v2666 = vrot.slane %v2381, %v2665
    %v2667 = vlaneseq
    %v2668 = vshrl.u32 %v2667, 7
    %v2669 = vsub.s32 7, %v2668
    %v2670 = vrot.slane %v2381, %v2669
    %v2679 = vadd.f32 %v2382, %v2642
    %v2680 = vadd.f32 %v2383, %v2646
    %v2681 = vadd.f32 %v2384, %v2650
    %v2682 = vadd.f32 %v2385, %v2654
    %v2683 = vadd.f32 %v2386, %v2658
    %v2684 = vadd.f32 %v2387, %v2662
    %v2685 = vadd.f32 %v2388, %v2666
    %v2686 = vadd.f32 %v2389, %v2670
    %v2687 = vadd.f32 %v2390, %v2642
    %v2688 = vadd.f32 %v2391, %v2646
    %v2689 = vadd.f32 %v2392, %v2650
    %v2690 = vadd.f32 %v2393, %v2654
    %v2691 = vadd.f32 %v2394, %v2658
    %v2692 = vadd.f32 %v2395, %v2662
    %v2693 = vadd.f32 %v2396, %v2666
    %v2694 = vadd.f32 %v2397, %v2670
    %v2695 = vadd.f32 %v2398, %v2642
    %v2696 = vadd.f32 %v2399, %v2646
    %v2697 = vadd.f32 %v2400, %v2650
    %v2698 = vadd.f32 %v2401, %v2654
    %v2699 = vadd.f32 %v2402, %v2658
    %v2700 = vadd.f32 %v2403, %v2662
    %v2701 = vadd.f32 %v2404, %v2666
    %v2702 = vadd.f32 %v2405, %v2670
    %v2703 = vadd.f32 %v2406, %v2642
    %v2704 = vadd.f32 %v2407, %v2646
    %v2705 = vadd.f32 %v2408, %v2650
    %v2706 = vadd.f32 %v2409, %v2654
    %v2707 = vadd.f32 %v2410, %v2658
    %v2708 = vadd.f32 %v2411, %v2662
    %v2709 = vadd.f32 %v2412, %v2666
    %v2710 = vadd.f32 %v2413, %v2670
    %v2711 = vadd.f32 %v2414, %v2642
    %v2712 = vadd.f32 %v2415, %v2646
    %v2713 = vadd.f32 %v2416, %v2650
    %v2714 = vadd.f32 %v2417, %v2654
    %v2715 = vadd.f32 %v2418, %v2658
    %v2716 = vadd.f32 %v2419, %v2662
    %v2717 = vadd.f32 %v2420, %v2666
    %v2718 = vadd.f32 %v2421, %v2670
    %v2719 = vadd.f32 %v2422, %v2642
    %v2720 = vadd.f32 %v2423, %v2646
    %v2721 = vadd.f32 %v2424, %v2650
    %v2722 = vadd.f32 %v2425, %v2654
    %v2723 = vadd.f32 %v2426, %v2658
    %v2724 = vadd.f32 %v2427, %v2662
    %v2725 = vadd.f32 %v2428, %v2666
    %v2726 = vadd.f32 %v2429, %v2670
    %v2727 = vadd.f32 %v2430, %v2642
    %v2728 = vadd.f32 %v2431, %v2646
    %v2729 = vadd.f32 %v2432, %v2650
    %v2730 = vadd.f32 %v2433, %v2654
    %v2731 = vadd.f32 %v2434, %v2658
    %v2732 = vadd.f32 %v2435, %v2662
    %v2733 = vadd.f32 %v2436, %v2666
    %v2734 = vadd.f32 %v2437, %v2670
    %v2735 = vadd.f32 %v2438, %v2642
    %v2736 = vadd.f32 %v2439, %v2646
    %v2737 = vadd.f32 %v2440, %v2650
    %v2738 = vadd.f32 %v2441, %v2654
    %v2739 = vadd.f32 %v2442, %v2658
    %v2740 = vadd.f32 %v2443, %v2662
    %v2741 = vadd.f32 %v2444, %v2666
    %v2742 = vadd.f32 %v2445, %v2670
    %v2743 = vadd.f32 %v2446, %v2642
    %v2744 = vadd.f32 %v2447, %v2646
    %v2745 = vadd.f32 %v2448, %v2650
    %v2746 = vadd.f32 %v2449, %v2654
    %v2747 = vadd.f32 %v2450, %v2658
    %v2748 = vadd.f32 %v2451, %v2662
    %v2749 = vadd.f32 %v2452, %v2666
    %v2750 = vadd.f32 %v2453, %v2670
    %v2751 = vadd.f32 %v2454, %v2642
    %v2752 = vadd.f32 %v2455, %v2646
    %v2753 = vadd.f32 %v2456, %v2650
    %v2754 = vadd.f32 %v2457, %v2654
    %v2755 = vadd.f32 %v2458, %v2658
    %v2756 = vadd.f32 %v2459, %v2662
    %v2757 = vadd.f32 %v2460, %v2666
    %v2758 = vadd.f32 %v2461, %v2670
    %v2759 = vadd.f32 %v2462, %v2642
    %v2760 = vadd.f32 %v2463, %v2646
    %v2761 = vadd.f32 %v2464, %v2650
    %v2762 = vadd.f32 %v2465, %v2654
    %v2763 = vadd.f32 %v2466, %v2658
    %v2764 = vadd.f32 %v2467, %v2662
    %v2765 = vadd.f32 %v2468, %v2666
    %v2766 = vadd.f32 %v2469, %v2670
    %v2767 = vadd.f32 %v2470, %v2642
    %v2768 = vadd.f32 %v2471, %v2646
    %v2769 = vadd.f32 %v2472, %v2650
    %v2770 = vadd.f32 %v2473, %v2654
    %v2771 = vadd.f32 %v2474, %v2658
    %v2772 = vadd.f32 %v2475, %v2662
    %v2773 = vadd.f32 %v2476, %v2666
    %v2774 = vadd.f32 %v2477, %v2670
    %v2775 = vadd.f32 %v2478, %v2642
    %v2776 = vadd.f32 %v2479, %v2646
    %v2777 = vadd.f32 %v2480, %v2650
    %v2778 = vadd.f32 %v2481, %v2654
    %v2779 = vadd.f32 %v2482, %v2658
    %v2780 = vadd.f32 %v2483, %v2662
    %v2781 = vadd.f32 %v2484, %v2666
    %v2782 = vadd.f32 %v2485, %v2670
    %v2783 = vadd.f32 %v2486, %v2642
    %v2784 = vadd.f32 %v2487, %v2646
    %v2785 = vadd.f32 %v2488, %v2650
    %v2786 = vadd.f32 %v2489, %v2654
    %v2787 = vadd.f32 %v2490, %v2658
    %v2788 = vadd.f32 %v2491, %v2662
    %v2789 = vadd.f32 %v2492, %v2666
    %v2790 = vadd.f32 %v2493, %v2670
    %v2791 = vadd.f32 %v2494, %v2642
    %v2792 = vadd.f32 %v2495, %v2646
    %v2793 = vadd.f32 %v2496, %v2650
    %v2794 = vadd.f32 %v2497, %v2654
    %v2795 = vadd.f32 %v2498, %v2658
    %v2796 = vadd.f32 %v2499, %v2662
    %v2797 = vadd.f32 %v2500, %v2666
    %v2798 = vadd.f32 %v2501, %v2670
    %v2799 = vadd.f32 %v2502, %v2642
    %v2800 = vadd.f32 %v2503, %v2646
    %v2801 = vadd.f32 %v2504, %v2650
    %v2802 = vadd.f32 %v2505, %v2654
    %v2803 = vadd.f32 %v2506, %v2658
    %v2804 = vadd.f32 %v2507, %v2662
    %v2805 = vadd.f32 %v2508, %v2666
    %v2806 = vadd.f32 %v2509, %v2670
    %v2807 = vadd.f32 %v2510, %v2642
    %v2808 = vadd.f32 %v2511, %v2646
    %v2809 = vadd.f32 %v2512, %v2650
    %v2810 = vadd.f32 %v2513, %v2654
    %v2811 = vadd.f32 %v2514, %v2658
    %v2812 = vadd.f32 %v2515, %v2662
    %v2813 = vadd.f32 %v2516, %v2666
    %v2814 = vadd.f32 %v2517, %v2670
    %v2815 = vadd.f32 %v2518, %v2642
    %v2816 = vadd.f32 %v2519, %v2646
    %v2817 = vadd.f32 %v2520, %v2650
    %v2818 = vadd.f32 %v2521, %v2654
    %v2819 = vadd.f32 %v2522, %v2658
    %v2820 = vadd.f32 %v2523, %v2662
    %v2821 = vadd.f32 %v2524, %v2666
    %v2822 = vadd.f32 %v2525, %v2670
    %v2823 = vadd.f32 %v2526, %v2642
    %v2824 = vadd.f32 %v2527, %v2646
    %v2825 = vadd.f32 %v2528, %v2650
    %v2826 = vadd.f32 %v2529, %v2654
    %v2827 = vadd.f32 %v2530, %v2658
    %v2828 = vadd.f32 %v2531, %v2662
    %v2829 = vadd.f32 %v2532, %v2666
    %v2830 = vadd.f32 %v2533, %v2670
    %v2831 = vadd.f32 %v2534, %v2642
    %v2832 = vadd.f32 %v2535, %v2646
    %v2833 = vadd.f32 %v2536, %v2650
    %v2834 = vadd.f32 %v2537, %v2654
    %v2835 = vadd.f32 %v2538, %v2658
    %v2836 = vadd.f32 %v2539, %v2662
    %v2837 = vadd.f32 %v2540, %v2666
    %v2838 = vadd.f32 %v2541, %v2670
    %v2839 = vadd.f32 %v2542, %v2642
    %v2840 = vadd.f32 %v2543, %v2646
    %v2841 = vadd.f32 %v2544, %v2650
    %v2842 = vadd.f32 %v2545, %v2654
    %v2843 = vadd.f32 %v2546, %v2658
    %v2844 = vadd.f32 %v2547, %v2662
    %v2845 = vadd.f32 %v2548, %v2666
    %v2846 = vadd.f32 %v2549, %v2670
    %v2847 = vadd.f32 %v2550, %v2642
    %v2848 = vadd.f32 %v2551, %v2646
    %v2849 = vadd.f32 %v2552, %v2650
    %v2850 = vadd.f32 %v2553, %v2654
    %v2851 = vadd.f32 %v2554, %v2658
    %v2852 = vadd.f32 %v2555, %v2662
    %v2853 = vadd.f32 %v2556, %v2666
    %v2854 = vadd.f32 %v2557, %v2670
    %v2855 = vadd.f32 %v2558, %v2642
    %v2856 = vadd.f32 %v2559, %v2646
    %v2857 = vadd.f32 %v2560, %v2650
    %v2858 = vadd.f32 %v2561, %v2654
    %v2859 = vadd.f32 %v2562, %v2658
    %v2860 = vadd.f32 %v2563, %v2662
    %v2861 = vadd.f32 %v2564, %v2666
    %v2862 = vadd.f32 %v2565, %v2670
    %v2863 = vadd.f32 %v2566, %v2642
    %v2864 = vadd.f32 %v2567, %v2646
    %v2865 = vadd.f32 %v2568, %v2650
    %v2866 = vadd.f32 %v2569, %v2654
    %v2867 = vadd.f32 %v2570, %v2658
    %v2868 = vadd.f32 %v2571, %v2662
    %v2869 = vadd.f32 %v2572, %v2666
    %v2870 = vadd.f32 %v2573, %v2670
    %v2871 = vadd.f32 %v2574, %v2642
    %v2872 = vadd.f32 %v2575, %v2646
    %v2873 = vadd.f32 %v2576, %v2650
    %v2874 = vadd.f32 %v2577, %v2654
    %v2875 = vadd.f32 %v2578, %v2658
    %v2876 = vadd.f32 %v2579, %v2662
    %v2877 = vadd.f32 %v2580, %v2666
    %v2878 = vadd.f32 %v2581, %v2670
    %v2879 = vadd.f32 %v2582, %v2642
    %v2880 = vadd.f32 %v2583, %v2646
    %v2881 = vadd.f32 %v2584, %v2650
    %v2882 = vadd.f32 %v2585, %v2654
    %v2883 = vadd.f32 %v2586, %v2658
    %v2884 = vadd.f32 %v2587, %v2662
    %v2885 = vadd.f32 %v2588, %v2666
    %v2886 = vadd.f32 %v2589, %v2670
    %v2887 = vadd.f32 %v2590, %v2642
    %v2888 = vadd.f32 %v2591, %v2646
    %v2889 = vadd.f32 %v2592, %v2650
    %v2890 = vadd.f32 %v2593, %v2654
    %v2891 = vadd.f32 %v2594, %v2658
    %v2892 = vadd.f32 %v2595, %v2662
    %v2893 = vadd.f32 %v2596, %v2666
    %v2894 = vadd.f32 %v2597, %v2670
    %v2895 = vadd.f32 %v2598, %v2642
    %v2896 = vadd.f32 %v2599, %v2646
    %v2897 = vadd.f32 %v2600, %v2650
    %v2898 = vadd.f32 %v2601, %v2654
    %v2899 = vadd.f32 %v2602, %v2658
    %v2900 = vadd.f32 %v2603, %v2662
    %v2901 = vadd.f32 %v2604, %v2666
    %v2902 = vadd.f32 %v2605, %v2670
    %v2903 = vadd.f32 %v2606, %v2642
    %v2904 = vadd.f32 %v2607, %v2646
    %v2905 = vadd.f32 %v2608, %v2650
    %v2906 = vadd.f32 %v2609, %v2654
    %v2907 = vadd.f32 %v2610, %v2658
    %v2908 = vadd.f32 %v2611, %v2662
    %v2909 = vadd.f32 %v2612, %v2666
    %v2910 = vadd.f32 %v2613, %v2670
    %v2911 = vadd.f32 %v2614, %v2642
    %v2912 = vadd.f32 %v2615, %v2646
    %v2913 = vadd.f32 %v2616, %v2650
    %v2914 = vadd.f32 %v2617, %v2654
    %v2915 = vadd.f32 %v2618, %v2658
    %v2916 = vadd.f32 %v2619, %v2662
    %v2917 = vadd.f32 %v2620, %v2666
    %v2918 = vadd.f32 %v2621, %v2670
    %v2919 = vadd.f32 %v2622, %v2642
    %v2920 = vadd.f32 %v2623, %v2646
    %v2921 = vadd.f32 %v2624, %v2650
    %v2922 = vadd.f32 %v2625, %v2654
    %v2923 = vadd.f32 %v2626, %v2658
    %v2924 = vadd.f32 %v2627, %v2662
    %v2925 = vadd.f32 %v2628, %v2666
    %v2926 = vadd.f32 %v2629, %v2670
    %v2927 = vadd.f32 %v2630, %v2642
    %v2928 = vadd.f32 %v2631, %v2646
    %v2929 = vadd.f32 %v2632, %v2650
    %v2930 = vadd.f32 %v2633, %v2654
    %v2931 = vadd.f32 %v2634, %v2658
    %v2932 = vadd.f32 %v2635, %v2662
    %v2933 = vadd.f32 %v2636, %v2666
    %v2934 = vadd.f32 %v2637, %v2670
    %vm2935 = vcmp.ge.f32.partialorder %v2679, 0.0
    %vm2936 = vcmp.ge.f32.partialorder %v2680, 0.0
    %vm2937 = vcmp.ge.f32.partialorder %v2681, 0.0
    %vm2938 = vcmp.ge.f32.partialorder %v2682, 0.0
    %vm2939 = vcmp.ge.f32.partialorder %v2683, 0.0
    %vm2940 = vcmp.ge.f32.partialorder %v2684, 0.0
    %vm2941 = vcmp.ge.f32.partialorder %v2685, 0.0
    %vm2942 = vcmp.ge.f32.partialorder %v2686, 0.0
    %vm2943 = vcmp.ge.f32.partialorder %v2687, 0.0
    %vm2944 = vcmp.ge.f32.partialorder %v2688, 0.0
    %vm2945 = vcmp.ge.f32.partialorder %v2689, 0.0
    %vm2946 = vcmp.ge.f32.partialorder %v2690, 0.0
    %vm2947 = vcmp.ge.f32.partialorder %v2691, 0.0
    %vm2948 = vcmp.ge.f32.partialorder %v2692, 0.0
    %vm2949 = vcmp.ge.f32.partialorder %v2693, 0.0
    %vm2950 = vcmp.ge.f32.partialorder %v2694, 0.0
    %vm2951 = vcmp.ge.f32.partialorder %v2695, 0.0
    %vm2952 = vcmp.ge.f32.partialorder %v2696, 0.0
    %vm2953 = vcmp.ge.f32.partialorder %v2697, 0.0
    %vm2954 = vcmp.ge.f32.partialorder %v2698, 0.0
    %vm2955 = vcmp.ge.f32.partialorder %v2699, 0.0
    %vm2956 = vcmp.ge.f32.partialorder %v2700, 0.0
    %vm2957 = vcmp.ge.f32.partialorder %v2701, 0.0
    %vm2958 = vcmp.ge.f32.partialorder %v2702, 0.0
    %vm2959 = vcmp.ge.f32.partialorder %v2703, 0.0
    %vm2960 = vcmp.ge.f32.partialorder %v2704, 0.0
    %vm2961 = vcmp.ge.f32.partialorder %v2705, 0.0
    %vm2962 = vcmp.ge.f32.partialorder %v2706, 0.0
    %vm2963 = vcmp.ge.f32.partialorder %v2707, 0.0
    %vm2964 = vcmp.ge.f32.partialorder %v2708, 0.0
    %vm2965 = vcmp.ge.f32.partialorder %v2709, 0.0
    %vm2966 = vcmp.ge.f32.partialorder %v2710, 0.0
    %vm2967 = vcmp.ge.f32.partialorder %v2711, 0.0
    %vm2968 = vcmp.ge.f32.partialorder %v2712, 0.0
    %vm2969 = vcmp.ge.f32.partialorder %v2713, 0.0
    %vm2970 = vcmp.ge.f32.partialorder %v2714, 0.0
    %vm2971 = vcmp.ge.f32.partialorder %v2715, 0.0
    %vm2972 = vcmp.ge.f32.partialorder %v2716, 0.0
    %vm2973 = vcmp.ge.f32.partialorder %v2717, 0.0
    %vm2974 = vcmp.ge.f32.partialorder %v2718, 0.0
    %vm2975 = vcmp.ge.f32.partialorder %v2719, 0.0
    %vm2976 = vcmp.ge.f32.partialorder %v2720, 0.0
    %vm2977 = vcmp.ge.f32.partialorder %v2721, 0.0
    %vm2978 = vcmp.ge.f32.partialorder %v2722, 0.0
    %vm2979 = vcmp.ge.f32.partialorder %v2723, 0.0
    %vm2980 = vcmp.ge.f32.partialorder %v2724, 0.0
    %vm2981 = vcmp.ge.f32.partialorder %v2725, 0.0
    %vm2982 = vcmp.ge.f32.partialorder %v2726, 0.0
    %vm2983 = vcmp.ge.f32.partialorder %v2727, 0.0
    %vm2984 = vcmp.ge.f32.partialorder %v2728, 0.0
    %vm2985 = vcmp.ge.f32.partialorder %v2729, 0.0
    %vm2986 = vcmp.ge.f32.partialorder %v2730, 0.0
    %vm2987 = vcmp.ge.f32.partialorder %v2731, 0.0
    %vm2988 = vcmp.ge.f32.partialorder %v2732, 0.0
    %vm2989 = vcmp.ge.f32.partialorder %v2733, 0.0
    %vm2990 = vcmp.ge.f32.partialorder %v2734, 0.0
    %vm2991 = vcmp.ge.f32.partialorder %v2735, 0.0
    %vm2992 = vcmp.ge.f32.partialorder %v2736, 0.0
    %vm2993 = vcmp.ge.f32.partialorder %v2737, 0.0
    %vm2994 = vcmp.ge.f32.partialorder %v2738, 0.0
    %vm2995 = vcmp.ge.f32.partialorder %v2739, 0.0
    %vm2996 = vcmp.ge.f32.partialorder %v2740, 0.0
    %vm2997 = vcmp.ge.f32.partialorder %v2741, 0.0
    %vm2998 = vcmp.ge.f32.partialorder %v2742, 0.0
    %vm2999 = vcmp.ge.f32.partialorder %v2743, 0.0
    %vm3000 = vcmp.ge.f32.partialorder %v2744, 0.0
    %vm3001 = vcmp.ge.f32.partialorder %v2745, 0.0
    %vm3002 = vcmp.ge.f32.partialorder %v2746, 0.0
    %vm3003 = vcmp.ge.f32.partialorder %v2747, 0.0
    %vm3004 = vcmp.ge.f32.partialorder %v2748, 0.0
    %vm3005 = vcmp.ge.f32.partialorder %v2749, 0.0
    %vm3006 = vcmp.ge.f32.partialorder %v2750, 0.0
    %vm3007 = vcmp.ge.f32.partialorder %v2751, 0.0
    %vm3008 = vcmp.ge.f32.partialorder %v2752, 0.0
    %vm3009 = vcmp.ge.f32.partialorder %v2753, 0.0
    %vm3010 = vcmp.ge.f32.partialorder %v2754, 0.0
    %vm3011 = vcmp.ge.f32.partialorder %v2755, 0.0
    %vm3012 = vcmp.ge.f32.partialorder %v2756, 0.0
    %vm3013 = vcmp.ge.f32.partialorder %v2757, 0.0
    %vm3014 = vcmp.ge.f32.partialorder %v2758, 0.0
    %vm3015 = vcmp.ge.f32.partialorder %v2759, 0.0
    %vm3016 = vcmp.ge.f32.partialorder %v2760, 0.0
    %vm3017 = vcmp.ge.f32.partialorder %v2761, 0.0
    %vm3018 = vcmp.ge.f32.partialorder %v2762, 0.0
    %vm3019 = vcmp.ge.f32.partialorder %v2763, 0.0
    %vm3020 = vcmp.ge.f32.partialorder %v2764, 0.0
    %vm3021 = vcmp.ge.f32.partialorder %v2765, 0.0
    %vm3022 = vcmp.ge.f32.partialorder %v2766, 0.0
    %vm3023 = vcmp.ge.f32.partialorder %v2767, 0.0
    %vm3024 = vcmp.ge.f32.partialorder %v2768, 0.0
    %vm3025 = vcmp.ge.f32.partialorder %v2769, 0.0
    %vm3026 = vcmp.ge.f32.partialorder %v2770, 0.0
    %vm3027 = vcmp.ge.f32.partialorder %v2771, 0.0
    %vm3028 = vcmp.ge.f32.partialorder %v2772, 0.0
    %vm3029 = vcmp.ge.f32.partialorder %v2773, 0.0
    %vm3030 = vcmp.ge.f32.partialorder %v2774, 0.0
    %vm3031 = vcmp.ge.f32.partialorder %v2775, 0.0
    %vm3032 = vcmp.ge.f32.partialorder %v2776, 0.0
    %vm3033 = vcmp.ge.f32.partialorder %v2777, 0.0
    %vm3034 = vcmp.ge.f32.partialorder %v2778, 0.0
    %vm3035 = vcmp.ge.f32.partialorder %v2779, 0.0
    %vm3036 = vcmp.ge.f32.partialorder %v2780, 0.0
    %vm3037 = vcmp.ge.f32.partialorder %v2781, 0.0
    %vm3038 = vcmp.ge.f32.partialorder %v2782, 0.0
    %vm3039 = vcmp.ge.f32.partialorder %v2783, 0.0
    %vm3040 = vcmp.ge.f32.partialorder %v2784, 0.0
    %vm3041 = vcmp.ge.f32.partialorder %v2785, 0.0
    %vm3042 = vcmp.ge.f32.partialorder %v2786, 0.0
    %vm3043 = vcmp.ge.f32.partialorder %v2787, 0.0
    %vm3044 = vcmp.ge.f32.partialorder %v2788, 0.0
    %vm3045 = vcmp.ge.f32.partialorder %v2789, 0.0
    %vm3046 = vcmp.ge.f32.partialorder %v2790, 0.0
    %vm3047 = vcmp.ge.f32.partialorder %v2791, 0.0
    %vm3048 = vcmp.ge.f32.partialorder %v2792, 0.0
    %vm3049 = vcmp.ge.f32.partialorder %v2793, 0.0
    %vm3050 = vcmp.ge.f32.partialorder %v2794, 0.0
    %vm3051 = vcmp.ge.f32.partialorder %v2795, 0.0
    %vm3052 = vcmp.ge.f32.partialorder %v2796, 0.0
    %vm3053 = vcmp.ge.f32.partialorder %v2797, 0.0
    %vm3054 = vcmp.ge.f32.partialorder %v2798, 0.0
    %vm3055 = vcmp.ge.f32.partialorder %v2799, 0.0
    %vm3056 = vcmp.ge.f32.partialorder %v2800, 0.0
    %vm3057 = vcmp.ge.f32.partialorder %v2801, 0.0
    %vm3058 = vcmp.ge.f32.partialorder %v2802, 0.0
    %vm3059 = vcmp.ge.f32.partialorder %v2803, 0.0
    %vm3060 = vcmp.ge.f32.partialorder %v2804, 0.0
    %vm3061 = vcmp.ge.f32.partialorder %v2805, 0.0
    %vm3062 = vcmp.ge.f32.partialorder %v2806, 0.0
    %vm3063 = vcmp.ge.f32.partialorder %v2807, 0.0
    %vm3064 = vcmp.ge.f32.partialorder %v2808, 0.0
    %vm3065 = vcmp.ge.f32.partialorder %v2809, 0.0
    %vm3066 = vcmp.ge.f32.partialorder %v2810, 0.0
    %vm3067 = vcmp.ge.f32.partialorder %v2811, 0.0
    %vm3068 = vcmp.ge.f32.partialorder %v2812, 0.0
    %vm3069 = vcmp.ge.f32.partialorder %v2813, 0.0
    %vm3070 = vcmp.ge.f32.partialorder %v2814, 0.0
    %vm3071 = vcmp.ge.f32.partialorder %v2815, 0.0
    %vm3072 = vcmp.ge.f32.partialorder %v2816, 0.0
    %vm3073 = vcmp.ge.f32.partialorder %v2817, 0.0
    %vm3074 = vcmp.ge.f32.partialorder %v2818, 0.0
    %vm3075 = vcmp.ge.f32.partialorder %v2819, 0.0
    %vm3076 = vcmp.ge.f32.partialorder %v2820, 0.0
    %vm3077 = vcmp.ge.f32.partialorder %v2821, 0.0
    %vm3078 = vcmp.ge.f32.partialorder %v2822, 0.0
    %vm3079 = vcmp.ge.f32.partialorder %v2823, 0.0
    %vm3080 = vcmp.ge.f32.partialorder %v2824, 0.0
    %vm3081 = vcmp.ge.f32.partialorder %v2825, 0.0
    %vm3082 = vcmp.ge.f32.partialorder %v2826, 0.0
    %vm3083 = vcmp.ge.f32.partialorder %v2827, 0.0
    %vm3084 = vcmp.ge.f32.partialorder %v2828, 0.0
    %vm3085 = vcmp.ge.f32.partialorder %v2829, 0.0
    %vm3086 = vcmp.ge.f32.partialorder %v2830, 0.0
    %vm3087 = vcmp.ge.f32.partialorder %v2831, 0.0
    %vm3088 = vcmp.ge.f32.partialorder %v2832, 0.0
    %vm3089 = vcmp.ge.f32.partialorder %v2833, 0.0
    %vm3090 = vcmp.ge.f32.partialorder %v2834, 0.0
    %vm3091 = vcmp.ge.f32.partialorder %v2835, 0.0
    %vm3092 = vcmp.ge.f32.partialorder %v2836, 0.0
    %vm3093 = vcmp.ge.f32.partialorder %v2837, 0.0
    %vm3094 = vcmp.ge.f32.partialorder %v2838, 0.0
    %vm3095 = vcmp.ge.f32.partialorder %v2839, 0.0
    %vm3096 = vcmp.ge.f32.partialorder %v2840, 0.0
    %vm3097 = vcmp.ge.f32.partialorder %v2841, 0.0
    %vm3098 = vcmp.ge.f32.partialorder %v2842, 0.0
    %vm3099 = vcmp.ge.f32.partialorder %v2843, 0.0
    %vm3100 = vcmp.ge.f32.partialorder %v2844, 0.0
    %vm3101 = vcmp.ge.f32.partialorder %v2845, 0.0
    %vm3102 = vcmp.ge.f32.partialorder %v2846, 0.0
    %vm3103 = vcmp.ge.f32.partialorder %v2847, 0.0
    %vm3104 = vcmp.ge.f32.partialorder %v2848, 0.0
    %vm3105 = vcmp.ge.f32.partialorder %v2849, 0.0
    %vm3106 = vcmp.ge.f32.partialorder %v2850, 0.0
    %vm3107 = vcmp.ge.f32.partialorder %v2851, 0.0
    %vm3108 = vcmp.ge.f32.partialorder %v2852, 0.0
    %vm3109 = vcmp.ge.f32.partialorder %v2853, 0.0
    %vm3110 = vcmp.ge.f32.partialorder %v2854, 0.0
    %vm3111 = vcmp.ge.f32.partialorder %v2855, 0.0
    %vm3112 = vcmp.ge.f32.partialorder %v2856, 0.0
    %vm3113 = vcmp.ge.f32.partialorder %v2857, 0.0
    %vm3114 = vcmp.ge.f32.partialorder %v2858, 0.0
    %vm3115 = vcmp.ge.f32.partialorder %v2859, 0.0
    %vm3116 = vcmp.ge.f32.partialorder %v2860, 0.0
    %vm3117 = vcmp.ge.f32.partialorder %v2861, 0.0
    %vm3118 = vcmp.ge.f32.partialorder %v2862, 0.0
    %vm3119 = vcmp.ge.f32.partialorder %v2863, 0.0
    %vm3120 = vcmp.ge.f32.partialorder %v2864, 0.0
    %vm3121 = vcmp.ge.f32.partialorder %v2865, 0.0
    %vm3122 = vcmp.ge.f32.partialorder %v2866, 0.0
    %vm3123 = vcmp.ge.f32.partialorder %v2867, 0.0
    %vm3124 = vcmp.ge.f32.partialorder %v2868, 0.0
    %vm3125 = vcmp.ge.f32.partialorder %v2869, 0.0
    %vm3126 = vcmp.ge.f32.partialorder %v2870, 0.0
    %vm3127 = vcmp.ge.f32.partialorder %v2871, 0.0
    %vm3128 = vcmp.ge.f32.partialorder %v2872, 0.0
    %vm3129 = vcmp.ge.f32.partialorder %v2873, 0.0
    %vm3130 = vcmp.ge.f32.partialorder %v2874, 0.0
    %vm3131 = vcmp.ge.f32.partialorder %v2875, 0.0
    %vm3132 = vcmp.ge.f32.partialorder %v2876, 0.0
    %vm3133 = vcmp.ge.f32.partialorder %v2877, 0.0
    %vm3134 = vcmp.ge.f32.partialorder %v2878, 0.0
    %vm3135 = vcmp.ge.f32.partialorder %v2879, 0.0
    %vm3136 = vcmp.ge.f32.partialorder %v2880, 0.0
    %vm3137 = vcmp.ge.f32.partialorder %v2881, 0.0
    %vm3138 = vcmp.ge.f32.partialorder %v2882, 0.0
    %vm3139 = vcmp.ge.f32.partialorder %v2883, 0.0
    %vm3140 = vcmp.ge.f32.partialorder %v2884, 0.0
    %vm3141 = vcmp.ge.f32.partialorder %v2885, 0.0
    %vm3142 = vcmp.ge.f32.partialorder %v2886, 0.0
    %vm3143 = vcmp.ge.f32.partialorder %v2887, 0.0
    %vm3144 = vcmp.ge.f32.partialorder %v2888, 0.0
    %vm3145 = vcmp.ge.f32.partialorder %v2889, 0.0
    %vm3146 = vcmp.ge.f32.partialorder %v2890, 0.0
    %vm3147 = vcmp.ge.f32.partialorder %v2891, 0.0
    %vm3148 = vcmp.ge.f32.partialorder %v2892, 0.0
    %vm3149 = vcmp.ge.f32.partialorder %v2893, 0.0
    %vm3150 = vcmp.ge.f32.partialorder %v2894, 0.0
    %vm3151 = vcmp.ge.f32.partialorder %v2895, 0.0
    %vm3152 = vcmp.ge.f32.partialorder %v2896, 0.0
    %vm3153 = vcmp.ge.f32.partialorder %v2897, 0.0
    %vm3154 = vcmp.ge.f32.partialorder %v2898, 0.0
    %vm3155 = vcmp.ge.f32.partialorder %v2899, 0.0
    %vm3156 = vcmp.ge.f32.partialorder %v2900, 0.0
    %vm3157 = vcmp.ge.f32.partialorder %v2901, 0.0
    %vm3158 = vcmp.ge.f32.partialorder %v2902, 0.0
    %vm3159 = vcmp.ge.f32.partialorder %v2903, 0.0
    %vm3160 = vcmp.ge.f32.partialorder %v2904, 0.0
    %vm3161 = vcmp.ge.f32.partialorder %v2905, 0.0
    %vm3162 = vcmp.ge.f32.partialorder %v2906, 0.0
    %vm3163 = vcmp.ge.f32.partialorder %v2907, 0.0
    %vm3164 = vcmp.ge.f32.partialorder %v2908, 0.0
    %vm3165 = vcmp.ge.f32.partialorder %v2909, 0.0
    %vm3166 = vcmp.ge.f32.partialorder %v2910, 0.0
    %vm3167 = vcmp.ge.f32.partialorder %v2911, 0.0
    %vm3168 = vcmp.ge.f32.partialorder %v2912, 0.0
    %vm3169 = vcmp.ge.f32.partialorder %v2913, 0.0
    %vm3170 = vcmp.ge.f32.partialorder %v2914, 0.0
    %vm3171 = vcmp.ge.f32.partialorder %v2915, 0.0
    %vm3172 = vcmp.ge.f32.partialorder %v2916, 0.0
    %vm3173 = vcmp.ge.f32.partialorder %v2917, 0.0
    %vm3174 = vcmp.ge.f32.partialorder %v2918, 0.0
    %vm3175 = vcmp.ge.f32.partialorder %v2919, 0.0
    %vm3176 = vcmp.ge.f32.partialorder %v2920, 0.0
    %vm3177 = vcmp.ge.f32.partialorder %v2921, 0.0
    %vm3178 = vcmp.ge.f32.partialorder %v2922, 0.0
    %vm3179 = vcmp.ge.f32.partialorder %v2923, 0.0
    %vm3180 = vcmp.ge.f32.partialorder %v2924, 0.0
    %vm3181 = vcmp.ge.f32.partialorder %v2925, 0.0
    %vm3182 = vcmp.ge.f32.partialorder %v2926, 0.0
    %vm3183 = vcmp.ge.f32.partialorder %v2927, 0.0
    %vm3184 = vcmp.ge.f32.partialorder %v2928, 0.0
    %vm3185 = vcmp.ge.f32.partialorder %v2929, 0.0
    %vm3186 = vcmp.ge.f32.partialorder %v2930, 0.0
    %vm3187 = vcmp.ge.f32.partialorder %v2931, 0.0
    %vm3188 = vcmp.ge.f32.partialorder %v2932, 0.0
    %vm3189 = vcmp.ge.f32.partialorder %v2933, 0.0
    %vm3190 = vcmp.ge.f32.partialorder %v2934, 0.0
    %v3191 = vmul.f32 %v2679, 0.01
    %v3192 = vmul.f32 %v2680, 0.01
    %v3193 = vmul.f32 %v2681, 0.01
    %v3194 = vmul.f32 %v2682, 0.01
    %v3195 = vmul.f32 %v2683, 0.01
    %v3196 = vmul.f32 %v2684, 0.01
    %v3197 = vmul.f32 %v2685, 0.01
    %v3198 = vmul.f32 %v2686, 0.01
    %v3199 = vmul.f32 %v2687, 0.01
    %v3200 = vmul.f32 %v2688, 0.01
    %v3201 = vmul.f32 %v2689, 0.01
    %v3202 = vmul.f32 %v2690, 0.01
    %v3203 = vmul.f32 %v2691, 0.01
    %v3204 = vmul.f32 %v2692, 0.01
    %v3205 = vmul.f32 %v2693, 0.01
    %v3206 = vmul.f32 %v2694, 0.01
    %v3207 = vmul.f32 %v2695, 0.01
    %v3208 = vmul.f32 %v2696, 0.01
    %v3209 = vmul.f32 %v2697, 0.01
    %v3210 = vmul.f32 %v2698, 0.01
    %v3211 = vmul.f32 %v2699, 0.01
    %v3212 = vmul.f32 %v2700, 0.01
    %v3213 = vmul.f32 %v2701, 0.01
    %v3214 = vmul.f32 %v2702, 0.01
    %v3215 = vmul.f32 %v2703, 0.01
    %v3216 = vmul.f32 %v2704, 0.01
    %v3217 = vmul.f32 %v2705, 0.01
    %v3218 = vmul.f32 %v2706, 0.01
    %v3219 = vmul.f32 %v2707, 0.01
    %v3220 = vmul.f32 %v2708, 0.01
    %v3221 = vmul.f32 %v2709, 0.01
    %v3222 = vmul.f32 %v2710, 0.01
    %v3223 = vmul.f32 %v2711, 0.01
    %v3224 = vmul.f32 %v2712, 0.01
    %v3225 = vmul.f32 %v2713, 0.01
    %v3226 = vmul.f32 %v2714, 0.01
    %v3227 = vmul.f32 %v2715, 0.01
    %v3228 = vmul.f32 %v2716, 0.01
    %v3229 = vmul.f32 %v2717, 0.01
    %v3230 = vmul.f32 %v2718, 0.01
    %v3231 = vmul.f32 %v2719, 0.01
    %v3232 = vmul.f32 %v2720, 0.01
    %v3233 = vmul.f32 %v2721, 0.01
    %v3234 = vmul.f32 %v2722, 0.01
    %v3235 = vmul.f32 %v2723, 0.01
    %v3236 = vmul.f32 %v2724, 0.01
    %v3237 = vmul.f32 %v2725, 0.01
    %v3238 = vmul.f32 %v2726, 0.01
    %v3239 = vmul.f32 %v2727, 0.01
    %v3240 = vmul.f32 %v2728, 0.01
    %v3241 = vmul.f32 %v2729, 0.01
    %v3242 = vmul.f32 %v2730, 0.01
    %v3243 = vmul.f32 %v2731, 0.01
    %v3244 = vmul.f32 %v2732, 0.01
    %v3245 = vmul.f32 %v2733, 0.01
    %v3246 = vmul.f32 %v2734, 0.01
    %v3247 = vmul.f32 %v2735, 0.01
    %v3248 = vmul.f32 %v2736, 0.01
    %v3249 = vmul.f32 %v2737, 0.01
    %v3250 = vmul.f32 %v2738, 0.01
    %v3251 = vmul.f32 %v2739, 0.01
    %v3252 = vmul.f32 %v2740, 0.01
    %v3253 = vmul.f32 %v2741, 0.01
    %v3254 = vmul.f32 %v2742, 0.01
    %v3255 = vmul.f32 %v2743, 0.01
    %v3256 = vmul.f32 %v2744, 0.01
    %v3257 = vmul.f32 %v2745, 0.01
    %v3258 = vmul.f32 %v2746, 0.01
    %v3259 = vmul.f32 %v2747, 0.01
    %v3260 = vmul.f32 %v2748, 0.01
    %v3261 = vmul.f32 %v2749, 0.01
    %v3262 = vmul.f32 %v2750, 0.01
    %v3263 = vmul.f32 %v2751, 0.01
    %v3264 = vmul.f32 %v2752, 0.01
    %v3265 = vmul.f32 %v2753, 0.01
    %v3266 = vmul.f32 %v2754, 0.01
    %v3267 = vmul.f32 %v2755, 0.01
    %v3268 = vmul.f32 %v2756, 0.01
    %v3269 = vmul.f32 %v2757, 0.01
    %v3270 = vmul.f32 %v2758, 0.01
    %v3271 = vmul.f32 %v2759, 0.01
    %v3272 = vmul.f32 %v2760, 0.01
    %v3273 = vmul.f32 %v2761, 0.01
    %v3274 = vmul.f32 %v2762, 0.01
    %v3275 = vmul.f32 %v2763, 0.01
    %v3276 = vmul.f32 %v2764, 0.01
    %v3277 = vmul.f32 %v2765, 0.01
    %v3278 = vmul.f32 %v2766, 0.01
    %v3279 = vmul.f32 %v2767, 0.01
    %v3280 = vmul.f32 %v2768, 0.01
    %v3281 = vmul.f32 %v2769, 0.01
    %v3282 = vmul.f32 %v2770, 0.01
    %v3283 = vmul.f32 %v2771, 0.01
    %v3284 = vmul.f32 %v2772, 0.01
    %v3285 = vmul.f32 %v2773, 0.01
    %v3286 = vmul.f32 %v2774, 0.01
    %v3287 = vmul.f32 %v2775, 0.01
    %v3288 = vmul.f32 %v2776, 0.01
    %v3289 = vmul.f32 %v2777, 0.01
    %v3290 = vmul.f32 %v2778, 0.01
    %v3291 = vmul.f32 %v2779, 0.01
    %v3292 = vmul.f32 %v2780, 0.01
    %v3293 = vmul.f32 %v2781, 0.01
    %v3294 = vmul.f32 %v2782, 0.01
    %v3295 = vmul.f32 %v2783, 0.01
    %v3296 = vmul.f32 %v2784, 0.01
    %v3297 = vmul.f32 %v2785, 0.01
    %v3298 = vmul.f32 %v2786, 0.01
    %v3299 = vmul.f32 %v2787, 0.01
    %v3300 = vmul.f32 %v2788, 0.01
    %v3301 = vmul.f32 %v2789, 0.01
    %v3302 = vmul.f32 %v2790, 0.01
    %v3303 = vmul.f32 %v2791, 0.01
    %v3304 = vmul.f32 %v2792, 0.01
    %v3305 = vmul.f32 %v2793, 0.01
    %v3306 = vmul.f32 %v2794, 0.01
    %v3307 = vmul.f32 %v2795, 0.01
    %v3308 = vmul.f32 %v2796, 0.01
    %v3309 = vmul.f32 %v2797, 0.01
    %v3310 = vmul.f32 %v2798, 0.01
    %v3311 = vmul.f32 %v2799, 0.01
    %v3312 = vmul.f32 %v2800, 0.01
    %v3313 = vmul.f32 %v2801, 0.01
    %v3314 = vmul.f32 %v2802, 0.01
    %v3315 = vmul.f32 %v2803, 0.01
    %v3316 = vmul.f32 %v2804, 0.01
    %v3317 = vmul.f32 %v2805, 0.01
    %v3318 = vmul.f32 %v2806, 0.01
    %v3319 = vmul.f32 %v2807, 0.01
    %v3320 = vmul.f32 %v2808, 0.01
    %v3321 = vmul.f32 %v2809, 0.01
    %v3322 = vmul.f32 %v2810, 0.01
    %v3323 = vmul.f32 %v2811, 0.01
    %v3324 = vmul.f32 %v2812, 0.01
    %v3325 = vmul.f32 %v2813, 0.01
    %v3326 = vmul.f32 %v2814, 0.01
    %v3327 = vmul.f32 %v2815, 0.01
    %v3328 = vmul.f32 %v2816, 0.01
    %v3329 = vmul.f32 %v2817, 0.01
    %v3330 = vmul.f32 %v2818, 0.01
    %v3331 = vmul.f32 %v2819, 0.01
    %v3332 = vmul.f32 %v2820, 0.01
    %v3333 = vmul.f32 %v2821, 0.01
    %v3334 = vmul.f32 %v2822, 0.01
    %v3335 = vmul.f32 %v2823, 0.01
    %v3336 = vmul.f32 %v2824, 0.01
    %v3337 = vmul.f32 %v2825, 0.01
    %v3338 = vmul.f32 %v2826, 0.01
    %v3339 = vmul.f32 %v2827, 0.01
    %v3340 = vmul.f32 %v2828, 0.01
    %v3341 = vmul.f32 %v2829, 0.01
    %v3342 = vmul.f32 %v2830, 0.01
    %v3343 = vmul.f32 %v2831, 0.01
    %v3344 = vmul.f32 %v2832, 0.01
    %v3345 = vmul.f32 %v2833, 0.01
    %v3346 = vmul.f32 %v2834, 0.01
    %v3347 = vmul.f32 %v2835, 0.01
    %v3348 = vmul.f32 %v2836, 0.01
    %v3349 = vmul.f32 %v2837, 0.01
    %v3350 = vmul.f32 %v2838, 0.01
    %v3351 = vmul.f32 %v2839, 0.01
    %v3352 = vmul.f32 %v2840, 0.01
    %v3353 = vmul.f32 %v2841, 0.01
    %v3354 = vmul.f32 %v2842, 0.01
    %v3355 = vmul.f32 %v2843, 0.01
    %v3356 = vmul.f32 %v2844, 0.01
    %v3357 = vmul.f32 %v2845, 0.01
    %v3358 = vmul.f32 %v2846, 0.01
    %v3359 = vmul.f32 %v2847, 0.01
    %v3360 = vmul.f32 %v2848, 0.01
    %v3361 = vmul.f32 %v2849, 0.01
    %v3362 = vmul.f32 %v2850, 0.01
    %v3363 = vmul.f32 %v2851, 0.01
    %v3364 = vmul.f32 %v2852, 0.01
    %v3365 = vmul.f32 %v2853, 0.01
    %v3366 = vmul.f32 %v2854, 0.01
    %v3367 = vmul.f32 %v2855, 0.01
    %v3368 = vmul.f32 %v2856, 0.01
    %v3369 = vmul.f32 %v2857, 0.01
    %v3370 = vmul.f32 %v2858, 0.01
    %v3371 = vmul.f32 %v2859, 0.01
    %v3372 = vmul.f32 %v2860, 0.01
    %v3373 = vmul.f32 %v2861, 0.01
    %v3374 = vmul.f32 %v2862, 0.01
    %v3375 = vmul.f32 %v2863, 0.01
    %v3376 = vmul.f32 %v2864, 0.01
    %v3377 = vmul.f32 %v2865, 0.01
    %v3378 = vmul.f32 %v2866, 0.01
    %v3379 = vmul.f32 %v2867, 0.01
    %v3380 = vmul.f32 %v2868, 0.01
    %v3381 = vmul.f32 %v2869, 0.01
    %v3382 = vmul.f32 %v2870, 0.01
    %v3383 = vmul.f32 %v2871, 0.01
    %v3384 = vmul.f32 %v2872, 0.01
    %v3385 = vmul.f32 %v2873, 0.01
    %v3386 = vmul.f32 %v2874, 0.01
    %v3387 = vmul.f32 %v2875, 0.01
    %v3388 = vmul.f32 %v2876, 0.01
    %v3389 = vmul.f32 %v2877, 0.01
    %v3390 = vmul.f32 %v2878, 0.01
    %v3391 = vmul.f32 %v2879, 0.01
    %v3392 = vmul.f32 %v2880, 0.01
    %v3393 = vmul.f32 %v2881, 0.01
    %v3394 = vmul.f32 %v2882, 0.01
    %v3395 = vmul.f32 %v2883, 0.01
    %v3396 = vmul.f32 %v2884, 0.01
    %v3397 = vmul.f32 %v2885, 0.01
    %v3398 = vmul.f32 %v2886, 0.01
    %v3399 = vmul.f32 %v2887, 0.01
    %v3400 = vmul.f32 %v2888, 0.01
    %v3401 = vmul.f32 %v2889, 0.01
    %v3402 = vmul.f32 %v2890, 0.01
    %v3403 = vmul.f32 %v2891, 0.01
    %v3404 = vmul.f32 %v2892, 0.01
    %v3405 = vmul.f32 %v2893, 0.01
    %v3406 = vmul.f32 %v2894, 0.01
    %v3407 = vmul.f32 %v2895, 0.01
    %v3408 = vmul.f32 %v2896, 0.01
    %v3409 = vmul.f32 %v2897, 0.01
    %v3410 = vmul.f32 %v2898, 0.01
    %v3411 = vmul.f32 %v2899, 0.01
    %v3412 = vmul.f32 %v2900, 0.01
    %v3413 = vmul.f32 %v2901, 0.01
    %v3414 = vmul.f32 %v2902, 0.01
    %v3415 = vmul.f32 %v2903, 0.01
    %v3416 = vmul.f32 %v2904, 0.01
    %v3417 = vmul.f32 %v2905, 0.01
    %v3418 = vmul.f32 %v2906, 0.01
    %v3419 = vmul.f32 %v2907, 0.01
    %v3420 = vmul.f32 %v2908, 0.01
    %v3421 = vmul.f32 %v2909, 0.01
    %v3422 = vmul.f32 %v2910, 0.01
    %v3423 = vmul.f32 %v2911, 0.01
    %v3424 = vmul.f32 %v2912, 0.01
    %v3425 = vmul.f32 %v2913, 0.01
    %v3426 = vmul.f32 %v2914, 0.01
    %v3427 = vmul.f32 %v2915, 0.01
    %v3428 = vmul.f32 %v2916, 0.01
    %v3429 = vmul.f32 %v2917, 0.01
    %v3430 = vmul.f32 %v2918, 0.01
    %v3431 = vmul.f32 %v2919, 0.01
    %v3432 = vmul.f32 %v2920, 0.01
    %v3433 = vmul.f32 %v2921, 0.01
    %v3434 = vmul.f32 %v2922, 0.01
    %v3435 = vmul.f32 %v2923, 0.01
    %v3436 = vmul.f32 %v2924, 0.01
    %v3437 = vmul.f32 %v2925, 0.01
    %v3438 = vmul.f32 %v2926, 0.01
    %v3439 = vmul.f32 %v2927, 0.01
    %v3440 = vmul.f32 %v2928, 0.01
    %v3441 = vmul.f32 %v2929, 0.01
    %v3442 = vmul.f32 %v2930, 0.01
    %v3443 = vmul.f32 %v2931, 0.01
    %v3444 = vmul.f32 %v2932, 0.01
    %v3445 = vmul.f32 %v2933, 0.01
    %v3446 = vmul.f32 %v2934, 0.01
    %v3447 = vsel %vm2935, %v2679, %v3191
    %v3448 = vsel %vm2936, %v2680, %v3192
    %v3449 = vsel %vm2937, %v2681, %v3193
    %v3450 = vsel %vm2938, %v2682, %v3194
    %v3451 = vsel %vm2939, %v2683, %v3195
    %v3452 = vsel %vm2940, %v2684, %v3196
    %v3453 = vsel %vm2941, %v2685, %v3197
    %v3454 = vsel %vm2942, %v2686, %v3198
    %v3455 = vsel %vm2943, %v2687, %v3199
    %v3456 = vsel %vm2944, %v2688, %v3200
    %v3457 = vsel %vm2945, %v2689, %v3201
    %v3458 = vsel %vm2946, %v2690, %v3202
    %v3459 = vsel %vm2947, %v2691, %v3203
    %v3460 = vsel %vm2948, %v2692, %v3204
    %v3461 = vsel %vm2949, %v2693, %v3205
    %v3462 = vsel %vm2950, %v2694, %v3206
    %v3463 = vsel %vm2951, %v2695, %v3207
    %v3464 = vsel %vm2952, %v2696, %v3208
    %v3465 = vsel %vm2953, %v2697, %v3209
    %v3466 = vsel %vm2954, %v2698, %v3210
    %v3467 = vsel %vm2955, %v2699, %v3211
    %v3468 = vsel %vm2956, %v2700, %v3212
    %v3469 = vsel %vm2957, %v2701, %v3213
    %v3470 = vsel %vm2958, %v2702, %v3214
    %v3471 = vsel %vm2959, %v2703, %v3215
    %v3472 = vsel %vm2960, %v2704, %v3216
    %v3473 = vsel %vm2961, %v2705, %v3217
    %v3474 = vsel %vm2962, %v2706, %v3218
    %v3475 = vsel %vm2963, %v2707, %v3219
    %v3476 = vsel %vm2964, %v2708, %v3220
    %v3477 = vsel %vm2965, %v2709, %v3221
    %v3478 = vsel %vm2966, %v2710, %v3222
    %v3479 = vsel %vm2967, %v2711, %v3223
    %v3480 = vsel %vm2968, %v2712, %v3224
    %v3481 = vsel %vm2969, %v2713, %v3225
    %v3482 = vsel %vm2970, %v2714, %v3226
    %v3483 = vsel %vm2971, %v2715, %v3227
    %v3484 = vsel %vm2972, %v2716, %v3228
    %v3485 = vsel %vm2973, %v2717, %v3229
    %v3486 = vsel %vm2974, %v2718, %v3230
    %v3487 = vsel %vm2975, %v2719, %v3231
    %v3488 = vsel %vm2976, %v2720, %v3232
    %v3489 = vsel %vm2977, %v2721, %v3233
    %v3490 = vsel %vm2978, %v2722, %v3234
    %v3491 = vsel %vm2979, %v2723, %v3235
    %v3492 = vsel %vm2980, %v2724, %v3236
    %v3493 = vsel %vm2981, %v2725, %v3237
    %v3494 = vsel %vm2982, %v2726, %v3238
    %v3495 = vsel %vm2983, %v2727, %v3239
    %v3496 = vsel %vm2984, %v2728, %v3240
    %v3497 = vsel %vm2985, %v2729, %v3241
    %v3498 = vsel %vm2986, %v2730, %v3242
    %v3499 = vsel %vm2987, %v2731, %v3243
    %v3500 = vsel %vm2988, %v2732, %v3244
    %v3501 = vsel %vm2989, %v2733, %v3245
    %v3502 = vsel %vm2990, %v2734, %v3246
    %v3503 = vsel %vm2991, %v2735, %v3247
    %v3504 = vsel %vm2992, %v2736, %v3248
    %v3505 = vsel %vm2993, %v2737, %v3249
    %v3506 = vsel %vm2994, %v2738, %v3250
    %v3507 = vsel %vm2995, %v2739, %v3251
    %v3508 = vsel %vm2996, %v2740, %v3252
    %v3509 = vsel %vm2997, %v2741, %v3253
    %v3510 = vsel %vm2998, %v2742, %v3254
    %v3511 = vsel %vm2999, %v2743, %v3255
    %v3512 = vsel %vm3000, %v2744, %v3256
    %v3513 = vsel %vm3001, %v2745, %v3257
    %v3514 = vsel %vm3002, %v2746, %v3258
    %v3515 = vsel %vm3003, %v2747, %v3259
    %v3516 = vsel %vm3004, %v2748, %v3260
    %v3517 = vsel %vm3005, %v2749, %v3261
    %v3518 = vsel %vm3006, %v2750, %v3262
    %v3519 = vsel %vm3007, %v2751, %v3263
    %v3520 = vsel %vm3008, %v2752, %v3264
    %v3521 = vsel %vm3009, %v2753, %v3265
    %v3522 = vsel %vm3010, %v2754, %v3266
    %v3523 = vsel %vm3011, %v2755, %v3267
    %v3524 = vsel %vm3012, %v2756, %v3268
    %v3525 = vsel %vm3013, %v2757, %v3269
    %v3526 = vsel %vm3014, %v2758, %v3270
    %v3527 = vsel %vm3015, %v2759, %v3271
    %v3528 = vsel %vm3016, %v2760, %v3272
    %v3529 = vsel %vm3017, %v2761, %v3273
    %v3530 = vsel %vm3018, %v2762, %v3274
    %v3531 = vsel %vm3019, %v2763, %v3275
    %v3532 = vsel %vm3020, %v2764, %v3276
    %v3533 = vsel %vm3021, %v2765, %v3277
    %v3534 = vsel %vm3022, %v2766, %v3278
    %v3535 = vsel %vm3023, %v2767, %v3279
    %v3536 = vsel %vm3024, %v2768, %v3280
    %v3537 = vsel %vm3025, %v2769, %v3281
    %v3538 = vsel %vm3026, %v2770, %v3282
    %v3539 = vsel %vm3027, %v2771, %v3283
    %v3540 = vsel %vm3028, %v2772, %v3284
    %v3541 = vsel %vm3029, %v2773, %v3285
    %v3542 = vsel %vm3030, %v2774, %v3286
    %v3543 = vsel %vm3031, %v2775, %v3287
    %v3544 = vsel %vm3032, %v2776, %v3288
    %v3545 = vsel %vm3033, %v2777, %v3289
    %v3546 = vsel %vm3034, %v2778, %v3290
    %v3547 = vsel %vm3035, %v2779, %v3291
    %v3548 = vsel %vm3036, %v2780, %v3292
    %v3549 = vsel %vm3037, %v2781, %v3293
    %v3550 = vsel %vm3038, %v2782, %v3294
    %v3551 = vsel %vm3039, %v2783, %v3295
    %v3552 = vsel %vm3040, %v2784, %v3296
    %v3553 = vsel %vm3041, %v2785, %v3297
    %v3554 = vsel %vm3042, %v2786, %v3298
    %v3555 = vsel %vm3043, %v2787, %v3299
    %v3556 = vsel %vm3044, %v2788, %v3300
    %v3557 = vsel %vm3045, %v2789, %v3301
    %v3558 = vsel %vm3046, %v2790, %v3302
    %v3559 = vsel %vm3047, %v2791, %v3303
    %v3560 = vsel %vm3048, %v2792, %v3304
    %v3561 = vsel %vm3049, %v2793, %v3305
    %v3562 = vsel %vm3050, %v2794, %v3306
    %v3563 = vsel %vm3051, %v2795, %v3307
    %v3564 = vsel %vm3052, %v2796, %v3308
    %v3565 = vsel %vm3053, %v2797, %v3309
    %v3566 = vsel %vm3054, %v2798, %v3310
    %v3567 = vsel %vm3055, %v2799, %v3311
    %v3568 = vsel %vm3056, %v2800, %v3312
    %v3569 = vsel %vm3057, %v2801, %v3313
    %v3570 = vsel %vm3058, %v2802, %v3314
    %v3571 = vsel %vm3059, %v2803, %v3315
    %v3572 = vsel %vm3060, %v2804, %v3316
    %v3573 = vsel %vm3061, %v2805, %v3317
    %v3574 = vsel %vm3062, %v2806, %v3318
    %v3575 = vsel %vm3063, %v2807, %v3319
    %v3576 = vsel %vm3064, %v2808, %v3320
    %v3577 = vsel %vm3065, %v2809, %v3321
    %v3578 = vsel %vm3066, %v2810, %v3322
    %v3579 = vsel %vm3067, %v2811, %v3323
    %v3580 = vsel %vm3068, %v2812, %v3324
    %v3581 = vsel %vm3069, %v2813, %v3325
    %v3582 = vsel %vm3070, %v2814, %v3326
    %v3583 = vsel %vm3071, %v2815, %v3327
    %v3584 = vsel %vm3072, %v2816, %v3328
    %v3585 = vsel %vm3073, %v2817, %v3329
    %v3586 = vsel %vm3074, %v2818, %v3330
    %v3587 = vsel %vm3075, %v2819, %v3331
    %v3588 = vsel %vm3076, %v2820, %v3332
    %v3589 = vsel %vm3077, %v2821, %v3333
    %v3590 = vsel %vm3078, %v2822, %v3334
    %v3591 = vsel %vm3079, %v2823, %v3335
    %v3592 = vsel %vm3080, %v2824, %v3336
    %v3593 = vsel %vm3081, %v2825, %v3337
    %v3594 = vsel %vm3082, %v2826, %v3338
    %v3595 = vsel %vm3083, %v2827, %v3339
    %v3596 = vsel %vm3084, %v2828, %v3340
    %v3597 = vsel %vm3085, %v2829, %v3341
    %v3598 = vsel %vm3086, %v2830, %v3342
    %v3599 = vsel %vm3087, %v2831, %v3343
    %v3600 = vsel %vm3088, %v2832, %v3344
    %v3601 = vsel %vm3089, %v2833, %v3345
    %v3602 = vsel %vm3090, %v2834, %v3346
    %v3603 = vsel %vm3091, %v2835, %v3347
    %v3604 = vsel %vm3092, %v2836, %v3348
    %v3605 = vsel %vm3093, %v2837, %v3349
    %v3606 = vsel %vm3094, %v2838, %v3350
    %v3607 = vsel %vm3095, %v2839, %v3351
    %v3608 = vsel %vm3096, %v2840, %v3352
    %v3609 = vsel %vm3097, %v2841, %v3353
    %v3610 = vsel %vm3098, %v2842, %v3354
    %v3611 = vsel %vm3099, %v2843, %v3355
    %v3612 = vsel %vm3100, %v2844, %v3356
    %v3613 = vsel %vm3101, %v2845, %v3357
    %v3614 = vsel %vm3102, %v2846, %v3358
    %v3615 = vsel %vm3103, %v2847, %v3359
    %v3616 = vsel %vm3104, %v2848, %v3360
    %v3617 = vsel %vm3105, %v2849, %v3361
    %v3618 = vsel %vm3106, %v2850, %v3362
    %v3619 = vsel %vm3107, %v2851, %v3363
    %v3620 = vsel %vm3108, %v2852, %v3364
    %v3621 = vsel %vm3109, %v2853, %v3365
    %v3622 = vsel %vm3110, %v2854, %v3366
    %v3623 = vsel %vm3111, %v2855, %v3367
    %v3624 = vsel %vm3112, %v2856, %v3368
    %v3625 = vsel %vm3113, %v2857, %v3369
    %v3626 = vsel %vm3114, %v2858, %v3370
    %v3627 = vsel %vm3115, %v2859, %v3371
    %v3628 = vsel %vm3116, %v2860, %v3372
    %v3629 = vsel %vm3117, %v2861, %v3373
    %v3630 = vsel %vm3118, %v2862, %v3374
    %v3631 = vsel %vm3119, %v2863, %v3375
    %v3632 = vsel %vm3120, %v2864, %v3376
    %v3633 = vsel %vm3121, %v2865, %v3377
    %v3634 = vsel %vm3122, %v2866, %v3378
    %v3635 = vsel %vm3123, %v2867, %v3379
    %v3636 = vsel %vm3124, %v2868, %v3380
    %v3637 = vsel %vm3125, %v2869, %v3381
    %v3638 = vsel %vm3126, %v2870, %v3382
    %v3639 = vsel %vm3127, %v2871, %v3383
    %v3640 = vsel %vm3128, %v2872, %v3384
    %v3641 = vsel %vm3129, %v2873, %v3385
    %v3642 = vsel %vm3130, %v2874, %v3386
    %v3643 = vsel %vm3131, %v2875, %v3387
    %v3644 = vsel %vm3132, %v2876, %v3388
    %v3645 = vsel %vm3133, %v2877, %v3389
    %v3646 = vsel %vm3134, %v2878, %v3390
    %v3647 = vsel %vm3135, %v2879, %v3391
    %v3648 = vsel %vm3136, %v2880, %v3392
    %v3649 = vsel %vm3137, %v2881, %v3393
    %v3650 = vsel %vm3138, %v2882, %v3394
    %v3651 = vsel %vm3139, %v2883, %v3395
    %v3652 = vsel %vm3140, %v2884, %v3396
    %v3653 = vsel %vm3141, %v2885, %v3397
    %v3654 = vsel %vm3142, %v2886, %v3398
    %v3655 = vsel %vm3143, %v2887, %v3399
    %v3656 = vsel %vm3144, %v2888, %v3400
    %v3657 = vsel %vm3145, %v2889, %v3401
    %v3658 = vsel %vm3146, %v2890, %v3402
    %v3659 = vsel %vm3147, %v2891, %v3403
    %v3660 = vsel %vm3148, %v2892, %v3404
    %v3661 = vsel %vm3149, %v2893, %v3405
    %v3662 = vsel %vm3150, %v2894, %v3406
    %v3663 = vsel %vm3151, %v2895, %v3407
    %v3664 = vsel %vm3152, %v2896, %v3408
    %v3665 = vsel %vm3153, %v2897, %v3409
    %v3666 = vsel %vm3154, %v2898, %v3410
    %v3667 = vsel %vm3155, %v2899, %v3411
    %v3668 = vsel %vm3156, %v2900, %v3412
    %v3669 = vsel %vm3157, %v2901, %v3413
    %v3670 = vsel %vm3158, %v2902, %v3414
    %v3671 = vsel %vm3159, %v2903, %v3415
    %v3672 = vsel %vm3160, %v2904, %v3416
    %v3673 = vsel %vm3161, %v2905, %v3417
    %v3674 = vsel %vm3162, %v2906, %v3418
    %v3675 = vsel %vm3163, %v2907, %v3419
    %v3676 = vsel %vm3164, %v2908, %v3420
    %v3677 = vsel %vm3165, %v2909, %v3421
    %v3678 = vsel %vm3166, %v2910, %v3422
    %v3679 = vsel %vm3167, %v2911, %v3423
    %v3680 = vsel %vm3168, %v2912, %v3424
    %v3681 = vsel %vm3169, %v2913, %v3425
    %v3682 = vsel %vm3170, %v2914, %v3426
    %v3683 = vsel %vm3171, %v2915, %v3427
    %v3684 = vsel %vm3172, %v2916, %v3428
    %v3685 = vsel %vm3173, %v2917, %v3429
    %v3686 = vsel %vm3174, %v2918, %v3430
    %v3687 = vsel %vm3175, %v2919, %v3431
    %v3688 = vsel %vm3176, %v2920, %v3432
    %v3689 = vsel %vm3177, %v2921, %v3433
    %v3690 = vsel %vm3178, %v2922, %v3434
    %v3691 = vsel %vm3179, %v2923, %v3435
    %v3692 = vsel %vm3180, %v2924, %v3436
    %v3693 = vsel %vm3181, %v2925, %v3437
    %v3694 = vsel %vm3182, %v2926, %v3438
    %v3695 = vsel %vm3183, %v2927, %v3439
    %v3696 = vsel %vm3184, %v2928, %v3440
    %v3697 = vsel %vm3185, %v2929, %v3441
    %v3698 = vsel %vm3186, %v2930, %v3442
    %v3699 = vsel %vm3187, %v2931, %v3443
    %v3700 = vsel %vm3188, %v2932, %v3444
    %v3701 = vsel %vm3189, %v2933, %v3445
    %v3702 = vsel %vm3190, %v2934, %v3446
    %s3703 = smul.u32 4, 128
    %s3704 = smul.u32 %s3703, 4
    %s3705 = sshll.u32 %s3704, 4
    %3706 = dma.done [#allocation5], %s3705
    %v3707 = vpack.c.bf16 %v3455, %v3447
    %v3708 = vpack.c.bf16 %v3456, %v3448
    %v3709 = vpack.c.bf16 %v3457, %v3449
    %v3710 = vpack.c.bf16 %v3458, %v3450
    %v3711 = vpack.c.bf16 %v3459, %v3451
    %v3712 = vpack.c.bf16 %v3460, %v3452
    %v3713 = vpack.c.bf16 %v3461, %v3453
    %v3714 = vpack.c.bf16 %v3462, %v3454
    %v3715 = vpack.c.bf16 %v3471, %v3463
    %v3716 = vpack.c.bf16 %v3472, %v3464
    %v3717 = vpack.c.bf16 %v3473, %v3465
    %v3718 = vpack.c.bf16 %v3474, %v3466
    %v3719 = vpack.c.bf16 %v3475, %v3467
    %v3720 = vpack.c.bf16 %v3476, %v3468
    %v3721 = vpack.c.bf16 %v3477, %v3469
    %v3722 = vpack.c.bf16 %v3478, %v3470
    %v3723 = vpack.c.bf16 %v3487, %v3479
    %v3724 = vpack.c.bf16 %v3488, %v3480
    %v3725 = vpack.c.bf16 %v3489, %v3481
    %v3726 = vpack.c.bf16 %v3490, %v3482
    %v3727 = vpack.c.bf16 %v3491, %v3483
    %v3728 = vpack.c.bf16 %v3492, %v3484
    %v3729 = vpack.c.bf16 %v3493, %v3485
    %v3730 = vpack.c.bf16 %v3494, %v3486
    %v3731 = vpack.c.bf16 %v3503, %v3495
    %v3732 = vpack.c.bf16 %v3504, %v3496
    %v3733 = vpack.c.bf16 %v3505, %v3497
    %v3734 = vpack.c.bf16 %v3506, %v3498
    %v3735 = vpack.c.bf16 %v3507, %v3499
    %v3736 = vpack.c.bf16 %v3508, %v3500
    %v3737 = vpack.c.bf16 %v3509, %v3501
    %v3738 = vpack.c.bf16 %v3510, %v3502
    %v3739 = vpack.c.bf16 %v3519, %v3511
    %v3740 = vpack.c.bf16 %v3520, %v3512
    %v3741 = vpack.c.bf16 %v3521, %v3513
    %v3742 = vpack.c.bf16 %v3522, %v3514
    %v3743 = vpack.c.bf16 %v3523, %v3515
    %v3744 = vpack.c.bf16 %v3524, %v3516
    %v3745 = vpack.c.bf16 %v3525, %v3517
    %v3746 = vpack.c.bf16 %v3526, %v3518
    %v3747 = vpack.c.bf16 %v3535, %v3527
    %v3748 = vpack.c.bf16 %v3536, %v3528
    %v3749 = vpack.c.bf16 %v3537, %v3529
    %v3750 = vpack.c.bf16 %v3538, %v3530
    %v3751 = vpack.c.bf16 %v3539, %v3531
    %v3752 = vpack.c.bf16 %v3540, %v3532
    %v3753 = vpack.c.bf16 %v3541, %v3533
    %v3754 = vpack.c.bf16 %v3542, %v3534
    %v3755 = vpack.c.bf16 %v3551, %v3543
    %v3756 = vpack.c.bf16 %v3552, %v3544
    %v3757 = vpack.c.bf16 %v3553, %v3545
    %v3758 = vpack.c.bf16 %v3554, %v3546
    %v3759 = vpack.c.bf16 %v3555, %v3547
    %v3760 = vpack.c.bf16 %v3556, %v3548
    %v3761 = vpack.c.bf16 %v3557, %v3549
    %v3762 = vpack.c.bf16 %v3558, %v3550
    %v3763 = vpack.c.bf16 %v3567, %v3559
    %v3764 = vpack.c.bf16 %v3568, %v3560
    %v3765 = vpack.c.bf16 %v3569, %v3561
    %v3766 = vpack.c.bf16 %v3570, %v3562
    %v3767 = vpack.c.bf16 %v3571, %v3563
    %v3768 = vpack.c.bf16 %v3572, %v3564
    %v3769 = vpack.c.bf16 %v3573, %v3565
    %v3770 = vpack.c.bf16 %v3574, %v3566
    %v3771 = vpack.c.bf16 %v3583, %v3575
    %v3772 = vpack.c.bf16 %v3584, %v3576
    %v3773 = vpack.c.bf16 %v3585, %v3577
    %v3774 = vpack.c.bf16 %v3586, %v3578
    %v3775 = vpack.c.bf16 %v3587, %v3579
    %v3776 = vpack.c.bf16 %v3588, %v3580
    %v3777 = vpack.c.bf16 %v3589, %v3581
    %v3778 = vpack.c.bf16 %v3590, %v3582
    %v3779 = vpack.c.bf16 %v3599, %v3591
    %v3780 = vpack.c.bf16 %v3600, %v3592
    %v3781 = vpack.c.bf16 %v3601, %v3593
    %v3782 = vpack.c.bf16 %v3602, %v3594
    %v3783 = vpack.c.bf16 %v3603, %v3595
    %v3784 = vpack.c.bf16 %v3604, %v3596
    %v3785 = vpack.c.bf16 %v3605, %v3597
    %v3786 = vpack.c.bf16 %v3606, %v3598
    %v3787 = vpack.c.bf16 %v3615, %v3607
    %v3788 = vpack.c.bf16 %v3616, %v3608
    %v3789 = vpack.c.bf16 %v3617, %v3609
    %v3790 = vpack.c.bf16 %v3618, %v3610
    %v3791 = vpack.c.bf16 %v3619, %v3611
    %v3792 = vpack.c.bf16 %v3620, %v3612
    %v3793 = vpack.c.bf16 %v3621, %v3613
    %v3794 = vpack.c.bf16 %v3622, %v3614
    %v3795 = vpack.c.bf16 %v3631, %v3623
    %v3796 = vpack.c.bf16 %v3632, %v3624
    %v3797 = vpack.c.bf16 %v3633, %v3625
    %v3798 = vpack.c.bf16 %v3634, %v3626
    %v3799 = vpack.c.bf16 %v3635, %v3627
    %v3800 = vpack.c.bf16 %v3636, %v3628
    %v3801 = vpack.c.bf16 %v3637, %v3629
    %v3802 = vpack.c.bf16 %v3638, %v3630
    %v3803 = vpack.c.bf16 %v3647, %v3639
    %v3804 = vpack.c.bf16 %v3648, %v3640
    %v3805 = vpack.c.bf16 %v3649, %v3641
    %v3806 = vpack.c.bf16 %v3650, %v3642
    %v3807 = vpack.c.bf16 %v3651, %v3643
    %v3808 = vpack.c.bf16 %v3652, %v3644
    %v3809 = vpack.c.bf16 %v3653, %v3645
    %v3810 = vpack.c.bf16 %v3654, %v3646
    %v3811 = vpack.c.bf16 %v3663, %v3655
    %v3812 = vpack.c.bf16 %v3664, %v3656
    %v3813 = vpack.c.bf16 %v3665, %v3657
    %v3814 = vpack.c.bf16 %v3666, %v3658
    %v3815 = vpack.c.bf16 %v3667, %v3659
    %v3816 = vpack.c.bf16 %v3668, %v3660
    %v3817 = vpack.c.bf16 %v3669, %v3661
    %v3818 = vpack.c.bf16 %v3670, %v3662
    %v3819 = vpack.c.bf16 %v3679, %v3671
    %v3820 = vpack.c.bf16 %v3680, %v3672
    %v3821 = vpack.c.bf16 %v3681, %v3673
    %v3822 = vpack.c.bf16 %v3682, %v3674
    %v3823 = vpack.c.bf16 %v3683, %v3675
    %v3824 = vpack.c.bf16 %v3684, %v3676
    %v3825 = vpack.c.bf16 %v3685, %v3677
    %v3826 = vpack.c.bf16 %v3686, %v3678
    %v3827 = vpack.c.bf16 %v3695, %v3687
    %v3828 = vpack.c.bf16 %v3696, %v3688
    %v3829 = vpack.c.bf16 %v3697, %v3689
    %v3830 = vpack.c.bf16 %v3698, %v3690
    %v3831 = vpack.c.bf16 %v3699, %v3691
    %v3832 = vpack.c.bf16 %v3700, %v3692
    %v3833 = vpack.c.bf16 %v3701, %v3693
    %v3834 = vpack.c.bf16 %v3702, %v3694
    %v3835 = vld [vmem:[#allocation2] sm:$0xff]
    %v3836 = vld [vmem:[#allocation2 + $0x8] sm:$0xff]
    %v3837 = vld [vmem:[#allocation2 + $0x10] sm:$0xff]
    %v3838 = vld [vmem:[#allocation2 + $0x18] sm:$0xff]
    %v3839 = vld [vmem:[#allocation2 + $0x20] sm:$0xff]
    %v3840 = vld [vmem:[#allocation2 + $0x28] sm:$0xff]
    %v3841 = vld [vmem:[#allocation2 + $0x30] sm:$0xff]
    %v3842 = vld [vmem:[#allocation2 + $0x38] sm:$0xff]
    %v3843 = vld [vmem:[#allocation2 + $0x40] sm:$0xff]
    %v3844 = vld [vmem:[#allocation2 + $0x48] sm:$0xff]
    %v3845 = vld [vmem:[#allocation2 + $0x50] sm:$0xff]
    %v3846 = vld [vmem:[#allocation2 + $0x58] sm:$0xff]
    %v3847 = vld [vmem:[#allocation2 + $0x60] sm:$0xff]
    %v3848 = vld [vmem:[#allocation2 + $0x68] sm:$0xff]
    %v3849 = vld [vmem:[#allocation2 + $0x70] sm:$0xff]
    %v3850 = vld [vmem:[#allocation2 + $0x78] sm:$0xff]
    %v3851 = vld [vmem:[#allocation2 + $0x80] sm:$0xff]
    %v3852 = vld [vmem:[#allocation2 + $0x88] sm:$0xff]
    %v3853 = vld [vmem:[#allocation2 + $0x90] sm:$0xff]
    %v3854 = vld [vmem:[#allocation2 + $0x98] sm:$0xff]
    %v3855 = vld [vmem:[#allocation2 + $0xa0] sm:$0xff]
    %v3856 = vld [vmem:[#allocation2 + $0xa8] sm:$0xff]
    %v3857 = vld [vmem:[#allocation2 + $0xb0] sm:$0xff]
    %v3858 = vld [vmem:[#allocation2 + $0xb8] sm:$0xff]
    %v3859 = vld [vmem:[#allocation2 + $0xc0] sm:$0xff]
    %v3860 = vld [vmem:[#allocation2 + $0xc8] sm:$0xff]
    %v3861 = vld [vmem:[#allocation2 + $0xd0] sm:$0xff]
    %v3862 = vld [vmem:[#allocation2 + $0xd8] sm:$0xff]
    %v3863 = vld [vmem:[#allocation2 + $0xe0] sm:$0xff]
    %v3864 = vld [vmem:[#allocation2 + $0xe8] sm:$0xff]
    %v3865 = vld [vmem:[#allocation2 + $0xf0] sm:$0xff]
    %v3866 = vld [vmem:[#allocation2 + $0xf8] sm:$0xff]
    %v3867 = vld [vmem:[#allocation2 + $0x100] sm:$0xff]
    %v3868 = vld [vmem:[#allocation2 + $0x108] sm:$0xff]
    %v3869 = vld [vmem:[#allocation2 + $0x110] sm:$0xff]
    %v3870 = vld [vmem:[#allocation2 + $0x118] sm:$0xff]
    %v3871 = vld [vmem:[#allocation2 + $0x120] sm:$0xff]
    %v3872 = vld [vmem:[#allocation2 + $0x128] sm:$0xff]
    %v3873 = vld [vmem:[#allocation2 + $0x130] sm:$0xff]
    %v3874 = vld [vmem:[#allocation2 + $0x138] sm:$0xff]
    %v3875 = vld [vmem:[#allocation2 + $0x140] sm:$0xff]
    %v3876 = vld [vmem:[#allocation2 + $0x148] sm:$0xff]
    %v3877 = vld [vmem:[#allocation2 + $0x150] sm:$0xff]
    %v3878 = vld [vmem:[#allocation2 + $0x158] sm:$0xff]
    %v3879 = vld [vmem:[#allocation2 + $0x160] sm:$0xff]
    %v3880 = vld [vmem:[#allocation2 + $0x168] sm:$0xff]
    %v3881 = vld [vmem:[#allocation2 + $0x170] sm:$0xff]
    %v3882 = vld [vmem:[#allocation2 + $0x178] sm:$0xff]
    %v3883 = vld [vmem:[#allocation2 + $0x180] sm:$0xff]
    %v3884 = vld [vmem:[#allocation2 + $0x188] sm:$0xff]
    %v3885 = vld [vmem:[#allocation2 + $0x190] sm:$0xff]
    %v3886 = vld [vmem:[#allocation2 + $0x198] sm:$0xff]
    %v3887 = vld [vmem:[#allocation2 + $0x1a0] sm:$0xff]
    %v3888 = vld [vmem:[#allocation2 + $0x1a8] sm:$0xff]
    %v3889 = vld [vmem:[#allocation2 + $0x1b0] sm:$0xff]
    %v3890 = vld [vmem:[#allocation2 + $0x1b8] sm:$0xff]
    %v3891 = vld [vmem:[#allocation2 + $0x1c0] sm:$0xff]
    %v3892 = vld [vmem:[#allocation2 + $0x1c8] sm:$0xff]
    %v3893 = vld [vmem:[#allocation2 + $0x1d0] sm:$0xff]
    %v3894 = vld [vmem:[#allocation2 + $0x1d8] sm:$0xff]
    %v3895 = vld [vmem:[#allocation2 + $0x1e0] sm:$0xff]
    %v3896 = vld [vmem:[#allocation2 + $0x1e8] sm:$0xff]
    %v3897 = vld [vmem:[#allocation2 + $0x1f0] sm:$0xff]
    %v3898 = vld [vmem:[#allocation2 + $0x1f8] sm:$0xff]
    %v3899 = vld [vmem:[#allocation2 + $0x200] sm:$0xff]
    %v3900 = vld [vmem:[#allocation2 + $0x208] sm:$0xff]
    %v3901 = vld [vmem:[#allocation2 + $0x210] sm:$0xff]
    %v3902 = vld [vmem:[#allocation2 + $0x218] sm:$0xff]
    %v3903 = vld [vmem:[#allocation2 + $0x220] sm:$0xff]
    %v3904 = vld [vmem:[#allocation2 + $0x228] sm:$0xff]
    %v3905 = vld [vmem:[#allocation2 + $0x230] sm:$0xff]
    %v3906 = vld [vmem:[#allocation2 + $0x238] sm:$0xff]
    %v3907 = vld [vmem:[#allocation2 + $0x240] sm:$0xff]
    %v3908 = vld [vmem:[#allocation2 + $0x248] sm:$0xff]
    %v3909 = vld [vmem:[#allocation2 + $0x250] sm:$0xff]
    %v3910 = vld [vmem:[#allocation2 + $0x258] sm:$0xff]
    %v3911 = vld [vmem:[#allocation2 + $0x260] sm:$0xff]
    %v3912 = vld [vmem:[#allocation2 + $0x268] sm:$0xff]
    %v3913 = vld [vmem:[#allocation2 + $0x270] sm:$0xff]
    %v3914 = vld [vmem:[#allocation2 + $0x278] sm:$0xff]
    %v3915 = vld [vmem:[#allocation2 + $0x280] sm:$0xff]
    %v3916 = vld [vmem:[#allocation2 + $0x288] sm:$0xff]
    %v3917 = vld [vmem:[#allocation2 + $0x290] sm:$0xff]
    %v3918 = vld [vmem:[#allocation2 + $0x298] sm:$0xff]
    %v3919 = vld [vmem:[#allocation2 + $0x2a0] sm:$0xff]
    %v3920 = vld [vmem:[#allocation2 + $0x2a8] sm:$0xff]
    %v3921 = vld [vmem:[#allocation2 + $0x2b0] sm:$0xff]
    %v3922 = vld [vmem:[#allocation2 + $0x2b8] sm:$0xff]
    %v3923 = vld [vmem:[#allocation2 + $0x2c0] sm:$0xff]
    %v3924 = vld [vmem:[#allocation2 + $0x2c8] sm:$0xff]
    %v3925 = vld [vmem:[#allocation2 + $0x2d0] sm:$0xff]
    %v3926 = vld [vmem:[#allocation2 + $0x2d8] sm:$0xff]
    %v3927 = vld [vmem:[#allocation2 + $0x2e0] sm:$0xff]
    %v3928 = vld [vmem:[#allocation2 + $0x2e8] sm:$0xff]
    %v3929 = vld [vmem:[#allocation2 + $0x2f0] sm:$0xff]
    %v3930 = vld [vmem:[#allocation2 + $0x2f8] sm:$0xff]
    %v3931 = vld [vmem:[#allocation2 + $0x300] sm:$0xff]
    %v3932 = vld [vmem:[#allocation2 + $0x308] sm:$0xff]
    %v3933 = vld [vmem:[#allocation2 + $0x310] sm:$0xff]
    %v3934 = vld [vmem:[#allocation2 + $0x318] sm:$0xff]
    %v3935 = vld [vmem:[#allocation2 + $0x320] sm:$0xff]
    %v3936 = vld [vmem:[#allocation2 + $0x328] sm:$0xff]
    %v3937 = vld [vmem:[#allocation2 + $0x330] sm:$0xff]
    %v3938 = vld [vmem:[#allocation2 + $0x338] sm:$0xff]
    %v3939 = vld [vmem:[#allocation2 + $0x340] sm:$0xff]
    %v3940 = vld [vmem:[#allocation2 + $0x348] sm:$0xff]
    %v3941 = vld [vmem:[#allocation2 + $0x350] sm:$0xff]
    %v3942 = vld [vmem:[#allocation2 + $0x358] sm:$0xff]
    %v3943 = vld [vmem:[#allocation2 + $0x360] sm:$0xff]
    %v3944 = vld [vmem:[#allocation2 + $0x368] sm:$0xff]
    %v3945 = vld [vmem:[#allocation2 + $0x370] sm:$0xff]
    %v3946 = vld [vmem:[#allocation2 + $0x378] sm:$0xff]
    %v3947 = vld [vmem:[#allocation2 + $0x380] sm:$0xff]
    %v3948 = vld [vmem:[#allocation2 + $0x388] sm:$0xff]
    %v3949 = vld [vmem:[#allocation2 + $0x390] sm:$0xff]
    %v3950 = vld [vmem:[#allocation2 + $0x398] sm:$0xff]
    %v3951 = vld [vmem:[#allocation2 + $0x3a0] sm:$0xff]
    %v3952 = vld [vmem:[#allocation2 + $0x3a8] sm:$0xff]
    %v3953 = vld [vmem:[#allocation2 + $0x3b0] sm:$0xff]
    %v3954 = vld [vmem:[#allocation2 + $0x3b8] sm:$0xff]
    %v3955 = vld [vmem:[#allocation2 + $0x3c0] sm:$0xff]
    %v3956 = vld [vmem:[#allocation2 + $0x3c8] sm:$0xff]
    %v3957 = vld [vmem:[#allocation2 + $0x3d0] sm:$0xff]
    %v3958 = vld [vmem:[#allocation2 + $0x3d8] sm:$0xff]
    %v3959 = vld [vmem:[#allocation2 + $0x3e0] sm:$0xff]
    %v3960 = vld [vmem:[#allocation2 + $0x3e8] sm:$0xff]
    %v3961 = vld [vmem:[#allocation2 + $0x3f0] sm:$0xff]
    %v3962 = vld [vmem:[#allocation2 + $0x3f8] sm:$0xff]
    %v3963 = vld [vmem:[#allocation2 + $0x400] sm:$0xff]
    %v3964 = vld [vmem:[#allocation2 + $0x408] sm:$0xff]
    %v3965 = vld [vmem:[#allocation2 + $0x410] sm:$0xff]
    %v3966 = vld [vmem:[#allocation2 + $0x418] sm:$0xff]
    %v3967 = vld [vmem:[#allocation2 + $0x420] sm:$0xff]
    %v3968 = vld [vmem:[#allocation2 + $0x428] sm:$0xff]
    %v3969 = vld [vmem:[#allocation2 + $0x430] sm:$0xff]
    %v3970 = vld [vmem:[#allocation2 + $0x438] sm:$0xff]
    %v3971 = vld [vmem:[#allocation2 + $0x440] sm:$0xff]
    %v3972 = vld [vmem:[#allocation2 + $0x448] sm:$0xff]
    %v3973 = vld [vmem:[#allocation2 + $0x450] sm:$0xff]
    %v3974 = vld [vmem:[#allocation2 + $0x458] sm:$0xff]
    %v3975 = vld [vmem:[#allocation2 + $0x460] sm:$0xff]
    %v3976 = vld [vmem:[#allocation2 + $0x468] sm:$0xff]
    %v3977 = vld [vmem:[#allocation2 + $0x470] sm:$0xff]
    %v3978 = vld [vmem:[#allocation2 + $0x478] sm:$0xff]
    %v3979 = vld [vmem:[#allocation2 + $0x480] sm:$0xff]
    %v3980 = vld [vmem:[#allocation2 + $0x488] sm:$0xff]
    %v3981 = vld [vmem:[#allocation2 + $0x490] sm:$0xff]
    %v3982 = vld [vmem:[#allocation2 + $0x498] sm:$0xff]
    %v3983 = vld [vmem:[#allocation2 + $0x4a0] sm:$0xff]
    %v3984 = vld [vmem:[#allocation2 + $0x4a8] sm:$0xff]
    %v3985 = vld [vmem:[#allocation2 + $0x4b0] sm:$0xff]
    %v3986 = vld [vmem:[#allocation2 + $0x4b8] sm:$0xff]
    %v3987 = vld [vmem:[#allocation2 + $0x4c0] sm:$0xff]
    %v3988 = vld [vmem:[#allocation2 + $0x4c8] sm:$0xff]
    %v3989 = vld [vmem:[#allocation2 + $0x4d0] sm:$0xff]
    %v3990 = vld [vmem:[#allocation2 + $0x4d8] sm:$0xff]
    %v3991 = vld [vmem:[#allocation2 + $0x4e0] sm:$0xff]
    %v3992 = vld [vmem:[#allocation2 + $0x4e8] sm:$0xff]
    %v3993 = vld [vmem:[#allocation2 + $0x4f0] sm:$0xff]
    %v3994 = vld [vmem:[#allocation2 + $0x4f8] sm:$0xff]
    %v3995 = vld [vmem:[#allocation2 + $0x500] sm:$0xff]
    %v3996 = vld [vmem:[#allocation2 + $0x508] sm:$0xff]
    %v3997 = vld [vmem:[#allocation2 + $0x510] sm:$0xff]
    %v3998 = vld [vmem:[#allocation2 + $0x518] sm:$0xff]
    %v3999 = vld [vmem:[#allocation2 + $0x520] sm:$0xff]
    %v4000 = vld [vmem:[#allocation2 + $0x528] sm:$0xff]
    %v4001 = vld [vmem:[#allocation2 + $0x530] sm:$0xff]
    %v4002 = vld [vmem:[#allocation2 + $0x538] sm:$0xff]
    %v4003 = vld [vmem:[#allocation2 + $0x540] sm:$0xff]
    %v4004 = vld [vmem:[#allocation2 + $0x548] sm:$0xff]
    %v4005 = vld [vmem:[#allocation2 + $0x550] sm:$0xff]
    %v4006 = vld [vmem:[#allocation2 + $0x558] sm:$0xff]
    %v4007 = vld [vmem:[#allocation2 + $0x560] sm:$0xff]
    %v4008 = vld [vmem:[#allocation2 + $0x568] sm:$0xff]
    %v4009 = vld [vmem:[#allocation2 + $0x570] sm:$0xff]
    %v4010 = vld [vmem:[#allocation2 + $0x578] sm:$0xff]
    %v4011 = vld [vmem:[#allocation2 + $0x580] sm:$0xff]
    %v4012 = vld [vmem:[#allocation2 + $0x588] sm:$0xff]
    %v4013 = vld [vmem:[#allocation2 + $0x590] sm:$0xff]
    %v4014 = vld [vmem:[#allocation2 + $0x598] sm:$0xff]
    %v4015 = vld [vmem:[#allocation2 + $0x5a0] sm:$0xff]
    %v4016 = vld [vmem:[#allocation2 + $0x5a8] sm:$0xff]
    %v4017 = vld [vmem:[#allocation2 + $0x5b0] sm:$0xff]
    %v4018 = vld [vmem:[#allocation2 + $0x5b8] sm:$0xff]
    %v4019 = vld [vmem:[#allocation2 + $0x5c0] sm:$0xff]
    %v4020 = vld [vmem:[#allocation2 + $0x5c8] sm:$0xff]
    %v4021 = vld [vmem:[#allocation2 + $0x5d0] sm:$0xff]
    %v4022 = vld [vmem:[#allocation2 + $0x5d8] sm:$0xff]
    %v4023 = vld [vmem:[#allocation2 + $0x5e0] sm:$0xff]
    %v4024 = vld [vmem:[#allocation2 + $0x5e8] sm:$0xff]
    %v4025 = vld [vmem:[#allocation2 + $0x5f0] sm:$0xff]
    %v4026 = vld [vmem:[#allocation2 + $0x5f8] sm:$0xff]
    %v4027 = vld [vmem:[#allocation2 + $0x600] sm:$0xff]
    %v4028 = vld [vmem:[#allocation2 + $0x608] sm:$0xff]
    %v4029 = vld [vmem:[#allocation2 + $0x610] sm:$0xff]
    %v4030 = vld [vmem:[#allocation2 + $0x618] sm:$0xff]
    %v4031 = vld [vmem:[#allocation2 + $0x620] sm:$0xff]
    %v4032 = vld [vmem:[#allocation2 + $0x628] sm:$0xff]
    %v4033 = vld [vmem:[#allocation2 + $0x630] sm:$0xff]
    %v4034 = vld [vmem:[#allocation2 + $0x638] sm:$0xff]
    %v4035 = vld [vmem:[#allocation2 + $0x640] sm:$0xff]
    %v4036 = vld [vmem:[#allocation2 + $0x648] sm:$0xff]
    %v4037 = vld [vmem:[#allocation2 + $0x650] sm:$0xff]
    %v4038 = vld [vmem:[#allocation2 + $0x658] sm:$0xff]
    %v4039 = vld [vmem:[#allocation2 + $0x660] sm:$0xff]
    %v4040 = vld [vmem:[#allocation2 + $0x668] sm:$0xff]
    %v4041 = vld [vmem:[#allocation2 + $0x670] sm:$0xff]
    %v4042 = vld [vmem:[#allocation2 + $0x678] sm:$0xff]
    %v4043 = vld [vmem:[#allocation2 + $0x680] sm:$0xff]
    %v4044 = vld [vmem:[#allocation2 + $0x688] sm:$0xff]
    %v4045 = vld [vmem:[#allocation2 + $0x690] sm:$0xff]
    %v4046 = vld [vmem:[#allocation2 + $0x698] sm:$0xff]
    %v4047 = vld [vmem:[#allocation2 + $0x6a0] sm:$0xff]
    %v4048 = vld [vmem:[#allocation2 + $0x6a8] sm:$0xff]
    %v4049 = vld [vmem:[#allocation2 + $0x6b0] sm:$0xff]
    %v4050 = vld [vmem:[#allocation2 + $0x6b8] sm:$0xff]
    %v4051 = vld [vmem:[#allocation2 + $0x6c0] sm:$0xff]
    %v4052 = vld [vmem:[#allocation2 + $0x6c8] sm:$0xff]
    %v4053 = vld [vmem:[#allocation2 + $0x6d0] sm:$0xff]
    %v4054 = vld [vmem:[#allocation2 + $0x6d8] sm:$0xff]
    %v4055 = vld [vmem:[#allocation2 + $0x6e0] sm:$0xff]
    %v4056 = vld [vmem:[#allocation2 + $0x6e8] sm:$0xff]
    %v4057 = vld [vmem:[#allocation2 + $0x6f0] sm:$0xff]
    %v4058 = vld [vmem:[#allocation2 + $0x6f8] sm:$0xff]
    %v4059 = vld [vmem:[#allocation2 + $0x700] sm:$0xff]
    %v4060 = vld [vmem:[#allocation2 + $0x708] sm:$0xff]
    %v4061 = vld [vmem:[#allocation2 + $0x710] sm:$0xff]
    %v4062 = vld [vmem:[#allocation2 + $0x718] sm:$0xff]
    %v4063 = vld [vmem:[#allocation2 + $0x720] sm:$0xff]
    %v4064 = vld [vmem:[#allocation2 + $0x728] sm:$0xff]
    %v4065 = vld [vmem:[#allocation2 + $0x730] sm:$0xff]
    %v4066 = vld [vmem:[#allocation2 + $0x738] sm:$0xff]
    %v4067 = vld [vmem:[#allocation2 + $0x740] sm:$0xff]
    %v4068 = vld [vmem:[#allocation2 + $0x748] sm:$0xff]
    %v4069 = vld [vmem:[#allocation2 + $0x750] sm:$0xff]
    %v4070 = vld [vmem:[#allocation2 + $0x758] sm:$0xff]
    %v4071 = vld [vmem:[#allocation2 + $0x760] sm:$0xff]
    %v4072 = vld [vmem:[#allocation2 + $0x768] sm:$0xff]
    %v4073 = vld [vmem:[#allocation2 + $0x770] sm:$0xff]
    %v4074 = vld [vmem:[#allocation2 + $0x778] sm:$0xff]
    %v4075 = vld [vmem:[#allocation2 + $0x780] sm:$0xff]
    %v4076 = vld [vmem:[#allocation2 + $0x788] sm:$0xff]
    %v4077 = vld [vmem:[#allocation2 + $0x790] sm:$0xff]
    %v4078 = vld [vmem:[#allocation2 + $0x798] sm:$0xff]
    %v4079 = vld [vmem:[#allocation2 + $0x7a0] sm:$0xff]
    %v4080 = vld [vmem:[#allocation2 + $0x7a8] sm:$0xff]
    %v4081 = vld [vmem:[#allocation2 + $0x7b0] sm:$0xff]
    %v4082 = vld [vmem:[#allocation2 + $0x7b8] sm:$0xff]
    %v4083 = vld [vmem:[#allocation2 + $0x7c0] sm:$0xff]
    %v4084 = vld [vmem:[#allocation2 + $0x7c8] sm:$0xff]
    %v4085 = vld [vmem:[#allocation2 + $0x7d0] sm:$0xff]
    %v4086 = vld [vmem:[#allocation2 + $0x7d8] sm:$0xff]
    %v4087 = vld [vmem:[#allocation2 + $0x7e0] sm:$0xff]
    %v4088 = vld [vmem:[#allocation2 + $0x7e8] sm:$0xff]
    %v4089 = vld [vmem:[#allocation2 + $0x7f0] sm:$0xff]
    %v4090 = vld [vmem:[#allocation2 + $0x7f8] sm:$0xff]
    %4091 = vmatprep.subr.bf16.mxu0 %v3836
    %4092 = vmatpush1.bf16.msra.mxu0 %v3835
    %4093 = vmatprep.subr.bf16.mxu0 %v3840
    %4094 = vmatpush1.bf16.msra.mxu0 %v3839
    %4095 = vmatprep.subr.bf16.mxu0 %v3844
    %4096 = vmatpush1.bf16.msra.mxu0 %v3843
    %4097 = vmatprep.subr.bf16.mxu0 %v3848
    %4098 = vmatpush1.bf16.msra.mxu0 %v3847
    %4099 = vmatprep.subr.bf16.mxu0 %v3852
    %4100 = vmatpush1.bf16.msra.mxu0 %v3851
    %4101 = vmatprep.subr.bf16.mxu0 %v3856
    %4102 = vmatpush1.bf16.msra.mxu0 %v3855
    %4103 = vmatprep.subr.bf16.mxu0 %v3860
    %4104 = vmatpush1.bf16.msra.mxu0 %v3859
    %4105 = vmatprep.subr.bf16.mxu0 %v3864
    %4106 = vmatpush1.bf16.msra.mxu0 %v3863
    %4107 = vmatprep.subr.bf16.mxu0 %v3868
    %4108 = vmatpush1.bf16.msra.mxu0 %v3867
    %4109 = vmatprep.subr.bf16.mxu0 %v3872
    %4110 = vmatpush1.bf16.msra.mxu0 %v3871
    %4111 = vmatprep.subr.bf16.mxu0 %v3876
    %4112 = vmatpush1.bf16.msra.mxu0 %v3875
    %4113 = vmatprep.subr.bf16.mxu0 %v3880
    %4114 = vmatpush1.bf16.msra.mxu0 %v3879
    %4115 = vmatprep.subr.bf16.mxu0 %v3884
    %4116 = vmatpush1.bf16.msra.mxu0 %v3883
    %4117 = vmatprep.subr.bf16.mxu0 %v3888
    %4118 = vmatpush1.bf16.msra.mxu0 %v3887
    %4119 = vmatprep.subr.bf16.mxu0 %v3892
    %4120 = vmatpush1.bf16.msra.mxu0 %v3891
    %4121 = vmatprep.subr.bf16.mxu0 %v3896
    %4122 = vmatpush1.bf16.msra.mxu0 %v3895
    %4123 = vmatprep.mubr.bf16.mxu0 %v3708
    %4124 = vmatmul.mubr.bf16.gmra.mrb[0].mxu0 %v3707
    %v4125 = vpop.f32.mrb[0].mxu0
    %v4126 = vadd.f32 0.0, %v4125
    %v4127 = vpop.f32.mrb[0].mxu0
    %v4128 = vadd.f32 0.0, %v4127
    %v4129 = vpop.f32.mrb[0].mxu0
    %v4130 = vadd.f32 0.0, %v4129
    %v4131 = vpop.f32.mrb[0].mxu0
    %v4132 = vadd.f32 0.0, %v4131
    %4133 = vmatprep.mubr.bf16.mxu0 %v3716
    %4134 = vmatmul.mubr.bf16.gmra.mrb[0].mxu0 %v3715
    %v4135 = vpop.f32.mrb[0].mxu0
    %v4136 = vadd.f32 0.0, %v4135
    %v4137 = vpop.f32.mrb[0].mxu0
    %v4138 = vadd.f32 0.0, %v4137
    %v4139 = vpop.f32.mrb[0].mxu0
    %v4140 = vadd.f32 0.0, %v4139
    %v4141 = vpop.f32.mrb[0].mxu0
    %v4142 = vadd.f32 0.0, %v4141
    %4143 = vmatprep.mubr.bf16.mxu0 %v3724
    %4144 = vmatmul.mubr.bf16.gmra.mrb[0].mxu0 %v3723
    %v4145 = vpop.f32.mrb[0].mxu0
    %v4146 = vadd.f32 0.0, %v4145
    %v4147 = vpop.f32.mrb[0].mxu0
    %v4148 = vadd.f32 0.0, %v4147
    %v4149 = vpop.f32.mrb[0].mxu0
    %v4150 = vadd.f32 0.0, %v4149
    %v4151 = vpop.f32.mrb[0].mxu0
    %v4152 = vadd.f32 0.0, %v4151
    %4153 = vmatprep.mubr.bf16.mxu0 %v3732
    %4154 = vmatmul.mubr.bf16.gmra.mrb[0].mxu0 %v3731
    %v4155 = vpop.f32.mrb[0].mxu0
    %v4156 = vadd.f32 0.0, %v4155
    %v4157 = vpop.f32.mrb[0].mxu0
    %v4158 = vadd.f32 0.0, %v4157
    %v4159 = vpop.f32.mrb[0].mxu0
    %v4160 = vadd.f32 0.0, %v4159
    %v4161 = vpop.f32.mrb[0].mxu0
    %v4162 = vadd.f32 0.0, %v4161
    %4163 = vmatprep.mubr.bf16.mxu0 %v3740
    %4164 = vmatmul.mubr.bf16.gmra.mrb[0].mxu0 %v3739
    %v4165 = vpop.f32.mrb[0].mxu0
    %v4166 = vadd.f32 0.0, %v4165
    %v4167 = vpop.f32.mrb[0].mxu0
    %v4168 = vadd.f32 0.0, %v4167
    %v4169 = vpop.f32.mrb[0].mxu0
    %v4170 = vadd.f32 0.0, %v4169
    %v4171 = vpop.f32.mrb[0].mxu0
    %v4172 = vadd.f32 0.0, %v4171
    %4173 = vmatprep.mubr.bf16.mxu0 %v3748
    %4174 = vmatmul.mubr.bf16.gmra.mrb[0].mxu0 %v3747
    %v4175 = vpop.f32.mrb[0].mxu0
    %v4176 = vadd.f32 0.0, %v4175
    %v4177 = vpop.f32.mrb[0].mxu0
    %v4178 = vadd.f32 0.0, %v4177
    %v4179 = vpop.f32.mrb[0].mxu0
    %v4180 = vadd.f32 0.0, %v4179
    %v4181 = vpop.f32.mrb[0].mxu0
    %v4182 = vadd.f32 0.0, %v4181
    %4183 = vmatprep.mubr.bf16.mxu0 %v3756
    %4184 = vmatmul.mubr.bf16.gmra.mrb[0].mxu0 %v3755
    %v4185 = vpop.f32.mrb[0].mxu0
    %v4186 = vadd.f32 0.0, %v4185
    %v4187 = vpop.f32.mrb[0].mxu0
    %v4188 = vadd.f32 0.0, %v4187
    %v4189 = vpop.f32.mrb[0].mxu0
    %v4190 = vadd.f32 0.0, %v4189
    %v4191 = vpop.f32.mrb[0].mxu0
    %v4192 = vadd.f32 0.0, %v4191
    %4193 = vmatprep.mubr.bf16.mxu0 %v3764
    %4194 = vmatmul.mubr.bf16.gmra.mrb[0].mxu0 %v3763
    %v4195 = vpop.f32.mrb[0].mxu0
    %v4196 = vadd.f32 0.0, %v4195
    %v4197 = vpop.f32.mrb[0].mxu0
    %v4198 = vadd.f32 0.0, %v4197
    %v4199 = vpop.f32.mrb[0].mxu0
    %v4200 = vadd.f32 0.0, %v4199
    %v4201 = vpop.f32.mrb[0].mxu0
    %v4202 = vadd.f32 0.0, %v4201
    %4203 = vmatprep.mubr.bf16.mxu0 %v3772
    %4204 = vmatmul.mubr.bf16.gmra.mrb[0].mxu0 %v3771
    %v4205 = vpop.f32.mrb[0].mxu0
    %v4206 = vadd.f32 0.0, %v4205
    %v4207 = vpop.f32.mrb[0].mxu0
    %v4208 = vadd.f32 0.0, %v4207
    %v4209 = vpop.f32.mrb[0].mxu0
    %v4210 = vadd.f32 0.0, %v4209
    %v4211 = vpop.f32.mrb[0].mxu0
    %v4212 = vadd.f32 0.0, %v4211
    %4213 = vmatprep.mubr.bf16.mxu0 %v3780
    %4214 = vmatmul.mubr.bf16.gmra.mrb[0].mxu0 %v3779
    %v4215 = vpop.f32.mrb[0].mxu0
    %v4216 = vadd.f32 0.0, %v4215
    %v4217 = vpop.f32.mrb[0].mxu0
    %v4218 = vadd.f32 0.0, %v4217
    %v4219 = vpop.f32.mrb[0].mxu0
    %v4220 = vadd.f32 0.0, %v4219
    %v4221 = vpop.f32.mrb[0].mxu0
    %v4222 = vadd.f32 0.0, %v4221
    %4223 = vmatprep.mubr.bf16.mxu0 %v3788
    %4224 = vmatmul.mubr.bf16.gmra.mrb[0].mxu0 %v3787
    %v4225 = vpop.f32.mrb[0].mxu0
    %v4226 = vadd.f32 0.0, %v4225
    %v4227 = vpop.f32.mrb[0].mxu0
    %v4228 = vadd.f32 0.0, %v4227
    %v4229 = vpop.f32.mrb[0].mxu0
    %v4230 = vadd.f32 0.0, %v4229
    %v4231 = vpop.f32.mrb[0].mxu0
    %v4232 = vadd.f32 0.0, %v4231
    %4233 = vmatprep.mubr.bf16.mxu0 %v3796
    %4234 = vmatmul.mubr.bf16.gmra.mrb[0].mxu0 %v3795
    %v4235 = vpop.f32.mrb[0].mxu0
    %v4236 = vadd.f32 0.0, %v4235
    %v4237 = vpop.f32.mrb[0].mxu0
    %v4238 = vadd.f32 0.0, %v4237
    %v4239 = vpop.f32.mrb[0].mxu0
    %v4240 = vadd.f32 0.0, %v4239
    %v4241 = vpop.f32.mrb[0].mxu0
    %v4242 = vadd.f32 0.0, %v4241
    %4243 = vmatprep.mubr.bf16.mxu0 %v3804
    %4244 = vmatmul.mubr.bf16.gmra.mrb[0].mxu0 %v3803
    %v4245 = vpop.f32.mrb[0].mxu0
    %v4246 = vadd.f32 0.0, %v4245
    %v4247 = vpop.f32.mrb[0].mxu0
    %v4248 = vadd.f32 0.0, %v4247
    %v4249 = vpop.f32.mrb[0].mxu0
    %v4250 = vadd.f32 0.0, %v4249
    %v4251 = vpop.f32.mrb[0].mxu0
    %v4252 = vadd.f32 0.0, %v4251
    %4253 = vmatprep.mubr.bf16.mxu0 %v3812
    %4254 = vmatmul.mubr.bf16.gmra.mrb[0].mxu0 %v3811
    %v4255 = vpop.f32.mrb[0].mxu0
    %v4256 = vadd.f32 0.0, %v4255
    %v4257 = vpop.f32.mrb[0].mxu0
    %v4258 = vadd.f32 0.0, %v4257
    %v4259 = vpop.f32.mrb[0].mxu0
    %v4260 = vadd.f32 0.0, %v4259
    %v4261 = vpop.f32.mrb[0].mxu0
    %v4262 = vadd.f32 0.0, %v4261
    %4263 = vmatprep.mubr.bf16.mxu0 %v3820
    %4264 = vmatmul.mubr.bf16.gmra.mrb[0].mxu0 %v3819
    %v4265 = vpop.f32.mrb[0].mxu0
    %v4266 = vadd.f32 0.0, %v4265
    %v4267 = vpop.f32.mrb[0].mxu0
    %v4268 = vadd.f32 0.0, %v4267
    %v4269 = vpop.f32.mrb[0].mxu0
    %v4270 = vadd.f32 0.0, %v4269
    %v4271 = vpop.f32.mrb[0].mxu0
    %v4272 = vadd.f32 0.0, %v4271
    %4273 = vmatprep.mubr.bf16.mxu0 %v3828
    %4274 = vmatmul.mubr.bf16.gmra.mrb[0].mxu0 %v3827
    %v4275 = vpop.f32.mrb[0].mxu0
    %v4276 = vadd.f32 0.0, %v4275
    %v4277 = vpop.f32.mrb[0].mxu0
    %v4278 = vadd.f32 0.0, %v4277
    %v4279 = vpop.f32.mrb[0].mxu0
    %v4280 = vadd.f32 0.0, %v4279
    %v4281 = vpop.f32.mrb[0].mxu0
    %v4282 = vadd.f32 0.0, %v4281
    %4283 = vdwg.mxu0
    %4284 = vmatprep.subr.bf16.mxu0 %v3900
    %4285 = vmatpush1.bf16.msra.mxu0 %v3899
    %4286 = vmatprep.subr.bf16.mxu0 %v3904
    %4287 = vmatpush1.bf16.msra.mxu0 %v3903
    %4288 = vmatprep.subr.bf16.mxu0 %v3908
    %4289 = vmatpush1.bf16.msra.mxu0 %v3907
    %4290 = vmatprep.subr.bf16.mxu0 %v3912
    %4291 = vmatpush1.bf16.msra.mxu0 %v3911
    %4292 = vmatprep.subr.bf16.mxu0 %v3916
    %4293 = vmatpush1.bf16.msra.mxu0 %v3915
    %4294 = vmatprep.subr.bf16.mxu0 %v3920
    %4295 = vmatpush1.bf16.msra.mxu0 %v3919
    %4296 = vmatprep.subr.bf16.mxu0 %v3924
    %4297 = vmatpush1.bf16.msra.mxu0 %v3923
    %4298 = vmatprep.subr.bf16.mxu0 %v3928
    %4299 = vmatpush1.bf16.msra.mxu0 %v3927
    %4300 = vmatprep.subr.bf16.mxu0 %v3932
    %4301 = vmatpush1.bf16.msra.mxu0 %v3931
    %4302 = vmatprep.subr.bf16.mxu0 %v3936
    %4303 = vmatpush1.bf16.msra.mxu0 %v3935
    %4304 = vmatprep.subr.bf16.mxu0 %v3940
    %4305 = vmatpush1.bf16.msra.mxu0 %v3939
    %4306 = vmatprep.subr.bf16.mxu0 %v3944
    %4307 = vmatpush1.bf16.msra.mxu0 %v3943
    %4308 = vmatprep.subr.bf16.mxu0 %v3948
    %4309 = vmatpush1.bf16.msra.mxu0 %v3947
    %4310 = vmatprep.subr.bf16.mxu0 %v3952
    %4311 = vmatpush1.bf16.msra.mxu0 %v3951
    %4312 = vmatprep.subr.bf16.mxu0 %v3956
    %4313 = vmatpush1.bf16.msra.mxu0 %v3955
    %4314 = vmatprep.subr.bf16.mxu0 %v3960
    %4315 = vmatpush1.bf16.msra.mxu0 %v3959
    %4316 = vmatprep.mubr.bf16.mxu0 %v3710
    %4317 = vmatmul.mubr.bf16.gmra.mrb[0].mxu0 %v3709
    %v4318 = vpop.f32.mrb[0].mxu0
    %v4319 = vadd.f32 %v4126, %v4318
    %v4320 = vpop.f32.mrb[0].mxu0
    %v4321 = vadd.f32 %v4128, %v4320
    %v4322 = vpop.f32.mrb[0].mxu0
    %v4323 = vadd.f32 %v4130, %v4322
    %v4324 = vpop.f32.mrb[0].mxu0
    %v4325 = vadd.f32 %v4132, %v4324
    %4326 = vmatprep.mubr.bf16.mxu0 %v3718
    %4327 = vmatmul.mubr.bf16.gmra.mrb[0].mxu0 %v3717
    %v4328 = vpop.f32.mrb[0].mxu0
    %v4329 = vadd.f32 %v4136, %v4328
    %v4330 = vpop.f32.mrb[0].mxu0
    %v4331 = vadd.f32 %v4138, %v4330
    %v4332 = vpop.f32.mrb[0].mxu0
    %v4333 = vadd.f32 %v4140, %v4332
    %v4334 = vpop.f32.mrb[0].mxu0
    %v4335 = vadd.f32 %v4142, %v4334
    %4336 = vmatprep.mubr.bf16.mxu0 %v3726
    %4337 = vmatmul.mubr.bf16.gmra.mrb[0].mxu0 %v3725
    %v4338 = vpop.f32.mrb[0].mxu0
    %v4339 = vadd.f32 %v4146, %v4338
    %v4340 = vpop.f32.mrb[0].mxu0
    %v4341 = vadd.f32 %v4148, %v4340
    %v4342 = vpop.f32.mrb[0].mxu0
    %v4343 = vadd.f32 %v4150, %v4342
    %v4344 = vpop.f32.mrb[0].mxu0
    %v4345 = vadd.f32 %v4152, %v4344
    %4346 = vmatprep.mubr.bf16.mxu0 %v3734
    %4347 = vmatmul.mubr.bf16.gmra.mrb[0].mxu0 %v3733
    %v4348 = vpop.f32.mrb[0].mxu0
    %v4349 = vadd.f32 %v4156, %v4348
    %v4350 = vpop.f32.mrb[0].mxu0
    %v4351 = vadd.f32 %v4158, %v4350
    %v4352 = vpop.f32.mrb[0].mxu0
    %v4353 = vadd.f32 %v4160, %v4352
    %v4354 = vpop.f32.mrb[0].mxu0
    %v4355 = vadd.f32 %v4162, %v4354
    %4356 = vmatprep.mubr.bf16.mxu0 %v3742
    %4357 = vmatmul.mubr.bf16.gmra.mrb[0].mxu0 %v3741
    %v4358 = vpop.f32.mrb[0].mxu0
    %v4359 = vadd.f32 %v4166, %v4358
    %v4360 = vpop.f32.mrb[0].mxu0
    %v4361 = vadd.f32 %v4168, %v4360
    %v4362 = vpop.f32.mrb[0].mxu0
    %v4363 = vadd.f32 %v4170, %v4362
    %v4364 = vpop.f32.mrb[0].mxu0
    %v4365 = vadd.f32 %v4172, %v4364
    %4366 = vmatprep.mubr.bf16.mxu0 %v3750
    %4367 = vmatmul.mubr.bf16.gmra.mrb[0].mxu0 %v3749
    %v4368 = vpop.f32.mrb[0].mxu0
    %v4369 = vadd.f32 %v4176, %v4368
    %v4370 = vpop.f32.mrb[0].mxu0
    %v4371 = vadd.f32 %v4178, %v4370
    %v4372 = vpop.f32.mrb[0].mxu0
    %v4373 = vadd.f32 %v4180, %v4372
    %v4374 = vpop.f32.mrb[0].mxu0
    %v4375 = vadd.f32 %v4182, %v4374
    %4376 = vmatprep.mubr.bf16.mxu0 %v3758
    %4377 = vmatmul.mubr.bf16.gmra.mrb[0].mxu0 %v3757
    %v4378 = vpop.f32.mrb[0].mxu0
    %v4379 = vadd.f32 %v4186, %v4378
    %v4380 = vpop.f32.mrb[0].mxu0
    %v4381 = vadd.f32 %v4188, %v4380
    %v4382 = vpop.f32.mrb[0].mxu0
    %v4383 = vadd.f32 %v4190, %v4382
    %v4384 = vpop.f32.mrb[0].mxu0
    %v4385 = vadd.f32 %v4192, %v4384
    %4386 = vmatprep.mubr.bf16.mxu0 %v3766
    %4387 = vmatmul.mubr.bf16.gmra.mrb[0].mxu0 %v3765
    %v4388 = vpop.f32.mrb[0].mxu0
    %v4389 = vadd.f32 %v4196, %v4388
    %v4390 = vpop.f32.mrb[0].mxu0
    %v4391 = vadd.f32 %v4198, %v4390
    %v4392 = vpop.f32.mrb[0].mxu0
    %v4393 = vadd.f32 %v4200, %v4392
    %v4394 = vpop.f32.mrb[0].mxu0
    %v4395 = vadd.f32 %v4202, %v4394
    %4396 = vmatprep.mubr.bf16.mxu0 %v3774
    %4397 = vmatmul.mubr.bf16.gmra.mrb[0].mxu0 %v3773
    %v4398 = vpop.f32.mrb[0].mxu0
    %v4399 = vadd.f32 %v4206, %v4398
    %v4400 = vpop.f32.mrb[0].mxu0
    %v4401 = vadd.f32 %v4208, %v4400
    %v4402 = vpop.f32.mrb[0].mxu0
    %v4403 = vadd.f32 %v4210, %v4402
    %v4404 = vpop.f32.mrb[0].mxu0
    %v4405 = vadd.f32 %v4212, %v4404
    %4406 = vmatprep.mubr.bf16.mxu0 %v3782
    %4407 = vmatmul.mubr.bf16.gmra.mrb[0].mxu0 %v3781
    %v4408 = vpop.f32.mrb[0].mxu0
    %v4409 = vadd.f32 %v4216, %v4408
    %v4410 = vpop.f32.mrb[0].mxu0
    %v4411 = vadd.f32 %v4218, %v4410
    %v4412 = vpop.f32.mrb[0].mxu0
    %v4413 = vadd.f32 %v4220, %v4412
    %v4414 = vpop.f32.mrb[0].mxu0
    %v4415 = vadd.f32 %v4222, %v4414
    %4416 = vmatprep.mubr.bf16.mxu0 %v3790
    %4417 = vmatmul.mubr.bf16.gmra.mrb[0].mxu0 %v3789
    %v4418 = vpop.f32.mrb[0].mxu0
    %v4419 = vadd.f32 %v4226, %v4418
    %v4420 = vpop.f32.mrb[0].mxu0
    %v4421 = vadd.f32 %v4228, %v4420
    %v4422 = vpop.f32.mrb[0].mxu0
    %v4423 = vadd.f32 %v4230, %v4422
    %v4424 = vpop.f32.mrb[0].mxu0
    %v4425 = vadd.f32 %v4232, %v4424
    %4426 = vmatprep.mubr.bf16.mxu0 %v3798
    %4427 = vmatmul.mubr.bf16.gmra.mrb[0].mxu0 %v3797
    %v4428 = vpop.f32.mrb[0].mxu0
    %v4429 = vadd.f32 %v4236, %v4428
    %v4430 = vpop.f32.mrb[0].mxu0
    %v4431 = vadd.f32 %v4238, %v4430
    %v4432 = vpop.f32.mrb[0].mxu0
    %v4433 = vadd.f32 %v4240, %v4432
    %v4434 = vpop.f32.mrb[0].mxu0
    %v4435 = vadd.f32 %v4242, %v4434
    %4436 = vmatprep.mubr.bf16.mxu0 %v3806
    %4437 = vmatmul.mubr.bf16.gmra.mrb[0].mxu0 %v3805
    %v4438 = vpop.f32.mrb[0].mxu0
    %v4439 = vadd.f32 %v4246, %v4438
    %v4440 = vpop.f32.mrb[0].mxu0
    %v4441 = vadd.f32 %v4248, %v4440
    %v4442 = vpop.f32.mrb[0].mxu0
    %v4443 = vadd.f32 %v4250, %v4442
    %v4444 = vpop.f32.mrb[0].mxu0
    %v4445 = vadd.f32 %v4252, %v4444
    %4446 = vmatprep.mubr.bf16.mxu0 %v3814
    %4447 = vmatmul.mubr.bf16.gmra.mrb[0].mxu0 %v3813
    %v4448 = vpop.f32.mrb[0].mxu0
    %v4449 = vadd.f32 %v4256, %v4448
    %v4450 = vpop.f32.mrb[0].mxu0
    %v4451 = vadd.f32 %v4258, %v4450
    %v4452 = vpop.f32.mrb[0].mxu0
    %v4453 = vadd.f32 %v4260, %v4452
    %v4454 = vpop.f32.mrb[0].mxu0
    %v4455 = vadd.f32 %v4262, %v4454
    %4456 = vmatprep.mubr.bf16.mxu0 %v3822
    %4457 = vmatmul.mubr.bf16.gmra.mrb[0].mxu0 %v3821
    %v4458 = vpop.f32.mrb[0].mxu0
    %v4459 = vadd.f32 %v4266, %v4458
    %v4460 = vpop.f32.mrb[0].mxu0
    %v4461 = vadd.f32 %v4268, %v4460
    %v4462 = vpop.f32.mrb[0].mxu0
    %v4463 = vadd.f32 %v4270, %v4462
    %v4464 = vpop.f32.mrb[0].mxu0
    %v4465 = vadd.f32 %v4272, %v4464
    %4466 = vmatprep.mubr.bf16.mxu0 %v3830
    %4467 = vmatmul.mubr.bf16.gmra.mrb[0].mxu0 %v3829
    %v4468 = vpop.f32.mrb[0].mxu0
    %v4469 = vadd.f32 %v4276, %v4468
    %v4470 = vpop.f32.mrb[0].mxu0
    %v4471 = vadd.f32 %v4278, %v4470
    %v4472 = vpop.f32.mrb[0].mxu0
    %v4473 = vadd.f32 %v4280, %v4472
    %v4474 = vpop.f32.mrb[0].mxu0
    %v4475 = vadd.f32 %v4282, %v4474
    %4476 = vdwg.mxu0
    %4477 = vmatprep.subr.bf16.mxu0 %v3964
    %4478 = vmatpush1.bf16.msra.mxu0 %v3963
    %4479 = vmatprep.subr.bf16.mxu0 %v3968
    %4480 = vmatpush1.bf16.msra.mxu0 %v3967
    %4481 = vmatprep.subr.bf16.mxu0 %v3972
    %4482 = vmatpush1.bf16.msra.mxu0 %v3971
    %4483 = vmatprep.subr.bf16.mxu0 %v3976
    %4484 = vmatpush1.bf16.msra.mxu0 %v3975
    %4485 = vmatprep.subr.bf16.mxu0 %v3980
    %4486 = vmatpush1.bf16.msra.mxu0 %v3979
    %4487 = vmatprep.subr.bf16.mxu0 %v3984
    %4488 = vmatpush1.bf16.msra.mxu0 %v3983
    %4489 = vmatprep.subr.bf16.mxu0 %v3988
    %4490 = vmatpush1.bf16.msra.mxu0 %v3987
    %4491 = vmatprep.subr.bf16.mxu0 %v3992
    %4492 = vmatpush1.bf16.msra.mxu0 %v3991
    %4493 = vmatprep.subr.bf16.mxu0 %v3996
    %4494 = vmatpush1.bf16.msra.mxu0 %v3995
    %4495 = vmatprep.subr.bf16.mxu0 %v4000
    %4496 = vmatpush1.bf16.msra.mxu0 %v3999
    %4497 = vmatprep.subr.bf16.mxu0 %v4004
    %4498 = vmatpush1.bf16.msra.mxu0 %v4003
    %4499 = vmatprep.subr.bf16.mxu0 %v4008
    %4500 = vmatpush1.bf16.msra.mxu0 %v4007
    %4501 = vmatprep.subr.bf16.mxu0 %v4012
    %4502 = vmatpush1.bf16.msra.mxu0 %v4011
    %4503 = vmatprep.subr.bf16.mxu0 %v4016
    %4504 = vmatpush1.bf16.msra.mxu0 %v4015
    %4505 = vmatprep.subr.bf16.mxu0 %v4020
    %4506 = vmatpush1.bf16.msra.mxu0 %v4019
    %4507 = vmatprep.subr.bf16.mxu0 %v4024
    %4508 = vmatpush1.bf16.msra.mxu0 %v4023
    %4509 = vmatprep.mubr.bf16.mxu0 %v3712
    %4510 = vmatmul.mubr.bf16.gmra.mrb[0].mxu0 %v3711
    %v4511 = vpop.f32.mrb[0].mxu0
    %v4512 = vadd.f32 %v4319, %v4511
    %v4513 = vpop.f32.mrb[0].mxu0
    %v4514 = vadd.f32 %v4321, %v4513
    %v4515 = vpop.f32.mrb[0].mxu0
    %v4516 = vadd.f32 %v4323, %v4515
    %v4517 = vpop.f32.mrb[0].mxu0
    %v4518 = vadd.f32 %v4325, %v4517
    %4519 = vmatprep.mubr.bf16.mxu0 %v3720
    %4520 = vmatmul.mubr.bf16.gmra.mrb[0].mxu0 %v3719
    %v4521 = vpop.f32.mrb[0].mxu0
    %v4522 = vadd.f32 %v4329, %v4521
    %v4523 = vpop.f32.mrb[0].mxu0
    %v4524 = vadd.f32 %v4331, %v4523
    %v4525 = vpop.f32.mrb[0].mxu0
    %v4526 = vadd.f32 %v4333, %v4525
    %v4527 = vpop.f32.mrb[0].mxu0
    %v4528 = vadd.f32 %v4335, %v4527
    %4529 = vmatprep.mubr.bf16.mxu0 %v3728
    %4530 = vmatmul.mubr.bf16.gmra.mrb[0].mxu0 %v3727
    %v4531 = vpop.f32.mrb[0].mxu0
    %v4532 = vadd.f32 %v4339, %v4531
    %v4533 = vpop.f32.mrb[0].mxu0
    %v4534 = vadd.f32 %v4341, %v4533
    %v4535 = vpop.f32.mrb[0].mxu0
    %v4536 = vadd.f32 %v4343, %v4535
    %v4537 = vpop.f32.mrb[0].mxu0
    %v4538 = vadd.f32 %v4345, %v4537
    %4539 = vmatprep.mubr.bf16.mxu0 %v3736
    %4540 = vmatmul.mubr.bf16.gmra.mrb[0].mxu0 %v3735
    %v4541 = vpop.f32.mrb[0].mxu0
    %v4542 = vadd.f32 %v4349, %v4541
    %v4543 = vpop.f32.mrb[0].mxu0
    %v4544 = vadd.f32 %v4351, %v4543
    %v4545 = vpop.f32.mrb[0].mxu0
    %v4546 = vadd.f32 %v4353, %v4545
    %v4547 = vpop.f32.mrb[0].mxu0
    %v4548 = vadd.f32 %v4355, %v4547
    %4549 = vmatprep.mubr.bf16.mxu0 %v3744
    %4550 = vmatmul.mubr.bf16.gmra.mrb[0].mxu0 %v3743
    %v4551 = vpop.f32.mrb[0].mxu0
    %v4552 = vadd.f32 %v4359, %v4551
    %v4553 = vpop.f32.mrb[0].mxu0
    %v4554 = vadd.f32 %v4361, %v4553
    %v4555 = vpop.f32.mrb[0].mxu0
    %v4556 = vadd.f32 %v4363, %v4555
    %v4557 = vpop.f32.mrb[0].mxu0
    %v4558 = vadd.f32 %v4365, %v4557
    %4559 = vmatprep.mubr.bf16.mxu0 %v3752
    %4560 = vmatmul.mubr.bf16.gmra.mrb[0].mxu0 %v3751
    %v4561 = vpop.f32.mrb[0].mxu0
    %v4562 = vadd.f32 %v4369, %v4561
    %v4563 = vpop.f32.mrb[0].mxu0
    %v4564 = vadd.f32 %v4371, %v4563
    %v4565 = vpop.f32.mrb[0].mxu0
    %v4566 = vadd.f32 %v4373, %v4565
    %v4567 = vpop.f32.mrb[0].mxu0
    %v4568 = vadd.f32 %v4375, %v4567
    %4569 = vmatprep.mubr.bf16.mxu0 %v3760
    %4570 = vmatmul.mubr.bf16.gmra.mrb[0].mxu0 %v3759
    %v4571 = vpop.f32.mrb[0].mxu0
    %v4572 = vadd.f32 %v4379, %v4571
    %v4573 = vpop.f32.mrb[0].mxu0
    %v4574 = vadd.f32 %v4381, %v4573
    %v4575 = vpop.f32.mrb[0].mxu0
    %v4576 = vadd.f32 %v4383, %v4575
    %v4577 = vpop.f32.mrb[0].mxu0
    %v4578 = vadd.f32 %v4385, %v4577
    %4579 = vmatprep.mubr.bf16.mxu0 %v3768
    %4580 = vmatmul.mubr.bf16.gmra.mrb[0].mxu0 %v3767
    %v4581 = vpop.f32.mrb[0].mxu0
    %v4582 = vadd.f32 %v4389, %v4581
    %v4583 = vpop.f32.mrb[0].mxu0
    %v4584 = vadd.f32 %v4391, %v4583
    %v4585 = vpop.f32.mrb[0].mxu0
    %v4586 = vadd.f32 %v4393, %v4585
    %v4587 = vpop.f32.mrb[0].mxu0
    %v4588 = vadd.f32 %v4395, %v4587
    %4589 = vmatprep.mubr.bf16.mxu0 %v3776
    %4590 = vmatmul.mubr.bf16.gmra.mrb[0].mxu0 %v3775
    %v4591 = vpop.f32.mrb[0].mxu0
    %v4592 = vadd.f32 %v4399, %v4591
    %v4593 = vpop.f32.mrb[0].mxu0
    %v4594 = vadd.f32 %v4401, %v4593
    %v4595 = vpop.f32.mrb[0].mxu0
    %v4596 = vadd.f32 %v4403, %v4595
    %v4597 = vpop.f32.mrb[0].mxu0
    %v4598 = vadd.f32 %v4405, %v4597
    %4599 = vmatprep.mubr.bf16.mxu0 %v3784
    %4600 = vmatmul.mubr.bf16.gmra.mrb[0].mxu0 %v3783
    %v4601 = vpop.f32.mrb[0].mxu0
    %v4602 = vadd.f32 %v4409, %v4601
    %v4603 = vpop.f32.mrb[0].mxu0
    %v4604 = vadd.f32 %v4411, %v4603
    %v4605 = vpop.f32.mrb[0].mxu0
    %v4606 = vadd.f32 %v4413, %v4605
    %v4607 = vpop.f32.mrb[0].mxu0
    %v4608 = vadd.f32 %v4415, %v4607
    %4609 = vmatprep.mubr.bf16.mxu0 %v3792
    %4610 = vmatmul.mubr.bf16.gmra.mrb[0].mxu0 %v3791
    %v4611 = vpop.f32.mrb[0].mxu0
    %v4612 = vadd.f32 %v4419, %v4611
    %v4613 = vpop.f32.mrb[0].mxu0
    %v4614 = vadd.f32 %v4421, %v4613
    %v4615 = vpop.f32.mrb[0].mxu0
    %v4616 = vadd.f32 %v4423, %v4615
    %v4617 = vpop.f32.mrb[0].mxu0
    %v4618 = vadd.f32 %v4425, %v4617
    %4619 = vmatprep.mubr.bf16.mxu0 %v3800
    %4620 = vmatmul.mubr.bf16.gmra.mrb[0].mxu0 %v3799
    %v4621 = vpop.f32.mrb[0].mxu0
    %v4622 = vadd.f32 %v4429, %v4621
    %v4623 = vpop.f32.mrb[0].mxu0
    %v4624 = vadd.f32 %v4431, %v4623
    %v4625 = vpop.f32.mrb[0].mxu0
    %v4626 = vadd.f32 %v4433, %v4625
    %v4627 = vpop.f32.mrb[0].mxu0
    %v4628 = vadd.f32 %v4435, %v4627
    %4629 = vmatprep.mubr.bf16.mxu0 %v3808
    %4630 = vmatmul.mubr.bf16.gmra.mrb[0].mxu0 %v3807
    %v4631 = vpop.f32.mrb[0].mxu0
    %v4632 = vadd.f32 %v4439, %v4631
    %v4633 = vpop.f32.mrb[0].mxu0
    %v4634 = vadd.f32 %v4441, %v4633
    %v4635 = vpop.f32.mrb[0].mxu0
    %v4636 = vadd.f32 %v4443, %v4635
    %v4637 = vpop.f32.mrb[0].mxu0
    %v4638 = vadd.f32 %v4445, %v4637
    %4639 = vmatprep.mubr.bf16.mxu0 %v3816
    %4640 = vmatmul.mubr.bf16.gmra.mrb[0].mxu0 %v3815
    %v4641 = vpop.f32.mrb[0].mxu0
    %v4642 = vadd.f32 %v4449, %v4641
    %v4643 = vpop.f32.mrb[0].mxu0
    %v4644 = vadd.f32 %v4451, %v4643
    %v4645 = vpop.f32.mrb[0].mxu0
    %v4646 = vadd.f32 %v4453, %v4645
    %v4647 = vpop.f32.mrb[0].mxu0
    %v4648 = vadd.f32 %v4455, %v4647
    %4649 = vmatprep.mubr.bf16.mxu0 %v3824
    %4650 = vmatmul.mubr.bf16.gmra.mrb[0].mxu0 %v3823
    %v4651 = vpop.f32.mrb[0].mxu0
    %v4652 = vadd.f32 %v4459, %v4651
    %v4653 = vpop.f32.mrb[0].mxu0
    %v4654 = vadd.f32 %v4461, %v4653
    %v4655 = vpop.f32.mrb[0].mxu0
    %v4656 = vadd.f32 %v4463, %v4655
    %v4657 = vpop.f32.mrb[0].mxu0
    %v4658 = vadd.f32 %v4465, %v4657
    %4659 = vmatprep.mubr.bf16.mxu0 %v3832
    %4660 = vmatmul.mubr.bf16.gmra.mrb[0].mxu0 %v3831
    %v4661 = vpop.f32.mrb[0].mxu0
    %v4662 = vadd.f32 %v4469, %v4661
    %v4663 = vpop.f32.mrb[0].mxu0
    %v4664 = vadd.f32 %v4471, %v4663
    %v4665 = vpop.f32.mrb[0].mxu0
    %v4666 = vadd.f32 %v4473, %v4665
    %v4667 = vpop.f32.mrb[0].mxu0
    %v4668 = vadd.f32 %v4475, %v4667
    %4669 = vdwg.mxu0
    %4670 = vmatprep.subr.bf16.mxu0 %v4028
    %4671 = vmatpush1.bf16.msra.mxu0 %v4027
    %4672 = vmatprep.subr.bf16.mxu0 %v4032
    %4673 = vmatpush1.bf16.msra.mxu0 %v4031
    %4674 = vmatprep.subr.bf16.mxu0 %v4036
    %4675 = vmatpush1.bf16.msra.mxu0 %v4035
    %4676 = vmatprep.subr.bf16.mxu0 %v4040
    %4677 = vmatpush1.bf16.msra.mxu0 %v4039
    %4678 = vmatprep.subr.bf16.mxu0 %v4044
    %4679 = vmatpush1.bf16.msra.mxu0 %v4043
    %4680 = vmatprep.subr.bf16.mxu0 %v4048
    %4681 = vmatpush1.bf16.msra.mxu0 %v4047
    %4682 = vmatprep.subr.bf16.mxu0 %v4052
    %4683 = vmatpush1.bf16.msra.mxu0 %v4051
    %4684 = vmatprep.subr.bf16.mxu0 %v4056
    %4685 = vmatpush1.bf16.msra.mxu0 %v4055
    %4686 = vmatprep.subr.bf16.mxu0 %v4060
    %4687 = vmatpush1.bf16.msra.mxu0 %v4059
    %4688 = vmatprep.subr.bf16.mxu0 %v4064
    %4689 = vmatpush1.bf16.msra.mxu0 %v4063
    %4690 = vmatprep.subr.bf16.mxu0 %v4068
    %4691 = vmatpush1.bf16.msra.mxu0 %v4067
    %4692 = vmatprep.subr.bf16.mxu0 %v4072
    %4693 = vmatpush1.bf16.msra.mxu0 %v4071
    %4694 = vmatprep.subr.bf16.mxu0 %v4076
    %4695 = vmatpush1.bf16.msra.mxu0 %v4075
    %4696 = vmatprep.subr.bf16.mxu0 %v4080
    %4697 = vmatpush1.bf16.msra.mxu0 %v4079
    %4698 = vmatprep.subr.bf16.mxu0 %v4084
    %4699 = vmatpush1.bf16.msra.mxu0 %v4083
    %4700 = vmatprep.subr.bf16.mxu0 %v4088
    %4701 = vmatpush1.bf16.msra.mxu0 %v4087
    %4702 = vmatprep.mubr.bf16.mxu0 %v3714
    %4703 = vmatmul.mubr.bf16.gmra.mrb[0].mxu0 %v3713
    %v4704 = vpop.f32.mrb[0].mxu0
    %v4705 = vadd.f32 %v4512, %v4704
    %v4706 = vpop.f32.mrb[0].mxu0
    %v4707 = vadd.f32 %v4514, %v4706
    %v4708 = vpop.f32.mrb[0].mxu0
    %v4709 = vadd.f32 %v4516, %v4708
    %v4710 = vpop.f32.mrb[0].mxu0
    %v4711 = vadd.f32 %v4518, %v4710
    %4712 = vmatprep.mubr.bf16.mxu0 %v3722
    %4713 = vmatmul.mubr.bf16.gmra.mrb[0].mxu0 %v3721
    %v4714 = vpop.f32.mrb[0].mxu0
    %v4715 = vadd.f32 %v4522, %v4714
    %v4716 = vpop.f32.mrb[0].mxu0
    %v4717 = vadd.f32 %v4524, %v4716
    %v4718 = vpop.f32.mrb[0].mxu0
    %v4719 = vadd.f32 %v4526, %v4718
    %v4720 = vpop.f32.mrb[0].mxu0
    %v4721 = vadd.f32 %v4528, %v4720
    %4722 = vmatprep.mubr.bf16.mxu0 %v3730
    %4723 = vmatmul.mubr.bf16.gmra.mrb[0].mxu0 %v3729
    %v4724 = vpop.f32.mrb[0].mxu0
    %v4725 = vadd.f32 %v4532, %v4724
    %v4726 = vpop.f32.mrb[0].mxu0
    %v4727 = vadd.f32 %v4534, %v4726
    %v4728 = vpop.f32.mrb[0].mxu0
    %v4729 = vadd.f32 %v4536, %v4728
    %v4730 = vpop.f32.mrb[0].mxu0
    %v4731 = vadd.f32 %v4538, %v4730
    %4732 = vmatprep.mubr.bf16.mxu0 %v3738
    %4733 = vmatmul.mubr.bf16.gmra.mrb[0].mxu0 %v3737
    %v4734 = vpop.f32.mrb[0].mxu0
    %v4735 = vadd.f32 %v4542, %v4734
    %v4736 = vpop.f32.mrb[0].mxu0
    %v4737 = vadd.f32 %v4544, %v4736
    %v4738 = vpop.f32.mrb[0].mxu0
    %v4739 = vadd.f32 %v4546, %v4738
    %v4740 = vpop.f32.mrb[0].mxu0
    %v4741 = vadd.f32 %v4548, %v4740
    %4742 = vmatprep.mubr.bf16.mxu0 %v3746
    %4743 = vmatmul.mubr.bf16.gmra.mrb[0].mxu0 %v3745
    %v4744 = vpop.f32.mrb[0].mxu0
    %v4745 = vadd.f32 %v4552, %v4744
    %v4746 = vpop.f32.mrb[0].mxu0
    %v4747 = vadd.f32 %v4554, %v4746
    %v4748 = vpop.f32.mrb[0].mxu0
    %v4749 = vadd.f32 %v4556, %v4748
    %v4750 = vpop.f32.mrb[0].mxu0
    %v4751 = vadd.f32 %v4558, %v4750
    %4752 = vmatprep.mubr.bf16.mxu0 %v3754
    %4753 = vmatmul.mubr.bf16.gmra.mrb[0].mxu0 %v3753
    %v4754 = vpop.f32.mrb[0].mxu0
    %v4755 = vadd.f32 %v4562, %v4754
    %v4756 = vpop.f32.mrb[0].mxu0
    %v4757 = vadd.f32 %v4564, %v4756
    %v4758 = vpop.f32.mrb[0].mxu0
    %v4759 = vadd.f32 %v4566, %v4758
    %v4760 = vpop.f32.mrb[0].mxu0
    %v4761 = vadd.f32 %v4568, %v4760
    %4762 = vmatprep.mubr.bf16.mxu0 %v3762
    %4763 = vmatmul.mubr.bf16.gmra.mrb[0].mxu0 %v3761
    %v4764 = vpop.f32.mrb[0].mxu0
    %v4765 = vadd.f32 %v4572, %v4764
    %v4766 = vpop.f32.mrb[0].mxu0
    %v4767 = vadd.f32 %v4574, %v4766
    %v4768 = vpop.f32.mrb[0].mxu0
    %v4769 = vadd.f32 %v4576, %v4768
    %v4770 = vpop.f32.mrb[0].mxu0
    %v4771 = vadd.f32 %v4578, %v4770
    %4772 = vmatprep.mubr.bf16.mxu0 %v3770
    %4773 = vmatmul.mubr.bf16.gmra.mrb[0].mxu0 %v3769
    %v4774 = vpop.f32.mrb[0].mxu0
    %v4775 = vadd.f32 %v4582, %v4774
    %v4776 = vpop.f32.mrb[0].mxu0
    %v4777 = vadd.f32 %v4584, %v4776
    %v4778 = vpop.f32.mrb[0].mxu0
    %v4779 = vadd.f32 %v4586, %v4778
    %v4780 = vpop.f32.mrb[0].mxu0
    %v4781 = vadd.f32 %v4588, %v4780
    %4782 = vmatprep.mubr.bf16.mxu0 %v3778
    %4783 = vmatmul.mubr.bf16.gmra.mrb[0].mxu0 %v3777
    %v4784 = vpop.f32.mrb[0].mxu0
    %v4785 = vadd.f32 %v4592, %v4784
    %v4786 = vpop.f32.mrb[0].mxu0
    %v4787 = vadd.f32 %v4594, %v4786
    %v4788 = vpop.f32.mrb[0].mxu0
    %v4789 = vadd.f32 %v4596, %v4788
    %v4790 = vpop.f32.mrb[0].mxu0
    %v4791 = vadd.f32 %v4598, %v4790
    %4792 = vmatprep.mubr.bf16.mxu0 %v3786
    %4793 = vmatmul.mubr.bf16.gmra.mrb[0].mxu0 %v3785
    %v4794 = vpop.f32.mrb[0].mxu0
    %v4795 = vadd.f32 %v4602, %v4794
    %v4796 = vpop.f32.mrb[0].mxu0
    %v4797 = vadd.f32 %v4604, %v4796
    %v4798 = vpop.f32.mrb[0].mxu0
    %v4799 = vadd.f32 %v4606, %v4798
    %v4800 = vpop.f32.mrb[0].mxu0
    %v4801 = vadd.f32 %v4608, %v4800
    %4802 = vmatprep.mubr.bf16.mxu0 %v3794
    %4803 = vmatmul.mubr.bf16.gmra.mrb[0].mxu0 %v3793
    %v4804 = vpop.f32.mrb[0].mxu0
    %v4805 = vadd.f32 %v4612, %v4804
    %v4806 = vpop.f32.mrb[0].mxu0
    %v4807 = vadd.f32 %v4614, %v4806
    %v4808 = vpop.f32.mrb[0].mxu0
    %v4809 = vadd.f32 %v4616, %v4808
    %v4810 = vpop.f32.mrb[0].mxu0
    %v4811 = vadd.f32 %v4618, %v4810
    %4812 = vmatprep.mubr.bf16.mxu0 %v3802
    %4813 = vmatmul.mubr.bf16.gmra.mrb[0].mxu0 %v3801
    %v4814 = vpop.f32.mrb[0].mxu0
    %v4815 = vadd.f32 %v4622, %v4814
    %v4816 = vpop.f32.mrb[0].mxu0
    %v4817 = vadd.f32 %v4624, %v4816
    %v4818 = vpop.f32.mrb[0].mxu0
    %v4819 = vadd.f32 %v4626, %v4818
    %v4820 = vpop.f32.mrb[0].mxu0
    %v4821 = vadd.f32 %v4628, %v4820
    %4822 = vmatprep.mubr.bf16.mxu0 %v3810
    %4823 = vmatmul.mubr.bf16.gmra.mrb[0].mxu0 %v3809
    %v4824 = vpop.f32.mrb[0].mxu0
    %v4825 = vadd.f32 %v4632, %v4824
    %v4826 = vpop.f32.mrb[0].mxu0
    %v4827 = vadd.f32 %v4634, %v4826
    %v4828 = vpop.f32.mrb[0].mxu0
    %v4829 = vadd.f32 %v4636, %v4828
    %v4830 = vpop.f32.mrb[0].mxu0
    %v4831 = vadd.f32 %v4638, %v4830
    %4832 = vmatprep.mubr.bf16.mxu0 %v3818
    %4833 = vmatmul.mubr.bf16.gmra.mrb[0].mxu0 %v3817
    %v4834 = vpop.f32.mrb[0].mxu0
    %v4835 = vadd.f32 %v4642, %v4834
    %v4836 = vpop.f32.mrb[0].mxu0
    %v4837 = vadd.f32 %v4644, %v4836
    %v4838 = vpop.f32.mrb[0].mxu0
    %v4839 = vadd.f32 %v4646, %v4838
    %v4840 = vpop.f32.mrb[0].mxu0
    %v4841 = vadd.f32 %v4648, %v4840
    %4842 = vmatprep.mubr.bf16.mxu0 %v3826
    %4843 = vmatmul.mubr.bf16.gmra.mrb[0].mxu0 %v3825
    %v4844 = vpop.f32.mrb[0].mxu0
    %v4845 = vadd.f32 %v4652, %v4844
    %v4846 = vpop.f32.mrb[0].mxu0
    %v4847 = vadd.f32 %v4654, %v4846
    %v4848 = vpop.f32.mrb[0].mxu0
    %v4849 = vadd.f32 %v4656, %v4848
    %v4850 = vpop.f32.mrb[0].mxu0
    %v4851 = vadd.f32 %v4658, %v4850
    %4852 = vmatprep.mubr.bf16.mxu0 %v3834
    %4853 = vmatmul.mubr.bf16.gmra.mrb[0].mxu0 %v3833
    %v4854 = vpop.f32.mrb[0].mxu0
    %v4855 = vadd.f32 %v4662, %v4854
    %v4856 = vpop.f32.mrb[0].mxu0
    %v4857 = vadd.f32 %v4664, %v4856
    %v4858 = vpop.f32.mrb[0].mxu0
    %v4859 = vadd.f32 %v4666, %v4858
    %v4860 = vpop.f32.mrb[0].mxu0
    %v4861 = vadd.f32 %v4668, %v4860
    %4862 = vdwg.mxu0
    %4863 = vmatprep.subr.bf16.mxu0 %v3838
    %4864 = vmatpush1.bf16.msra.mxu0 %v3837
    %4865 = vmatprep.subr.bf16.mxu0 %v3842
    %4866 = vmatpush1.bf16.msra.mxu0 %v3841
    %4867 = vmatprep.subr.bf16.mxu0 %v3846
    %4868 = vmatpush1.bf16.msra.mxu0 %v3845
    %4869 = vmatprep.subr.bf16.mxu0 %v3850
    %4870 = vmatpush1.bf16.msra.mxu0 %v3849
    %4871 = vmatprep.subr.bf16.mxu0 %v3854
    %4872 = vmatpush1.bf16.msra.mxu0 %v3853
    %4873 = vmatprep.subr.bf16.mxu0 %v3858
    %4874 = vmatpush1.bf16.msra.mxu0 %v3857
    %4875 = vmatprep.subr.bf16.mxu0 %v3862
    %4876 = vmatpush1.bf16.msra.mxu0 %v3861
    %4877 = vmatprep.subr.bf16.mxu0 %v3866
    %4878 = vmatpush1.bf16.msra.mxu0 %v3865
    %4879 = vmatprep.subr.bf16.mxu0 %v3870
    %4880 = vmatpush1.bf16.msra.mxu0 %v3869
    %4881 = vmatprep.subr.bf16.mxu0 %v3874
    %4882 = vmatpush1.bf16.msra.mxu0 %v3873
    %4883 = vmatprep.subr.bf16.mxu0 %v3878
    %4884 = vmatpush1.bf16.msra.mxu0 %v3877
    %4885 = vmatprep.subr.bf16.mxu0 %v3882
    %4886 = vmatpush1.bf16.msra.mxu0 %v3881
    %4887 = vmatprep.subr.bf16.mxu0 %v3886
    %4888 = vmatpush1.bf16.msra.mxu0 %v3885
    %4889 = vmatprep.subr.bf16.mxu0 %v3890
    %4890 = vmatpush1.bf16.msra.mxu0 %v3889
    %4891 = vmatprep.subr.bf16.mxu0 %v3894
    %4892 = vmatpush1.bf16.msra.mxu0 %v3893
    %4893 = vmatprep.subr.bf16.mxu0 %v3898
    %4894 = vmatpush1.bf16.msra.mxu0 %v3897
    %4895 = vmatprep.mubr.bf16.mxu0 %v3708
    %4896 = vmatmul.mubr.bf16.gmra.mrb[0].mxu0 %v3707
    %v4897 = vpop.f32.mrb[0].mxu0
    %v4898 = vadd.f32 0.0, %v4897
    %v4899 = vpop.f32.mrb[0].mxu0
    %v4900 = vadd.f32 0.0, %v4899
    %v4901 = vpop.f32.mrb[0].mxu0
    %v4902 = vadd.f32 0.0, %v4901
    %v4903 = vpop.f32.mrb[0].mxu0
    %v4904 = vadd.f32 0.0, %v4903
    %4905 = vmatprep.mubr.bf16.mxu0 %v3716
    %4906 = vmatmul.mubr.bf16.gmra.mrb[0].mxu0 %v3715
    %v4907 = vpop.f32.mrb[0].mxu0
    %v4908 = vadd.f32 0.0, %v4907
    %v4909 = vpop.f32.mrb[0].mxu0
    %v4910 = vadd.f32 0.0, %v4909
    %v4911 = vpop.f32.mrb[0].mxu0
    %v4912 = vadd.f32 0.0, %v4911
    %v4913 = vpop.f32.mrb[0].mxu0
    %v4914 = vadd.f32 0.0, %v4913
    %4915 = vmatprep.mubr.bf16.mxu0 %v3724
    %4916 = vmatmul.mubr.bf16.gmra.mrb[0].mxu0 %v3723
    %v4917 = vpop.f32.mrb[0].mxu0
    %v4918 = vadd.f32 0.0, %v4917
    %v4919 = vpop.f32.mrb[0].mxu0
    %v4920 = vadd.f32 0.0, %v4919
    %v4921 = vpop.f32.mrb[0].mxu0
    %v4922 = vadd.f32 0.0, %v4921
    %v4923 = vpop.f32.mrb[0].mxu0
    %v4924 = vadd.f32 0.0, %v4923
    %4925 = vmatprep.mubr.bf16.mxu0 %v3732
    %4926 = vmatmul.mubr.bf16.gmra.mrb[0].mxu0 %v3731
    %v4927 = vpop.f32.mrb[0].mxu0
    %v4928 = vadd.f32 0.0, %v4927
    %v4929 = vpop.f32.mrb[0].mxu0
    %v4930 = vadd.f32 0.0, %v4929
    %v4931 = vpop.f32.mrb[0].mxu0
    %v4932 = vadd.f32 0.0, %v4931
    %v4933 = vpop.f32.mrb[0].mxu0
    %v4934 = vadd.f32 0.0, %v4933
    %4935 = vmatprep.mubr.bf16.mxu0 %v3740
    %4936 = vmatmul.mubr.bf16.gmra.mrb[0].mxu0 %v3739
    %v4937 = vpop.f32.mrb[0].mxu0
    %v4938 = vadd.f32 0.0, %v4937
    %v4939 = vpop.f32.mrb[0].mxu0
    %v4940 = vadd.f32 0.0, %v4939
    %v4941 = vpop.f32.mrb[0].mxu0
    %v4942 = vadd.f32 0.0, %v4941
    %v4943 = vpop.f32.mrb[0].mxu0
    %v4944 = vadd.f32 0.0, %v4943
    %4945 = vmatprep.mubr.bf16.mxu0 %v3748
    %4946 = vmatmul.mubr.bf16.gmra.mrb[0].mxu0 %v3747
    %v4947 = vpop.f32.mrb[0].mxu0
    %v4948 = vadd.f32 0.0, %v4947
    %v4949 = vpop.f32.mrb[0].mxu0
    %v4950 = vadd.f32 0.0, %v4949
    %v4951 = vpop.f32.mrb[0].mxu0
    %v4952 = vadd.f32 0.0, %v4951
    %v4953 = vpop.f32.mrb[0].mxu0
    %v4954 = vadd.f32 0.0, %v4953
    %4955 = vmatprep.mubr.bf16.mxu0 %v3756
    %4956 = vmatmul.mubr.bf16.gmra.mrb[0].mxu0 %v3755
    %v4957 = vpop.f32.mrb[0].mxu0
    %v4958 = vadd.f32 0.0, %v4957
    %v4959 = vpop.f32.mrb[0].mxu0
    %v4960 = vadd.f32 0.0, %v4959
    %v4961 = vpop.f32.mrb[0].mxu0
    %v4962 = vadd.f32 0.0, %v4961
    %v4963 = vpop.f32.mrb[0].mxu0
    %v4964 = vadd.f32 0.0, %v4963
    %4965 = vmatprep.mubr.bf16.mxu0 %v3764
    %4966 = vmatmul.mubr.bf16.gmra.mrb[0].mxu0 %v3763
    %v4967 = vpop.f32.mrb[0].mxu0
    %v4968 = vadd.f32 0.0, %v4967
    %v4969 = vpop.f32.mrb[0].mxu0
    %v4970 = vadd.f32 0.0, %v4969
    %v4971 = vpop.f32.mrb[0].mxu0
    %v4972 = vadd.f32 0.0, %v4971
    %v4973 = vpop.f32.mrb[0].mxu0
    %v4974 = vadd.f32 0.0, %v4973
    %4975 = vmatprep.mubr.bf16.mxu0 %v3772
    %4976 = vmatmul.mubr.bf16.gmra.mrb[0].mxu0 %v3771
    %v4977 = vpop.f32.mrb[0].mxu0
    %v4978 = vadd.f32 0.0, %v4977
    %v4979 = vpop.f32.mrb[0].mxu0
    %v4980 = vadd.f32 0.0, %v4979
    %v4981 = vpop.f32.mrb[0].mxu0
    %v4982 = vadd.f32 0.0, %v4981
    %v4983 = vpop.f32.mrb[0].mxu0
    %v4984 = vadd.f32 0.0, %v4983
    %4985 = vmatprep.mubr.bf16.mxu0 %v3780
    %4986 = vmatmul.mubr.bf16.gmra.mrb[0].mxu0 %v3779
    %v4987 = vpop.f32.mrb[0].mxu0
    %v4988 = vadd.f32 0.0, %v4987
    %v4989 = vpop.f32.mrb[0].mxu0
    %v4990 = vadd.f32 0.0, %v4989
    %v4991 = vpop.f32.mrb[0].mxu0
    %v4992 = vadd.f32 0.0, %v4991
    %v4993 = vpop.f32.mrb[0].mxu0
    %v4994 = vadd.f32 0.0, %v4993
    %4995 = vmatprep.mubr.bf16.mxu0 %v3788
    %4996 = vmatmul.mubr.bf16.gmra.mrb[0].mxu0 %v3787
    %v4997 = vpop.f32.mrb[0].mxu0
    %v4998 = vadd.f32 0.0, %v4997
    %v4999 = vpop.f32.mrb[0].mxu0
    %v5000 = vadd.f32 0.0, %v4999
    %v5001 = vpop.f32.mrb[0].mxu0
    %v5002 = vadd.f32 0.0, %v5001
    %v5003 = vpop.f32.mrb[0].mxu0
    %v5004 = vadd.f32 0.0, %v5003
    %5005 = vmatprep.mubr.bf16.mxu0 %v3796
    %5006 = vmatmul.mubr.bf16.gmra.mrb[0].mxu0 %v3795
    %v5007 = vpop.f32.mrb[0].mxu0
    %v5008 = vadd.f32 0.0, %v5007
    %v5009 = vpop.f32.mrb[0].mxu0
    %v5010 = vadd.f32 0.0, %v5009
    %v5011 = vpop.f32.mrb[0].mxu0
    %v5012 = vadd.f32 0.0, %v5011
    %v5013 = vpop.f32.mrb[0].mxu0
    %v5014 = vadd.f32 0.0, %v5013
    %5015 = vmatprep.mubr.bf16.mxu0 %v3804
    %5016 = vmatmul.mubr.bf16.gmra.mrb[0].mxu0 %v3803
    %v5017 = vpop.f32.mrb[0].mxu0
    %v5018 = vadd.f32 0.0, %v5017
    %v5019 = vpop.f32.mrb[0].mxu0
    %v5020 = vadd.f32 0.0, %v5019
    %v5021 = vpop.f32.mrb[0].mxu0
    %v5022 = vadd.f32 0.0, %v5021
    %v5023 = vpop.f32.mrb[0].mxu0
    %v5024 = vadd.f32 0.0, %v5023
    %5025 = vmatprep.mubr.bf16.mxu0 %v3812
    %5026 = vmatmul.mubr.bf16.gmra.mrb[0].mxu0 %v3811
    %v5027 = vpop.f32.mrb[0].mxu0
    %v5028 = vadd.f32 0.0, %v5027
    %v5029 = vpop.f32.mrb[0].mxu0
    %v5030 = vadd.f32 0.0, %v5029
    %v5031 = vpop.f32.mrb[0].mxu0
    %v5032 = vadd.f32 0.0, %v5031
    %v5033 = vpop.f32.mrb[0].mxu0
    %v5034 = vadd.f32 0.0, %v5033
    %5035 = vmatprep.mubr.bf16.mxu0 %v3820
    %5036 = vmatmul.mubr.bf16.gmra.mrb[0].mxu0 %v3819
    %v5037 = vpop.f32.mrb[0].mxu0
    %v5038 = vadd.f32 0.0, %v5037
    %v5039 = vpop.f32.mrb[0].mxu0
    %v5040 = vadd.f32 0.0, %v5039
    %v5041 = vpop.f32.mrb[0].mxu0
    %v5042 = vadd.f32 0.0, %v5041
    %v5043 = vpop.f32.mrb[0].mxu0
    %v5044 = vadd.f32 0.0, %v5043
    %5045 = vmatprep.mubr.bf16.mxu0 %v3828
    %5046 = vmatmul.mubr.bf16.gmra.mrb[0].mxu0 %v3827
    %v5047 = vpop.f32.mrb[0].mxu0
    %v5048 = vadd.f32 0.0, %v5047
    %v5049 = vpop.f32.mrb[0].mxu0
    %v5050 = vadd.f32 0.0, %v5049
    %v5051 = vpop.f32.mrb[0].mxu0
    %v5052 = vadd.f32 0.0, %v5051
    %v5053 = vpop.f32.mrb[0].mxu0
    %v5054 = vadd.f32 0.0, %v5053
    %5055 = vdwg.mxu0
    %5056 = vmatprep.subr.bf16.mxu0 %v3902
    %5057 = vmatpush1.bf16.msra.mxu0 %v3901
    %5058 = vmatprep.subr.bf16.mxu0 %v3906
    %5059 = vmatpush1.bf16.msra.mxu0 %v3905
    %5060 = vmatprep.subr.bf16.mxu0 %v3910
    %5061 = vmatpush1.bf16.msra.mxu0 %v3909
    %5062 = vmatprep.subr.bf16.mxu0 %v3914
    %5063 = vmatpush1.bf16.msra.mxu0 %v3913
    %5064 = vmatprep.subr.bf16.mxu0 %v3918
    %5065 = vmatpush1.bf16.msra.mxu0 %v3917
    %5066 = vmatprep.subr.bf16.mxu0 %v3922
    %5067 = vmatpush1.bf16.msra.mxu0 %v3921
    %5068 = vmatprep.subr.bf16.mxu0 %v3926
    %5069 = vmatpush1.bf16.msra.mxu0 %v3925
    %5070 = vmatprep.subr.bf16.mxu0 %v3930
    %5071 = vmatpush1.bf16.msra.mxu0 %v3929
    %5072 = vmatprep.subr.bf16.mxu0 %v3934
    %5073 = vmatpush1.bf16.msra.mxu0 %v3933
    %5074 = vmatprep.subr.bf16.mxu0 %v3938
    %5075 = vmatpush1.bf16.msra.mxu0 %v3937
    %5076 = vmatprep.subr.bf16.mxu0 %v3942
    %5077 = vmatpush1.bf16.msra.mxu0 %v3941
    %5078 = vmatprep.subr.bf16.mxu0 %v3946
    %5079 = vmatpush1.bf16.msra.mxu0 %v3945
    %5080 = vmatprep.subr.bf16.mxu0 %v3950
    %5081 = vmatpush1.bf16.msra.mxu0 %v3949
    %5082 = vmatprep.subr.bf16.mxu0 %v3954
    %5083 = vmatpush1.bf16.msra.mxu0 %v3953
    %5084 = vmatprep.subr.bf16.mxu0 %v3958
    %5085 = vmatpush1.bf16.msra.mxu0 %v3957
    %5086 = vmatprep.subr.bf16.mxu0 %v3962
    %5087 = vmatpush1.bf16.msra.mxu0 %v3961
    %5088 = vmatprep.mubr.bf16.mxu0 %v3710
    %5089 = vmatmul.mubr.bf16.gmra.mrb[0].mxu0 %v3709
    %v5090 = vpop.f32.mrb[0].mxu0
    %v5091 = vadd.f32 %v4898, %v5090
    %v5092 = vpop.f32.mrb[0].mxu0
    %v5093 = vadd.f32 %v4900, %v5092
    %v5094 = vpop.f32.mrb[0].mxu0
    %v5095 = vadd.f32 %v4902, %v5094
    %v5096 = vpop.f32.mrb[0].mxu0
    %v5097 = vadd.f32 %v4904, %v5096
    %5098 = vmatprep.mubr.bf16.mxu0 %v3718
    %5099 = vmatmul.mubr.bf16.gmra.mrb[0].mxu0 %v3717
    %v5100 = vpop.f32.mrb[0].mxu0
    %v5101 = vadd.f32 %v4908, %v5100
    %v5102 = vpop.f32.mrb[0].mxu0
    %v5103 = vadd.f32 %v4910, %v5102
    %v5104 = vpop.f32.mrb[0].mxu0
    %v5105 = vadd.f32 %v4912, %v5104
    %v5106 = vpop.f32.mrb[0].mxu0
    %v5107 = vadd.f32 %v4914, %v5106
    %5108 = vmatprep.mubr.bf16.mxu0 %v3726
    %5109 = vmatmul.mubr.bf16.gmra.mrb[0].mxu0 %v3725
    %v5110 = vpop.f32.mrb[0].mxu0
    %v5111 = vadd.f32 %v4918, %v5110
    %v5112 = vpop.f32.mrb[0].mxu0
    %v5113 = vadd.f32 %v4920, %v5112
    %v5114 = vpop.f32.mrb[0].mxu0
    %v5115 = vadd.f32 %v4922, %v5114
    %v5116 = vpop.f32.mrb[0].mxu0
    %v5117 = vadd.f32 %v4924, %v5116
    %5118 = vmatprep.mubr.bf16.mxu0 %v3734
    %5119 = vmatmul.mubr.bf16.gmra.mrb[0].mxu0 %v3733
    %v5120 = vpop.f32.mrb[0].mxu0
    %v5121 = vadd.f32 %v4928, %v5120
    %v5122 = vpop.f32.mrb[0].mxu0
    %v5123 = vadd.f32 %v4930, %v5122
    %v5124 = vpop.f32.mrb[0].mxu0
    %v5125 = vadd.f32 %v4932, %v5124
    %v5126 = vpop.f32.mrb[0].mxu0
    %v5127 = vadd.f32 %v4934, %v5126
    %5128 = vmatprep.mubr.bf16.mxu0 %v3742
    %5129 = vmatmul.mubr.bf16.gmra.mrb[0].mxu0 %v3741
    %v5130 = vpop.f32.mrb[0].mxu0
    %v5131 = vadd.f32 %v4938, %v5130
    %v5132 = vpop.f32.mrb[0].mxu0
    %v5133 = vadd.f32 %v4940, %v5132
    %v5134 = vpop.f32.mrb[0].mxu0
    %v5135 = vadd.f32 %v4942, %v5134
    %v5136 = vpop.f32.mrb[0].mxu0
    %v5137 = vadd.f32 %v4944, %v5136
    %5138 = vmatprep.mubr.bf16.mxu0 %v3750
    %5139 = vmatmul.mubr.bf16.gmra.mrb[0].mxu0 %v3749
    %v5140 = vpop.f32.mrb[0].mxu0
    %v5141 = vadd.f32 %v4948, %v5140
    %v5142 = vpop.f32.mrb[0].mxu0
    %v5143 = vadd.f32 %v4950, %v5142
    %v5144 = vpop.f32.mrb[0].mxu0
    %v5145 = vadd.f32 %v4952, %v5144
    %v5146 = vpop.f32.mrb[0].mxu0
    %v5147 = vadd.f32 %v4954, %v5146
    %5148 = vmatprep.mubr.bf16.mxu0 %v3758
    %5149 = vmatmul.mubr.bf16.gmra.mrb[0].mxu0 %v3757
    %v5150 = vpop.f32.mrb[0].mxu0
    %v5151 = vadd.f32 %v4958, %v5150
    %v5152 = vpop.f32.mrb[0].mxu0
    %v5153 = vadd.f32 %v4960, %v5152
    %v5154 = vpop.f32.mrb[0].mxu0
    %v5155 = vadd.f32 %v4962, %v5154
    %v5156 = vpop.f32.mrb[0].mxu0
    %v5157 = vadd.f32 %v4964, %v5156
    %5158 = vmatprep.mubr.bf16.mxu0 %v3766
    %5159 = vmatmul.mubr.bf16.gmra.mrb[0].mxu0 %v3765
    %v5160 = vpop.f32.mrb[0].mxu0
    %v5161 = vadd.f32 %v4968, %v5160
    %v5162 = vpop.f32.mrb[0].mxu0
    %v5163 = vadd.f32 %v4970, %v5162
    %v5164 = vpop.f32.mrb[0].mxu0
    %v5165 = vadd.f32 %v4972, %v5164
    %v5166 = vpop.f32.mrb[0].mxu0
    %v5167 = vadd.f32 %v4974, %v5166
    %5168 = vmatprep.mubr.bf16.mxu0 %v3774
    %5169 = vmatmul.mubr.bf16.gmra.mrb[0].mxu0 %v3773
    %v5170 = vpop.f32.mrb[0].mxu0
    %v5171 = vadd.f32 %v4978, %v5170
    %v5172 = vpop.f32.mrb[0].mxu0
    %v5173 = vadd.f32 %v4980, %v5172
    %v5174 = vpop.f32.mrb[0].mxu0
    %v5175 = vadd.f32 %v4982, %v5174
    %v5176 = vpop.f32.mrb[0].mxu0
    %v5177 = vadd.f32 %v4984, %v5176
    %5178 = vmatprep.mubr.bf16.mxu0 %v3782
    %5179 = vmatmul.mubr.bf16.gmra.mrb[0].mxu0 %v3781
    %v5180 = vpop.f32.mrb[0].mxu0
    %v5181 = vadd.f32 %v4988, %v5180
    %v5182 = vpop.f32.mrb[0].mxu0
    %v5183 = vadd.f32 %v4990, %v5182
    %v5184 = vpop.f32.mrb[0].mxu0
    %v5185 = vadd.f32 %v4992, %v5184
    %v5186 = vpop.f32.mrb[0].mxu0
    %v5187 = vadd.f32 %v4994, %v5186
    %5188 = vmatprep.mubr.bf16.mxu0 %v3790
    %5189 = vmatmul.mubr.bf16.gmra.mrb[0].mxu0 %v3789
    %v5190 = vpop.f32.mrb[0].mxu0
    %v5191 = vadd.f32 %v4998, %v5190
    %v5192 = vpop.f32.mrb[0].mxu0
    %v5193 = vadd.f32 %v5000, %v5192
    %v5194 = vpop.f32.mrb[0].mxu0
    %v5195 = vadd.f32 %v5002, %v5194
    %v5196 = vpop.f32.mrb[0].mxu0
    %v5197 = vadd.f32 %v5004, %v5196
    %5198 = vmatprep.mubr.bf16.mxu0 %v3798
    %5199 = vmatmul.mubr.bf16.gmra.mrb[0].mxu0 %v3797
    %v5200 = vpop.f32.mrb[0].mxu0
    %v5201 = vadd.f32 %v5008, %v5200
    %v5202 = vpop.f32.mrb[0].mxu0
    %v5203 = vadd.f32 %v5010, %v5202
    %v5204 = vpop.f32.mrb[0].mxu0
    %v5205 = vadd.f32 %v5012, %v5204
    %v5206 = vpop.f32.mrb[0].mxu0
    %v5207 = vadd.f32 %v5014, %v5206
    %5208 = vmatprep.mubr.bf16.mxu0 %v3806
    %5209 = vmatmul.mubr.bf16.gmra.mrb[0].mxu0 %v3805
    %v5210 = vpop.f32.mrb[0].mxu0
    %v5211 = vadd.f32 %v5018, %v5210
    %v5212 = vpop.f32.mrb[0].mxu0
    %v5213 = vadd.f32 %v5020, %v5212
    %v5214 = vpop.f32.mrb[0].mxu0
    %v5215 = vadd.f32 %v5022, %v5214
    %v5216 = vpop.f32.mrb[0].mxu0
    %v5217 = vadd.f32 %v5024, %v5216
    %5218 = vmatprep.mubr.bf16.mxu0 %v3814
    %5219 = vmatmul.mubr.bf16.gmra.mrb[0].mxu0 %v3813
    %v5220 = vpop.f32.mrb[0].mxu0
    %v5221 = vadd.f32 %v5028, %v5220
    %v5222 = vpop.f32.mrb[0].mxu0
    %v5223 = vadd.f32 %v5030, %v5222
    %v5224 = vpop.f32.mrb[0].mxu0
    %v5225 = vadd.f32 %v5032, %v5224
    %v5226 = vpop.f32.mrb[0].mxu0
    %v5227 = vadd.f32 %v5034, %v5226
    %5228 = vmatprep.mubr.bf16.mxu0 %v3822
    %5229 = vmatmul.mubr.bf16.gmra.mrb[0].mxu0 %v3821
    %v5230 = vpop.f32.mrb[0].mxu0
    %v5231 = vadd.f32 %v5038, %v5230
    %v5232 = vpop.f32.mrb[0].mxu0
    %v5233 = vadd.f32 %v5040, %v5232
    %v5234 = vpop.f32.mrb[0].mxu0
    %v5235 = vadd.f32 %v5042, %v5234
    %v5236 = vpop.f32.mrb[0].mxu0
    %v5237 = vadd.f32 %v5044, %v5236
    %5238 = vmatprep.mubr.bf16.mxu0 %v3830
    %5239 = vmatmul.mubr.bf16.gmra.mrb[0].mxu0 %v3829
    %v5240 = vpop.f32.mrb[0].mxu0
    %v5241 = vadd.f32 %v5048, %v5240
    %v5242 = vpop.f32.mrb[0].mxu0
    %v5243 = vadd.f32 %v5050, %v5242
    %v5244 = vpop.f32.mrb[0].mxu0
    %v5245 = vadd.f32 %v5052, %v5244
    %v5246 = vpop.f32.mrb[0].mxu0
    %v5247 = vadd.f32 %v5054, %v5246
    %5248 = vdwg.mxu0
    %5249 = vmatprep.subr.bf16.mxu0 %v3966
    %5250 = vmatpush1.bf16.msra.mxu0 %v3965
    %5251 = vmatprep.subr.bf16.mxu0 %v3970
    %5252 = vmatpush1.bf16.msra.mxu0 %v3969
    %5253 = vmatprep.subr.bf16.mxu0 %v3974
    %5254 = vmatpush1.bf16.msra.mxu0 %v3973
    %5255 = vmatprep.subr.bf16.mxu0 %v3978
    %5256 = vmatpush1.bf16.msra.mxu0 %v3977
    %5257 = vmatprep.subr.bf16.mxu0 %v3982
    %5258 = vmatpush1.bf16.msra.mxu0 %v3981
    %5259 = vmatprep.subr.bf16.mxu0 %v3986
    %5260 = vmatpush1.bf16.msra.mxu0 %v3985
    %5261 = vmatprep.subr.bf16.mxu0 %v3990
    %5262 = vmatpush1.bf16.msra.mxu0 %v3989
    %5263 = vmatprep.subr.bf16.mxu0 %v3994
    %5264 = vmatpush1.bf16.msra.mxu0 %v3993
    %5265 = vmatprep.subr.bf16.mxu0 %v3998
    %5266 = vmatpush1.bf16.msra.mxu0 %v3997
    %5267 = vmatprep.subr.bf16.mxu0 %v4002
    %5268 = vmatpush1.bf16.msra.mxu0 %v4001
    %5269 = vmatprep.subr.bf16.mxu0 %v4006
    %5270 = vmatpush1.bf16.msra.mxu0 %v4005
    %5271 = vmatprep.subr.bf16.mxu0 %v4010
    %5272 = vmatpush1.bf16.msra.mxu0 %v4009
    %5273 = vmatprep.subr.bf16.mxu0 %v4014
    %5274 = vmatpush1.bf16.msra.mxu0 %v4013
    %5275 = vmatprep.subr.bf16.mxu0 %v4018
    %5276 = vmatpush1.bf16.msra.mxu0 %v4017
    %5277 = vmatprep.subr.bf16.mxu0 %v4022
    %5278 = vmatpush1.bf16.msra.mxu0 %v4021
    %5279 = vmatprep.subr.bf16.mxu0 %v4026
    %5280 = vmatpush1.bf16.msra.mxu0 %v4025
    %5281 = vmatprep.mubr.bf16.mxu0 %v3712
    %5282 = vmatmul.mubr.bf16.gmra.mrb[0].mxu0 %v3711
    %v5283 = vpop.f32.mrb[0].mxu0
    %v5284 = vadd.f32 %v5091, %v5283
    %v5285 = vpop.f32.mrb[0].mxu0
    %v5286 = vadd.f32 %v5093, %v5285
    %v5287 = vpop.f32.mrb[0].mxu0
    %v5288 = vadd.f32 %v5095, %v5287
    %v5289 = vpop.f32.mrb[0].mxu0
    %v5290 = vadd.f32 %v5097, %v5289
    %5291 = vmatprep.mubr.bf16.mxu0 %v3720
    %5292 = vmatmul.mubr.bf16.gmra.mrb[0].mxu0 %v3719
    %v5293 = vpop.f32.mrb[0].mxu0
    %v5294 = vadd.f32 %v5101, %v5293
    %v5295 = vpop.f32.mrb[0].mxu0
    %v5296 = vadd.f32 %v5103, %v5295
    %v5297 = vpop.f32.mrb[0].mxu0
    %v5298 = vadd.f32 %v5105, %v5297
    %v5299 = vpop.f32.mrb[0].mxu0
    %v5300 = vadd.f32 %v5107, %v5299
    %5301 = vmatprep.mubr.bf16.mxu0 %v3728
    %5302 = vmatmul.mubr.bf16.gmra.mrb[0].mxu0 %v3727
    %v5303 = vpop.f32.mrb[0].mxu0
    %v5304 = vadd.f32 %v5111, %v5303
    %v5305 = vpop.f32.mrb[0].mxu0
    %v5306 = vadd.f32 %v5113, %v5305
    %v5307 = vpop.f32.mrb[0].mxu0
    %v5308 = vadd.f32 %v5115, %v5307
    %v5309 = vpop.f32.mrb[0].mxu0
    %v5310 = vadd.f32 %v5117, %v5309
    %5311 = vmatprep.mubr.bf16.mxu0 %v3736
    %5312 = vmatmul.mubr.bf16.gmra.mrb[0].mxu0 %v3735
    %v5313 = vpop.f32.mrb[0].mxu0
    %v5314 = vadd.f32 %v5121, %v5313
    %v5315 = vpop.f32.mrb[0].mxu0
    %v5316 = vadd.f32 %v5123, %v5315
    %v5317 = vpop.f32.mrb[0].mxu0
    %v5318 = vadd.f32 %v5125, %v5317
    %v5319 = vpop.f32.mrb[0].mxu0
    %v5320 = vadd.f32 %v5127, %v5319
    %5321 = vmatprep.mubr.bf16.mxu0 %v3744
    %5322 = vmatmul.mubr.bf16.gmra.mrb[0].mxu0 %v3743
    %v5323 = vpop.f32.mrb[0].mxu0
    %v5324 = vadd.f32 %v5131, %v5323
    %v5325 = vpop.f32.mrb[0].mxu0
    %v5326 = vadd.f32 %v5133, %v5325
    %v5327 = vpop.f32.mrb[0].mxu0
    %v5328 = vadd.f32 %v5135, %v5327
    %v5329 = vpop.f32.mrb[0].mxu0
    %v5330 = vadd.f32 %v5137, %v5329
    %5331 = vmatprep.mubr.bf16.mxu0 %v3752
    %5332 = vmatmul.mubr.bf16.gmra.mrb[0].mxu0 %v3751
    %v5333 = vpop.f32.mrb[0].mxu0
    %v5334 = vadd.f32 %v5141, %v5333
    %v5335 = vpop.f32.mrb[0].mxu0
    %v5336 = vadd.f32 %v5143, %v5335
    %v5337 = vpop.f32.mrb[0].mxu0
    %v5338 = vadd.f32 %v5145, %v5337
    %v5339 = vpop.f32.mrb[0].mxu0
    %v5340 = vadd.f32 %v5147, %v5339
    %5341 = vmatprep.mubr.bf16.mxu0 %v3760
    %5342 = vmatmul.mubr.bf16.gmra.mrb[0].mxu0 %v3759
    %v5343 = vpop.f32.mrb[0].mxu0
    %v5344 = vadd.f32 %v5151, %v5343
    %v5345 = vpop.f32.mrb[0].mxu0
    %v5346 = vadd.f32 %v5153, %v5345
    %v5347 = vpop.f32.mrb[0].mxu0
    %v5348 = vadd.f32 %v5155, %v5347
    %v5349 = vpop.f32.mrb[0].mxu0
    %v5350 = vadd.f32 %v5157, %v5349
    %5351 = vmatprep.mubr.bf16.mxu0 %v3768
    %5352 = vmatmul.mubr.bf16.gmra.mrb[0].mxu0 %v3767
    %v5353 = vpop.f32.mrb[0].mxu0
    %v5354 = vadd.f32 %v5161, %v5353
    %v5355 = vpop.f32.mrb[0].mxu0
    %v5356 = vadd.f32 %v5163, %v5355
    %v5357 = vpop.f32.mrb[0].mxu0
    %v5358 = vadd.f32 %v5165, %v5357
    %v5359 = vpop.f32.mrb[0].mxu0
    %v5360 = vadd.f32 %v5167, %v5359
    %5361 = vmatprep.mubr.bf16.mxu0 %v3776
    %5362 = vmatmul.mubr.bf16.gmra.mrb[0].mxu0 %v3775
    %v5363 = vpop.f32.mrb[0].mxu0
    %v5364 = vadd.f32 %v5171, %v5363
    %v5365 = vpop.f32.mrb[0].mxu0
    %v5366 = vadd.f32 %v5173, %v5365
    %v5367 = vpop.f32.mrb[0].mxu0
    %v5368 = vadd.f32 %v5175, %v5367
    %v5369 = vpop.f32.mrb[0].mxu0
    %v5370 = vadd.f32 %v5177, %v5369
    %5371 = vmatprep.mubr.bf16.mxu0 %v3784
    %5372 = vmatmul.mubr.bf16.gmra.mrb[0].mxu0 %v3783
    %v5373 = vpop.f32.mrb[0].mxu0
    %v5374 = vadd.f32 %v5181, %v5373
    %v5375 = vpop.f32.mrb[0].mxu0
    %v5376 = vadd.f32 %v5183, %v5375
    %v5377 = vpop.f32.mrb[0].mxu0
    %v5378 = vadd.f32 %v5185, %v5377
    %v5379 = vpop.f32.mrb[0].mxu0
    %v5380 = vadd.f32 %v5187, %v5379
    %5381 = vmatprep.mubr.bf16.mxu0 %v3792
    %5382 = vmatmul.mubr.bf16.gmra.mrb[0].mxu0 %v3791
    %v5383 = vpop.f32.mrb[0].mxu0
    %v5384 = vadd.f32 %v5191, %v5383
    %v5385 = vpop.f32.mrb[0].mxu0
    %v5386 = vadd.f32 %v5193, %v5385
    %v5387 = vpop.f32.mrb[0].mxu0
    %v5388 = vadd.f32 %v5195, %v5387
    %v5389 = vpop.f32.mrb[0].mxu0
    %v5390 = vadd.f32 %v5197, %v5389
    %5391 = vmatprep.mubr.bf16.mxu0 %v3800
    %5392 = vmatmul.mubr.bf16.gmra.mrb[0].mxu0 %v3799
    %v5393 = vpop.f32.mrb[0].mxu0
    %v5394 = vadd.f32 %v5201, %v5393
    %v5395 = vpop.f32.mrb[0].mxu0
    %v5396 = vadd.f32 %v5203, %v5395
    %v5397 = vpop.f32.mrb[0].mxu0
    %v5398 = vadd.f32 %v5205, %v5397
    %v5399 = vpop.f32.mrb[0].mxu0
    %v5400 = vadd.f32 %v5207, %v5399
    %5401 = vmatprep.mubr.bf16.mxu0 %v3808
    %5402 = vmatmul.mubr.bf16.gmra.mrb[0].mxu0 %v3807
    %v5403 = vpop.f32.mrb[0].mxu0
    %v5404 = vadd.f32 %v5211, %v5403
    %v5405 = vpop.f32.mrb[0].mxu0
    %v5406 = vadd.f32 %v5213, %v5405
    %v5407 = vpop.f32.mrb[0].mxu0
    %v5408 = vadd.f32 %v5215, %v5407
    %v5409 = vpop.f32.mrb[0].mxu0
    %v5410 = vadd.f32 %v5217, %v5409
    %5411 = vmatprep.mubr.bf16.mxu0 %v3816
    %5412 = vmatmul.mubr.bf16.gmra.mrb[0].mxu0 %v3815
    %v5413 = vpop.f32.mrb[0].mxu0
    %v5414 = vadd.f32 %v5221, %v5413
    %v5415 = vpop.f32.mrb[0].mxu0
    %v5416 = vadd.f32 %v5223, %v5415
    %v5417 = vpop.f32.mrb[0].mxu0
    %v5418 = vadd.f32 %v5225, %v5417
    %v5419 = vpop.f32.mrb[0].mxu0
    %v5420 = vadd.f32 %v5227, %v5419
    %5421 = vmatprep.mubr.bf16.mxu0 %v3824
    %5422 = vmatmul.mubr.bf16.gmra.mrb[0].mxu0 %v3823
    %v5423 = vpop.f32.mrb[0].mxu0
    %v5424 = vadd.f32 %v5231, %v5423
    %v5425 = vpop.f32.mrb[0].mxu0
    %v5426 = vadd.f32 %v5233, %v5425
    %v5427 = vpop.f32.mrb[0].mxu0
    %v5428 = vadd.f32 %v5235, %v5427
    %v5429 = vpop.f32.mrb[0].mxu0
    %v5430 = vadd.f32 %v5237, %v5429
    %5431 = vmatprep.mubr.bf16.mxu0 %v3832
    %5432 = vmatmul.mubr.bf16.gmra.mrb[0].mxu0 %v3831
    %v5433 = vpop.f32.mrb[0].mxu0
    %v5434 = vadd.f32 %v5241, %v5433
    %v5435 = vpop.f32.mrb[0].mxu0
    %v5436 = vadd.f32 %v5243, %v5435
    %v5437 = vpop.f32.mrb[0].mxu0
    %v5438 = vadd.f32 %v5245, %v5437
    %v5439 = vpop.f32.mrb[0].mxu0
    %v5440 = vadd.f32 %v5247, %v5439
    %5441 = vdwg.mxu0
    %5442 = vmatprep.subr.bf16.mxu0 %v4030
    %5443 = vmatpush1.bf16.msra.mxu0 %v4029
    %5444 = vmatprep.subr.bf16.mxu0 %v4034
    %5445 = vmatpush1.bf16.msra.mxu0 %v4033
    %5446 = vmatprep.subr.bf16.mxu0 %v4038
    %5447 = vmatpush1.bf16.msra.mxu0 %v4037
    %5448 = vmatprep.subr.bf16.mxu0 %v4042
    %5449 = vmatpush1.bf16.msra.mxu0 %v4041
    %5450 = vmatprep.subr.bf16.mxu0 %v4046
    %5451 = vmatpush1.bf16.msra.mxu0 %v4045
    %5452 = vmatprep.subr.bf16.mxu0 %v4050
    %5453 = vmatpush1.bf16.msra.mxu0 %v4049
    %5454 = vmatprep.subr.bf16.mxu0 %v4054
    %5455 = vmatpush1.bf16.msra.mxu0 %v4053
    %5456 = vmatprep.subr.bf16.mxu0 %v4058
    %5457 = vmatpush1.bf16.msra.mxu0 %v4057
    %5458 = vmatprep.subr.bf16.mxu0 %v4062
    %5459 = vmatpush1.bf16.msra.mxu0 %v4061
    %5460 = vmatprep.subr.bf16.mxu0 %v4066
    %5461 = vmatpush1.bf16.msra.mxu0 %v4065
    %5462 = vmatprep.subr.bf16.mxu0 %v4070
    %5463 = vmatpush1.bf16.msra.mxu0 %v4069
    %5464 = vmatprep.subr.bf16.mxu0 %v4074
    %5465 = vmatpush1.bf16.msra.mxu0 %v4073
    %5466 = vmatprep.subr.bf16.mxu0 %v4078
    %5467 = vmatpush1.bf16.msra.mxu0 %v4077
    %5468 = vmatprep.subr.bf16.mxu0 %v4082
    %5469 = vmatpush1.bf16.msra.mxu0 %v4081
    %5470 = vmatprep.subr.bf16.mxu0 %v4086
    %5471 = vmatpush1.bf16.msra.mxu0 %v4085
    %5472 = vmatprep.subr.bf16.mxu0 %v4090
    %5473 = vmatpush1.bf16.msra.mxu0 %v4089
    %5474 = vmatprep.mubr.bf16.mxu0 %v3714
    %5475 = vmatmul.mubr.bf16.gmra.mrb[0].mxu0 %v3713
    %v5476 = vpop.f32.mrb[0].mxu0
    %v5477 = vadd.f32 %v5284, %v5476
    %v5478 = vpop.f32.mrb[0].mxu0
    %v5479 = vadd.f32 %v5286, %v5478
    %v5480 = vpop.f32.mrb[0].mxu0
    %v5481 = vadd.f32 %v5288, %v5480
    %v5482 = vpop.f32.mrb[0].mxu0
    %v5483 = vadd.f32 %v5290, %v5482
    %5484 = vmatprep.mubr.bf16.mxu0 %v3722
    %5485 = vmatmul.mubr.bf16.gmra.mrb[0].mxu0 %v3721
    %v5486 = vpop.f32.mrb[0].mxu0
    %v5487 = vadd.f32 %v5294, %v5486
    %v5488 = vpop.f32.mrb[0].mxu0
    %v5489 = vadd.f32 %v5296, %v5488
    %v5490 = vpop.f32.mrb[0].mxu0
    %v5491 = vadd.f32 %v5298, %v5490
    %v5492 = vpop.f32.mrb[0].mxu0
    %v5493 = vadd.f32 %v5300, %v5492
    %5494 = vmatprep.mubr.bf16.mxu0 %v3730
    %5495 = vmatmul.mubr.bf16.gmra.mrb[0].mxu0 %v3729
    %v5496 = vpop.f32.mrb[0].mxu0
    %v5497 = vadd.f32 %v5304, %v5496
    %v5498 = vpop.f32.mrb[0].mxu0
    %v5499 = vadd.f32 %v5306, %v5498
    %v5500 = vpop.f32.mrb[0].mxu0
    %v5501 = vadd.f32 %v5308, %v5500
    %v5502 = vpop.f32.mrb[0].mxu0
    %v5503 = vadd.f32 %v5310, %v5502
    %5504 = vmatprep.mubr.bf16.mxu0 %v3738
    %5505 = vmatmul.mubr.bf16.gmra.mrb[0].mxu0 %v3737
    %v5506 = vpop.f32.mrb[0].mxu0
    %v5507 = vadd.f32 %v5314, %v5506
    %v5508 = vpop.f32.mrb[0].mxu0
    %v5509 = vadd.f32 %v5316, %v5508
    %v5510 = vpop.f32.mrb[0].mxu0
    %v5511 = vadd.f32 %v5318, %v5510
    %v5512 = vpop.f32.mrb[0].mxu0
    %v5513 = vadd.f32 %v5320, %v5512
    %5514 = vmatprep.mubr.bf16.mxu0 %v3746
    %5515 = vmatmul.mubr.bf16.gmra.mrb[0].mxu0 %v3745
    %v5516 = vpop.f32.mrb[0].mxu0
    %v5517 = vadd.f32 %v5324, %v5516
    %v5518 = vpop.f32.mrb[0].mxu0
    %v5519 = vadd.f32 %v5326, %v5518
    %v5520 = vpop.f32.mrb[0].mxu0
    %v5521 = vadd.f32 %v5328, %v5520
    %v5522 = vpop.f32.mrb[0].mxu0
    %v5523 = vadd.f32 %v5330, %v5522
    %5524 = vmatprep.mubr.bf16.mxu0 %v3754
    %5525 = vmatmul.mubr.bf16.gmra.mrb[0].mxu0 %v3753
    %v5526 = vpop.f32.mrb[0].mxu0
    %v5527 = vadd.f32 %v5334, %v5526
    %v5528 = vpop.f32.mrb[0].mxu0
    %v5529 = vadd.f32 %v5336, %v5528
    %v5530 = vpop.f32.mrb[0].mxu0
    %v5531 = vadd.f32 %v5338, %v5530
    %v5532 = vpop.f32.mrb[0].mxu0
    %v5533 = vadd.f32 %v5340, %v5532
    %5534 = vmatprep.mubr.bf16.mxu0 %v3762
    %5535 = vmatmul.mubr.bf16.gmra.mrb[0].mxu0 %v3761
    %v5536 = vpop.f32.mrb[0].mxu0
    %v5537 = vadd.f32 %v5344, %v5536
    %v5538 = vpop.f32.mrb[0].mxu0
    %v5539 = vadd.f32 %v5346, %v5538
    %v5540 = vpop.f32.mrb[0].mxu0
    %v5541 = vadd.f32 %v5348, %v5540
    %v5542 = vpop.f32.mrb[0].mxu0
    %v5543 = vadd.f32 %v5350, %v5542
    %5544 = vmatprep.mubr.bf16.mxu0 %v3770
    %5545 = vmatmul.mubr.bf16.gmra.mrb[0].mxu0 %v3769
    %v5546 = vpop.f32.mrb[0].mxu0
    %v5547 = vadd.f32 %v5354, %v5546
    %v5548 = vpop.f32.mrb[0].mxu0
    %v5549 = vadd.f32 %v5356, %v5548
    %v5550 = vpop.f32.mrb[0].mxu0
    %v5551 = vadd.f32 %v5358, %v5550
    %v5552 = vpop.f32.mrb[0].mxu0
    %v5553 = vadd.f32 %v5360, %v5552
    %5554 = vmatprep.mubr.bf16.mxu0 %v3778
    %5555 = vmatmul.mubr.bf16.gmra.mrb[0].mxu0 %v3777
    %v5556 = vpop.f32.mrb[0].mxu0
    %v5557 = vadd.f32 %v5364, %v5556
    %v5558 = vpop.f32.mrb[0].mxu0
    %v5559 = vadd.f32 %v5366, %v5558
    %v5560 = vpop.f32.mrb[0].mxu0
    %v5561 = vadd.f32 %v5368, %v5560
    %v5562 = vpop.f32.mrb[0].mxu0
    %v5563 = vadd.f32 %v5370, %v5562
    %5564 = vmatprep.mubr.bf16.mxu0 %v3786
    %5565 = vmatmul.mubr.bf16.gmra.mrb[0].mxu0 %v3785
    %v5566 = vpop.f32.mrb[0].mxu0
    %v5567 = vadd.f32 %v5374, %v5566
    %v5568 = vpop.f32.mrb[0].mxu0
    %v5569 = vadd.f32 %v5376, %v5568
    %v5570 = vpop.f32.mrb[0].mxu0
    %v5571 = vadd.f32 %v5378, %v5570
    %v5572 = vpop.f32.mrb[0].mxu0
    %v5573 = vadd.f32 %v5380, %v5572
    %5574 = vmatprep.mubr.bf16.mxu0 %v3794
    %5575 = vmatmul.mubr.bf16.gmra.mrb[0].mxu0 %v3793
    %v5576 = vpop.f32.mrb[0].mxu0
    %v5577 = vadd.f32 %v5384, %v5576
    %v5578 = vpop.f32.mrb[0].mxu0
    %v5579 = vadd.f32 %v5386, %v5578
    %v5580 = vpop.f32.mrb[0].mxu0
    %v5581 = vadd.f32 %v5388, %v5580
    %v5582 = vpop.f32.mrb[0].mxu0
    %v5583 = vadd.f32 %v5390, %v5582
    %5584 = vmatprep.mubr.bf16.mxu0 %v3802
    %5585 = vmatmul.mubr.bf16.gmra.mrb[0].mxu0 %v3801
    %v5586 = vpop.f32.mrb[0].mxu0
    %v5587 = vadd.f32 %v5394, %v5586
    %v5588 = vpop.f32.mrb[0].mxu0
    %v5589 = vadd.f32 %v5396, %v5588
    %v5590 = vpop.f32.mrb[0].mxu0
    %v5591 = vadd.f32 %v5398, %v5590
    %v5592 = vpop.f32.mrb[0].mxu0
    %v5593 = vadd.f32 %v5400, %v5592
    %5594 = vmatprep.mubr.bf16.mxu0 %v3810
    %5595 = vmatmul.mubr.bf16.gmra.mrb[0].mxu0 %v3809
    %v5596 = vpop.f32.mrb[0].mxu0
    %v5597 = vadd.f32 %v5404, %v5596
    %v5598 = vpop.f32.mrb[0].mxu0
    %v5599 = vadd.f32 %v5406, %v5598
    %v5600 = vpop.f32.mrb[0].mxu0
    %v5601 = vadd.f32 %v5408, %v5600
    %v5602 = vpop.f32.mrb[0].mxu0
    %v5603 = vadd.f32 %v5410, %v5602
    %5604 = vmatprep.mubr.bf16.mxu0 %v3818
    %5605 = vmatmul.mubr.bf16.gmra.mrb[0].mxu0 %v3817
    %v5606 = vpop.f32.mrb[0].mxu0
    %v5607 = vadd.f32 %v5414, %v5606
    %v5608 = vpop.f32.mrb[0].mxu0
    %v5609 = vadd.f32 %v5416, %v5608
    %v5610 = vpop.f32.mrb[0].mxu0
    %v5611 = vadd.f32 %v5418, %v5610
    %v5612 = vpop.f32.mrb[0].mxu0
    %v5613 = vadd.f32 %v5420, %v5612
    %5614 = vmatprep.mubr.bf16.mxu0 %v3826
    %5615 = vmatmul.mubr.bf16.gmra.mrb[0].mxu0 %v3825
    %v5616 = vpop.f32.mrb[0].mxu0
    %v5617 = vadd.f32 %v5424, %v5616
    %v5618 = vpop.f32.mrb[0].mxu0
    %v5619 = vadd.f32 %v5426, %v5618
    %v5620 = vpop.f32.mrb[0].mxu0
    %v5621 = vadd.f32 %v5428, %v5620
    %v5622 = vpop.f32.mrb[0].mxu0
    %v5623 = vadd.f32 %v5430, %v5622
    %5624 = vmatprep.mubr.bf16.mxu0 %v3834
    %5625 = vmatmul.mubr.bf16.gmra.mrb[0].mxu0 %v3833
    %v5626 = vpop.f32.mrb[0].mxu0
    %v5627 = vadd.f32 %v5434, %v5626
    %v5628 = vpop.f32.mrb[0].mxu0
    %v5629 = vadd.f32 %v5436, %v5628
    %v5630 = vpop.f32.mrb[0].mxu0
    %v5631 = vadd.f32 %v5438, %v5630
    %v5632 = vpop.f32.mrb[0].mxu0
    %v5633 = vadd.f32 %v5440, %v5632
    %5634 = vdwg.mxu0
    %s5635 = scalar_lea.vmem %s2, 2
    %v5636 = vld [vmem:[%s5635] ss:$8 sm:$0xf]
    %s5637 = scalar_lea.vmem %s2, 3
    %v5638 = vld [vmem:[%s5637] ss:$8 sm:$0xf]
    %v5639 = vadd.f32 %v4705, %v4709
    %v5640 = vadd.f32 %v5639, %v4715
    %v5641 = vadd.f32 %v5640, %v4719
    %v5642 = vadd.f32 %v5641, %v4725
    %v5643 = vadd.f32 %v5642, %v4729
    %v5644 = vadd.f32 %v5643, %v4735
    %v5645 = vadd.f32 %v5644, %v4739
    %v5646 = vadd.f32 %v5645, %v4745
    %v5647 = vadd.f32 %v5646, %v4749
    %v5648 = vadd.f32 %v5647, %v4755
    %v5649 = vadd.f32 %v5648, %v4759
    %v5650 = vadd.f32 %v5649, %v4765
    %v5651 = vadd.f32 %v5650, %v4769
    %v5652 = vadd.f32 %v5651, %v4775
    %v5653 = vadd.f32 %v5652, %v4779
    %v5654 = vadd.f32 %v5653, %v4785
    %v5655 = vadd.f32 %v5654, %v4789
    %v5656 = vadd.f32 %v5655, %v4795
    %v5657 = vadd.f32 %v5656, %v4799
    %v5658 = vadd.f32 %v5657, %v4805
    %v5659 = vadd.f32 %v5658, %v4809
    %v5660 = vadd.f32 %v5659, %v4815
    %v5661 = vadd.f32 %v5660, %v4819
    %v5662 = vadd.f32 %v5661, %v4825
    %v5663 = vadd.f32 %v5662, %v4829
    %v5664 = vadd.f32 %v5663, %v4835
    %v5665 = vadd.f32 %v5664, %v4839
    %v5666 = vadd.f32 %v5665, %v4845
    %v5667 = vadd.f32 %v5666, %v4849
    %v5668 = vadd.f32 %v5667, %v4855
    %v5669 = vadd.f32 %v5668, %v4859
    %v5670 = vrot.slane %v5669, 4
    %v5671 = vadd.f32 %v5669, %v5670
    %v5672 = vrot.slane %v5671, 2
    %v5673 = vadd.f32 %v5671, %v5672
    %v5674 = vrot.slane %v5673, 1
    %v5675 = vadd.f32 %v5673, %v5674
    %v5676 = vadd.f32 %v4707, %v4711
    %v5677 = vadd.f32 %v5676, %v4717
    %v5678 = vadd.f32 %v5677, %v4721
    %v5679 = vadd.f32 %v5678, %v4727
    %v5680 = vadd.f32 %v5679, %v4731
    %v5681 = vadd.f32 %v5680, %v4737
    %v5682 = vadd.f32 %v5681, %v4741
    %v5683 = vadd.f32 %v5682, %v4747
    %v5684 = vadd.f32 %v5683, %v4751
    %v5685 = vadd.f32 %v5684, %v4757
    %v5686 = vadd.f32 %v5685, %v4761
    %v5687 = vadd.f32 %v5686, %v4767
    %v5688 = vadd.f32 %v5687, %v4771
    %v5689 = vadd.f32 %v5688, %v4777
    %v5690 = vadd.f32 %v5689, %v4781
    %v5691 = vadd.f32 %v5690, %v4787
    %v5692 = vadd.f32 %v5691, %v4791
    %v5693 = vadd.f32 %v5692, %v4797
    %v5694 = vadd.f32 %v5693, %v4801
    %v5695 = vadd.f32 %v5694, %v4807
    %v5696 = vadd.f32 %v5695, %v4811
    %v5697 = vadd.f32 %v5696, %v4817
    %v5698 = vadd.f32 %v5697, %v4821
    %v5699 = vadd.f32 %v5698, %v4827
    %v5700 = vadd.f32 %v5699, %v4831
    %v5701 = vadd.f32 %v5700, %v4837
    %v5702 = vadd.f32 %v5701, %v4841
    %v5703 = vadd.f32 %v5702, %v4847
    %v5704 = vadd.f32 %v5703, %v4851
    %v5705 = vadd.f32 %v5704, %v4857
    %v5706 = vadd.f32 %v5705, %v4861
    %v5707 = vrot.slane %v5706, 4
    %v5708 = vadd.f32 %v5706, %v5707
    %v5709 = vrot.slane %v5708, 2
    %v5710 = vadd.f32 %v5708, %v5709
    %v5711 = vrot.slane %v5710, 1
    %v5712 = vadd.f32 %v5710, %v5711
    %v5713 = vadd.f32 %v5477, %v5481
    %v5714 = vadd.f32 %v5713, %v5487
    %v5715 = vadd.f32 %v5714, %v5491
    %v5716 = vadd.f32 %v5715, %v5497
    %v5717 = vadd.f32 %v5716, %v5501
    %v5718 = vadd.f32 %v5717, %v5507
    %v5719 = vadd.f32 %v5718, %v5511
    %v5720 = vadd.f32 %v5719, %v5517
    %v5721 = vadd.f32 %v5720, %v5521
    %v5722 = vadd.f32 %v5721, %v5527
    %v5723 = vadd.f32 %v5722, %v5531
    %v5724 = vadd.f32 %v5723, %v5537
    %v5725 = vadd.f32 %v5724, %v5541
    %v5726 = vadd.f32 %v5725, %v5547
    %v5727 = vadd.f32 %v5726, %v5551
    %v5728 = vadd.f32 %v5727, %v5557
    %v5729 = vadd.f32 %v5728, %v5561
    %v5730 = vadd.f32 %v5729, %v5567
    %v5731 = vadd.f32 %v5730, %v5571
    %v5732 = vadd.f32 %v5731, %v5577
    %v5733 = vadd.f32 %v5732, %v5581
    %v5734 = vadd.f32 %v5733, %v5587
    %v5735 = vadd.f32 %v5734, %v5591
    %v5736 = vadd.f32 %v5735, %v5597
    %v5737 = vadd.f32 %v5736, %v5601
    %v5738 = vadd.f32 %v5737, %v5607
    %v5739 = vadd.f32 %v5738, %v5611
    %v5740 = vadd.f32 %v5739, %v5617
    %v5741 = vadd.f32 %v5740, %v5621
    %v5742 = vadd.f32 %v5741, %v5627
    %v5743 = vadd.f32 %v5742, %v5631
    %v5744 = vrot.slane %v5743, 4
    %v5745 = vadd.f32 %v5743, %v5744
    %v5746 = vrot.slane %v5745, 2
    %v5747 = vadd.f32 %v5745, %v5746
    %v5748 = vrot.slane %v5747, 1
    %v5749 = vadd.f32 %v5747, %v5748
    %v5750 = vadd.f32 %v5479, %v5483
    %v5751 = vadd.f32 %v5750, %v5489
    %v5752 = vadd.f32 %v5751, %v5493
    %v5753 = vadd.f32 %v5752, %v5499
    %v5754 = vadd.f32 %v5753, %v5503
    %v5755 = vadd.f32 %v5754, %v5509
    %v5756 = vadd.f32 %v5755, %v5513
    %v5757 = vadd.f32 %v5756, %v5519
    %v5758 = vadd.f32 %v5757, %v5523
    %v5759 = vadd.f32 %v5758, %v5529
    %v5760 = vadd.f32 %v5759, %v5533
    %v5761 = vadd.f32 %v5760, %v5539
    %v5762 = vadd.f32 %v5761, %v5543
    %v5763 = vadd.f32 %v5762, %v5549
    %v5764 = vadd.f32 %v5763, %v5553
    %v5765 = vadd.f32 %v5764, %v5559
    %v5766 = vadd.f32 %v5765, %v5563
    %v5767 = vadd.f32 %v5766, %v5569
    %v5768 = vadd.f32 %v5767, %v5573
    %v5769 = vadd.f32 %v5768, %v5579
    %v5770 = vadd.f32 %v5769, %v5583
    %v5771 = vadd.f32 %v5770, %v5589
    %v5772 = vadd.f32 %v5771, %v5593
    %v5773 = vadd.f32 %v5772, %v5599
    %v5774 = vadd.f32 %v5773, %v5603
    %v5775 = vadd.f32 %v5774, %v5609
    %v5776 = vadd.f32 %v5775, %v5613
    %v5777 = vadd.f32 %v5776, %v5619
    %v5778 = vadd.f32 %v5777, %v5623
    %v5779 = vadd.f32 %v5778, %v5629
    %v5780 = vadd.f32 %v5779, %v5633
    %v5781 = vrot.slane %v5780, 4
    %v5782 = vadd.f32 %v5780, %v5781
    %v5783 = vrot.slane %v5782, 2
    %v5784 = vadd.f32 %v5782, %v5783
    %v5785 = vrot.slane %v5784, 1
    %v5786 = vadd.f32 %v5784, %v5785
    %v5787 = vmul.f32 %v5675, 0.00390625
    %v5788 = vmul.f32 %v5712, 0.00390625
    %v5789 = vmul.f32 %v5749, 0.00390625
    %v5790 = vmul.f32 %v5786, 0.00390625
    %v5791 = vmul.f32 %v4705, %v4705
    %v5792 = vmul.f32 %v4707, %v4707
    %v5793 = vmul.f32 %v5477, %v5477
    %v5794 = vmul.f32 %v5479, %v5479
    %v5795 = vmul.f32 %v4709, %v4709
    %v5796 = vmul.f32 %v4711, %v4711
    %v5797 = vmul.f32 %v5481, %v5481
    %v5798 = vmul.f32 %v5483, %v5483
    %v5799 = vmul.f32 %v4715, %v4715
    %v5800 = vmul.f32 %v4717, %v4717
    %v5801 = vmul.f32 %v5487, %v5487
    %v5802 = vmul.f32 %v5489, %v5489
    %v5803 = vmul.f32 %v4719, %v4719
    %v5804 = vmul.f32 %v4721, %v4721
    %v5805 = vmul.f32 %v5491, %v5491
    %v5806 = vmul.f32 %v5493, %v5493
    %v5807 = vmul.f32 %v4725, %v4725
    %v5808 = vmul.f32 %v4727, %v4727
    %v5809 = vmul.f32 %v5497, %v5497
    %v5810 = vmul.f32 %v5499, %v5499
    %v5811 = vmul.f32 %v4729, %v4729
    %v5812 = vmul.f32 %v4731, %v4731
    %v5813 = vmul.f32 %v5501, %v5501
    %v5814 = vmul.f32 %v5503, %v5503
    %v5815 = vmul.f32 %v4735, %v4735
    %v5816 = vmul.f32 %v4737, %v4737
    %v5817 = vmul.f32 %v5507, %v5507
    %v5818 = vmul.f32 %v5509, %v5509
    %v5819 = vmul.f32 %v4739, %v4739
    %v5820 = vmul.f32 %v4741, %v4741
    %v5821 = vmul.f32 %v5511, %v5511
    %v5822 = vmul.f32 %v5513, %v5513
    %v5823 = vmul.f32 %v4745, %v4745
    %v5824 = vmul.f32 %v4747, %v4747
    %v5825 = vmul.f32 %v5517, %v5517
    %v5826 = vmul.f32 %v5519, %v5519
    %v5827 = vmul.f32 %v4749, %v4749
    %v5828 = vmul.f32 %v4751, %v4751
    %v5829 = vmul.f32 %v5521, %v5521
    %v5830 = vmul.f32 %v5523, %v5523
    %v5831 = vmul.f32 %v4755, %v4755
    %v5832 = vmul.f32 %v4757, %v4757
    %v5833 = vmul.f32 %v5527, %v5527
    %v5834 = vmul.f32 %v5529, %v5529
    %v5835 = vmul.f32 %v4759, %v4759
    %v5836 = vmul.f32 %v4761, %v4761
    %v5837 = vmul.f32 %v5531, %v5531
    %v5838 = vmul.f32 %v5533, %v5533
    %v5839 = vmul.f32 %v4765, %v4765
    %v5840 = vmul.f32 %v4767, %v4767
    %v5841 = vmul.f32 %v5537, %v5537
    %v5842 = vmul.f32 %v5539, %v5539
    %v5843 = vmul.f32 %v4769, %v4769
    %v5844 = vmul.f32 %v4771, %v4771
    %v5845 = vmul.f32 %v5541, %v5541
    %v5846 = vmul.f32 %v5543, %v5543
    %v5847 = vmul.f32 %v4775, %v4775
    %v5848 = vmul.f32 %v4777, %v4777
    %v5849 = vmul.f32 %v5547, %v5547
    %v5850 = vmul.f32 %v5549, %v5549
    %v5851 = vmul.f32 %v4779, %v4779
    %v5852 = vmul.f32 %v4781, %v4781
    %v5853 = vmul.f32 %v5551, %v5551
    %v5854 = vmul.f32 %v5553, %v5553
    %v5855 = vmul.f32 %v4785, %v4785
    %v5856 = vmul.f32 %v4787, %v4787
    %v5857 = vmul.f32 %v5557, %v5557
    %v5858 = vmul.f32 %v5559, %v5559
    %v5859 = vmul.f32 %v4789, %v4789
    %v5860 = vmul.f32 %v4791, %v4791
    %v5861 = vmul.f32 %v5561, %v5561
    %v5862 = vmul.f32 %v5563, %v5563
    %v5863 = vmul.f32 %v4795, %v4795
    %v5864 = vmul.f32 %v4797, %v4797
    %v5865 = vmul.f32 %v5567, %v5567
    %v5866 = vmul.f32 %v5569, %v5569
    %v5867 = vmul.f32 %v4799, %v4799
    %v5868 = vmul.f32 %v4801, %v4801
    %v5869 = vmul.f32 %v5571, %v5571
    %v5870 = vmul.f32 %v5573, %v5573
    %v5871 = vmul.f32 %v4805, %v4805
    %v5872 = vmul.f32 %v4807, %v4807
    %v5873 = vmul.f32 %v5577, %v5577
    %v5874 = vmul.f32 %v5579, %v5579
    %v5875 = vmul.f32 %v4809, %v4809
    %v5876 = vmul.f32 %v4811, %v4811
    %v5877 = vmul.f32 %v5581, %v5581
    %v5878 = vmul.f32 %v5583, %v5583
    %v5879 = vmul.f32 %v4815, %v4815
    %v5880 = vmul.f32 %v4817, %v4817
    %v5881 = vmul.f32 %v5587, %v5587
    %v5882 = vmul.f32 %v5589, %v5589
    %v5883 = vmul.f32 %v4819, %v4819
    %v5884 = vmul.f32 %v4821, %v4821
    %v5885 = vmul.f32 %v5591, %v5591
    %v5886 = vmul.f32 %v5593, %v5593
    %v5887 = vmul.f32 %v4825, %v4825
    %v5888 = vmul.f32 %v4827, %v4827
    %v5889 = vmul.f32 %v5597, %v5597
    %v5890 = vmul.f32 %v5599, %v5599
    %v5891 = vmul.f32 %v4829, %v4829
    %v5892 = vmul.f32 %v4831, %v4831
    %v5893 = vmul.f32 %v5601, %v5601
    %v5894 = vmul.f32 %v5603, %v5603
    %v5895 = vmul.f32 %v4835, %v4835
    %v5896 = vmul.f32 %v4837, %v4837
    %v5897 = vmul.f32 %v5607, %v5607
    %v5898 = vmul.f32 %v5609, %v5609
    %v5899 = vmul.f32 %v4839, %v4839
    %v5900 = vmul.f32 %v4841, %v4841
    %v5901 = vmul.f32 %v5611, %v5611
    %v5902 = vmul.f32 %v5613, %v5613
    %v5903 = vmul.f32 %v4845, %v4845
    %v5904 = vmul.f32 %v4847, %v4847
    %v5905 = vmul.f32 %v5617, %v5617
    %v5906 = vmul.f32 %v5619, %v5619
    %v5907 = vmul.f32 %v4849, %v4849
    %v5908 = vmul.f32 %v4851, %v4851
    %v5909 = vmul.f32 %v5621, %v5621
    %v5910 = vmul.f32 %v5623, %v5623
    %v5911 = vmul.f32 %v4855, %v4855
    %v5912 = vmul.f32 %v4857, %v4857
    %v5913 = vmul.f32 %v5627, %v5627
    %v5914 = vmul.f32 %v5629, %v5629
    %v5915 = vmul.f32 %v4859, %v4859
    %v5916 = vmul.f32 %v4861, %v4861
    %v5917 = vmul.f32 %v5631, %v5631
    %v5918 = vmul.f32 %v5633, %v5633
    %v5919 = vadd.f32 %v5791, %v5795
    %v5920 = vadd.f32 %v5919, %v5799
    %v5921 = vadd.f32 %v5920, %v5803
    %v5922 = vadd.f32 %v5921, %v5807
    %v5923 = vadd.f32 %v5922, %v5811
    %v5924 = vadd.f32 %v5923, %v5815
    %v5925 = vadd.f32 %v5924, %v5819
    %v5926 = vadd.f32 %v5925, %v5823
    %v5927 = vadd.f32 %v5926, %v5827
    %v5928 = vadd.f32 %v5927, %v5831
    %v5929 = vadd.f32 %v5928, %v5835
    %v5930 = vadd.f32 %v5929, %v5839
    %v5931 = vadd.f32 %v5930, %v5843
    %v5932 = vadd.f32 %v5931, %v5847
    %v5933 = vadd.f32 %v5932, %v5851
    %v5934 = vadd.f32 %v5933, %v5855
    %v5935 = vadd.f32 %v5934, %v5859
    %v5936 = vadd.f32 %v5935, %v5863
    %v5937 = vadd.f32 %v5936, %v5867
    %v5938 = vadd.f32 %v5937, %v5871
    %v5939 = vadd.f32 %v5938, %v5875
    %v5940 = vadd.f32 %v5939, %v5879
    %v5941 = vadd.f32 %v5940, %v5883
    %v5942 = vadd.f32 %v5941, %v5887
    %v5943 = vadd.f32 %v5942, %v5891
    %v5944 = vadd.f32 %v5943, %v5895
    %v5945 = vadd.f32 %v5944, %v5899
    %v5946 = vadd.f32 %v5945, %v5903
    %v5947 = vadd.f32 %v5946, %v5907
    %v5948 = vadd.f32 %v5947, %v5911
    %v5949 = vadd.f32 %v5948, %v5915
    %v5950 = vrot.slane %v5949, 4
    %v5951 = vadd.f32 %v5949, %v5950
    %v5952 = vrot.slane %v5951, 2
    %v5953 = vadd.f32 %v5951, %v5952
    %v5954 = vrot.slane %v5953, 1
    %v5955 = vadd.f32 %v5953, %v5954
    %v5956 = vadd.f32 %v5792, %v5796
    %v5957 = vadd.f32 %v5956, %v5800
    %v5958 = vadd.f32 %v5957, %v5804
    %v5959 = vadd.f32 %v5958, %v5808
    %v5960 = vadd.f32 %v5959, %v5812
    %v5961 = vadd.f32 %v5960, %v5816
    %v5962 = vadd.f32 %v5961, %v5820
    %v5963 = vadd.f32 %v5962, %v5824
    %v5964 = vadd.f32 %v5963, %v5828
    %v5965 = vadd.f32 %v5964, %v5832
    %v5966 = vadd.f32 %v5965, %v5836
    %v5967 = vadd.f32 %v5966, %v5840
    %v5968 = vadd.f32 %v5967, %v5844
    %v5969 = vadd.f32 %v5968, %v5848
    %v5970 = vadd.f32 %v5969, %v5852
    %v5971 = vadd.f32 %v5970, %v5856
    %v5972 = vadd.f32 %v5971, %v5860
    %v5973 = vadd.f32 %v5972, %v5864
    %v5974 = vadd.f32 %v5973, %v5868
    %v5975 = vadd.f32 %v5974, %v5872
    %v5976 = vadd.f32 %v5975, %v5876
    %v5977 = vadd.f32 %v5976, %v5880
    %v5978 = vadd.f32 %v5977, %v5884
    %v5979 = vadd.f32 %v5978, %v5888
    %v5980 = vadd.f32 %v5979, %v5892
    %v5981 = vadd.f32 %v5980, %v5896
    %v5982 = vadd.f32 %v5981, %v5900
    %v5983 = vadd.f32 %v5982, %v5904
    %v5984 = vadd.f32 %v5983, %v5908
    %v5985 = vadd.f32 %v5984, %v5912
    %v5986 = vadd.f32 %v5985, %v5916
    %v5987 = vrot.slane %v5986, 4
    %v5988 = vadd.f32 %v5986, %v5987
    %v5989 = vrot.slane %v5988, 2
    %v5990 = vadd.f32 %v5988, %v5989
    %v5991 = vrot.slane %v5990, 1
    %v5992 = vadd.f32 %v5990, %v5991
    %v5993 = vadd.f32 %v5793, %v5797
    %v5994 = vadd.f32 %v5993, %v5801
    %v5995 = vadd.f32 %v5994, %v5805
    %v5996 = vadd.f32 %v5995, %v5809
    %v5997 = vadd.f32 %v5996, %v5813
    %v5998 = vadd.f32 %v5997, %v5817
    %v5999 = vadd.f32 %v5998, %v5821
    %v6000 = vadd.f32 %v5999, %v5825
    %v6001 = vadd.f32 %v6000, %v5829
    %v6002 = vadd.f32 %v6001, %v5833
    %v6003 = vadd.f32 %v6002, %v5837
    %v6004 = vadd.f32 %v6003, %v5841
    %v6005 = vadd.f32 %v6004, %v5845
    %v6006 = vadd.f32 %v6005, %v5849
    %v6007 = vadd.f32 %v6006, %v5853
    %v6008 = vadd.f32 %v6007, %v5857
    %v6009 = vadd.f32 %v6008, %v5861
    %v6010 = vadd.f32 %v6009, %v5865
    %v6011 = vadd.f32 %v6010, %v5869
    %v6012 = vadd.f32 %v6011, %v5873
    %v6013 = vadd.f32 %v6012, %v5877
    %v6014 = vadd.f32 %v6013, %v5881
    %v6015 = vadd.f32 %v6014, %v5885
    %v6016 = vadd.f32 %v6015, %v5889
    %v6017 = vadd.f32 %v6016, %v5893
    %v6018 = vadd.f32 %v6017, %v5897
    %v6019 = vadd.f32 %v6018, %v5901
    %v6020 = vadd.f32 %v6019, %v5905
    %v6021 = vadd.f32 %v6020, %v5909
    %v6022 = vadd.f32 %v6021, %v5913
    %v6023 = vadd.f32 %v6022, %v5917
    %v6024 = vrot.slane %v6023, 4
    %v6025 = vadd.f32 %v6023, %v6024
    %v6026 = vrot.slane %v6025, 2
    %v6027 = vadd.f32 %v6025, %v6026
    %v6028 = vrot.slane %v6027, 1
    %v6029 = vadd.f32 %v6027, %v6028
    %v6030 = vadd.f32 %v5794, %v5798
    %v6031 = vadd.f32 %v6030, %v5802
    %v6032 = vadd.f32 %v6031, %v5806
    %v6033 = vadd.f32 %v6032, %v5810
    %v6034 = vadd.f32 %v6033, %v5814
    %v6035 = vadd.f32 %v6034, %v5818
    %v6036 = vadd.f32 %v6035, %v5822
    %v6037 = vadd.f32 %v6036, %v5826
    %v6038 = vadd.f32 %v6037, %v5830
    %v6039 = vadd.f32 %v6038, %v5834
    %v6040 = vadd.f32 %v6039, %v5838
    %v6041 = vadd.f32 %v6040, %v5842
    %v6042 = vadd.f32 %v6041, %v5846
    %v6043 = vadd.f32 %v6042, %v5850
    %v6044 = vadd.f32 %v6043, %v5854
    %v6045 = vadd.f32 %v6044, %v5858
    %v6046 = vadd.f32 %v6045, %v5862
    %v6047 = vadd.f32 %v6046, %v5866
    %v6048 = vadd.f32 %v6047, %v5870
    %v6049 = vadd.f32 %v6048, %v5874
    %v6050 = vadd.f32 %v6049, %v5878
    %v6051 = vadd.f32 %v6050, %v5882
    %v6052 = vadd.f32 %v6051, %v5886
    %v6053 = vadd.f32 %v6052, %v5890
    %v6054 = vadd.f32 %v6053, %v5894
    %v6055 = vadd.f32 %v6054, %v5898
    %v6056 = vadd.f32 %v6055, %v5902
    %v6057 = vadd.f32 %v6056, %v5906
    %v6058 = vadd.f32 %v6057, %v5910
    %v6059 = vadd.f32 %v6058, %v5914
    %v6060 = vadd.f32 %v6059, %v5918
    %v6061 = vrot.slane %v6060, 4
    %v6062 = vadd.f32 %v6060, %v6061
    %v6063 = vrot.slane %v6062, 2
    %v6064 = vadd.f32 %v6062, %v6063
    %v6065 = vrot.slane %v6064, 1
    %v6066 = vadd.f32 %v6064, %v6065
    %v6067 = vmul.f32 %v5955, 0.00390625
    %v6068 = vmul.f32 %v5992, 0.00390625
    %v6069 = vmul.f32 %v6029, 0.00390625
    %v6070 = vmul.f32 %v6066, 0.00390625
    %v6071 = vmul.f32 %v5787, %v5787
    %v6072 = vmul.f32 %v5788, %v5788
    %v6073 = vmul.f32 %v5789, %v5789
    %v6074 = vmul.f32 %v5790, %v5790
    %v6075 = vsub.f32 %v6067, %v6071
    %v6076 = vsub.f32 %v6068, %v6072
    %v6077 = vsub.f32 %v6069, %v6073
    %v6078 = vsub.f32 %v6070, %v6074
    %v6079 = vmax.f32 %v6075, 0.0
    %v6080 = vmax.f32 %v6076, 0.0
    %v6081 = vmax.f32 %v6077, 0.0
    %v6082 = vmax.f32 %v6078, 0.0
    %v6083 = vadd.f32 %v6079, 1e-05
    %v6084 = vadd.f32 %v6080, 1e-05
    %v6085 = vadd.f32 %v6081, 1e-05
    %v6086 = vadd.f32 %v6082, 1e-05
    %v6087 = vrsqrt.pop %v6083
    %v6088 = vrsqrt.pop %v6084
    %v6089 = vrsqrt.pop %v6085
    %v6090 = vrsqrt.pop %v6086
    %v6095 = vcombine.low %v6087, %v6088
    %v6096 = vcombine.low %v6089, %v6090
    %v6098 = vunpack.c.l.s4 1966171168
    %v6099 = vunpack.c.0.s8 %v6098
    %v6100 = vlaneseq
    %v6101 = vshrl.u32 %v6100, 7
    %v6102 = vsub.s32 %v6099, %v6101
    %v6103 = vrot.slane %v6095, %v6102
    %v6105 = vunpack.c.l.s4 1966171168
    %v6106 = vunpack.c.0.s8 %v6105
    %v6107 = vlaneseq
    %v6108 = vshrl.u32 %v6107, 7
    %v6109 = vsub.s32 %v6106, %v6108
    %v6110 = vrot.slane %v6096, %v6109
    %v6111 = vcombine.low %v6103, %v6110
    %v6113 = vunpack.c.l.s4 1966171168
    %v6114 = vunpack.c.0.s8 %v6113
    %v6115 = vlaneseq
    %v6116 = vshrl.u32 %v6115, 7
    %v6117 = vsub.s32 %v6114, %v6116
    %v6118 = vrot.slane %v6111, %v6117
    %v6120 = vmul.f32 %v5636, %v6118
    %v6122 = vlaneseq
    %v6123 = vshrl.u32 %v6122, 7
    %v6124 = vsub.s32 0, %v6123
    %v6125 = vrot.slane %v6120, %v6124
    %v6126 = vlaneseq
    %v6127 = vshrl.u32 %v6126, 7
    %v6128 = vsub.s32 1, %v6127
    %v6129 = vrot.slane %v6120, %v6128
    %v6130 = vlaneseq
    %v6131 = vshrl.u32 %v6130, 7
    %v6132 = vsub.s32 2, %v6131
    %v6133 = vrot.slane %v6120, %v6132
    %v6134 = vlaneseq
    %v6135 = vshrl.u32 %v6134, 7
    %v6136 = vsub.s32 3, %v6135
    %v6137 = vrot.slane %v6120, %v6136
    %v6142 = vmul.f32 %v5787, %v6125
    %v6143 = vmul.f32 %v5788, %v6129
    %v6144 = vmul.f32 %v5789, %v6133
    %v6145 = vmul.f32 %v5790, %v6137
    %v6150 = vcombine.low %v6142, %v6143
    %v6151 = vcombine.low %v6144, %v6145
    %v6153 = vunpack.c.l.s4 1966171168
    %v6154 = vunpack.c.0.s8 %v6153
    %v6155 = vlaneseq
    %v6156 = vshrl.u32 %v6155, 7
    %v6157 = vsub.s32 %v6154, %v6156
    %v6158 = vrot.slane %v6150, %v6157
    %v6160 = vunpack.c.l.s4 1966171168
    %v6161 = vunpack.c.0.s8 %v6160
    %v6162 = vlaneseq
    %v6163 = vshrl.u32 %v6162, 7
    %v6164 = vsub.s32 %v6161, %v6163
    %v6165 = vrot.slane %v6151, %v6164
    %v6166 = vcombine.low %v6158, %v6165
    %v6168 = vunpack.c.l.s4 1966171168
    %v6169 = vunpack.c.0.s8 %v6168
    %v6170 = vlaneseq
    %v6171 = vshrl.u32 %v6170, 7
    %v6172 = vsub.s32 %v6169, %v6171
    %v6173 = vrot.slane %v6166, %v6172
    %v6175 = vsub.f32 %v5638, %v6173
    %v6176 = vmul.f32 %v4705, %v6125
    %v6177 = vmul.f32 %v4707, %v6129
    %v6178 = vmul.f32 %v5477, %v6133
    %v6179 = vmul.f32 %v5479, %v6137
    %v6180 = vmul.f32 %v4709, %v6125
    %v6181 = vmul.f32 %v4711, %v6129
    %v6182 = vmul.f32 %v5481, %v6133
    %v6183 = vmul.f32 %v5483, %v6137
    %v6184 = vmul.f32 %v4715, %v6125
    %v6185 = vmul.f32 %v4717, %v6129
    %v6186 = vmul.f32 %v5487, %v6133
    %v6187 = vmul.f32 %v5489, %v6137
    %v6188 = vmul.f32 %v4719, %v6125
    %v6189 = vmul.f32 %v4721, %v6129
    %v6190 = vmul.f32 %v5491, %v6133
    %v6191 = vmul.f32 %v5493, %v6137
    %v6192 = vmul.f32 %v4725, %v6125
    %v6193 = vmul.f32 %v4727, %v6129
    %v6194 = vmul.f32 %v5497, %v6133
    %v6195 = vmul.f32 %v5499, %v6137
    %v6196 = vmul.f32 %v4729, %v6125
    %v6197 = vmul.f32 %v4731, %v6129
    %v6198 = vmul.f32 %v5501, %v6133
    %v6199 = vmul.f32 %v5503, %v6137
    %v6200 = vmul.f32 %v4735, %v6125
    %v6201 = vmul.f32 %v4737, %v6129
    %v6202 = vmul.f32 %v5507, %v6133
    %v6203 = vmul.f32 %v5509, %v6137
    %v6204 = vmul.f32 %v4739, %v6125
    %v6205 = vmul.f32 %v4741, %v6129
    %v6206 = vmul.f32 %v5511, %v6133
    %v6207 = vmul.f32 %v5513, %v6137
    %v6208 = vmul.f32 %v4745, %v6125
    %v6209 = vmul.f32 %v4747, %v6129
    %v6210 = vmul.f32 %v5517, %v6133
    %v6211 = vmul.f32 %v5519, %v6137
    %v6212 = vmul.f32 %v4749, %v6125
    %v6213 = vmul.f32 %v4751, %v6129
    %v6214 = vmul.f32 %v5521, %v6133
    %v6215 = vmul.f32 %v5523, %v6137
    %v6216 = vmul.f32 %v4755, %v6125
    %v6217 = vmul.f32 %v4757, %v6129
    %v6218 = vmul.f32 %v5527, %v6133
    %v6219 = vmul.f32 %v5529, %v6137
    %v6220 = vmul.f32 %v4759, %v6125
    %v6221 = vmul.f32 %v4761, %v6129
    %v6222 = vmul.f32 %v5531, %v6133
    %v6223 = vmul.f32 %v5533, %v6137
    %v6224 = vmul.f32 %v4765, %v6125
    %v6225 = vmul.f32 %v4767, %v6129
    %v6226 = vmul.f32 %v5537, %v6133
    %v6227 = vmul.f32 %v5539, %v6137
    %v6228 = vmul.f32 %v4769, %v6125
    %v6229 = vmul.f32 %v4771, %v6129
    %v6230 = vmul.f32 %v5541, %v6133
    %v6231 = vmul.f32 %v5543, %v6137
    %v6232 = vmul.f32 %v4775, %v6125
    %v6233 = vmul.f32 %v4777, %v6129
    %v6234 = vmul.f32 %v5547, %v6133
    %v6235 = vmul.f32 %v5549, %v6137
    %v6236 = vmul.f32 %v4779, %v6125
    %v6237 = vmul.f32 %v4781, %v6129
    %v6238 = vmul.f32 %v5551, %v6133
    %v6239 = vmul.f32 %v5553, %v6137
    %v6240 = vmul.f32 %v4785, %v6125
    %v6241 = vmul.f32 %v4787, %v6129
    %v6242 = vmul.f32 %v5557, %v6133
    %v6243 = vmul.f32 %v5559, %v6137
    %v6244 = vmul.f32 %v4789, %v6125
    %v6245 = vmul.f32 %v4791, %v6129
    %v6246 = vmul.f32 %v5561, %v6133
    %v6247 = vmul.f32 %v5563, %v6137
    %v6248 = vmul.f32 %v4795, %v6125
    %v6249 = vmul.f32 %v4797, %v6129
    %v6250 = vmul.f32 %v5567, %v6133
    %v6251 = vmul.f32 %v5569, %v6137
    %v6252 = vmul.f32 %v4799, %v6125
    %v6253 = vmul.f32 %v4801, %v6129
    %v6254 = vmul.f32 %v5571, %v6133
    %v6255 = vmul.f32 %v5573, %v6137
    %v6256 = vmul.f32 %v4805, %v6125
    %v6257 = vmul.f32 %v4807, %v6129
    %v6258 = vmul.f32 %v5577, %v6133
    %v6259 = vmul.f32 %v5579, %v6137
    %v6260 = vmul.f32 %v4809, %v6125
    %v6261 = vmul.f32 %v4811, %v6129
    %v6262 = vmul.f32 %v5581, %v6133
    %v6263 = vmul.f32 %v5583, %v6137
    %v6264 = vmul.f32 %v4815, %v6125
    %v6265 = vmul.f32 %v4817, %v6129
    %v6266 = vmul.f32 %v5587, %v6133
    %v6267 = vmul.f32 %v5589, %v6137
    %v6268 = vmul.f32 %v4819, %v6125
    %v6269 = vmul.f32 %v4821, %v6129
    %v6270 = vmul.f32 %v5591, %v6133
    %v6271 = vmul.f32 %v5593, %v6137
    %v6272 = vmul.f32 %v4825, %v6125
    %v6273 = vmul.f32 %v4827, %v6129
    %v6274 = vmul.f32 %v5597, %v6133
    %v6275 = vmul.f32 %v5599, %v6137
    %v6276 = vmul.f32 %v4829, %v6125
    %v6277 = vmul.f32 %v4831, %v6129
    %v6278 = vmul.f32 %v5601, %v6133
    %v6279 = vmul.f32 %v5603, %v6137
    %v6280 = vmul.f32 %v4835, %v6125
    %v6281 = vmul.f32 %v4837, %v6129
    %v6282 = vmul.f32 %v5607, %v6133
    %v6283 = vmul.f32 %v5609, %v6137
    %v6284 = vmul.f32 %v4839, %v6125
    %v6285 = vmul.f32 %v4841, %v6129
    %v6286 = vmul.f32 %v5611, %v6133
    %v6287 = vmul.f32 %v5613, %v6137
    %v6288 = vmul.f32 %v4845, %v6125
    %v6289 = vmul.f32 %v4847, %v6129
    %v6290 = vmul.f32 %v5617, %v6133
    %v6291 = vmul.f32 %v5619, %v6137
    %v6292 = vmul.f32 %v4849, %v6125
    %v6293 = vmul.f32 %v4851, %v6129
    %v6294 = vmul.f32 %v5621, %v6133
    %v6295 = vmul.f32 %v5623, %v6137
    %v6296 = vmul.f32 %v4855, %v6125
    %v6297 = vmul.f32 %v4857, %v6129
    %v6298 = vmul.f32 %v5627, %v6133
    %v6299 = vmul.f32 %v5629, %v6137
    %v6300 = vmul.f32 %v4859, %v6125
    %v6301 = vmul.f32 %v4861, %v6129
    %v6302 = vmul.f32 %v5631, %v6133
    %v6303 = vmul.f32 %v5633, %v6137
    %v6305 = vlaneseq
    %v6306 = vshrl.u32 %v6305, 7
    %v6307 = vsub.s32 0, %v6306
    %v6308 = vrot.slane %v6175, %v6307
    %v6309 = vlaneseq
    %v6310 = vshrl.u32 %v6309, 7
    %v6311 = vsub.s32 1, %v6310
    %v6312 = vrot.slane %v6175, %v6311
    %v6313 = vlaneseq
    %v6314 = vshrl.u32 %v6313, 7
    %v6315 = vsub.s32 2, %v6314
    %v6316 = vrot.slane %v6175, %v6315
    %v6317 = vlaneseq
    %v6318 = vshrl.u32 %v6317, 7
    %v6319 = vsub.s32 3, %v6318
    %v6320 = vrot.slane %v6175, %v6319
    %v6325 = vadd.f32 %v6176, %v6308
    %v6326 = vadd.f32 %v6177, %v6312
    %v6327 = vadd.f32 %v6178, %v6316
    %v6328 = vadd.f32 %v6179, %v6320
    %v6329 = vadd.f32 %v6180, %v6308
    %v6330 = vadd.f32 %v6181, %v6312
    %v6331 = vadd.f32 %v6182, %v6316
    %v6332 = vadd.f32 %v6183, %v6320
    %v6333 = vadd.f32 %v6184, %v6308
    %v6334 = vadd.f32 %v6185, %v6312
    %v6335 = vadd.f32 %v6186, %v6316
    %v6336 = vadd.f32 %v6187, %v6320
    %v6337 = vadd.f32 %v6188, %v6308
    %v6338 = vadd.f32 %v6189, %v6312
    %v6339 = vadd.f32 %v6190, %v6316
    %v6340 = vadd.f32 %v6191, %v6320
    %v6341 = vadd.f32 %v6192, %v6308
    %v6342 = vadd.f32 %v6193, %v6312
    %v6343 = vadd.f32 %v6194, %v6316
    %v6344 = vadd.f32 %v6195, %v6320
    %v6345 = vadd.f32 %v6196, %v6308
    %v6346 = vadd.f32 %v6197, %v6312
    %v6347 = vadd.f32 %v6198, %v6316
    %v6348 = vadd.f32 %v6199, %v6320
    %v6349 = vadd.f32 %v6200, %v6308
    %v6350 = vadd.f32 %v6201, %v6312
    %v6351 = vadd.f32 %v6202, %v6316
    %v6352 = vadd.f32 %v6203, %v6320
    %v6353 = vadd.f32 %v6204, %v6308
    %v6354 = vadd.f32 %v6205, %v6312
    %v6355 = vadd.f32 %v6206, %v6316
    %v6356 = vadd.f32 %v6207, %v6320
    %v6357 = vadd.f32 %v6208, %v6308
    %v6358 = vadd.f32 %v6209, %v6312
    %v6359 = vadd.f32 %v6210, %v6316
    %v6360 = vadd.f32 %v6211, %v6320
    %v6361 = vadd.f32 %v6212, %v6308
    %v6362 = vadd.f32 %v6213, %v6312
    %v6363 = vadd.f32 %v6214, %v6316
    %v6364 = vadd.f32 %v6215, %v6320
    %v6365 = vadd.f32 %v6216, %v6308
    %v6366 = vadd.f32 %v6217, %v6312
    %v6367 = vadd.f32 %v6218, %v6316
    %v6368 = vadd.f32 %v6219, %v6320
    %v6369 = vadd.f32 %v6220, %v6308
    %v6370 = vadd.f32 %v6221, %v6312
    %v6371 = vadd.f32 %v6222, %v6316
    %v6372 = vadd.f32 %v6223, %v6320
    %v6373 = vadd.f32 %v6224, %v6308
    %v6374 = vadd.f32 %v6225, %v6312
    %v6375 = vadd.f32 %v6226, %v6316
    %v6376 = vadd.f32 %v6227, %v6320
    %v6377 = vadd.f32 %v6228, %v6308
    %v6378 = vadd.f32 %v6229, %v6312
    %v6379 = vadd.f32 %v6230, %v6316
    %v6380 = vadd.f32 %v6231, %v6320
    %v6381 = vadd.f32 %v6232, %v6308
    %v6382 = vadd.f32 %v6233, %v6312
    %v6383 = vadd.f32 %v6234, %v6316
    %v6384 = vadd.f32 %v6235, %v6320
    %v6385 = vadd.f32 %v6236, %v6308
    %v6386 = vadd.f32 %v6237, %v6312
    %v6387 = vadd.f32 %v6238, %v6316
    %v6388 = vadd.f32 %v6239, %v6320
    %v6389 = vadd.f32 %v6240, %v6308
    %v6390 = vadd.f32 %v6241, %v6312
    %v6391 = vadd.f32 %v6242, %v6316
    %v6392 = vadd.f32 %v6243, %v6320
    %v6393 = vadd.f32 %v6244, %v6308
    %v6394 = vadd.f32 %v6245, %v6312
    %v6395 = vadd.f32 %v6246, %v6316
    %v6396 = vadd.f32 %v6247, %v6320
    %v6397 = vadd.f32 %v6248, %v6308
    %v6398 = vadd.f32 %v6249, %v6312
    %v6399 = vadd.f32 %v6250, %v6316
    %v6400 = vadd.f32 %v6251, %v6320
    %v6401 = vadd.f32 %v6252, %v6308
    %v6402 = vadd.f32 %v6253, %v6312
    %v6403 = vadd.f32 %v6254, %v6316
    %v6404 = vadd.f32 %v6255, %v6320
    %v6405 = vadd.f32 %v6256, %v6308
    %v6406 = vadd.f32 %v6257, %v6312
    %v6407 = vadd.f32 %v6258, %v6316
    %v6408 = vadd.f32 %v6259, %v6320
    %v6409 = vadd.f32 %v6260, %v6308
    %v6410 = vadd.f32 %v6261, %v6312
    %v6411 = vadd.f32 %v6262, %v6316
    %v6412 = vadd.f32 %v6263, %v6320
    %v6413 = vadd.f32 %v6264, %v6308
    %v6414 = vadd.f32 %v6265, %v6312
    %v6415 = vadd.f32 %v6266, %v6316
    %v6416 = vadd.f32 %v6267, %v6320
    %v6417 = vadd.f32 %v6268, %v6308
    %v6418 = vadd.f32 %v6269, %v6312
    %v6419 = vadd.f32 %v6270, %v6316
    %v6420 = vadd.f32 %v6271, %v6320
    %v6421 = vadd.f32 %v6272, %v6308
    %v6422 = vadd.f32 %v6273, %v6312
    %v6423 = vadd.f32 %v6274, %v6316
    %v6424 = vadd.f32 %v6275, %v6320
    %v6425 = vadd.f32 %v6276, %v6308
    %v6426 = vadd.f32 %v6277, %v6312
    %v6427 = vadd.f32 %v6278, %v6316
    %v6428 = vadd.f32 %v6279, %v6320
    %v6429 = vadd.f32 %v6280, %v6308
    %v6430 = vadd.f32 %v6281, %v6312
    %v6431 = vadd.f32 %v6282, %v6316
    %v6432 = vadd.f32 %v6283, %v6320
    %v6433 = vadd.f32 %v6284, %v6308
    %v6434 = vadd.f32 %v6285, %v6312
    %v6435 = vadd.f32 %v6286, %v6316
    %v6436 = vadd.f32 %v6287, %v6320
    %v6437 = vadd.f32 %v6288, %v6308
    %v6438 = vadd.f32 %v6289, %v6312
    %v6439 = vadd.f32 %v6290, %v6316
    %v6440 = vadd.f32 %v6291, %v6320
    %v6441 = vadd.f32 %v6292, %v6308
    %v6442 = vadd.f32 %v6293, %v6312
    %v6443 = vadd.f32 %v6294, %v6316
    %v6444 = vadd.f32 %v6295, %v6320
    %v6445 = vadd.f32 %v6296, %v6308
    %v6446 = vadd.f32 %v6297, %v6312
    %v6447 = vadd.f32 %v6298, %v6316
    %v6448 = vadd.f32 %v6299, %v6320
    %v6449 = vadd.f32 %v6300, %v6308
    %v6450 = vadd.f32 %v6301, %v6312
    %v6451 = vadd.f32 %v6302, %v6316
    %v6452 = vadd.f32 %v6303, %v6320
    %vm6453 = vcmp.ge.f32.partialorder %v6325, 0.0
    %vm6454 = vcmp.ge.f32.partialorder %v6326, 0.0
    %vm6455 = vcmp.ge.f32.partialorder %v6327, 0.0
    %vm6456 = vcmp.ge.f32.partialorder %v6328, 0.0
    %vm6457 = vcmp.ge.f32.partialorder %v6329, 0.0
    %vm6458 = vcmp.ge.f32.partialorder %v6330, 0.0
    %vm6459 = vcmp.ge.f32.partialorder %v6331, 0.0
    %vm6460 = vcmp.ge.f32.partialorder %v6332, 0.0
    %vm6461 = vcmp.ge.f32.partialorder %v6333, 0.0
    %vm6462 = vcmp.ge.f32.partialorder %v6334, 0.0
    %vm6463 = vcmp.ge.f32.partialorder %v6335, 0.0
    %vm6464 = vcmp.ge.f32.partialorder %v6336, 0.0
    %vm6465 = vcmp.ge.f32.partialorder %v6337, 0.0
    %vm6466 = vcmp.ge.f32.partialorder %v6338, 0.0
    %vm6467 = vcmp.ge.f32.partialorder %v6339, 0.0
    %vm6468 = vcmp.ge.f32.partialorder %v6340, 0.0
    %vm6469 = vcmp.ge.f32.partialorder %v6341, 0.0
    %vm6470 = vcmp.ge.f32.partialorder %v6342, 0.0
    %vm6471 = vcmp.ge.f32.partialorder %v6343, 0.0
    %vm6472 = vcmp.ge.f32.partialorder %v6344, 0.0
    %vm6473 = vcmp.ge.f32.partialorder %v6345, 0.0
    %vm6474 = vcmp.ge.f32.partialorder %v6346, 0.0
    %vm6475 = vcmp.ge.f32.partialorder %v6347, 0.0
    %vm6476 = vcmp.ge.f32.partialorder %v6348, 0.0
    %vm6477 = vcmp.ge.f32.partialorder %v6349, 0.0
    %vm6478 = vcmp.ge.f32.partialorder %v6350, 0.0
    %vm6479 = vcmp.ge.f32.partialorder %v6351, 0.0
    %vm6480 = vcmp.ge.f32.partialorder %v6352, 0.0
    %vm6481 = vcmp.ge.f32.partialorder %v6353, 0.0
    %vm6482 = vcmp.ge.f32.partialorder %v6354, 0.0
    %vm6483 = vcmp.ge.f32.partialorder %v6355, 0.0
    %vm6484 = vcmp.ge.f32.partialorder %v6356, 0.0
    %vm6485 = vcmp.ge.f32.partialorder %v6357, 0.0
    %vm6486 = vcmp.ge.f32.partialorder %v6358, 0.0
    %vm6487 = vcmp.ge.f32.partialorder %v6359, 0.0
    %vm6488 = vcmp.ge.f32.partialorder %v6360, 0.0
    %vm6489 = vcmp.ge.f32.partialorder %v6361, 0.0
    %vm6490 = vcmp.ge.f32.partialorder %v6362, 0.0
    %vm6491 = vcmp.ge.f32.partialorder %v6363, 0.0
    %vm6492 = vcmp.ge.f32.partialorder %v6364, 0.0
    %vm6493 = vcmp.ge.f32.partialorder %v6365, 0.0
    %vm6494 = vcmp.ge.f32.partialorder %v6366, 0.0
    %vm6495 = vcmp.ge.f32.partialorder %v6367, 0.0
    %vm6496 = vcmp.ge.f32.partialorder %v6368, 0.0
    %vm6497 = vcmp.ge.f32.partialorder %v6369, 0.0
    %vm6498 = vcmp.ge.f32.partialorder %v6370, 0.0
    %vm6499 = vcmp.ge.f32.partialorder %v6371, 0.0
    %vm6500 = vcmp.ge.f32.partialorder %v6372, 0.0
    %vm6501 = vcmp.ge.f32.partialorder %v6373, 0.0
    %vm6502 = vcmp.ge.f32.partialorder %v6374, 0.0
    %vm6503 = vcmp.ge.f32.partialorder %v6375, 0.0
    %vm6504 = vcmp.ge.f32.partialorder %v6376, 0.0
    %vm6505 = vcmp.ge.f32.partialorder %v6377, 0.0
    %vm6506 = vcmp.ge.f32.partialorder %v6378, 0.0
    %vm6507 = vcmp.ge.f32.partialorder %v6379, 0.0
    %vm6508 = vcmp.ge.f32.partialorder %v6380, 0.0
    %vm6509 = vcmp.ge.f32.partialorder %v6381, 0.0
    %vm6510 = vcmp.ge.f32.partialorder %v6382, 0.0
    %vm6511 = vcmp.ge.f32.partialorder %v6383, 0.0
    %vm6512 = vcmp.ge.f32.partialorder %v6384, 0.0
    %vm6513 = vcmp.ge.f32.partialorder %v6385, 0.0
    %vm6514 = vcmp.ge.f32.partialorder %v6386, 0.0
    %vm6515 = vcmp.ge.f32.partialorder %v6387, 0.0
    %vm6516 = vcmp.ge.f32.partialorder %v6388, 0.0
    %vm6517 = vcmp.ge.f32.partialorder %v6389, 0.0
    %vm6518 = vcmp.ge.f32.partialorder %v6390, 0.0
    %vm6519 = vcmp.ge.f32.partialorder %v6391, 0.0
    %vm6520 = vcmp.ge.f32.partialorder %v6392, 0.0
    %vm6521 = vcmp.ge.f32.partialorder %v6393, 0.0
    %vm6522 = vcmp.ge.f32.partialorder %v6394, 0.0
    %vm6523 = vcmp.ge.f32.partialorder %v6395, 0.0
    %vm6524 = vcmp.ge.f32.partialorder %v6396, 0.0
    %vm6525 = vcmp.ge.f32.partialorder %v6397, 0.0
    %vm6526 = vcmp.ge.f32.partialorder %v6398, 0.0
    %vm6527 = vcmp.ge.f32.partialorder %v6399, 0.0
    %vm6528 = vcmp.ge.f32.partialorder %v6400, 0.0
    %vm6529 = vcmp.ge.f32.partialorder %v6401, 0.0
    %vm6530 = vcmp.ge.f32.partialorder %v6402, 0.0
    %vm6531 = vcmp.ge.f32.partialorder %v6403, 0.0
    %vm6532 = vcmp.ge.f32.partialorder %v6404, 0.0
    %vm6533 = vcmp.ge.f32.partialorder %v6405, 0.0
    %vm6534 = vcmp.ge.f32.partialorder %v6406, 0.0
    %vm6535 = vcmp.ge.f32.partialorder %v6407, 0.0
    %vm6536 = vcmp.ge.f32.partialorder %v6408, 0.0
    %vm6537 = vcmp.ge.f32.partialorder %v6409, 0.0
    %vm6538 = vcmp.ge.f32.partialorder %v6410, 0.0
    %vm6539 = vcmp.ge.f32.partialorder %v6411, 0.0
    %vm6540 = vcmp.ge.f32.partialorder %v6412, 0.0
    %vm6541 = vcmp.ge.f32.partialorder %v6413, 0.0
    %vm6542 = vcmp.ge.f32.partialorder %v6414, 0.0
    %vm6543 = vcmp.ge.f32.partialorder %v6415, 0.0
    %vm6544 = vcmp.ge.f32.partialorder %v6416, 0.0
    %vm6545 = vcmp.ge.f32.partialorder %v6417, 0.0
    %vm6546 = vcmp.ge.f32.partialorder %v6418, 0.0
    %vm6547 = vcmp.ge.f32.partialorder %v6419, 0.0
    %vm6548 = vcmp.ge.f32.partialorder %v6420, 0.0
    %vm6549 = vcmp.ge.f32.partialorder %v6421, 0.0
    %vm6550 = vcmp.ge.f32.partialorder %v6422, 0.0
    %vm6551 = vcmp.ge.f32.partialorder %v6423, 0.0
    %vm6552 = vcmp.ge.f32.partialorder %v6424, 0.0
    %vm6553 = vcmp.ge.f32.partialorder %v6425, 0.0
    %vm6554 = vcmp.ge.f32.partialorder %v6426, 0.0
    %vm6555 = vcmp.ge.f32.partialorder %v6427, 0.0
    %vm6556 = vcmp.ge.f32.partialorder %v6428, 0.0
    %vm6557 = vcmp.ge.f32.partialorder %v6429, 0.0
    %vm6558 = vcmp.ge.f32.partialorder %v6430, 0.0
    %vm6559 = vcmp.ge.f32.partialorder %v6431, 0.0
    %vm6560 = vcmp.ge.f32.partialorder %v6432, 0.0
    %vm6561 = vcmp.ge.f32.partialorder %v6433, 0.0
    %vm6562 = vcmp.ge.f32.partialorder %v6434, 0.0
    %vm6563 = vcmp.ge.f32.partialorder %v6435, 0.0
    %vm6564 = vcmp.ge.f32.partialorder %v6436, 0.0
    %vm6565 = vcmp.ge.f32.partialorder %v6437, 0.0
    %vm6566 = vcmp.ge.f32.partialorder %v6438, 0.0
    %vm6567 = vcmp.ge.f32.partialorder %v6439, 0.0
    %vm6568 = vcmp.ge.f32.partialorder %v6440, 0.0
    %vm6569 = vcmp.ge.f32.partialorder %v6441, 0.0
    %vm6570 = vcmp.ge.f32.partialorder %v6442, 0.0
    %vm6571 = vcmp.ge.f32.partialorder %v6443, 0.0
    %vm6572 = vcmp.ge.f32.partialorder %v6444, 0.0
    %vm6573 = vcmp.ge.f32.partialorder %v6445, 0.0
    %vm6574 = vcmp.ge.f32.partialorder %v6446, 0.0
    %vm6575 = vcmp.ge.f32.partialorder %v6447, 0.0
    %vm6576 = vcmp.ge.f32.partialorder %v6448, 0.0
    %vm6577 = vcmp.ge.f32.partialorder %v6449, 0.0
    %vm6578 = vcmp.ge.f32.partialorder %v6450, 0.0
    %vm6579 = vcmp.ge.f32.partialorder %v6451, 0.0
    %vm6580 = vcmp.ge.f32.partialorder %v6452, 0.0
    %v6581 = vmul.f32 %v6325, 0.01
    %v6582 = vmul.f32 %v6326, 0.01
    %v6583 = vmul.f32 %v6327, 0.01
    %v6584 = vmul.f32 %v6328, 0.01
    %v6585 = vmul.f32 %v6329, 0.01
    %v6586 = vmul.f32 %v6330, 0.01
    %v6587 = vmul.f32 %v6331, 0.01
    %v6588 = vmul.f32 %v6332, 0.01
    %v6589 = vmul.f32 %v6333, 0.01
    %v6590 = vmul.f32 %v6334, 0.01
    %v6591 = vmul.f32 %v6335, 0.01
    %v6592 = vmul.f32 %v6336, 0.01
    %v6593 = vmul.f32 %v6337, 0.01
    %v6594 = vmul.f32 %v6338, 0.01
    %v6595 = vmul.f32 %v6339, 0.01
    %v6596 = vmul.f32 %v6340, 0.01
    %v6597 = vmul.f32 %v6341, 0.01
    %v6598 = vmul.f32 %v6342, 0.01
    %v6599 = vmul.f32 %v6343, 0.01
    %v6600 = vmul.f32 %v6344, 0.01
    %v6601 = vmul.f32 %v6345, 0.01
    %v6602 = vmul.f32 %v6346, 0.01
    %v6603 = vmul.f32 %v6347, 0.01
    %v6604 = vmul.f32 %v6348, 0.01
    %v6605 = vmul.f32 %v6349, 0.01
    %v6606 = vmul.f32 %v6350, 0.01
    %v6607 = vmul.f32 %v6351, 0.01
    %v6608 = vmul.f32 %v6352, 0.01
    %v6609 = vmul.f32 %v6353, 0.01
    %v6610 = vmul.f32 %v6354, 0.01
    %v6611 = vmul.f32 %v6355, 0.01
    %v6612 = vmul.f32 %v6356, 0.01
    %v6613 = vmul.f32 %v6357, 0.01
    %v6614 = vmul.f32 %v6358, 0.01
    %v6615 = vmul.f32 %v6359, 0.01
    %v6616 = vmul.f32 %v6360, 0.01
    %v6617 = vmul.f32 %v6361, 0.01
    %v6618 = vmul.f32 %v6362, 0.01
    %v6619 = vmul.f32 %v6363, 0.01
    %v6620 = vmul.f32 %v6364, 0.01
    %v6621 = vmul.f32 %v6365, 0.01
    %v6622 = vmul.f32 %v6366, 0.01
    %v6623 = vmul.f32 %v6367, 0.01
    %v6624 = vmul.f32 %v6368, 0.01
    %v6625 = vmul.f32 %v6369, 0.01
    %v6626 = vmul.f32 %v6370, 0.01
    %v6627 = vmul.f32 %v6371, 0.01
    %v6628 = vmul.f32 %v6372, 0.01
    %v6629 = vmul.f32 %v6373, 0.01
    %v6630 = vmul.f32 %v6374, 0.01
    %v6631 = vmul.f32 %v6375, 0.01
    %v6632 = vmul.f32 %v6376, 0.01
    %v6633 = vmul.f32 %v6377, 0.01
    %v6634 = vmul.f32 %v6378, 0.01
    %v6635 = vmul.f32 %v6379, 0.01
    %v6636 = vmul.f32 %v6380, 0.01
    %v6637 = vmul.f32 %v6381, 0.01
    %v6638 = vmul.f32 %v6382, 0.01
    %v6639 = vmul.f32 %v6383, 0.01
    %v6640 = vmul.f32 %v6384, 0.01
    %v6641 = vmul.f32 %v6385, 0.01
    %v6642 = vmul.f32 %v6386, 0.01
    %v6643 = vmul.f32 %v6387, 0.01
    %v6644 = vmul.f32 %v6388, 0.01
    %v6645 = vmul.f32 %v6389, 0.01
    %v6646 = vmul.f32 %v6390, 0.01
    %v6647 = vmul.f32 %v6391, 0.01
    %v6648 = vmul.f32 %v6392, 0.01
    %v6649 = vmul.f32 %v6393, 0.01
    %v6650 = vmul.f32 %v6394, 0.01
    %v6651 = vmul.f32 %v6395, 0.01
    %v6652 = vmul.f32 %v6396, 0.01
    %v6653 = vmul.f32 %v6397, 0.01
    %v6654 = vmul.f32 %v6398, 0.01
    %v6655 = vmul.f32 %v6399, 0.01
    %v6656 = vmul.f32 %v6400, 0.01
    %v6657 = vmul.f32 %v6401, 0.01
    %v6658 = vmul.f32 %v6402, 0.01
    %v6659 = vmul.f32 %v6403, 0.01
    %v6660 = vmul.f32 %v6404, 0.01
    %v6661 = vmul.f32 %v6405, 0.01
    %v6662 = vmul.f32 %v6406, 0.01
    %v6663 = vmul.f32 %v6407, 0.01
    %v6664 = vmul.f32 %v6408, 0.01
    %v6665 = vmul.f32 %v6409, 0.01
    %v6666 = vmul.f32 %v6410, 0.01
    %v6667 = vmul.f32 %v6411, 0.01
    %v6668 = vmul.f32 %v6412, 0.01
    %v6669 = vmul.f32 %v6413, 0.01
    %v6670 = vmul.f32 %v6414, 0.01
    %v6671 = vmul.f32 %v6415, 0.01
    %v6672 = vmul.f32 %v6416, 0.01
    %v6673 = vmul.f32 %v6417, 0.01
    %v6674 = vmul.f32 %v6418, 0.01
    %v6675 = vmul.f32 %v6419, 0.01
    %v6676 = vmul.f32 %v6420, 0.01
    %v6677 = vmul.f32 %v6421, 0.01
    %v6678 = vmul.f32 %v6422, 0.01
    %v6679 = vmul.f32 %v6423, 0.01
    %v6680 = vmul.f32 %v6424, 0.01
    %v6681 = vmul.f32 %v6425, 0.01
    %v6682 = vmul.f32 %v6426, 0.01
    %v6683 = vmul.f32 %v6427, 0.01
    %v6684 = vmul.f32 %v6428, 0.01
    %v6685 = vmul.f32 %v6429, 0.01
    %v6686 = vmul.f32 %v6430, 0.01
    %v6687 = vmul.f32 %v6431, 0.01
    %v6688 = vmul.f32 %v6432, 0.01
    %v6689 = vmul.f32 %v6433, 0.01
    %v6690 = vmul.f32 %v6434, 0.01
    %v6691 = vmul.f32 %v6435, 0.01
    %v6692 = vmul.f32 %v6436, 0.01
    %v6693 = vmul.f32 %v6437, 0.01
    %v6694 = vmul.f32 %v6438, 0.01
    %v6695 = vmul.f32 %v6439, 0.01
    %v6696 = vmul.f32 %v6440, 0.01
    %v6697 = vmul.f32 %v6441, 0.01
    %v6698 = vmul.f32 %v6442, 0.01
    %v6699 = vmul.f32 %v6443, 0.01
    %v6700 = vmul.f32 %v6444, 0.01
    %v6701 = vmul.f32 %v6445, 0.01
    %v6702 = vmul.f32 %v6446, 0.01
    %v6703 = vmul.f32 %v6447, 0.01
    %v6704 = vmul.f32 %v6448, 0.01
    %v6705 = vmul.f32 %v6449, 0.01
    %v6706 = vmul.f32 %v6450, 0.01
    %v6707 = vmul.f32 %v6451, 0.01
    %v6708 = vmul.f32 %v6452, 0.01
    %v6709 = vsel %vm6453, %v6325, %v6581
    %v6710 = vsel %vm6454, %v6326, %v6582
    %v6711 = vsel %vm6455, %v6327, %v6583
    %v6712 = vsel %vm6456, %v6328, %v6584
    %v6713 = vsel %vm6457, %v6329, %v6585
    %v6714 = vsel %vm6458, %v6330, %v6586
    %v6715 = vsel %vm6459, %v6331, %v6587
    %v6716 = vsel %vm6460, %v6332, %v6588
    %v6717 = vsel %vm6461, %v6333, %v6589
    %v6718 = vsel %vm6462, %v6334, %v6590
    %v6719 = vsel %vm6463, %v6335, %v6591
    %v6720 = vsel %vm6464, %v6336, %v6592
    %v6721 = vsel %vm6465, %v6337, %v6593
    %v6722 = vsel %vm6466, %v6338, %v6594
    %v6723 = vsel %vm6467, %v6339, %v6595
    %v6724 = vsel %vm6468, %v6340, %v6596
    %v6725 = vsel %vm6469, %v6341, %v6597
    %v6726 = vsel %vm6470, %v6342, %v6598
    %v6727 = vsel %vm6471, %v6343, %v6599
    %v6728 = vsel %vm6472, %v6344, %v6600
    %v6729 = vsel %vm6473, %v6345, %v6601
    %v6730 = vsel %vm6474, %v6346, %v6602
    %v6731 = vsel %vm6475, %v6347, %v6603
    %v6732 = vsel %vm6476, %v6348, %v6604
    %v6733 = vsel %vm6477, %v6349, %v6605
    %v6734 = vsel %vm6478, %v6350, %v6606
    %v6735 = vsel %vm6479, %v6351, %v6607
    %v6736 = vsel %vm6480, %v6352, %v6608
    %v6737 = vsel %vm6481, %v6353, %v6609
    %v6738 = vsel %vm6482, %v6354, %v6610
    %v6739 = vsel %vm6483, %v6355, %v6611
    %v6740 = vsel %vm6484, %v6356, %v6612
    %v6741 = vsel %vm6485, %v6357, %v6613
    %v6742 = vsel %vm6486, %v6358, %v6614
    %v6743 = vsel %vm6487, %v6359, %v6615
    %v6744 = vsel %vm6488, %v6360, %v6616
    %v6745 = vsel %vm6489, %v6361, %v6617
    %v6746 = vsel %vm6490, %v6362, %v6618
    %v6747 = vsel %vm6491, %v6363, %v6619
    %v6748 = vsel %vm6492, %v6364, %v6620
    %v6749 = vsel %vm6493, %v6365, %v6621
    %v6750 = vsel %vm6494, %v6366, %v6622
    %v6751 = vsel %vm6495, %v6367, %v6623
    %v6752 = vsel %vm6496, %v6368, %v6624
    %v6753 = vsel %vm6497, %v6369, %v6625
    %v6754 = vsel %vm6498, %v6370, %v6626
    %v6755 = vsel %vm6499, %v6371, %v6627
    %v6756 = vsel %vm6500, %v6372, %v6628
    %v6757 = vsel %vm6501, %v6373, %v6629
    %v6758 = vsel %vm6502, %v6374, %v6630
    %v6759 = vsel %vm6503, %v6375, %v6631
    %v6760 = vsel %vm6504, %v6376, %v6632
    %v6761 = vsel %vm6505, %v6377, %v6633
    %v6762 = vsel %vm6506, %v6378, %v6634
    %v6763 = vsel %vm6507, %v6379, %v6635
    %v6764 = vsel %vm6508, %v6380, %v6636
    %v6765 = vsel %vm6509, %v6381, %v6637
    %v6766 = vsel %vm6510, %v6382, %v6638
    %v6767 = vsel %vm6511, %v6383, %v6639
    %v6768 = vsel %vm6512, %v6384, %v6640
    %v6769 = vsel %vm6513, %v6385, %v6641
    %v6770 = vsel %vm6514, %v6386, %v6642
    %v6771 = vsel %vm6515, %v6387, %v6643
    %v6772 = vsel %vm6516, %v6388, %v6644
    %v6773 = vsel %vm6517, %v6389, %v6645
    %v6774 = vsel %vm6518, %v6390, %v6646
    %v6775 = vsel %vm6519, %v6391, %v6647
    %v6776 = vsel %vm6520, %v6392, %v6648
    %v6777 = vsel %vm6521, %v6393, %v6649
    %v6778 = vsel %vm6522, %v6394, %v6650
    %v6779 = vsel %vm6523, %v6395, %v6651
    %v6780 = vsel %vm6524, %v6396, %v6652
    %v6781 = vsel %vm6525, %v6397, %v6653
    %v6782 = vsel %vm6526, %v6398, %v6654
    %v6783 = vsel %vm6527, %v6399, %v6655
    %v6784 = vsel %vm6528, %v6400, %v6656
    %v6785 = vsel %vm6529, %v6401, %v6657
    %v6786 = vsel %vm6530, %v6402, %v6658
    %v6787 = vsel %vm6531, %v6403, %v6659
    %v6788 = vsel %vm6532, %v6404, %v6660
    %v6789 = vsel %vm6533, %v6405, %v6661
    %v6790 = vsel %vm6534, %v6406, %v6662
    %v6791 = vsel %vm6535, %v6407, %v6663
    %v6792 = vsel %vm6536, %v6408, %v6664
    %v6793 = vsel %vm6537, %v6409, %v6665
    %v6794 = vsel %vm6538, %v6410, %v6666
    %v6795 = vsel %vm6539, %v6411, %v6667
    %v6796 = vsel %vm6540, %v6412, %v6668
    %v6797 = vsel %vm6541, %v6413, %v6669
    %v6798 = vsel %vm6542, %v6414, %v6670
    %v6799 = vsel %vm6543, %v6415, %v6671
    %v6800 = vsel %vm6544, %v6416, %v6672
    %v6801 = vsel %vm6545, %v6417, %v6673
    %v6802 = vsel %vm6546, %v6418, %v6674
    %v6803 = vsel %vm6547, %v6419, %v6675
    %v6804 = vsel %vm6548, %v6420, %v6676
    %v6805 = vsel %vm6549, %v6421, %v6677
    %v6806 = vsel %vm6550, %v6422, %v6678
    %v6807 = vsel %vm6551, %v6423, %v6679
    %v6808 = vsel %vm6552, %v6424, %v6680
    %v6809 = vsel %vm6553, %v6425, %v6681
    %v6810 = vsel %vm6554, %v6426, %v6682
    %v6811 = vsel %vm6555, %v6427, %v6683
    %v6812 = vsel %vm6556, %v6428, %v6684
    %v6813 = vsel %vm6557, %v6429, %v6685
    %v6814 = vsel %vm6558, %v6430, %v6686
    %v6815 = vsel %vm6559, %v6431, %v6687
    %v6816 = vsel %vm6560, %v6432, %v6688
    %v6817 = vsel %vm6561, %v6433, %v6689
    %v6818 = vsel %vm6562, %v6434, %v6690
    %v6819 = vsel %vm6563, %v6435, %v6691
    %v6820 = vsel %vm6564, %v6436, %v6692
    %v6821 = vsel %vm6565, %v6437, %v6693
    %v6822 = vsel %vm6566, %v6438, %v6694
    %v6823 = vsel %vm6567, %v6439, %v6695
    %v6824 = vsel %vm6568, %v6440, %v6696
    %v6825 = vsel %vm6569, %v6441, %v6697
    %v6826 = vsel %vm6570, %v6442, %v6698
    %v6827 = vsel %vm6571, %v6443, %v6699
    %v6828 = vsel %vm6572, %v6444, %v6700
    %v6829 = vsel %vm6573, %v6445, %v6701
    %v6830 = vsel %vm6574, %v6446, %v6702
    %v6831 = vsel %vm6575, %v6447, %v6703
    %v6832 = vsel %vm6576, %v6448, %v6704
    %v6833 = vsel %vm6577, %v6449, %v6705
    %v6834 = vsel %vm6578, %v6450, %v6706
    %v6835 = vsel %vm6579, %v6451, %v6707
    %v6836 = vsel %vm6580, %v6452, %v6708
    %s6837 = smul.u32 4, 64
    %s6838 = smul.u32 %s6837, 2
    %s6839 = sshll.u32 %s6838, 4
    %6840 = dma.done %s71, %s6839
    %v6841 = vpack.c.bf16 %v6713, %v6709
    %v6842 = vpack.c.bf16 %v6714, %v6710
    %v6843 = vpack.c.bf16 %v6715, %v6711
    %v6844 = vpack.c.bf16 %v6716, %v6712
    %v6845 = vpack.c.bf16 %v6721, %v6717
    %v6846 = vpack.c.bf16 %v6722, %v6718
    %v6847 = vpack.c.bf16 %v6723, %v6719
    %v6848 = vpack.c.bf16 %v6724, %v6720
    %v6849 = vpack.c.bf16 %v6729, %v6725
    %v6850 = vpack.c.bf16 %v6730, %v6726
    %v6851 = vpack.c.bf16 %v6731, %v6727
    %v6852 = vpack.c.bf16 %v6732, %v6728
    %v6853 = vpack.c.bf16 %v6737, %v6733
    %v6854 = vpack.c.bf16 %v6738, %v6734
    %v6855 = vpack.c.bf16 %v6739, %v6735
    %v6856 = vpack.c.bf16 %v6740, %v6736
    %v6857 = vpack.c.bf16 %v6745, %v6741
    %v6858 = vpack.c.bf16 %v6746, %v6742
    %v6859 = vpack.c.bf16 %v6747, %v6743
    %v6860 = vpack.c.bf16 %v6748, %v6744
    %v6861 = vpack.c.bf16 %v6753, %v6749
    %v6862 = vpack.c.bf16 %v6754, %v6750
    %v6863 = vpack.c.bf16 %v6755, %v6751
    %v6864 = vpack.c.bf16 %v6756, %v6752
    %v6865 = vpack.c.bf16 %v6761, %v6757
    %v6866 = vpack.c.bf16 %v6762, %v6758
    %v6867 = vpack.c.bf16 %v6763, %v6759
    %v6868 = vpack.c.bf16 %v6764, %v6760
    %v6869 = vpack.c.bf16 %v6769, %v6765
    %v6870 = vpack.c.bf16 %v6770, %v6766
    %v6871 = vpack.c.bf16 %v6771, %v6767
    %v6872 = vpack.c.bf16 %v6772, %v6768
    %v6873 = vpack.c.bf16 %v6777, %v6773
    %v6874 = vpack.c.bf16 %v6778, %v6774
    %v6875 = vpack.c.bf16 %v6779, %v6775
    %v6876 = vpack.c.bf16 %v6780, %v6776
    %v6877 = vpack.c.bf16 %v6785, %v6781
    %v6878 = vpack.c.bf16 %v6786, %v6782
    %v6879 = vpack.c.bf16 %v6787, %v6783
    %v6880 = vpack.c.bf16 %v6788, %v6784
    %v6881 = vpack.c.bf16 %v6793, %v6789
    %v6882 = vpack.c.bf16 %v6794, %v6790
    %v6883 = vpack.c.bf16 %v6795, %v6791
    %v6884 = vpack.c.bf16 %v6796, %v6792
    %v6885 = vpack.c.bf16 %v6801, %v6797
    %v6886 = vpack.c.bf16 %v6802, %v6798
    %v6887 = vpack.c.bf16 %v6803, %v6799
    %v6888 = vpack.c.bf16 %v6804, %v6800
    %v6889 = vpack.c.bf16 %v6809, %v6805
    %v6890 = vpack.c.bf16 %v6810, %v6806
    %v6891 = vpack.c.bf16 %v6811, %v6807
    %v6892 = vpack.c.bf16 %v6812, %v6808
    %v6893 = vpack.c.bf16 %v6817, %v6813
    %v6894 = vpack.c.bf16 %v6818, %v6814
    %v6895 = vpack.c.bf16 %v6819, %v6815
    %v6896 = vpack.c.bf16 %v6820, %v6816
    %v6897 = vpack.c.bf16 %v6825, %v6821
    %v6898 = vpack.c.bf16 %v6826, %v6822
    %v6899 = vpack.c.bf16 %v6827, %v6823
    %v6900 = vpack.c.bf16 %v6828, %v6824
    %v6901 = vpack.c.bf16 %v6833, %v6829
    %v6902 = vpack.c.bf16 %v6834, %v6830
    %v6903 = vpack.c.bf16 %v6835, %v6831
    %v6904 = vpack.c.bf16 %v6836, %v6832
    %v6905 = vld [vmem:[#allocation3] sm:$0xff]
    %v6906 = vld [vmem:[#allocation3 + $0x8] sm:$0xff]
    %v6907 = vld [vmem:[#allocation3 + $0x10] sm:$0xff]
    %v6908 = vld [vmem:[#allocation3 + $0x18] sm:$0xff]
    %v6909 = vld [vmem:[#allocation3 + $0x20] sm:$0xff]
    %v6910 = vld [vmem:[#allocation3 + $0x28] sm:$0xff]
    %v6911 = vld [vmem:[#allocation3 + $0x30] sm:$0xff]
    %v6912 = vld [vmem:[#allocation3 + $0x38] sm:$0xff]
    %v6913 = vld [vmem:[#allocation3 + $0x40] sm:$0xff]
    %v6914 = vld [vmem:[#allocation3 + $0x48] sm:$0xff]
    %v6915 = vld [vmem:[#allocation3 + $0x50] sm:$0xff]
    %v6916 = vld [vmem:[#allocation3 + $0x58] sm:$0xff]
    %v6917 = vld [vmem:[#allocation3 + $0x60] sm:$0xff]
    %v6918 = vld [vmem:[#allocation3 + $0x68] sm:$0xff]
    %v6919 = vld [vmem:[#allocation3 + $0x70] sm:$0xff]
    %v6920 = vld [vmem:[#allocation3 + $0x78] sm:$0xff]
    %v6921 = vld [vmem:[#allocation3 + $0x80] sm:$0xff]
    %v6922 = vld [vmem:[#allocation3 + $0x88] sm:$0xff]
    %v6923 = vld [vmem:[#allocation3 + $0x90] sm:$0xff]
    %v6924 = vld [vmem:[#allocation3 + $0x98] sm:$0xff]
    %v6925 = vld [vmem:[#allocation3 + $0xa0] sm:$0xff]
    %v6926 = vld [vmem:[#allocation3 + $0xa8] sm:$0xff]
    %v6927 = vld [vmem:[#allocation3 + $0xb0] sm:$0xff]
    %v6928 = vld [vmem:[#allocation3 + $0xb8] sm:$0xff]
    %v6929 = vld [vmem:[#allocation3 + $0xc0] sm:$0xff]
    %v6930 = vld [vmem:[#allocation3 + $0xc8] sm:$0xff]
    %v6931 = vld [vmem:[#allocation3 + $0xd0] sm:$0xff]
    %v6932 = vld [vmem:[#allocation3 + $0xd8] sm:$0xff]
    %v6933 = vld [vmem:[#allocation3 + $0xe0] sm:$0xff]
    %v6934 = vld [vmem:[#allocation3 + $0xe8] sm:$0xff]
    %v6935 = vld [vmem:[#allocation3 + $0xf0] sm:$0xff]
    %v6936 = vld [vmem:[#allocation3 + $0xf8] sm:$0xff]
    %v6937 = vld [vmem:[#allocation3 + $0x100] sm:$0xff]
    %v6938 = vld [vmem:[#allocation3 + $0x108] sm:$0xff]
    %v6939 = vld [vmem:[#allocation3 + $0x110] sm:$0xff]
    %v6940 = vld [vmem:[#allocation3 + $0x118] sm:$0xff]
    %v6941 = vld [vmem:[#allocation3 + $0x120] sm:$0xff]
    %v6942 = vld [vmem:[#allocation3 + $0x128] sm:$0xff]
    %v6943 = vld [vmem:[#allocation3 + $0x130] sm:$0xff]
    %v6944 = vld [vmem:[#allocation3 + $0x138] sm:$0xff]
    %v6945 = vld [vmem:[#allocation3 + $0x140] sm:$0xff]
    %v6946 = vld [vmem:[#allocation3 + $0x148] sm:$0xff]
    %v6947 = vld [vmem:[#allocation3 + $0x150] sm:$0xff]
    %v6948 = vld [vmem:[#allocation3 + $0x158] sm:$0xff]
    %v6949 = vld [vmem:[#allocation3 + $0x160] sm:$0xff]
    %v6950 = vld [vmem:[#allocation3 + $0x168] sm:$0xff]
    %v6951 = vld [vmem:[#allocation3 + $0x170] sm:$0xff]
    %v6952 = vld [vmem:[#allocation3 + $0x178] sm:$0xff]
    %v6953 = vld [vmem:[#allocation3 + $0x180] sm:$0xff]
    %v6954 = vld [vmem:[#allocation3 + $0x188] sm:$0xff]
    %v6955 = vld [vmem:[#allocation3 + $0x190] sm:$0xff]
    %v6956 = vld [vmem:[#allocation3 + $0x198] sm:$0xff]
    %v6957 = vld [vmem:[#allocation3 + $0x1a0] sm:$0xff]
    %v6958 = vld [vmem:[#allocation3 + $0x1a8] sm:$0xff]
    %v6959 = vld [vmem:[#allocation3 + $0x1b0] sm:$0xff]
    %v6960 = vld [vmem:[#allocation3 + $0x1b8] sm:$0xff]
    %v6961 = vld [vmem:[#allocation3 + $0x1c0] sm:$0xff]
    %v6962 = vld [vmem:[#allocation3 + $0x1c8] sm:$0xff]
    %v6963 = vld [vmem:[#allocation3 + $0x1d0] sm:$0xff]
    %v6964 = vld [vmem:[#allocation3 + $0x1d8] sm:$0xff]
    %v6965 = vld [vmem:[#allocation3 + $0x1e0] sm:$0xff]
    %v6966 = vld [vmem:[#allocation3 + $0x1e8] sm:$0xff]
    %v6967 = vld [vmem:[#allocation3 + $0x1f0] sm:$0xff]
    %v6968 = vld [vmem:[#allocation3 + $0x1f8] sm:$0xff]
    %6969 = vmatprep.subr.bf16.mxu0 %v6906
    %6970 = vmatpush1.bf16.msra.mxu0 %v6905
    %6971 = vmatprep.subr.bf16.mxu0 %v6908
    %6972 = vmatpush1.bf16.msra.mxu0 %v6907
    %6973 = vmatprep.subr.bf16.mxu0 %v6910
    %6974 = vmatpush1.bf16.msra.mxu0 %v6909
    %6975 = vmatprep.subr.bf16.mxu0 %v6912
    %6976 = vmatpush1.bf16.msra.mxu0 %v6911
    %6977 = vmatprep.subr.bf16.mxu0 %v6914
    %6978 = vmatpush1.bf16.msra.mxu0 %v6913
    %6979 = vmatprep.subr.bf16.mxu0 %v6916
    %6980 = vmatpush1.bf16.msra.mxu0 %v6915
    %6981 = vmatprep.subr.bf16.mxu0 %v6918
    %6982 = vmatpush1.bf16.msra.mxu0 %v6917
    %6983 = vmatprep.subr.bf16.mxu0 %v6920
    %6984 = vmatpush1.bf16.msra.mxu0 %v6919
    %6985 = vmatprep.subr.bf16.mxu0 %v6922
    %6986 = vmatpush1.bf16.msra.mxu0 %v6921
    %6987 = vmatprep.subr.bf16.mxu0 %v6924
    %6988 = vmatpush1.bf16.msra.mxu0 %v6923
    %6989 = vmatprep.subr.bf16.mxu0 %v6926
    %6990 = vmatpush1.bf16.msra.mxu0 %v6925
    %6991 = vmatprep.subr.bf16.mxu0 %v6928
    %6992 = vmatpush1.bf16.msra.mxu0 %v6927
    %6993 = vmatprep.subr.bf16.mxu0 %v6930
    %6994 = vmatpush1.bf16.msra.mxu0 %v6929
    %6995 = vmatprep.subr.bf16.mxu0 %v6932
    %6996 = vmatpush1.bf16.msra.mxu0 %v6931
    %6997 = vmatprep.subr.bf16.mxu0 %v6934
    %6998 = vmatpush1.bf16.msra.mxu0 %v6933
    %6999 = vmatprep.subr.bf16.mxu0 %v6936
    %7000 = vmatpush1.bf16.msra.mxu0 %v6935
    %7001 = vmatprep.mubr.bf16.mxu0 %v6842
    %7002 = vmatmul.mubr.bf16.gmra.mrb[0].mxu0 %v6841
    %v7003 = vpop.f32.mrb[0].mxu0
    %v7004 = vadd.f32 0.0, %v7003
    %v7005 = vpop.f32.mrb[0].mxu0
    %v7006 = vadd.f32 0.0, %v7005
    %v7007 = vpop.f32.mrb[0].mxu0
    %v7008 = vadd.f32 0.0, %v7007
    %v7009 = vpop.f32.mrb[0].mxu0
    %v7010 = vadd.f32 0.0, %v7009
    %7011 = vmatprep.mubr.bf16.mxu0 %v6846
    %7012 = vmatmul.mubr.bf16.gmra.mrb[0].mxu0 %v6845
    %v7013 = vpop.f32.mrb[0].mxu0
    %v7014 = vadd.f32 0.0, %v7013
    %v7015 = vpop.f32.mrb[0].mxu0
    %v7016 = vadd.f32 0.0, %v7015
    %v7017 = vpop.f32.mrb[0].mxu0
    %v7018 = vadd.f32 0.0, %v7017
    %v7019 = vpop.f32.mrb[0].mxu0
    %v7020 = vadd.f32 0.0, %v7019
    %7021 = vmatprep.mubr.bf16.mxu0 %v6850
    %7022 = vmatmul.mubr.bf16.gmra.mrb[0].mxu0 %v6849
    %v7023 = vpop.f32.mrb[0].mxu0
    %v7024 = vadd.f32 0.0, %v7023
    %v7025 = vpop.f32.mrb[0].mxu0
    %v7026 = vadd.f32 0.0, %v7025
    %v7027 = vpop.f32.mrb[0].mxu0
    %v7028 = vadd.f32 0.0, %v7027
    %v7029 = vpop.f32.mrb[0].mxu0
    %v7030 = vadd.f32 0.0, %v7029
    %7031 = vmatprep.mubr.bf16.mxu0 %v6854
    %7032 = vmatmul.mubr.bf16.gmra.mrb[0].mxu0 %v6853
    %v7033 = vpop.f32.mrb[0].mxu0
    %v7034 = vadd.f32 0.0, %v7033
    %v7035 = vpop.f32.mrb[0].mxu0
    %v7036 = vadd.f32 0.0, %v7035
    %v7037 = vpop.f32.mrb[0].mxu0
    %v7038 = vadd.f32 0.0, %v7037
    %v7039 = vpop.f32.mrb[0].mxu0
    %v7040 = vadd.f32 0.0, %v7039
    %7041 = vmatprep.mubr.bf16.mxu0 %v6858
    %7042 = vmatmul.mubr.bf16.gmra.mrb[0].mxu0 %v6857
    %v7043 = vpop.f32.mrb[0].mxu0
    %v7044 = vadd.f32 0.0, %v7043
    %v7045 = vpop.f32.mrb[0].mxu0
    %v7046 = vadd.f32 0.0, %v7045
    %v7047 = vpop.f32.mrb[0].mxu0
    %v7048 = vadd.f32 0.0, %v7047
    %v7049 = vpop.f32.mrb[0].mxu0
    %v7050 = vadd.f32 0.0, %v7049
    %7051 = vmatprep.mubr.bf16.mxu0 %v6862
    %7052 = vmatmul.mubr.bf16.gmra.mrb[0].mxu0 %v6861
    %v7053 = vpop.f32.mrb[0].mxu0
    %v7054 = vadd.f32 0.0, %v7053
    %v7055 = vpop.f32.mrb[0].mxu0
    %v7056 = vadd.f32 0.0, %v7055
    %v7057 = vpop.f32.mrb[0].mxu0
    %v7058 = vadd.f32 0.0, %v7057
    %v7059 = vpop.f32.mrb[0].mxu0
    %v7060 = vadd.f32 0.0, %v7059
    %7061 = vmatprep.mubr.bf16.mxu0 %v6866
    %7062 = vmatmul.mubr.bf16.gmra.mrb[0].mxu0 %v6865
    %v7063 = vpop.f32.mrb[0].mxu0
    %v7064 = vadd.f32 0.0, %v7063
    %v7065 = vpop.f32.mrb[0].mxu0
    %v7066 = vadd.f32 0.0, %v7065
    %v7067 = vpop.f32.mrb[0].mxu0
    %v7068 = vadd.f32 0.0, %v7067
    %v7069 = vpop.f32.mrb[0].mxu0
    %v7070 = vadd.f32 0.0, %v7069
    %7071 = vmatprep.mubr.bf16.mxu0 %v6870
    %7072 = vmatmul.mubr.bf16.gmra.mrb[0].mxu0 %v6869
    %v7073 = vpop.f32.mrb[0].mxu0
    %v7074 = vadd.f32 0.0, %v7073
    %v7075 = vpop.f32.mrb[0].mxu0
    %v7076 = vadd.f32 0.0, %v7075
    %v7077 = vpop.f32.mrb[0].mxu0
    %v7078 = vadd.f32 0.0, %v7077
    %v7079 = vpop.f32.mrb[0].mxu0
    %v7080 = vadd.f32 0.0, %v7079
    %7081 = vmatprep.mubr.bf16.mxu0 %v6874
    %7082 = vmatmul.mubr.bf16.gmra.mrb[0].mxu0 %v6873
    %v7083 = vpop.f32.mrb[0].mxu0
    %v7084 = vadd.f32 0.0, %v7083
    %v7085 = vpop.f32.mrb[0].mxu0
    %v7086 = vadd.f32 0.0, %v7085
    %v7087 = vpop.f32.mrb[0].mxu0
    %v7088 = vadd.f32 0.0, %v7087
    %v7089 = vpop.f32.mrb[0].mxu0
    %v7090 = vadd.f32 0.0, %v7089
    %7091 = vmatprep.mubr.bf16.mxu0 %v6878
    %7092 = vmatmul.mubr.bf16.gmra.mrb[0].mxu0 %v6877
    %v7093 = vpop.f32.mrb[0].mxu0
    %v7094 = vadd.f32 0.0, %v7093
    %v7095 = vpop.f32.mrb[0].mxu0
    %v7096 = vadd.f32 0.0, %v7095
    %v7097 = vpop.f32.mrb[0].mxu0
    %v7098 = vadd.f32 0.0, %v7097
    %v7099 = vpop.f32.mrb[0].mxu0
    %v7100 = vadd.f32 0.0, %v7099
    %7101 = vmatprep.mubr.bf16.mxu0 %v6882
    %7102 = vmatmul.mubr.bf16.gmra.mrb[0].mxu0 %v6881
    %v7103 = vpop.f32.mrb[0].mxu0
    %v7104 = vadd.f32 0.0, %v7103
    %v7105 = vpop.f32.mrb[0].mxu0
    %v7106 = vadd.f32 0.0, %v7105
    %v7107 = vpop.f32.mrb[0].mxu0
    %v7108 = vadd.f32 0.0, %v7107
    %v7109 = vpop.f32.mrb[0].mxu0
    %v7110 = vadd.f32 0.0, %v7109
    %7111 = vmatprep.mubr.bf16.mxu0 %v6886
    %7112 = vmatmul.mubr.bf16.gmra.mrb[0].mxu0 %v6885
    %v7113 = vpop.f32.mrb[0].mxu0
    %v7114 = vadd.f32 0.0, %v7113
    %v7115 = vpop.f32.mrb[0].mxu0
    %v7116 = vadd.f32 0.0, %v7115
    %v7117 = vpop.f32.mrb[0].mxu0
    %v7118 = vadd.f32 0.0, %v7117
    %v7119 = vpop.f32.mrb[0].mxu0
    %v7120 = vadd.f32 0.0, %v7119
    %7121 = vmatprep.mubr.bf16.mxu0 %v6890
    %7122 = vmatmul.mubr.bf16.gmra.mrb[0].mxu0 %v6889
    %v7123 = vpop.f32.mrb[0].mxu0
    %v7124 = vadd.f32 0.0, %v7123
    %v7125 = vpop.f32.mrb[0].mxu0
    %v7126 = vadd.f32 0.0, %v7125
    %v7127 = vpop.f32.mrb[0].mxu0
    %v7128 = vadd.f32 0.0, %v7127
    %v7129 = vpop.f32.mrb[0].mxu0
    %v7130 = vadd.f32 0.0, %v7129
    %7131 = vmatprep.mubr.bf16.mxu0 %v6894
    %7132 = vmatmul.mubr.bf16.gmra.mrb[0].mxu0 %v6893
    %v7133 = vpop.f32.mrb[0].mxu0
    %v7134 = vadd.f32 0.0, %v7133
    %v7135 = vpop.f32.mrb[0].mxu0
    %v7136 = vadd.f32 0.0, %v7135
    %v7137 = vpop.f32.mrb[0].mxu0
    %v7138 = vadd.f32 0.0, %v7137
    %v7139 = vpop.f32.mrb[0].mxu0
    %v7140 = vadd.f32 0.0, %v7139
    %7141 = vmatprep.mubr.bf16.mxu0 %v6898
    %7142 = vmatmul.mubr.bf16.gmra.mrb[0].mxu0 %v6897
    %v7143 = vpop.f32.mrb[0].mxu0
    %v7144 = vadd.f32 0.0, %v7143
    %v7145 = vpop.f32.mrb[0].mxu0
    %v7146 = vadd.f32 0.0, %v7145
    %v7147 = vpop.f32.mrb[0].mxu0
    %v7148 = vadd.f32 0.0, %v7147
    %v7149 = vpop.f32.mrb[0].mxu0
    %v7150 = vadd.f32 0.0, %v7149
    %7151 = vmatprep.mubr.bf16.mxu0 %v6902
    %7152 = vmatmul.mubr.bf16.gmra.mrb[0].mxu0 %v6901
    %v7153 = vpop.f32.mrb[0].mxu0
    %v7154 = vadd.f32 0.0, %v7153
    %v7155 = vpop.f32.mrb[0].mxu0
    %v7156 = vadd.f32 0.0, %v7155
    %v7157 = vpop.f32.mrb[0].mxu0
    %v7158 = vadd.f32 0.0, %v7157
    %v7159 = vpop.f32.mrb[0].mxu0
    %v7160 = vadd.f32 0.0, %v7159
    %7161 = vdwg.mxu0
    %7162 = vmatprep.subr.bf16.mxu0 %v6938
    %7163 = vmatpush1.bf16.msra.mxu0 %v6937
    %7164 = vmatprep.subr.bf16.mxu0 %v6940
    %7165 = vmatpush1.bf16.msra.mxu0 %v6939
    %7166 = vmatprep.subr.bf16.mxu0 %v6942
    %7167 = vmatpush1.bf16.msra.mxu0 %v6941
    %7168 = vmatprep.subr.bf16.mxu0 %v6944
    %7169 = vmatpush1.bf16.msra.mxu0 %v6943
    %7170 = vmatprep.subr.bf16.mxu0 %v6946
    %7171 = vmatpush1.bf16.msra.mxu0 %v6945
    %7172 = vmatprep.subr.bf16.mxu0 %v6948
    %7173 = vmatpush1.bf16.msra.mxu0 %v6947
    %7174 = vmatprep.subr.bf16.mxu0 %v6950
    %7175 = vmatpush1.bf16.msra.mxu0 %v6949
    %7176 = vmatprep.subr.bf16.mxu0 %v6952
    %7177 = vmatpush1.bf16.msra.mxu0 %v6951
    %7178 = vmatprep.subr.bf16.mxu0 %v6954
    %7179 = vmatpush1.bf16.msra.mxu0 %v6953
    %7180 = vmatprep.subr.bf16.mxu0 %v6956
    %7181 = vmatpush1.bf16.msra.mxu0 %v6955
    %7182 = vmatprep.subr.bf16.mxu0 %v6958
    %7183 = vmatpush1.bf16.msra.mxu0 %v6957
    %7184 = vmatprep.subr.bf16.mxu0 %v6960
    %7185 = vmatpush1.bf16.msra.mxu0 %v6959
    %7186 = vmatprep.subr.bf16.mxu0 %v6962
    %7187 = vmatpush1.bf16.msra.mxu0 %v6961
    %7188 = vmatprep.subr.bf16.mxu0 %v6964
    %7189 = vmatpush1.bf16.msra.mxu0 %v6963
    %7190 = vmatprep.subr.bf16.mxu0 %v6966
    %7191 = vmatpush1.bf16.msra.mxu0 %v6965
    %7192 = vmatprep.subr.bf16.mxu0 %v6968
    %7193 = vmatpush1.bf16.msra.mxu0 %v6967
    %7194 = vmatprep.mubr.bf16.mxu0 %v6844
    %7195 = vmatmul.mubr.bf16.gmra.mrb[0].mxu0 %v6843
    %v7196 = vpop.f32.mrb[0].mxu0
    %v7197 = vadd.f32 %v7004, %v7196
    %v7198 = vpop.f32.mrb[0].mxu0
    %v7199 = vadd.f32 %v7006, %v7198
    %v7200 = vpop.f32.mrb[0].mxu0
    %v7201 = vadd.f32 %v7008, %v7200
    %v7202 = vpop.f32.mrb[0].mxu0
    %v7203 = vadd.f32 %v7010, %v7202
    %7204 = vmatprep.mubr.bf16.mxu0 %v6848
    %7205 = vmatmul.mubr.bf16.gmra.mrb[0].mxu0 %v6847
    %v7206 = vpop.f32.mrb[0].mxu0
    %v7207 = vadd.f32 %v7014, %v7206
    %v7208 = vpop.f32.mrb[0].mxu0
    %v7209 = vadd.f32 %v7016, %v7208
    %v7210 = vpop.f32.mrb[0].mxu0
    %v7211 = vadd.f32 %v7018, %v7210
    %v7212 = vpop.f32.mrb[0].mxu0
    %v7213 = vadd.f32 %v7020, %v7212
    %7214 = vmatprep.mubr.bf16.mxu0 %v6852
    %7215 = vmatmul.mubr.bf16.gmra.mrb[0].mxu0 %v6851
    %v7216 = vpop.f32.mrb[0].mxu0
    %v7217 = vadd.f32 %v7024, %v7216
    %v7218 = vpop.f32.mrb[0].mxu0
    %v7219 = vadd.f32 %v7026, %v7218
    %v7220 = vpop.f32.mrb[0].mxu0
    %v7221 = vadd.f32 %v7028, %v7220
    %v7222 = vpop.f32.mrb[0].mxu0
    %v7223 = vadd.f32 %v7030, %v7222
    %7224 = vmatprep.mubr.bf16.mxu0 %v6856
    %7225 = vmatmul.mubr.bf16.gmra.mrb[0].mxu0 %v6855
    %v7226 = vpop.f32.mrb[0].mxu0
    %v7227 = vadd.f32 %v7034, %v7226
    %v7228 = vpop.f32.mrb[0].mxu0
    %v7229 = vadd.f32 %v7036, %v7228
    %v7230 = vpop.f32.mrb[0].mxu0
    %v7231 = vadd.f32 %v7038, %v7230
    %v7232 = vpop.f32.mrb[0].mxu0
    %v7233 = vadd.f32 %v7040, %v7232
    %7234 = vmatprep.mubr.bf16.mxu0 %v6860
    %7235 = vmatmul.mubr.bf16.gmra.mrb[0].mxu0 %v6859
    %v7236 = vpop.f32.mrb[0].mxu0
    %v7237 = vadd.f32 %v7044, %v7236
    %v7238 = vpop.f32.mrb[0].mxu0
    %v7239 = vadd.f32 %v7046, %v7238
    %v7240 = vpop.f32.mrb[0].mxu0
    %v7241 = vadd.f32 %v7048, %v7240
    %v7242 = vpop.f32.mrb[0].mxu0
    %v7243 = vadd.f32 %v7050, %v7242
    %7244 = vmatprep.mubr.bf16.mxu0 %v6864
    %7245 = vmatmul.mubr.bf16.gmra.mrb[0].mxu0 %v6863
    %v7246 = vpop.f32.mrb[0].mxu0
    %v7247 = vadd.f32 %v7054, %v7246
    %v7248 = vpop.f32.mrb[0].mxu0
    %v7249 = vadd.f32 %v7056, %v7248
    %v7250 = vpop.f32.mrb[0].mxu0
    %v7251 = vadd.f32 %v7058, %v7250
    %v7252 = vpop.f32.mrb[0].mxu0
    %v7253 = vadd.f32 %v7060, %v7252
    %7254 = vmatprep.mubr.bf16.mxu0 %v6868
    %7255 = vmatmul.mubr.bf16.gmra.mrb[0].mxu0 %v6867
    %v7256 = vpop.f32.mrb[0].mxu0
    %v7257 = vadd.f32 %v7064, %v7256
    %v7258 = vpop.f32.mrb[0].mxu0
    %v7259 = vadd.f32 %v7066, %v7258
    %v7260 = vpop.f32.mrb[0].mxu0
    %v7261 = vadd.f32 %v7068, %v7260
    %v7262 = vpop.f32.mrb[0].mxu0
    %v7263 = vadd.f32 %v7070, %v7262
    %7264 = vmatprep.mubr.bf16.mxu0 %v6872
    %7265 = vmatmul.mubr.bf16.gmra.mrb[0].mxu0 %v6871
    %v7266 = vpop.f32.mrb[0].mxu0
    %v7267 = vadd.f32 %v7074, %v7266
    %v7268 = vpop.f32.mrb[0].mxu0
    %v7269 = vadd.f32 %v7076, %v7268
    %v7270 = vpop.f32.mrb[0].mxu0
    %v7271 = vadd.f32 %v7078, %v7270
    %v7272 = vpop.f32.mrb[0].mxu0
    %v7273 = vadd.f32 %v7080, %v7272
    %7274 = vmatprep.mubr.bf16.mxu0 %v6876
    %7275 = vmatmul.mubr.bf16.gmra.mrb[0].mxu0 %v6875
    %v7276 = vpop.f32.mrb[0].mxu0
    %v7277 = vadd.f32 %v7084, %v7276
    %v7278 = vpop.f32.mrb[0].mxu0
    %v7279 = vadd.f32 %v7086, %v7278
    %v7280 = vpop.f32.mrb[0].mxu0
    %v7281 = vadd.f32 %v7088, %v7280
    %v7282 = vpop.f32.mrb[0].mxu0
    %v7283 = vadd.f32 %v7090, %v7282
    %7284 = vmatprep.mubr.bf16.mxu0 %v6880
    %7285 = vmatmul.mubr.bf16.gmra.mrb[0].mxu0 %v6879
    %v7286 = vpop.f32.mrb[0].mxu0
    %v7287 = vadd.f32 %v7094, %v7286
    %v7288 = vpop.f32.mrb[0].mxu0
    %v7289 = vadd.f32 %v7096, %v7288
    %v7290 = vpop.f32.mrb[0].mxu0
    %v7291 = vadd.f32 %v7098, %v7290
    %v7292 = vpop.f32.mrb[0].mxu0
    %v7293 = vadd.f32 %v7100, %v7292
    %7294 = vmatprep.mubr.bf16.mxu0 %v6884
    %7295 = vmatmul.mubr.bf16.gmra.mrb[0].mxu0 %v6883
    %v7296 = vpop.f32.mrb[0].mxu0
    %v7297 = vadd.f32 %v7104, %v7296
    %v7298 = vpop.f32.mrb[0].mxu0
    %v7299 = vadd.f32 %v7106, %v7298
    %v7300 = vpop.f32.mrb[0].mxu0
    %v7301 = vadd.f32 %v7108, %v7300
    %v7302 = vpop.f32.mrb[0].mxu0
    %v7303 = vadd.f32 %v7110, %v7302
    %7304 = vmatprep.mubr.bf16.mxu0 %v6888
    %7305 = vmatmul.mubr.bf16.gmra.mrb[0].mxu0 %v6887
    %v7306 = vpop.f32.mrb[0].mxu0
    %v7307 = vadd.f32 %v7114, %v7306
    %v7308 = vpop.f32.mrb[0].mxu0
    %v7309 = vadd.f32 %v7116, %v7308
    %v7310 = vpop.f32.mrb[0].mxu0
    %v7311 = vadd.f32 %v7118, %v7310
    %v7312 = vpop.f32.mrb[0].mxu0
    %v7313 = vadd.f32 %v7120, %v7312
    %7314 = vmatprep.mubr.bf16.mxu0 %v6892
    %7315 = vmatmul.mubr.bf16.gmra.mrb[0].mxu0 %v6891
    %v7316 = vpop.f32.mrb[0].mxu0
    %v7317 = vadd.f32 %v7124, %v7316
    %v7318 = vpop.f32.mrb[0].mxu0
    %v7319 = vadd.f32 %v7126, %v7318
    %v7320 = vpop.f32.mrb[0].mxu0
    %v7321 = vadd.f32 %v7128, %v7320
    %v7322 = vpop.f32.mrb[0].mxu0
    %v7323 = vadd.f32 %v7130, %v7322
    %7324 = vmatprep.mubr.bf16.mxu0 %v6896
    %7325 = vmatmul.mubr.bf16.gmra.mrb[0].mxu0 %v6895
    %v7326 = vpop.f32.mrb[0].mxu0
    %v7327 = vadd.f32 %v7134, %v7326
    %v7328 = vpop.f32.mrb[0].mxu0
    %v7329 = vadd.f32 %v7136, %v7328
    %v7330 = vpop.f32.mrb[0].mxu0
    %v7331 = vadd.f32 %v7138, %v7330
    %v7332 = vpop.f32.mrb[0].mxu0
    %v7333 = vadd.f32 %v7140, %v7332
    %7334 = vmatprep.mubr.bf16.mxu0 %v6900
    %7335 = vmatmul.mubr.bf16.gmra.mrb[0].mxu0 %v6899
    %v7336 = vpop.f32.mrb[0].mxu0
    %v7337 = vadd.f32 %v7144, %v7336
    %v7338 = vpop.f32.mrb[0].mxu0
    %v7339 = vadd.f32 %v7146, %v7338
    %v7340 = vpop.f32.mrb[0].mxu0
    %v7341 = vadd.f32 %v7148, %v7340
    %v7342 = vpop.f32.mrb[0].mxu0
    %v7343 = vadd.f32 %v7150, %v7342
    %7344 = vmatprep.mubr.bf16.mxu0 %v6904
    %7345 = vmatmul.mubr.bf16.gmra.mrb[0].mxu0 %v6903
    %v7346 = vpop.f32.mrb[0].mxu0
    %v7347 = vadd.f32 %v7154, %v7346
    %v7348 = vpop.f32.mrb[0].mxu0
    %v7349 = vadd.f32 %v7156, %v7348
    %v7350 = vpop.f32.mrb[0].mxu0
    %v7351 = vadd.f32 %v7158, %v7350
    %v7352 = vpop.f32.mrb[0].mxu0
    %v7353 = vadd.f32 %v7160, %v7352
    %7354 = vdwg.mxu0
    %s7355 = scalar_lea.vmem %s2, 4
    %v7356 = vld [vmem:[%s7355] ss:$8 sm:$0x3]
    %s7357 = scalar_lea.vmem %s2, 5
    %v7358 = vld [vmem:[%s7357] ss:$8 sm:$0x3]
    %v7359 = vadd.f32 %v7197, %v7201
    %v7360 = vadd.f32 %v7359, %v7207
    %v7361 = vadd.f32 %v7360, %v7211
    %v7362 = vadd.f32 %v7361, %v7217
    %v7363 = vadd.f32 %v7362, %v7221
    %v7364 = vadd.f32 %v7363, %v7227
    %v7365 = vadd.f32 %v7364, %v7231
    %v7366 = vadd.f32 %v7365, %v7237
    %v7367 = vadd.f32 %v7366, %v7241
    %v7368 = vadd.f32 %v7367, %v7247
    %v7369 = vadd.f32 %v7368, %v7251
    %v7370 = vadd.f32 %v7369, %v7257
    %v7371 = vadd.f32 %v7370, %v7261
    %v7372 = vadd.f32 %v7371, %v7267
    %v7373 = vadd.f32 %v7372, %v7271
    %v7374 = vadd.f32 %v7373, %v7277
    %v7375 = vadd.f32 %v7374, %v7281
    %v7376 = vadd.f32 %v7375, %v7287
    %v7377 = vadd.f32 %v7376, %v7291
    %v7378 = vadd.f32 %v7377, %v7297
    %v7379 = vadd.f32 %v7378, %v7301
    %v7380 = vadd.f32 %v7379, %v7307
    %v7381 = vadd.f32 %v7380, %v7311
    %v7382 = vadd.f32 %v7381, %v7317
    %v7383 = vadd.f32 %v7382, %v7321
    %v7384 = vadd.f32 %v7383, %v7327
    %v7385 = vadd.f32 %v7384, %v7331
    %v7386 = vadd.f32 %v7385, %v7337
    %v7387 = vadd.f32 %v7386, %v7341
    %v7388 = vadd.f32 %v7387, %v7347
    %v7389 = vadd.f32 %v7388, %v7351
    %v7390 = vrot.slane %v7389, 4
    %v7391 = vadd.f32 %v7389, %v7390
    %v7392 = vrot.slane %v7391, 2
    %v7393 = vadd.f32 %v7391, %v7392
    %v7394 = vrot.slane %v7393, 1
    %v7395 = vadd.f32 %v7393, %v7394
    %v7396 = vadd.f32 %v7199, %v7203
    %v7397 = vadd.f32 %v7396, %v7209
    %v7398 = vadd.f32 %v7397, %v7213
    %v7399 = vadd.f32 %v7398, %v7219
    %v7400 = vadd.f32 %v7399, %v7223
    %v7401 = vadd.f32 %v7400, %v7229
    %v7402 = vadd.f32 %v7401, %v7233
    %v7403 = vadd.f32 %v7402, %v7239
    %v7404 = vadd.f32 %v7403, %v7243
    %v7405 = vadd.f32 %v7404, %v7249
    %v7406 = vadd.f32 %v7405, %v7253
    %v7407 = vadd.f32 %v7406, %v7259
    %v7408 = vadd.f32 %v7407, %v7263
    %v7409 = vadd.f32 %v7408, %v7269
    %v7410 = vadd.f32 %v7409, %v7273
    %v7411 = vadd.f32 %v7410, %v7279
    %v7412 = vadd.f32 %v7411, %v7283
    %v7413 = vadd.f32 %v7412, %v7289
    %v7414 = vadd.f32 %v7413, %v7293
    %v7415 = vadd.f32 %v7414, %v7299
    %v7416 = vadd.f32 %v7415, %v7303
    %v7417 = vadd.f32 %v7416, %v7309
    %v7418 = vadd.f32 %v7417, %v7313
    %v7419 = vadd.f32 %v7418, %v7319
    %v7420 = vadd.f32 %v7419, %v7323
    %v7421 = vadd.f32 %v7420, %v7329
    %v7422 = vadd.f32 %v7421, %v7333
    %v7423 = vadd.f32 %v7422, %v7339
    %v7424 = vadd.f32 %v7423, %v7343
    %v7425 = vadd.f32 %v7424, %v7349
    %v7426 = vadd.f32 %v7425, %v7353
    %v7427 = vrot.slane %v7426, 4
    %v7428 = vadd.f32 %v7426, %v7427
    %v7429 = vrot.slane %v7428, 2
    %v7430 = vadd.f32 %v7428, %v7429
    %v7431 = vrot.slane %v7430, 1
    %v7432 = vadd.f32 %v7430, %v7431
    %v7433 = vmul.f32 %v7395, 0.00390625
    %v7434 = vmul.f32 %v7432, 0.00390625
    %v7435 = vmul.f32 %v7197, %v7197
    %v7436 = vmul.f32 %v7199, %v7199
    %v7437 = vmul.f32 %v7201, %v7201
    %v7438 = vmul.f32 %v7203, %v7203
    %v7439 = vmul.f32 %v7207, %v7207
    %v7440 = vmul.f32 %v7209, %v7209
    %v7441 = vmul.f32 %v7211, %v7211
    %v7442 = vmul.f32 %v7213, %v7213
    %v7443 = vmul.f32 %v7217, %v7217
    %v7444 = vmul.f32 %v7219, %v7219
    %v7445 = vmul.f32 %v7221, %v7221
    %v7446 = vmul.f32 %v7223, %v7223
    %v7447 = vmul.f32 %v7227, %v7227
    %v7448 = vmul.f32 %v7229, %v7229
    %v7449 = vmul.f32 %v7231, %v7231
    %v7450 = vmul.f32 %v7233, %v7233
    %v7451 = vmul.f32 %v7237, %v7237
    %v7452 = vmul.f32 %v7239, %v7239
    %v7453 = vmul.f32 %v7241, %v7241
    %v7454 = vmul.f32 %v7243, %v7243
    %v7455 = vmul.f32 %v7247, %v7247
    %v7456 = vmul.f32 %v7249, %v7249
    %v7457 = vmul.f32 %v7251, %v7251
    %v7458 = vmul.f32 %v7253, %v7253
    %v7459 = vmul.f32 %v7257, %v7257
    %v7460 = vmul.f32 %v7259, %v7259
    %v7461 = vmul.f32 %v7261, %v7261
    %v7462 = vmul.f32 %v7263, %v7263
    %v7463 = vmul.f32 %v7267, %v7267
    %v7464 = vmul.f32 %v7269, %v7269
    %v7465 = vmul.f32 %v7271, %v7271
    %v7466 = vmul.f32 %v7273, %v7273
    %v7467 = vmul.f32 %v7277, %v7277
    %v7468 = vmul.f32 %v7279, %v7279
    %v7469 = vmul.f32 %v7281, %v7281
    %v7470 = vmul.f32 %v7283, %v7283
    %v7471 = vmul.f32 %v7287, %v7287
    %v7472 = vmul.f32 %v7289, %v7289
    %v7473 = vmul.f32 %v7291, %v7291
    %v7474 = vmul.f32 %v7293, %v7293
    %v7475 = vmul.f32 %v7297, %v7297
    %v7476 = vmul.f32 %v7299, %v7299
    %v7477 = vmul.f32 %v7301, %v7301
    %v7478 = vmul.f32 %v7303, %v7303
    %v7479 = vmul.f32 %v7307, %v7307
    %v7480 = vmul.f32 %v7309, %v7309
    %v7481 = vmul.f32 %v7311, %v7311
    %v7482 = vmul.f32 %v7313, %v7313
    %v7483 = vmul.f32 %v7317, %v7317
    %v7484 = vmul.f32 %v7319, %v7319
    %v7485 = vmul.f32 %v7321, %v7321
    %v7486 = vmul.f32 %v7323, %v7323
    %v7487 = vmul.f32 %v7327, %v7327
    %v7488 = vmul.f32 %v7329, %v7329
    %v7489 = vmul.f32 %v7331, %v7331
    %v7490 = vmul.f32 %v7333, %v7333
    %v7491 = vmul.f32 %v7337, %v7337
    %v7492 = vmul.f32 %v7339, %v7339
    %v7493 = vmul.f32 %v7341, %v7341
    %v7494 = vmul.f32 %v7343, %v7343
    %v7495 = vmul.f32 %v7347, %v7347
    %v7496 = vmul.f32 %v7349, %v7349
    %v7497 = vmul.f32 %v7351, %v7351
    %v7498 = vmul.f32 %v7353, %v7353
    %v7499 = vadd.f32 %v7435, %v7437
    %v7500 = vadd.f32 %v7499, %v7439
    %v7501 = vadd.f32 %v7500, %v7441
    %v7502 = vadd.f32 %v7501, %v7443
    %v7503 = vadd.f32 %v7502, %v7445
    %v7504 = vadd.f32 %v7503, %v7447
    %v7505 = vadd.f32 %v7504, %v7449
    %v7506 = vadd.f32 %v7505, %v7451
    %v7507 = vadd.f32 %v7506, %v7453
    %v7508 = vadd.f32 %v7507, %v7455
    %v7509 = vadd.f32 %v7508, %v7457
    %v7510 = vadd.f32 %v7509, %v7459
    %v7511 = vadd.f32 %v7510, %v7461
    %v7512 = vadd.f32 %v7511, %v7463
    %v7513 = vadd.f32 %v7512, %v7465
    %v7514 = vadd.f32 %v7513, %v7467
    %v7515 = vadd.f32 %v7514, %v7469
    %v7516 = vadd.f32 %v7515, %v7471
    %v7517 = vadd.f32 %v7516, %v7473
    %v7518 = vadd.f32 %v7517, %v7475
    %v7519 = vadd.f32 %v7518, %v7477
    %v7520 = vadd.f32 %v7519, %v7479
    %v7521 = vadd.f32 %v7520, %v7481
    %v7522 = vadd.f32 %v7521, %v7483
    %v7523 = vadd.f32 %v7522, %v7485
    %v7524 = vadd.f32 %v7523, %v7487
    %v7525 = vadd.f32 %v7524, %v7489
    %v7526 = vadd.f32 %v7525, %v7491
    %v7527 = vadd.f32 %v7526, %v7493
    %v7528 = vadd.f32 %v7527, %v7495
    %v7529 = vadd.f32 %v7528, %v7497
    %v7530 = vrot.slane %v7529, 4
    %v7531 = vadd.f32 %v7529, %v7530
    %v7532 = vrot.slane %v7531, 2
    %v7533 = vadd.f32 %v7531, %v7532
    %v7534 = vrot.slane %v7533, 1
    %v7535 = vadd.f32 %v7533, %v7534
    %v7536 = vadd.f32 %v7436, %v7438
    %v7537 = vadd.f32 %v7536, %v7440
    %v7538 = vadd.f32 %v7537, %v7442
    %v7539 = vadd.f32 %v7538, %v7444
    %v7540 = vadd.f32 %v7539, %v7446
    %v7541 = vadd.f32 %v7540, %v7448
    %v7542 = vadd.f32 %v7541, %v7450
    %v7543 = vadd.f32 %v7542, %v7452
    %v7544 = vadd.f32 %v7543, %v7454
    %v7545 = vadd.f32 %v7544, %v7456
    %v7546 = vadd.f32 %v7545, %v7458
    %v7547 = vadd.f32 %v7546, %v7460
    %v7548 = vadd.f32 %v7547, %v7462
    %v7549 = vadd.f32 %v7548, %v7464
    %v7550 = vadd.f32 %v7549, %v7466
    %v7551 = vadd.f32 %v7550, %v7468
    %v7552 = vadd.f32 %v7551, %v7470
    %v7553 = vadd.f32 %v7552, %v7472
    %v7554 = vadd.f32 %v7553, %v7474
    %v7555 = vadd.f32 %v7554, %v7476
    %v7556 = vadd.f32 %v7555, %v7478
    %v7557 = vadd.f32 %v7556, %v7480
    %v7558 = vadd.f32 %v7557, %v7482
    %v7559 = vadd.f32 %v7558, %v7484
    %v7560 = vadd.f32 %v7559, %v7486
    %v7561 = vadd.f32 %v7560, %v7488
    %v7562 = vadd.f32 %v7561, %v7490
    %v7563 = vadd.f32 %v7562, %v7492
    %v7564 = vadd.f32 %v7563, %v7494
    %v7565 = vadd.f32 %v7564, %v7496
    %v7566 = vadd.f32 %v7565, %v7498
    %v7567 = vrot.slane %v7566, 4
    %v7568 = vadd.f32 %v7566, %v7567
    %v7569 = vrot.slane %v7568, 2
    %v7570 = vadd.f32 %v7568, %v7569
    %v7571 = vrot.slane %v7570, 1
    %v7572 = vadd.f32 %v7570, %v7571
    %v7573 = vmul.f32 %v7535, 0.00390625
    %v7574 = vmul.f32 %v7572, 0.00390625
    %v7575 = vmul.f32 %v7433, %v7433
    %v7576 = vmul.f32 %v7434, %v7434
    %v7577 = vsub.f32 %v7573, %v7575
    %v7578 = vsub.f32 %v7574, %v7576
    %v7579 = vmax.f32 %v7577, 0.0
    %v7580 = vmax.f32 %v7578, 0.0
    %v7581 = vadd.f32 %v7579, 1e-05
    %v7582 = vadd.f32 %v7580, 1e-05
    %v7583 = vrsqrt.pop %v7581
    %v7584 = vrsqrt.pop %v7582
    %v7587 = vcombine.low %v7583, %v7584
    %v7589 = vunpack.c.l.s4 1966171168
    %v7590 = vunpack.c.0.s8 %v7589
    %v7591 = vlaneseq
    %v7592 = vshrl.u32 %v7591, 7
    %v7593 = vsub.s32 %v7590, %v7592
    %v7594 = vrot.slane %v7587, %v7593
    %v7596 = vunpack.c.l.s4 1966171168
    %v7597 = vunpack.c.0.s8 %v7596
    %v7598 = vlaneseq
    %v7599 = vshrl.u32 %v7598, 7
    %v7600 = vsub.s32 %v7597, %v7599
    %v7601 = vrot.slane %v7594, %v7600
    %v7603 = vmul.f32 %v7356, %v7601
    %v7605 = vlaneseq
    %v7606 = vshrl.u32 %v7605, 7
    %v7607 = vsub.s32 0, %v7606
    %v7608 = vrot.slane %v7603, %v7607
    %v7609 = vlaneseq
    %v7610 = vshrl.u32 %v7609, 7
    %v7611 = vsub.s32 1, %v7610
    %v7612 = vrot.slane %v7603, %v7611
    %v7615 = vmul.f32 %v7433, %v7608
    %v7616 = vmul.f32 %v7434, %v7612
    %v7619 = vcombine.low %v7615, %v7616
    %v7621 = vunpack.c.l.s4 1966171168
    %v7622 = vunpack.c.0.s8 %v7621
    %v7623 = vlaneseq
    %v7624 = vshrl.u32 %v7623, 7
    %v7625 = vsub.s32 %v7622, %v7624
    %v7626 = vrot.slane %v7619, %v7625
    %v7628 = vunpack.c.l.s4 1966171168
    %v7629 = vunpack.c.0.s8 %v7628
    %v7630 = vlaneseq
    %v7631 = vshrl.u32 %v7630, 7
    %v7632 = vsub.s32 %v7629, %v7631
    %v7633 = vrot.slane %v7626, %v7632
    %v7635 = vsub.f32 %v7358, %v7633
    %v7636 = vmul.f32 %v7197, %v7608
    %v7637 = vmul.f32 %v7199, %v7612
    %v7638 = vmul.f32 %v7201, %v7608
    %v7639 = vmul.f32 %v7203, %v7612
    %v7640 = vmul.f32 %v7207, %v7608
    %v7641 = vmul.f32 %v7209, %v7612
    %v7642 = vmul.f32 %v7211, %v7608
    %v7643 = vmul.f32 %v7213, %v7612
    %v7644 = vmul.f32 %v7217, %v7608
    %v7645 = vmul.f32 %v7219, %v7612
    %v7646 = vmul.f32 %v7221, %v7608
    %v7647 = vmul.f32 %v7223, %v7612
    %v7648 = vmul.f32 %v7227, %v7608
    %v7649 = vmul.f32 %v7229, %v7612
    %v7650 = vmul.f32 %v7231, %v7608
    %v7651 = vmul.f32 %v7233, %v7612
    %v7652 = vmul.f32 %v7237, %v7608
    %v7653 = vmul.f32 %v7239, %v7612
    %v7654 = vmul.f32 %v7241, %v7608
    %v7655 = vmul.f32 %v7243, %v7612
    %v7656 = vmul.f32 %v7247, %v7608
    %v7657 = vmul.f32 %v7249, %v7612
    %v7658 = vmul.f32 %v7251, %v7608
    %v7659 = vmul.f32 %v7253, %v7612
    %v7660 = vmul.f32 %v7257, %v7608
    %v7661 = vmul.f32 %v7259, %v7612
    %v7662 = vmul.f32 %v7261, %v7608
    %v7663 = vmul.f32 %v7263, %v7612
    %v7664 = vmul.f32 %v7267, %v7608
    %v7665 = vmul.f32 %v7269, %v7612
    %v7666 = vmul.f32 %v7271, %v7608
    %v7667 = vmul.f32 %v7273, %v7612
    %v7668 = vmul.f32 %v7277, %v7608
    %v7669 = vmul.f32 %v7279, %v7612
    %v7670 = vmul.f32 %v7281, %v7608
    %v7671 = vmul.f32 %v7283, %v7612
    %v7672 = vmul.f32 %v7287, %v7608
    %v7673 = vmul.f32 %v7289, %v7612
    %v7674 = vmul.f32 %v7291, %v7608
    %v7675 = vmul.f32 %v7293, %v7612
    %v7676 = vmul.f32 %v7297, %v7608
    %v7677 = vmul.f32 %v7299, %v7612
    %v7678 = vmul.f32 %v7301, %v7608
    %v7679 = vmul.f32 %v7303, %v7612
    %v7680 = vmul.f32 %v7307, %v7608
    %v7681 = vmul.f32 %v7309, %v7612
    %v7682 = vmul.f32 %v7311, %v7608
    %v7683 = vmul.f32 %v7313, %v7612
    %v7684 = vmul.f32 %v7317, %v7608
    %v7685 = vmul.f32 %v7319, %v7612
    %v7686 = vmul.f32 %v7321, %v7608
    %v7687 = vmul.f32 %v7323, %v7612
    %v7688 = vmul.f32 %v7327, %v7608
    %v7689 = vmul.f32 %v7329, %v7612
    %v7690 = vmul.f32 %v7331, %v7608
    %v7691 = vmul.f32 %v7333, %v7612
    %v7692 = vmul.f32 %v7337, %v7608
    %v7693 = vmul.f32 %v7339, %v7612
    %v7694 = vmul.f32 %v7341, %v7608
    %v7695 = vmul.f32 %v7343, %v7612
    %v7696 = vmul.f32 %v7347, %v7608
    %v7697 = vmul.f32 %v7349, %v7612
    %v7698 = vmul.f32 %v7351, %v7608
    %v7699 = vmul.f32 %v7353, %v7612
    %v7701 = vlaneseq
    %v7702 = vshrl.u32 %v7701, 7
    %v7703 = vsub.s32 0, %v7702
    %v7704 = vrot.slane %v7635, %v7703
    %v7705 = vlaneseq
    %v7706 = vshrl.u32 %v7705, 7
    %v7707 = vsub.s32 1, %v7706
    %v7708 = vrot.slane %v7635, %v7707
    %v7711 = vadd.f32 %v7636, %v7704
    %v7712 = vadd.f32 %v7637, %v7708
    %v7713 = vadd.f32 %v7638, %v7704
    %v7714 = vadd.f32 %v7639, %v7708
    %v7715 = vadd.f32 %v7640, %v7704
    %v7716 = vadd.f32 %v7641, %v7708
    %v7717 = vadd.f32 %v7642, %v7704
    %v7718 = vadd.f32 %v7643, %v7708
    %v7719 = vadd.f32 %v7644, %v7704
    %v7720 = vadd.f32 %v7645, %v7708
    %v7721 = vadd.f32 %v7646, %v7704
    %v7722 = vadd.f32 %v7647, %v7708
    %v7723 = vadd.f32 %v7648, %v7704
    %v7724 = vadd.f32 %v7649, %v7708
    %v7725 = vadd.f32 %v7650, %v7704
    %v7726 = vadd.f32 %v7651, %v7708
    %v7727 = vadd.f32 %v7652, %v7704
    %v7728 = vadd.f32 %v7653, %v7708
    %v7729 = vadd.f32 %v7654, %v7704
    %v7730 = vadd.f32 %v7655, %v7708
    %v7731 = vadd.f32 %v7656, %v7704
    %v7732 = vadd.f32 %v7657, %v7708
    %v7733 = vadd.f32 %v7658, %v7704
    %v7734 = vadd.f32 %v7659, %v7708
    %v7735 = vadd.f32 %v7660, %v7704
    %v7736 = vadd.f32 %v7661, %v7708
    %v7737 = vadd.f32 %v7662, %v7704
    %v7738 = vadd.f32 %v7663, %v7708
    %v7739 = vadd.f32 %v7664, %v7704
    %v7740 = vadd.f32 %v7665, %v7708
    %v7741 = vadd.f32 %v7666, %v7704
    %v7742 = vadd.f32 %v7667, %v7708
    %v7743 = vadd.f32 %v7668, %v7704
    %v7744 = vadd.f32 %v7669, %v7708
    %v7745 = vadd.f32 %v7670, %v7704
    %v7746 = vadd.f32 %v7671, %v7708
    %v7747 = vadd.f32 %v7672, %v7704
    %v7748 = vadd.f32 %v7673, %v7708
    %v7749 = vadd.f32 %v7674, %v7704
    %v7750 = vadd.f32 %v7675, %v7708
    %v7751 = vadd.f32 %v7676, %v7704
    %v7752 = vadd.f32 %v7677, %v7708
    %v7753 = vadd.f32 %v7678, %v7704
    %v7754 = vadd.f32 %v7679, %v7708
    %v7755 = vadd.f32 %v7680, %v7704
    %v7756 = vadd.f32 %v7681, %v7708
    %v7757 = vadd.f32 %v7682, %v7704
    %v7758 = vadd.f32 %v7683, %v7708
    %v7759 = vadd.f32 %v7684, %v7704
    %v7760 = vadd.f32 %v7685, %v7708
    %v7761 = vadd.f32 %v7686, %v7704
    %v7762 = vadd.f32 %v7687, %v7708
    %v7763 = vadd.f32 %v7688, %v7704
    %v7764 = vadd.f32 %v7689, %v7708
    %v7765 = vadd.f32 %v7690, %v7704
    %v7766 = vadd.f32 %v7691, %v7708
    %v7767 = vadd.f32 %v7692, %v7704
    %v7768 = vadd.f32 %v7693, %v7708
    %v7769 = vadd.f32 %v7694, %v7704
    %v7770 = vadd.f32 %v7695, %v7708
    %v7771 = vadd.f32 %v7696, %v7704
    %v7772 = vadd.f32 %v7697, %v7708
    %v7773 = vadd.f32 %v7698, %v7704
    %v7774 = vadd.f32 %v7699, %v7708
    %vm7775 = vcmp.ge.f32.partialorder %v7711, 0.0
    %vm7776 = vcmp.ge.f32.partialorder %v7712, 0.0
    %vm7777 = vcmp.ge.f32.partialorder %v7713, 0.0
    %vm7778 = vcmp.ge.f32.partialorder %v7714, 0.0
    %vm7779 = vcmp.ge.f32.partialorder %v7715, 0.0
    %vm7780 = vcmp.ge.f32.partialorder %v7716, 0.0
    %vm7781 = vcmp.ge.f32.partialorder %v7717, 0.0
    %vm7782 = vcmp.ge.f32.partialorder %v7718, 0.0
    %vm7783 = vcmp.ge.f32.partialorder %v7719, 0.0
    %vm7784 = vcmp.ge.f32.partialorder %v7720, 0.0
    %vm7785 = vcmp.ge.f32.partialorder %v7721, 0.0
    %vm7786 = vcmp.ge.f32.partialorder %v7722, 0.0
    %vm7787 = vcmp.ge.f32.partialorder %v7723, 0.0
    %vm7788 = vcmp.ge.f32.partialorder %v7724, 0.0
    %vm7789 = vcmp.ge.f32.partialorder %v7725, 0.0
    %vm7790 = vcmp.ge.f32.partialorder %v7726, 0.0
    %vm7791 = vcmp.ge.f32.partialorder %v7727, 0.0
    %vm7792 = vcmp.ge.f32.partialorder %v7728, 0.0
    %vm7793 = vcmp.ge.f32.partialorder %v7729, 0.0
    %vm7794 = vcmp.ge.f32.partialorder %v7730, 0.0
    %vm7795 = vcmp.ge.f32.partialorder %v7731, 0.0
    %vm7796 = vcmp.ge.f32.partialorder %v7732, 0.0
    %vm7797 = vcmp.ge.f32.partialorder %v7733, 0.0
    %vm7798 = vcmp.ge.f32.partialorder %v7734, 0.0
    %vm7799 = vcmp.ge.f32.partialorder %v7735, 0.0
    %vm7800 = vcmp.ge.f32.partialorder %v7736, 0.0
    %vm7801 = vcmp.ge.f32.partialorder %v7737, 0.0
    %vm7802 = vcmp.ge.f32.partialorder %v7738, 0.0
    %vm7803 = vcmp.ge.f32.partialorder %v7739, 0.0
    %vm7804 = vcmp.ge.f32.partialorder %v7740, 0.0
    %vm7805 = vcmp.ge.f32.partialorder %v7741, 0.0
    %vm7806 = vcmp.ge.f32.partialorder %v7742, 0.0
    %vm7807 = vcmp.ge.f32.partialorder %v7743, 0.0
    %vm7808 = vcmp.ge.f32.partialorder %v7744, 0.0
    %vm7809 = vcmp.ge.f32.partialorder %v7745, 0.0
    %vm7810 = vcmp.ge.f32.partialorder %v7746, 0.0
    %vm7811 = vcmp.ge.f32.partialorder %v7747, 0.0
    %vm7812 = vcmp.ge.f32.partialorder %v7748, 0.0
    %vm7813 = vcmp.ge.f32.partialorder %v7749, 0.0
    %vm7814 = vcmp.ge.f32.partialorder %v7750, 0.0
    %vm7815 = vcmp.ge.f32.partialorder %v7751, 0.0
    %vm7816 = vcmp.ge.f32.partialorder %v7752, 0.0
    %vm7817 = vcmp.ge.f32.partialorder %v7753, 0.0
    %vm7818 = vcmp.ge.f32.partialorder %v7754, 0.0
    %vm7819 = vcmp.ge.f32.partialorder %v7755, 0.0
    %vm7820 = vcmp.ge.f32.partialorder %v7756, 0.0
    %vm7821 = vcmp.ge.f32.partialorder %v7757, 0.0
    %vm7822 = vcmp.ge.f32.partialorder %v7758, 0.0
    %vm7823 = vcmp.ge.f32.partialorder %v7759, 0.0
    %vm7824 = vcmp.ge.f32.partialorder %v7760, 0.0
    %vm7825 = vcmp.ge.f32.partialorder %v7761, 0.0
    %vm7826 = vcmp.ge.f32.partialorder %v7762, 0.0
    %vm7827 = vcmp.ge.f32.partialorder %v7763, 0.0
    %vm7828 = vcmp.ge.f32.partialorder %v7764, 0.0
    %vm7829 = vcmp.ge.f32.partialorder %v7765, 0.0
    %vm7830 = vcmp.ge.f32.partialorder %v7766, 0.0
    %vm7831 = vcmp.ge.f32.partialorder %v7767, 0.0
    %vm7832 = vcmp.ge.f32.partialorder %v7768, 0.0
    %vm7833 = vcmp.ge.f32.partialorder %v7769, 0.0
    %vm7834 = vcmp.ge.f32.partialorder %v7770, 0.0
    %vm7835 = vcmp.ge.f32.partialorder %v7771, 0.0
    %vm7836 = vcmp.ge.f32.partialorder %v7772, 0.0
    %vm7837 = vcmp.ge.f32.partialorder %v7773, 0.0
    %vm7838 = vcmp.ge.f32.partialorder %v7774, 0.0
    %v7839 = vmul.f32 %v7711, 0.01
    %v7840 = vmul.f32 %v7712, 0.01
    %v7841 = vmul.f32 %v7713, 0.01
    %v7842 = vmul.f32 %v7714, 0.01
    %v7843 = vmul.f32 %v7715, 0.01
    %v7844 = vmul.f32 %v7716, 0.01
    %v7845 = vmul.f32 %v7717, 0.01
    %v7846 = vmul.f32 %v7718, 0.01
    %v7847 = vmul.f32 %v7719, 0.01
    %v7848 = vmul.f32 %v7720, 0.01
    %v7849 = vmul.f32 %v7721, 0.01
    %v7850 = vmul.f32 %v7722, 0.01
    %v7851 = vmul.f32 %v7723, 0.01
    %v7852 = vmul.f32 %v7724, 0.01
    %v7853 = vmul.f32 %v7725, 0.01
    %v7854 = vmul.f32 %v7726, 0.01
    %v7855 = vmul.f32 %v7727, 0.01
    %v7856 = vmul.f32 %v7728, 0.01
    %v7857 = vmul.f32 %v7729, 0.01
    %v7858 = vmul.f32 %v7730, 0.01
    %v7859 = vmul.f32 %v7731, 0.01
    %v7860 = vmul.f32 %v7732, 0.01
    %v7861 = vmul.f32 %v7733, 0.01
    %v7862 = vmul.f32 %v7734, 0.01
    %v7863 = vmul.f32 %v7735, 0.01
    %v7864 = vmul.f32 %v7736, 0.01
    %v7865 = vmul.f32 %v7737, 0.01
    %v7866 = vmul.f32 %v7738, 0.01
    %v7867 = vmul.f32 %v7739, 0.01
    %v7868 = vmul.f32 %v7740, 0.01
    %v7869 = vmul.f32 %v7741, 0.01
    %v7870 = vmul.f32 %v7742, 0.01
    %v7871 = vmul.f32 %v7743, 0.01
    %v7872 = vmul.f32 %v7744, 0.01
    %v7873 = vmul.f32 %v7745, 0.01
    %v7874 = vmul.f32 %v7746, 0.01
    %v7875 = vmul.f32 %v7747, 0.01
    %v7876 = vmul.f32 %v7748, 0.01
    %v7877 = vmul.f32 %v7749, 0.01
    %v7878 = vmul.f32 %v7750, 0.01
    %v7879 = vmul.f32 %v7751, 0.01
    %v7880 = vmul.f32 %v7752, 0.01
    %v7881 = vmul.f32 %v7753, 0.01
    %v7882 = vmul.f32 %v7754, 0.01
    %v7883 = vmul.f32 %v7755, 0.01
    %v7884 = vmul.f32 %v7756, 0.01
    %v7885 = vmul.f32 %v7757, 0.01
    %v7886 = vmul.f32 %v7758, 0.01
    %v7887 = vmul.f32 %v7759, 0.01
    %v7888 = vmul.f32 %v7760, 0.01
    %v7889 = vmul.f32 %v7761, 0.01
    %v7890 = vmul.f32 %v7762, 0.01
    %v7891 = vmul.f32 %v7763, 0.01
    %v7892 = vmul.f32 %v7764, 0.01
    %v7893 = vmul.f32 %v7765, 0.01
    %v7894 = vmul.f32 %v7766, 0.01
    %v7895 = vmul.f32 %v7767, 0.01
    %v7896 = vmul.f32 %v7768, 0.01
    %v7897 = vmul.f32 %v7769, 0.01
    %v7898 = vmul.f32 %v7770, 0.01
    %v7899 = vmul.f32 %v7771, 0.01
    %v7900 = vmul.f32 %v7772, 0.01
    %v7901 = vmul.f32 %v7773, 0.01
    %v7902 = vmul.f32 %v7774, 0.01
    %v7903 = vsel %vm7775, %v7711, %v7839
    %v7904 = vsel %vm7776, %v7712, %v7840
    %v7905 = vsel %vm7777, %v7713, %v7841
    %v7906 = vsel %vm7778, %v7714, %v7842
    %v7907 = vsel %vm7779, %v7715, %v7843
    %v7908 = vsel %vm7780, %v7716, %v7844
    %v7909 = vsel %vm7781, %v7717, %v7845
    %v7910 = vsel %vm7782, %v7718, %v7846
    %v7911 = vsel %vm7783, %v7719, %v7847
    %v7912 = vsel %vm7784, %v7720, %v7848
    %v7913 = vsel %vm7785, %v7721, %v7849
    %v7914 = vsel %vm7786, %v7722, %v7850
    %v7915 = vsel %vm7787, %v7723, %v7851
    %v7916 = vsel %vm7788, %v7724, %v7852
    %v7917 = vsel %vm7789, %v7725, %v7853
    %v7918 = vsel %vm7790, %v7726, %v7854
    %v7919 = vsel %vm7791, %v7727, %v7855
    %v7920 = vsel %vm7792, %v7728, %v7856
    %v7921 = vsel %vm7793, %v7729, %v7857
    %v7922 = vsel %vm7794, %v7730, %v7858
    %v7923 = vsel %vm7795, %v7731, %v7859
    %v7924 = vsel %vm7796, %v7732, %v7860
    %v7925 = vsel %vm7797, %v7733, %v7861
    %v7926 = vsel %vm7798, %v7734, %v7862
    %v7927 = vsel %vm7799, %v7735, %v7863
    %v7928 = vsel %vm7800, %v7736, %v7864
    %v7929 = vsel %vm7801, %v7737, %v7865
    %v7930 = vsel %vm7802, %v7738, %v7866
    %v7931 = vsel %vm7803, %v7739, %v7867
    %v7932 = vsel %vm7804, %v7740, %v7868
    %v7933 = vsel %vm7805, %v7741, %v7869
    %v7934 = vsel %vm7806, %v7742, %v7870
    %v7935 = vsel %vm7807, %v7743, %v7871
    %v7936 = vsel %vm7808, %v7744, %v7872
    %v7937 = vsel %vm7809, %v7745, %v7873
    %v7938 = vsel %vm7810, %v7746, %v7874
    %v7939 = vsel %vm7811, %v7747, %v7875
    %v7940 = vsel %vm7812, %v7748, %v7876
    %v7941 = vsel %vm7813, %v7749, %v7877
    %v7942 = vsel %vm7814, %v7750, %v7878
    %v7943 = vsel %vm7815, %v7751, %v7879
    %v7944 = vsel %vm7816, %v7752, %v7880
    %v7945 = vsel %vm7817, %v7753, %v7881
    %v7946 = vsel %vm7818, %v7754, %v7882
    %v7947 = vsel %vm7819, %v7755, %v7883
    %v7948 = vsel %vm7820, %v7756, %v7884
    %v7949 = vsel %vm7821, %v7757, %v7885
    %v7950 = vsel %vm7822, %v7758, %v7886
    %v7951 = vsel %vm7823, %v7759, %v7887
    %v7952 = vsel %vm7824, %v7760, %v7888
    %v7953 = vsel %vm7825, %v7761, %v7889
    %v7954 = vsel %vm7826, %v7762, %v7890
    %v7955 = vsel %vm7827, %v7763, %v7891
    %v7956 = vsel %vm7828, %v7764, %v7892
    %v7957 = vsel %vm7829, %v7765, %v7893
    %v7958 = vsel %vm7830, %v7766, %v7894
    %v7959 = vsel %vm7831, %v7767, %v7895
    %v7960 = vsel %vm7832, %v7768, %v7896
    %v7961 = vsel %vm7833, %v7769, %v7897
    %v7962 = vsel %vm7834, %v7770, %v7898
    %v7963 = vsel %vm7835, %v7771, %v7899
    %v7964 = vsel %vm7836, %v7772, %v7900
    %v7965 = vsel %vm7837, %v7773, %v7901
    %v7966 = vsel %vm7838, %v7774, %v7902
    %s7967 = smul.u32 4, 32
    %s7968 = smul.u32 %s7967, 1
    %s7969 = sshll.u32 %s7968, 4
    %7970 = dma.done %s106, %s7969
    %v7971 = vpack.c.bf16 %v7905, %v7903
    %v7972 = vpack.c.bf16 %v7906, %v7904
    %v7973 = vpack.c.bf16 %v7909, %v7907
    %v7974 = vpack.c.bf16 %v7910, %v7908
    %v7975 = vpack.c.bf16 %v7913, %v7911
    %v7976 = vpack.c.bf16 %v7914, %v7912
    %v7977 = vpack.c.bf16 %v7917, %v7915
    %v7978 = vpack.c.bf16 %v7918, %v7916
    %v7979 = vpack.c.bf16 %v7921, %v7919
    %v7980 = vpack.c.bf16 %v7922, %v7920
    %v7981 = vpack.c.bf16 %v7925, %v7923
    %v7982 = vpack.c.bf16 %v7926, %v7924
    %v7983 = vpack.c.bf16 %v7929, %v7927
    %v7984 = vpack.c.bf16 %v7930, %v7928
    %v7985 = vpack.c.bf16 %v7933, %v7931
    %v7986 = vpack.c.bf16 %v7934, %v7932
    %v7987 = vpack.c.bf16 %v7937, %v7935
    %v7988 = vpack.c.bf16 %v7938, %v7936
    %v7989 = vpack.c.bf16 %v7941, %v7939
    %v7990 = vpack.c.bf16 %v7942, %v7940
    %v7991 = vpack.c.bf16 %v7945, %v7943
    %v7992 = vpack.c.bf16 %v7946, %v7944
    %v7993 = vpack.c.bf16 %v7949, %v7947
    %v7994 = vpack.c.bf16 %v7950, %v7948
    %v7995 = vpack.c.bf16 %v7953, %v7951
    %v7996 = vpack.c.bf16 %v7954, %v7952
    %v7997 = vpack.c.bf16 %v7957, %v7955
    %v7998 = vpack.c.bf16 %v7958, %v7956
    %v7999 = vpack.c.bf16 %v7961, %v7959
    %v8000 = vpack.c.bf16 %v7962, %v7960
    %v8001 = vpack.c.bf16 %v7965, %v7963
    %v8002 = vpack.c.bf16 %v7966, %v7964
    %v8003 = vld [vmem:[#allocation4] sm:$0xff]
    %v8004 = vld [vmem:[#allocation4 + $0x8] sm:$0xff]
    %v8005 = vld [vmem:[#allocation4 + $0x10] sm:$0xff]
    %v8006 = vld [vmem:[#allocation4 + $0x18] sm:$0xff]
    %v8007 = vld [vmem:[#allocation4 + $0x20] sm:$0xff]
    %v8008 = vld [vmem:[#allocation4 + $0x28] sm:$0xff]
    %v8009 = vld [vmem:[#allocation4 + $0x30] sm:$0xff]
    %v8010 = vld [vmem:[#allocation4 + $0x38] sm:$0xff]
    %v8011 = vld [vmem:[#allocation4 + $0x40] sm:$0xff]
    %v8012 = vld [vmem:[#allocation4 + $0x48] sm:$0xff]
    %v8013 = vld [vmem:[#allocation4 + $0x50] sm:$0xff]
    %v8014 = vld [vmem:[#allocation4 + $0x58] sm:$0xff]
    %v8015 = vld [vmem:[#allocation4 + $0x60] sm:$0xff]
    %v8016 = vld [vmem:[#allocation4 + $0x68] sm:$0xff]
    %v8017 = vld [vmem:[#allocation4 + $0x70] sm:$0xff]
    %v8018 = vld [vmem:[#allocation4 + $0x78] sm:$0xff]
    %v8019 = vld [vmem:[%s3] sm:$0x1]
    %v8021 = vlaneseq
    %v8022 = vshrl.u32 %v8021, 7
    %v8023 = vsub.s32 0, %v8022
    %v8024 = vrot.slane %v8019, %v8023
    %8026 = vmatprep.subr.bf16.mxu0 0
    %8027 = vmatpush1.bf16.msra.mxu0 %v8003
    %8028 = vmatprep.subr.bf16.mxu0 0
    %8029 = vmatpush1.bf16.msra.mxu0 %v8004
    %8030 = vmatprep.subr.bf16.mxu0 0
    %8031 = vmatpush1.bf16.msra.mxu0 %v8005
    %8032 = vmatprep.subr.bf16.mxu0 0
    %8033 = vmatpush1.bf16.msra.mxu0 %v8006
    %8034 = vmatprep.subr.bf16.mxu0 0
    %8035 = vmatpush1.bf16.msra.mxu0 %v8007
    %8036 = vmatprep.subr.bf16.mxu0 0
    %8037 = vmatpush1.bf16.msra.mxu0 %v8008
    %8038 = vmatprep.subr.bf16.mxu0 0
    %8039 = vmatpush1.bf16.msra.mxu0 %v8009
    %8040 = vmatprep.subr.bf16.mxu0 0
    %8041 = vmatpush1.bf16.msra.mxu0 %v8010
    %8042 = vmatprep.subr.bf16.mxu0 0
    %8043 = vmatpush1.bf16.msra.mxu0 %v8011
    %8044 = vmatprep.subr.bf16.mxu0 0
    %8045 = vmatpush1.bf16.msra.mxu0 %v8012
    %8046 = vmatprep.subr.bf16.mxu0 0
    %8047 = vmatpush1.bf16.msra.mxu0 %v8013
    %8048 = vmatprep.subr.bf16.mxu0 0
    %8049 = vmatpush1.bf16.msra.mxu0 %v8014
    %8050 = vmatprep.subr.bf16.mxu0 0
    %8051 = vmatpush1.bf16.msra.mxu0 %v8015
    %8052 = vmatprep.subr.bf16.mxu0 0
    %8053 = vmatpush1.bf16.msra.mxu0 %v8016
    %8054 = vmatprep.subr.bf16.mxu0 0
    %8055 = vmatpush1.bf16.msra.mxu0 %v8017
    %8056 = vmatprep.subr.bf16.mxu0 0
    %8057 = vmatpush1.bf16.msra.mxu0 %v8018
    %8058 = vmatprep.mubr.bf16.mxu0 %v7972
    %8059 = vmatmul.mubr.bf16.gmra.mrb[0].mxu0 %v7971
    %v8060 = vpop.f32.mrb[0].mxu0
    %v8061 = vadd.f32 %v8024, %v8060
    %v8062 = vpop.f32.mrb[0].mxu0
    %v8063 = vpop.f32.mrb[0].mxu0
    %v8064 = vadd.f32 %v8024, %v8063
    %v8065 = vpop.f32.mrb[0].mxu0
    %8066 = vmatprep.mubr.bf16.mxu0 %v7974
    %8067 = vmatmul.mubr.bf16.gmra.mrb[0].mxu0 %v7973
    %v8068 = vpop.f32.mrb[0].mxu0
    %v8069 = vadd.f32 %v8024, %v8068
    %v8070 = vpop.f32.mrb[0].mxu0
    %v8071 = vpop.f32.mrb[0].mxu0
    %v8072 = vadd.f32 %v8024, %v8071
    %v8073 = vpop.f32.mrb[0].mxu0
    %8074 = vmatprep.mubr.bf16.mxu0 %v7976
    %8075 = vmatmul.mubr.bf16.gmra.mrb[0].mxu0 %v7975
    %v8076 = vpop.f32.mrb[0].mxu0
    %v8077 = vadd.f32 %v8024, %v8076
    %v8078 = vpop.f32.mrb[0].mxu0
    %v8079 = vpop.f32.mrb[0].mxu0
    %v8080 = vadd.f32 %v8024, %v8079
    %v8081 = vpop.f32.mrb[0].mxu0
    %8082 = vmatprep.mubr.bf16.mxu0 %v7978
    %8083 = vmatmul.mubr.bf16.gmra.mrb[0].mxu0 %v7977
    %v8084 = vpop.f32.mrb[0].mxu0
    %v8085 = vadd.f32 %v8024, %v8084
    %v8086 = vpop.f32.mrb[0].mxu0
    %v8087 = vpop.f32.mrb[0].mxu0
    %v8088 = vadd.f32 %v8024, %v8087
    %v8089 = vpop.f32.mrb[0].mxu0
    %8090 = vmatprep.mubr.bf16.mxu0 %v7980
    %8091 = vmatmul.mubr.bf16.gmra.mrb[0].mxu0 %v7979
    %v8092 = vpop.f32.mrb[0].mxu0
    %v8093 = vadd.f32 %v8024, %v8092
    %v8094 = vpop.f32.mrb[0].mxu0
    %v8095 = vpop.f32.mrb[0].mxu0
    %v8096 = vadd.f32 %v8024, %v8095
    %v8097 = vpop.f32.mrb[0].mxu0
    %8098 = vmatprep.mubr.bf16.mxu0 %v7982
    %8099 = vmatmul.mubr.bf16.gmra.mrb[0].mxu0 %v7981
    %v8100 = vpop.f32.mrb[0].mxu0
    %v8101 = vadd.f32 %v8024, %v8100
    %v8102 = vpop.f32.mrb[0].mxu0
    %v8103 = vpop.f32.mrb[0].mxu0
    %v8104 = vadd.f32 %v8024, %v8103
    %v8105 = vpop.f32.mrb[0].mxu0
    %8106 = vmatprep.mubr.bf16.mxu0 %v7984
    %8107 = vmatmul.mubr.bf16.gmra.mrb[0].mxu0 %v7983
    %v8108 = vpop.f32.mrb[0].mxu0
    %v8109 = vadd.f32 %v8024, %v8108
    %v8110 = vpop.f32.mrb[0].mxu0
    %v8111 = vpop.f32.mrb[0].mxu0
    %v8112 = vadd.f32 %v8024, %v8111
    %v8113 = vpop.f32.mrb[0].mxu0
    %8114 = vmatprep.mubr.bf16.mxu0 %v7986
    %8115 = vmatmul.mubr.bf16.gmra.mrb[0].mxu0 %v7985
    %v8116 = vpop.f32.mrb[0].mxu0
    %v8117 = vadd.f32 %v8024, %v8116
    %v8118 = vpop.f32.mrb[0].mxu0
    %v8119 = vpop.f32.mrb[0].mxu0
    %v8120 = vadd.f32 %v8024, %v8119
    %v8121 = vpop.f32.mrb[0].mxu0
    %8122 = vmatprep.mubr.bf16.mxu0 %v7988
    %8123 = vmatmul.mubr.bf16.gmra.mrb[0].mxu0 %v7987
    %v8124 = vpop.f32.mrb[0].mxu0
    %v8125 = vadd.f32 %v8024, %v8124
    %v8126 = vpop.f32.mrb[0].mxu0
    %v8127 = vpop.f32.mrb[0].mxu0
    %v8128 = vadd.f32 %v8024, %v8127
    %v8129 = vpop.f32.mrb[0].mxu0
    %8130 = vmatprep.mubr.bf16.mxu0 %v7990
    %8131 = vmatmul.mubr.bf16.gmra.mrb[0].mxu0 %v7989
    %v8132 = vpop.f32.mrb[0].mxu0
    %v8133 = vadd.f32 %v8024, %v8132
    %v8134 = vpop.f32.mrb[0].mxu0
    %v8135 = vpop.f32.mrb[0].mxu0
    %v8136 = vadd.f32 %v8024, %v8135
    %v8137 = vpop.f32.mrb[0].mxu0
    %8138 = vmatprep.mubr.bf16.mxu0 %v7992
    %8139 = vmatmul.mubr.bf16.gmra.mrb[0].mxu0 %v7991
    %v8140 = vpop.f32.mrb[0].mxu0
    %v8141 = vadd.f32 %v8024, %v8140
    %v8142 = vpop.f32.mrb[0].mxu0
    %v8143 = vpop.f32.mrb[0].mxu0
    %v8144 = vadd.f32 %v8024, %v8143
    %v8145 = vpop.f32.mrb[0].mxu0
    %8146 = vmatprep.mubr.bf16.mxu0 %v7994
    %8147 = vmatmul.mubr.bf16.gmra.mrb[0].mxu0 %v7993
    %v8148 = vpop.f32.mrb[0].mxu0
    %v8149 = vadd.f32 %v8024, %v8148
    %v8150 = vpop.f32.mrb[0].mxu0
    %v8151 = vpop.f32.mrb[0].mxu0
    %v8152 = vadd.f32 %v8024, %v8151
    %v8153 = vpop.f32.mrb[0].mxu0
    %8154 = vmatprep.mubr.bf16.mxu0 %v7996
    %8155 = vmatmul.mubr.bf16.gmra.mrb[0].mxu0 %v7995
    %v8156 = vpop.f32.mrb[0].mxu0
    %v8157 = vadd.f32 %v8024, %v8156
    %v8158 = vpop.f32.mrb[0].mxu0
    %v8159 = vpop.f32.mrb[0].mxu0
    %v8160 = vadd.f32 %v8024, %v8159
    %v8161 = vpop.f32.mrb[0].mxu0
    %8162 = vmatprep.mubr.bf16.mxu0 %v7998
    %8163 = vmatmul.mubr.bf16.gmra.mrb[0].mxu0 %v7997
    %v8164 = vpop.f32.mrb[0].mxu0
    %v8165 = vadd.f32 %v8024, %v8164
    %v8166 = vpop.f32.mrb[0].mxu0
    %v8167 = vpop.f32.mrb[0].mxu0
    %v8168 = vadd.f32 %v8024, %v8167
    %v8169 = vpop.f32.mrb[0].mxu0
    %8170 = vmatprep.mubr.bf16.mxu0 %v8000
    %8171 = vmatmul.mubr.bf16.gmra.mrb[0].mxu0 %v7999
    %v8172 = vpop.f32.mrb[0].mxu0
    %v8173 = vadd.f32 %v8024, %v8172
    %v8174 = vpop.f32.mrb[0].mxu0
    %v8175 = vpop.f32.mrb[0].mxu0
    %v8176 = vadd.f32 %v8024, %v8175
    %v8177 = vpop.f32.mrb[0].mxu0
    %8178 = vmatprep.mubr.bf16.mxu0 %v8002
    %8179 = vmatmul.mubr.bf16.gmra.mrb[0].mxu0 %v8001
    %v8180 = vpop.f32.mrb[0].mxu0
    %v8181 = vadd.f32 %v8024, %v8180
    %v8182 = vpop.f32.mrb[0].mxu0
    %v8183 = vpop.f32.mrb[0].mxu0
    %v8184 = vadd.f32 %v8024, %v8183
    %v8185 = vpop.f32.mrb[0].mxu0
    %8186 = vdwg.mxu0
    %8187 = vst [vmem:[#allocation9] sm:$0xff] %v8061
    %8188 = vst [vmem:[#allocation9 + $0x8] sm:$0xff] %v8064
    %8189 = vst [vmem:[#allocation9 + $0x10] sm:$0xff] %v8069
    %8190 = vst [vmem:[#allocation9 + $0x18] sm:$0xff] %v8072
    %8191 = vst [vmem:[#allocation9 + $0x20] sm:$0xff] %v8077
    %8192 = vst [vmem:[#allocation9 + $0x28] sm:$0xff] %v8080
    %8193 = vst [vmem:[#allocation9 + $0x30] sm:$0xff] %v8085
    %8194 = vst [vmem:[#allocation9 + $0x38] sm:$0xff] %v8088
    %8195 = vst [vmem:[#allocation9 + $0x40] sm:$0xff] %v8093
    %8196 = vst [vmem:[#allocation9 + $0x48] sm:$0xff] %v8096
    %8197 = vst [vmem:[#allocation9 + $0x50] sm:$0xff] %v8101
    %8198 = vst [vmem:[#allocation9 + $0x58] sm:$0xff] %v8104
    %8199 = vst [vmem:[#allocation9 + $0x60] sm:$0xff] %v8109
    %8200 = vst [vmem:[#allocation9 + $0x68] sm:$0xff] %v8112
    %8201 = vst [vmem:[#allocation9 + $0x70] sm:$0xff] %v8117
    %8202 = vst [vmem:[#allocation9 + $0x78] sm:$0xff] %v8120
    %8203 = vst [vmem:[#allocation9 + $0x80] sm:$0xff] %v8125
    %8204 = vst [vmem:[#allocation9 + $0x88] sm:$0xff] %v8128
    %8205 = vst [vmem:[#allocation9 + $0x90] sm:$0xff] %v8133
    %8206 = vst [vmem:[#allocation9 + $0x98] sm:$0xff] %v8136
    %8207 = vst [vmem:[#allocation9 + $0xa0] sm:$0xff] %v8141
    %8208 = vst [vmem:[#allocation9 + $0xa8] sm:$0xff] %v8144
    %8209 = vst [vmem:[#allocation9 + $0xb0] sm:$0xff] %v8149
    %8210 = vst [vmem:[#allocation9 + $0xb8] sm:$0xff] %v8152
    %8211 = vst [vmem:[#allocation9 + $0xc0] sm:$0xff] %v8157
    %8212 = vst [vmem:[#allocation9 + $0xc8] sm:$0xff] %v8160
    %8213 = vst [vmem:[#allocation9 + $0xd0] sm:$0xff] %v8165
    %8214 = vst [vmem:[#allocation9 + $0xd8] sm:$0xff] %v8168
    %8215 = vst [vmem:[#allocation9 + $0xe0] sm:$0xff] %v8173
    %8216 = vst [vmem:[#allocation9 + $0xe8] sm:$0xff] %v8176
    %8217 = vst [vmem:[#allocation9 + $0xf0] sm:$0xff] %v8181
    %8218 = vst [vmem:[#allocation9 + $0xf8] sm:$0xff] %v8184
    // Predicated region
    $region56: #{tpu_custom_call.1} parent=1 // pred_check
      _
    $region57: #{tpu_custom_call.1} parent=1 // pred_check_branch
      %8220 = sbr.rel (0) target = $region59
    $region58: #{tpu_custom_call.1} parent=1 // pred_region
      %s8222 = ssub.s32 4096, 4096
      %8223 = vsyncadd [#allocation8], %s8222
      %s8224 = sshll.u32 [#allocation9], 4
      %s8225 = int_to_ptr.vmem [resolvable:$true] %s8224
      %8230 = dma.vmem_to_hbm [thread:$0]  %s8225, 4096, %s7, [#allocation8], 128, 128, 8
    $region59: #{tpu_custom_call.1} parent=1 // pred_fallthru
      _
    // Predicated region
    $region60: #{tpu_custom_call.1} parent=1 // pred_check
      _
    $region61: #{tpu_custom_call.1} parent=1 // pred_check_branch
      %8232 = sbr.rel (0) target = $region63
    $region62: #{tpu_custom_call.1} parent=1 // pred_region
      %8233 = dma.done [#allocation8], 4096
    $region63: #{tpu_custom_call.1} parent=1 // pred_fallthru
      _
    %8234 = vsyncpa [#allocation7], 1
    %8235 = vsyncpa [#allocation8], 1
  %8236 = vsyncmov [#allocation5]
  %s8237 = vpop.sfrf %8236
  %p8238 = scmp.eq.s32.totalorder %s8237, 0
  %p8239 = pneg %p8238
  %8241 = shalt.err (%p8239)
  %s8242 = scalar_lea.sflag [#allocation5], 1
  %8243 = vsyncmov %s8242
  %s8244 = vpop.sfrf %8243
  %p8245 = scmp.eq.s32.totalorder %s8244, 0
  %p8246 = pneg %p8245
  %8248 = shalt.err (%p8246)
  %s8249 = scalar_lea.sflag [#allocation5], 2
  %8250 = vsyncmov %s8249
  %s8251 = vpop.sfrf %8250
  %p8252 = scmp.eq.s32.totalorder %s8251, 0
  %p8253 = pneg %p8252
  %8255 = shalt.err (%p8253)

</llo_original>
